<compile_context>
chip_gen: v7x
topology: tpu7x:2x2x1
jax: 0.10.0
libtpu: 0.0.40
codegen_flags: <defaults>
</compile_context>

<pallas_src>
import functools

import jax
import jax.numpy as jnp
from jax.experimental import pallas as pl
from jax.experimental.pallas import tpu as pltpu

EPS = 1e-5


def _bn_relu(v, gamma, beta):
    """Training-mode BatchNorm (two-pass batch stats, biased var) + ReLU.

    v: (rows, C) f32, stats taken over rows (= N*H*W); gamma/beta: (1, C) f32.
    """
    mean = jnp.mean(v, axis=0, keepdims=True)
    var = jnp.mean(jnp.square(v - mean), axis=0, keepdims=True)
    scale = gamma * jax.lax.rsqrt(var + EPS)
    shift = beta - mean * scale
    return jnp.maximum(v * scale + shift, 0.0)


def _fused_residual_kernel(x_ref, g1_ref, be1_ref, w1_ref, b1_ref,
                           g2_ref, be2_ref, w2_ref, b2_ref,
                           g3_ref, be3_ref, w3_ref, b3_ref,
                           *rest, need_skip):
    if need_skip:
        wsk_ref, bsk_ref, out_ref, pad_ref = rest
    else:
        out_ref, pad_ref = rest

    N, H, W, Cin = x_ref.shape
    Cmid = w1_ref.shape[1]
    rows = N * H * W
    f32, bf16 = jnp.float32, jnp.bfloat16

    x = x_ref[...].reshape(rows, Cin)                               # f32 (rows, Cin)

    # ---- Stage 1: y1 = relu(bn1(x)) @ W1 + b1   (1x1 conv = one bf16 MXU matmul)
    t1 = _bn_relu(x, g1_ref[...], be1_ref[...]).astype(bf16)
    y1 = jnp.dot(t1, w1_ref[...], preferred_element_type=f32) + b1_ref[...]

    # ---- Stage 2: y2 = conv3x3(relu(bn2(y1)), pad=1) + b2
    # Zero-halo scratch + 9 accumulated tap matmuls (no (rows, 9*C) im2col buffer).
    t2 = _bn_relu(y1, g2_ref[...], be2_ref[...])
    pad_ref[...] = jnp.zeros(pad_ref.shape, pad_ref.dtype)          # zero halo
    pad_ref[:, pl.ds(1, H), pl.ds(1, W), :] = t2.reshape(N, H, W, Cmid)
    acc = jnp.zeros((rows, Cmid), f32)
    for kh in range(3):
        for kw in range(3):
            tap = pad_ref[:, pl.ds(kh, H), pl.ds(kw, W), :]
            tap = tap.reshape(rows, Cmid).astype(bf16)
            acc = acc + jnp.dot(tap, w2_ref[kh * 3 + kw],
                                preferred_element_type=f32)
    y2 = acc + b2_ref[...]

    # ---- Stage 3: out = relu(bn3(y2)) @ W3 + b3 + skip(x)
    t3 = _bn_relu(y2, g3_ref[...], be3_ref[...]).astype(bf16)
    out = jnp.dot(t3, w3_ref[...], preferred_element_type=f32) + b3_ref[...]
    if need_skip:
        out = out + (jnp.dot(x.astype(bf16), wsk_ref[...],
                             preferred_element_type=f32) + bsk_ref[...])
    else:
        out = out + x                                               # Cin == Cout
    out_ref[...] = out.reshape(out_ref.shape).astype(out_ref.dtype)


def residual_forward(x_nchw, params):
    """Forward pass of the PyTorch `Residual` module (training-mode BatchNorm)."""
    (g1, be1, w1, b1, g2, be2, w2, b2, g3, be3, w3, b3, wsk, bsk) = params
    N, Cin, H, W = x_nchw.shape
    Cmid = w1.shape[0]
    Cout = w3.shape[0]
    need_skip = wsk is not None
    f32, bf16 = jnp.float32, jnp.bfloat16

    # TODO(synk): drop these transposes if the surrounding model carries NHWC.
    x = jnp.transpose(x_nchw, (0, 2, 3, 1)).astype(f32)             # NHWC, f32

    # Matmul-ready weights: transposed once here, bf16 for the MXU.
    w1m = jnp.transpose(w1[:, :, 0, 0], (1, 0)).astype(bf16)        # (Cin, Cmid)
    w2t = jnp.transpose(w2, (2, 3, 1, 0)).reshape(9, Cmid, Cmid).astype(bf16)
    w3m = jnp.transpose(w3[:, :, 0, 0], (1, 0)).astype(bf16)        # (Cmid, Cout)
    b1r = b1.reshape(1, -1).astype(f32)
    b2r = b2.reshape(1, -1).astype(f32)
    b3r = b3.reshape(1, -1).astype(f32)
    g1r, be1r = g1.reshape(1, -1).astype(f32), be1.reshape(1, -1).astype(f32)
    g2r, be2r = g2.reshape(1, -1).astype(f32), be2.reshape(1, -1).astype(f32)
    g3r, be3r = g3.reshape(1, -1).astype(f32), be3.reshape(1, -1).astype(f32)

    inputs = [x, g1r, be1r, w1m, b1r, g2r, be2r, w2t, b2r, g3r, be3r, w3m, b3r]
    if need_skip:
        wskm = jnp.transpose(wsk[:, :, 0, 0], (1, 0)).astype(bf16)  # (Cin, Cout)
        inputs += [wskm, bsk.reshape(1, -1).astype(f32)]

    out = pl.pallas_call(
        functools.partial(_fused_residual_kernel, need_skip=need_skip),
        out_shape=jax.ShapeDtypeStruct((N, H, W, Cout), f32),
        scratch_shapes=[pltpu.VMEM((N, H + 2, W + 2, Cmid), f32)],
    )(*inputs)

    return jnp.transpose(out, (0, 3, 1, 2))                          # back to NCHW


# ----------------------------- pure-JAX reference -----------------------------

def _bn_train(x, gamma, beta):
    mean = jnp.mean(x, axis=(0, 2, 3), keepdims=True)
    var = jnp.mean(jnp.square(x - mean), axis=(0, 2, 3), keepdims=True)
    xn = (x - mean) * jax.lax.rsqrt(var + EPS)
    return xn * gamma.reshape(1, -1, 1, 1) + beta.reshape(1, -1, 1, 1)


def _conv_nchw(x, w, b, pad):
    y = jax.lax.conv_general_dilated(
        x, w, window_strides=(1, 1), padding=[(pad, pad), (pad, pad)],
        dimension_numbers=("NCHW", "OIHW", "NCHW"),
        precision=jax.lax.Precision.HIGHEST)
    return y + b.reshape(1, -1, 1, 1)


def _reference(x, params):
    (g1, be1, w1, b1, g2, be2, w2, b2, g3, be3, w3, b3, wsk, bsk) = params
    residual = _conv_nchw(x, wsk, bsk, 0) if wsk is not None else x
    out = jax.nn.relu(_bn_train(x, g1, be1))
    out = _conv_nchw(out, w1, b1, 0)
    out = jax.nn.relu(_bn_train(out, g2, be2))
    out = _conv_nchw(out, w2, b2, 1)
    out = jax.nn.relu(_bn_train(out, g3, be3))
    out = _conv_nchw(out, w3, b3, 0)
    return out + residual


if __name__ == "__main__":
    N, H, W = 2, 16, 16
    inp_dim, out_dim = 128, 256          # inp != out -> exercises the 1x1 skip conv
    mid = out_dim // 2

    key = jax.random.PRNGKey(0)
    keys = jax.random.split(key, 16)

    def conv_w(k, o, i, ksz):
        return jax.random.normal(k, (o, i, ksz, ksz), jnp.float32) / jnp.sqrt(i * ksz * ksz)

    x = jax.random.normal(keys[0], (N, inp_dim, H, W), jnp.float32)
    w1 = conv_w(keys[1], mid, inp_dim, 1)
    b1 = 0.1 * jax.random.normal(keys[2], (mid,), jnp.float32)
    w2 = conv_w(keys[3], mid, mid, 3)
    b2 = 0.1 * jax.random.normal(keys[4], (mid,), jnp.float32)
    w3 = conv_w(keys[5], out_dim, mid, 1)
    b3 = 0.1 * jax.random.normal(keys[6], (out_dim,), jnp.float32)
    wsk = conv_w(keys[7], out_dim, inp_dim, 1)
    bsk = 0.1 * jax.random.normal(keys[8], (out_dim,), jnp.float32)
    g1 = 1.0 + 0.1 * jax.random.normal(keys[9], (inp_dim,), jnp.float32)
    be1 = 0.1 * jax.random.normal(keys[10], (inp_dim,), jnp.float32)
    g2 = 1.0 + 0.1 * jax.random.normal(keys[11], (mid,), jnp.float32)
    be2 = 0.1 * jax.random.normal(keys[12], (mid,), jnp.float32)
    g3 = 1.0 + 0.1 * jax.random.normal(keys[13], (mid,), jnp.float32)
    be3 = 0.1 * jax.random.normal(keys[14], (mid,), jnp.float32)

    params = (g1, be1, w1, b1, g2, be2, w2, b2, g3, be3, w3, b3, wsk, bsk)

    out = jax.block_until_ready(residual_forward(x, params))
    assert out.shape == (N, out_dim, H, W), out.shape

    ref = _reference(x, params)
    # bf16 MXU operands (f32 accumulation) vs an all-f32 HIGHEST-precision
    # reference through four matmul stages -> tolerance relaxed from 1e-3.
    if not jnp.allclose(out, ref, atol=5e-2, rtol=5e-2):
        err = float(jnp.max(jnp.abs(out - ref)))
        raise AssertionError(
            f"Pallas Residual output mismatch vs JAX reference (max abs err {err})")

    print("KERNEL_OK")
</pallas_src>

<mosaic_0001>
module attributes {stable_mosaic.version = 11 : i64} {
  func.func @_fused_residual_kernel(%arg0: memref<2x16x16x128xf32, #tpu.memory_space<vmem>>, %arg1: memref<1x128xf32, #tpu.memory_space<vmem>>, %arg2: memref<1x128xf32, #tpu.memory_space<vmem>>, %arg3: memref<128x128xbf16, #tpu.memory_space<vmem>>, %arg4: memref<1x128xf32, #tpu.memory_space<vmem>>, %arg5: memref<1x128xf32, #tpu.memory_space<vmem>>, %arg6: memref<1x128xf32, #tpu.memory_space<vmem>>, %arg7: memref<9x128x128xbf16, #tpu.memory_space<vmem>>, %arg8: memref<1x128xf32, #tpu.memory_space<vmem>>, %arg9: memref<1x128xf32, #tpu.memory_space<vmem>>, %arg10: memref<1x128xf32, #tpu.memory_space<vmem>>, %arg11: memref<128x256xbf16, #tpu.memory_space<vmem>>, %arg12: memref<1x256xf32, #tpu.memory_space<vmem>>, %arg13: memref<128x256xbf16, #tpu.memory_space<vmem>>, %arg14: memref<1x256xf32, #tpu.memory_space<vmem>>, %arg15: memref<2x16x16x256xf32, #tpu.memory_space<vmem>>, %arg16: memref<2x18x18x128xf32, #tpu.memory_space<vmem>>) attributes {dimension_semantics = [], scalar_prefetch = 0 : i64, scratch_operands = 1 : i64, tpu.core_type = #tpu.core_type<tc>} {
    %c0 = arith.constant 0 : index
    %c0_0 = arith.constant 0 : index
    %c0_1 = arith.constant 0 : index
    %c0_2 = arith.constant 0 : index
    %0 = vector.load %arg0[%c0, %c0_0, %c0_1, %c0_2] : memref<2x16x16x128xf32, #tpu.memory_space<vmem>>, vector<2x16x16x128xf32>
    %1 = vector.shape_cast %0 : vector<2x16x16x128xf32> to vector<512x128xf32>
    %c0_3 = arith.constant 0 : index
    %c0_4 = arith.constant 0 : index
    %2 = vector.load %arg1[%c0_3, %c0_4] : memref<1x128xf32, #tpu.memory_space<vmem>>, vector<1x128xf32>
    %c0_5 = arith.constant 0 : index
    %c0_6 = arith.constant 0 : index
    %3 = vector.load %arg2[%c0_5, %c0_6] : memref<1x128xf32, #tpu.memory_space<vmem>>, vector<1x128xf32>
    %cst = arith.constant dense<0.000000e+00> : vector<128xf32>
    %4 = vector.multi_reduction <add>, %1, %cst [0] : vector<512x128xf32> to vector<128xf32>
    %5 = vector.shape_cast %4 : vector<128xf32> to vector<1x128xf32>
    %cst_7 = arith.constant 5.120000e+02 : f32
    %6 = vector.broadcast %cst_7 : f32 to vector<1x128xf32>
    %7 = arith.divf %5, %6 : vector<1x128xf32>
    %8 = vector.broadcast %7 : vector<1x128xf32> to vector<512x128xf32>
    %9 = arith.subf %1, %8 : vector<512x128xf32>
    %10 = arith.mulf %9, %9 : vector<512x128xf32>
    %cst_8 = arith.constant dense<0.000000e+00> : vector<128xf32>
    %11 = vector.multi_reduction <add>, %10, %cst_8 [0] : vector<512x128xf32> to vector<128xf32>
    %12 = vector.shape_cast %11 : vector<128xf32> to vector<1x128xf32>
    %cst_9 = arith.constant 5.120000e+02 : f32
    %13 = vector.broadcast %cst_9 : f32 to vector<1x128xf32>
    %14 = arith.divf %12, %13 : vector<1x128xf32>
    %cst_10 = arith.constant 9.99999974E-6 : f32
    %15 = vector.broadcast %cst_10 : f32 to vector<1x128xf32>
    %16 = arith.addf %14, %15 : vector<1x128xf32>
    %17 = math.rsqrt %16 : vector<1x128xf32>
    %18 = arith.mulf %2, %17 : vector<1x128xf32>
    %19 = arith.mulf %7, %18 : vector<1x128xf32>
    %20 = arith.subf %3, %19 : vector<1x128xf32>
    %21 = vector.broadcast %18 : vector<1x128xf32> to vector<512x128xf32>
    %22 = arith.mulf %1, %21 : vector<512x128xf32>
    %23 = vector.broadcast %20 : vector<1x128xf32> to vector<512x128xf32>
    %24 = arith.addf %22, %23 : vector<512x128xf32>
    %cst_11 = arith.constant 0.000000e+00 : f32
    %25 = vector.broadcast %cst_11 : f32 to vector<512x128xf32>
    %26 = arith.maximumf %24, %25 : vector<512x128xf32>
    %27 = arith.truncf %26 : vector<512x128xf32> to vector<512x128xbf16>
    %c0_12 = arith.constant 0 : index
    %c0_13 = arith.constant 0 : index
    %28 = vector.load %arg3[%c0_12, %c0_13] : memref<128x128xbf16, #tpu.memory_space<vmem>>, vector<128x128xbf16>
    %cst_14 = arith.constant dense<0.000000e+00> : vector<512x128xf32>
    %29 = tpu.matmul %27, %28, %cst_14 {dimension_numbers = #tpu.dot_dimension_numbers<[1], [0], [0], [1], [0, 0, 1, 1], [], []>} : vector<512x128xbf16>, vector<128x128xbf16>, vector<512x128xf32> -> vector<512x128xf32>
    %c0_15 = arith.constant 0 : index
    %c0_16 = arith.constant 0 : index
    %30 = vector.load %arg4[%c0_15, %c0_16] : memref<1x128xf32, #tpu.memory_space<vmem>>, vector<1x128xf32>
    %31 = vector.broadcast %30 : vector<1x128xf32> to vector<512x128xf32>
    %32 = arith.addf %29, %31 : vector<512x128xf32>
    %c0_17 = arith.constant 0 : index
    %c0_18 = arith.constant 0 : index
    %33 = vector.load %arg5[%c0_17, %c0_18] : memref<1x128xf32, #tpu.memory_space<vmem>>, vector<1x128xf32>
    %c0_19 = arith.constant 0 : index
    %c0_20 = arith.constant 0 : index
    %34 = vector.load %arg6[%c0_19, %c0_20] : memref<1x128xf32, #tpu.memory_space<vmem>>, vector<1x128xf32>
    %cst_21 = arith.constant dense<0.000000e+00> : vector<128xf32>
    %35 = vector.multi_reduction <add>, %32, %cst_21 [0] : vector<512x128xf32> to vector<128xf32>
    %36 = vector.shape_cast %35 : vector<128xf32> to vector<1x128xf32>
    %cst_22 = arith.constant 5.120000e+02 : f32
    %37 = vector.broadcast %cst_22 : f32 to vector<1x128xf32>
    %38 = arith.divf %36, %37 : vector<1x128xf32>
    %39 = vector.broadcast %38 : vector<1x128xf32> to vector<512x128xf32>
    %40 = arith.subf %32, %39 : vector<512x128xf32>
    %41 = arith.mulf %40, %40 : vector<512x128xf32>
    %cst_23 = arith.constant dense<0.000000e+00> : vector<128xf32>
    %42 = vector.multi_reduction <add>, %41, %cst_23 [0] : vector<512x128xf32> to vector<128xf32>
    %43 = vector.shape_cast %42 : vector<128xf32> to vector<1x128xf32>
    %cst_24 = arith.constant 5.120000e+02 : f32
    %44 = vector.broadcast %cst_24 : f32 to vector<1x128xf32>
    %45 = arith.divf %43, %44 : vector<1x128xf32>
    %cst_25 = arith.constant 9.99999974E-6 : f32
    %46 = vector.broadcast %cst_25 : f32 to vector<1x128xf32>
    %47 = arith.addf %45, %46 : vector<1x128xf32>
    %48 = math.rsqrt %47 : vector<1x128xf32>
    %49 = arith.mulf %33, %48 : vector<1x128xf32>
    %50 = arith.mulf %38, %49 : vector<1x128xf32>
    %51 = arith.subf %34, %50 : vector<1x128xf32>
    %52 = vector.broadcast %49 : vector<1x128xf32> to vector<512x128xf32>
    %53 = arith.mulf %32, %52 : vector<512x128xf32>
    %54 = vector.broadcast %51 : vector<1x128xf32> to vector<512x128xf32>
    %55 = arith.addf %53, %54 : vector<512x128xf32>
    %cst_26 = arith.constant 0.000000e+00 : f32
    %56 = vector.broadcast %cst_26 : f32 to vector<512x128xf32>
    %57 = arith.maximumf %55, %56 : vector<512x128xf32>
    %cst_27 = arith.constant 0.000000e+00 : f32
    %58 = vector.broadcast %cst_27 : f32 to vector<2x18x18x128xf32>
    %c0_28 = arith.constant 0 : index
    %c0_29 = arith.constant 0 : index
    %c0_30 = arith.constant 0 : index
    %c0_31 = arith.constant 0 : index
    %59 = vector.load %arg16[%c0_28, %c0_29, %c0_30, %c0_31] : memref<2x18x18x128xf32, #tpu.memory_space<vmem>>, vector<2x18x18x128xf32>
    tpu.vector_store %arg16[%c0_28, %c0_29, %c0_30, %c0_31], %58 {strides = array<i32>} : memref<2x18x18x128xf32, #tpu.memory_space<vmem>>, vector<2x18x18x128xf32>,
    %60 = vector.shape_cast %57 : vector<512x128xf32> to vector<2x16x16x128xf32>
    %c0_32 = arith.constant 0 : index
    %c1 = arith.constant 1 : index
    %c1_33 = arith.constant 1 : index
    %c0_34 = arith.constant 0 : index
    %61 = vector.load %arg16[%c0_32, %c1, %c1_33, %c0_34] : memref<2x18x18x128xf32, #tpu.memory_space<vmem>>, vector<2x16x16x128xf32>
    tpu.vector_store %arg16[%c0_32, %c1, %c1_33, %c0_34], %60 {strides = array<i32>} : memref<2x18x18x128xf32, #tpu.memory_space<vmem>>, vector<2x16x16x128xf32>,
    %cst_35 = arith.constant 0.000000e+00 : f32
    %62 = vector.broadcast %cst_35 : f32 to vector<512x128xf32>
    %c0_36 = arith.constant 0 : index
    %c0_37 = arith.constant 0 : index
    %c0_38 = arith.constant 0 : index
    %c0_39 = arith.constant 0 : index
    %63 = vector.load %arg16[%c0_36, %c0_37, %c0_38, %c0_39] : memref<2x18x18x128xf32, #tpu.memory_space<vmem>>, vector<2x16x16x128xf32>
    %64 = vector.shape_cast %63 : vector<2x16x16x128xf32> to vector<512x128xf32>
    %65 = arith.truncf %64 : vector<512x128xf32> to vector<512x128xbf16>
    %c0_40 = arith.constant 0 : index
    %c0_41 = arith.constant 0 : index
    %c0_42 = arith.constant 0 : index
    %66 = vector.load %arg7[%c0_40, %c0_41, %c0_42] : memref<9x128x128xbf16, #tpu.memory_space<vmem>>, vector<1x128x128xbf16>
    %67 = vector.shape_cast %66 : vector<1x128x128xbf16> to vector<128x128xbf16>
    %cst_43 = arith.constant dense<0.000000e+00> : vector<512x128xf32>
    %68 = tpu.matmul %65, %67, %cst_43 {dimension_numbers = #tpu.dot_dimension_numbers<[1], [0], [0], [1], [0, 0, 1, 1], [], []>} : vector<512x128xbf16>, vector<128x128xbf16>, vector<512x128xf32> -> vector<512x128xf32>
    %69 = arith.addf %62, %68 : vector<512x128xf32>
    %c0_44 = arith.constant 0 : index
    %c0_45 = arith.constant 0 : index
    %c1_46 = arith.constant 1 : index
    %c0_47 = arith.constant 0 : index
    %70 = vector.load %arg16[%c0_44, %c0_45, %c1_46, %c0_47] : memref<2x18x18x128xf32, #tpu.memory_space<vmem>>, vector<2x16x16x128xf32>
    %71 = vector.shape_cast %70 : vector<2x16x16x128xf32> to vector<512x128xf32>
    %72 = arith.truncf %71 : vector<512x128xf32> to vector<512x128xbf16>
    %c1_48 = arith.constant 1 : index
    %c0_49 = arith.constant 0 : index
    %c0_50 = arith.constant 0 : index
    %73 = vector.load %arg7[%c1_48, %c0_49, %c0_50] : memref<9x128x128xbf16, #tpu.memory_space<vmem>>, vector<1x128x128xbf16>
    %74 = vector.shape_cast %73 : vector<1x128x128xbf16> to vector<128x128xbf16>
    %cst_51 = arith.constant dense<0.000000e+00> : vector<512x128xf32>
    %75 = tpu.matmul %72, %74, %cst_51 {dimension_numbers = #tpu.dot_dimension_numbers<[1], [0], [0], [1], [0, 0, 1, 1], [], []>} : vector<512x128xbf16>, vector<128x128xbf16>, vector<512x128xf32> -> vector<512x128xf32>
    %76 = arith.addf %69, %75 : vector<512x128xf32>
    %c0_52 = arith.constant 0 : index
    %c0_53 = arith.constant 0 : index
    %c2 = arith.constant 2 : index
    %c0_54 = arith.constant 0 : index
    %77 = vector.load %arg16[%c0_52, %c0_53, %c2, %c0_54] : memref<2x18x18x128xf32, #tpu.memory_space<vmem>>, vector<2x16x16x128xf32>
    %78 = vector.shape_cast %77 : vector<2x16x16x128xf32> to vector<512x128xf32>
    %79 = arith.truncf %78 : vector<512x128xf32> to vector<512x128xbf16>
    %c2_55 = arith.constant 2 : index
    %c0_56 = arith.constant 0 : index
    %c0_57 = arith.constant 0 : index
    %80 = vector.load %arg7[%c2_55, %c0_56, %c0_57] : memref<9x128x128xbf16, #tpu.memory_space<vmem>>, vector<1x128x128xbf16>
    %81 = vector.shape_cast %80 : vector<1x128x128xbf16> to vector<128x128xbf16>
    %cst_58 = arith.constant dense<0.000000e+00> : vector<512x128xf32>
    %82 = tpu.matmul %79, %81, %cst_58 {dimension_numbers = #tpu.dot_dimension_numbers<[1], [0], [0], [1], [0, 0, 1, 1], [], []>} : vector<512x128xbf16>, vector<128x128xbf16>, vector<512x128xf32> -> vector<512x128xf32>
    %83 = arith.addf %76, %82 : vector<512x128xf32>
    %c0_59 = arith.constant 0 : index
    %c1_60 = arith.constant 1 : index
    %c0_61 = arith.constant 0 : index
    %c0_62 = arith.constant 0 : index
    %84 = vector.load %arg16[%c0_59, %c1_60, %c0_61, %c0_62] : memref<2x18x18x128xf32, #tpu.memory_space<vmem>>, vector<2x16x16x128xf32>
    %85 = vector.shape_cast %84 : vector<2x16x16x128xf32> to vector<512x128xf32>
    %86 = arith.truncf %85 : vector<512x128xf32> to vector<512x128xbf16>
    %c3 = arith.constant 3 : index
    %c0_63 = arith.constant 0 : index
    %c0_64 = arith.constant 0 : index
    %87 = vector.load %arg7[%c3, %c0_63, %c0_64] : memref<9x128x128xbf16, #tpu.memory_space<vmem>>, vector<1x128x128xbf16>
    %88 = vector.shape_cast %87 : vector<1x128x128xbf16> to vector<128x128xbf16>
    %cst_65 = arith.constant dense<0.000000e+00> : vector<512x128xf32>
    %89 = tpu.matmul %86, %88, %cst_65 {dimension_numbers = #tpu.dot_dimension_numbers<[1], [0], [0], [1], [0, 0, 1, 1], [], []>} : vector<512x128xbf16>, vector<128x128xbf16>, vector<512x128xf32> -> vector<512x128xf32>
    %90 = arith.addf %83, %89 : vector<512x128xf32>
    %c0_66 = arith.constant 0 : index
    %c1_67 = arith.constant 1 : index
    %c1_68 = arith.constant 1 : index
    %c0_69 = arith.constant 0 : index
    %91 = vector.load %arg16[%c0_66, %c1_67, %c1_68, %c0_69] : memref<2x18x18x128xf32, #tpu.memory_space<vmem>>, vector<2x16x16x128xf32>
    %92 = vector.shape_cast %91 : vector<2x16x16x128xf32> to vector<512x128xf32>
    %93 = arith.truncf %92 : vector<512x128xf32> to vector<512x128xbf16>
    %c4 = arith.constant 4 : index
    %c0_70 = arith.constant 0 : index
    %c0_71 = arith.constant 0 : index
    %94 = vector.load %arg7[%c4, %c0_70, %c0_71] : memref<9x128x128xbf16, #tpu.memory_space<vmem>>, vector<1x128x128xbf16>
    %95 = vector.shape_cast %94 : vector<1x128x128xbf16> to vector<128x128xbf16>
    %cst_72 = arith.constant dense<0.000000e+00> : vector<512x128xf32>
    %96 = tpu.matmul %93, %95, %cst_72 {dimension_numbers = #tpu.dot_dimension_numbers<[1], [0], [0], [1], [0, 0, 1, 1], [], []>} : vector<512x128xbf16>, vector<128x128xbf16>, vector<512x128xf32> -> vector<512x128xf32>
    %97 = arith.addf %90, %96 : vector<512x128xf32>
    %c0_73 = arith.constant 0 : index
    %c1_74 = arith.constant 1 : index
    %c2_75 = arith.constant 2 : index
    %c0_76 = arith.constant 0 : index
    %98 = vector.load %arg16[%c0_73, %c1_74, %c2_75, %c0_76] : memref<2x18x18x128xf32, #tpu.memory_space<vmem>>, vector<2x16x16x128xf32>
    %99 = vector.shape_cast %98 : vector<2x16x16x128xf32> to vector<512x128xf32>
    %100 = arith.truncf %99 : vector<512x128xf32> to vector<512x128xbf16>
    %c5 = arith.constant 5 : index
    %c0_77 = arith.constant 0 : index
    %c0_78 = arith.constant 0 : index
    %101 = vector.load %arg7[%c5, %c0_77, %c0_78] : memref<9x128x128xbf16, #tpu.memory_space<vmem>>, vector<1x128x128xbf16>
    %102 = vector.shape_cast %101 : vector<1x128x128xbf16> to vector<128x128xbf16>
    %cst_79 = arith.constant dense<0.000000e+00> : vector<512x128xf32>
    %103 = tpu.matmul %100, %102, %cst_79 {dimension_numbers = #tpu.dot_dimension_numbers<[1], [0], [0], [1], [0, 0, 1, 1], [], []>} : vector<512x128xbf16>, vector<128x128xbf16>, vector<512x128xf32> -> vector<512x128xf32>
    %104 = arith.addf %97, %103 : vector<512x128xf32>
    %c0_80 = arith.constant 0 : index
    %c2_81 = arith.constant 2 : index
    %c0_82 = arith.constant 0 : index
    %c0_83 = arith.constant 0 : index
    %105 = vector.load %arg16[%c0_80, %c2_81, %c0_82, %c0_83] : memref<2x18x18x128xf32, #tpu.memory_space<vmem>>, vector<2x16x16x128xf32>
    %106 = vector.shape_cast %105 : vector<2x16x16x128xf32> to vector<512x128xf32>
    %107 = arith.truncf %106 : vector<512x128xf32> to vector<512x128xbf16>
    %c6 = arith.constant 6 : index
    %c0_84 = arith.constant 0 : index
    %c0_85 = arith.constant 0 : index
    %108 = vector.load %arg7[%c6, %c0_84, %c0_85] : memref<9x128x128xbf16, #tpu.memory_space<vmem>>, vector<1x128x128xbf16>
    %109 = vector.shape_cast %108 : vector<1x128x128xbf16> to vector<128x128xbf16>
    %cst_86 = arith.constant dense<0.000000e+00> : vector<512x128xf32>
    %110 = tpu.matmul %107, %109, %cst_86 {dimension_numbers = #tpu.dot_dimension_numbers<[1], [0], [0], [1], [0, 0, 1, 1], [], []>} : vector<512x128xbf16>, vector<128x128xbf16>, vector<512x128xf32> -> vector<512x128xf32>
    %111 = arith.addf %104, %110 : vector<512x128xf32>
    %c0_87 = arith.constant 0 : index
    %c2_88 = arith.constant 2 : index
    %c1_89 = arith.constant 1 : index
    %c0_90 = arith.constant 0 : index
    %112 = vector.load %arg16[%c0_87, %c2_88, %c1_89, %c0_90] : memref<2x18x18x128xf32, #tpu.memory_space<vmem>>, vector<2x16x16x128xf32>
    %113 = vector.shape_cast %112 : vector<2x16x16x128xf32> to vector<512x128xf32>
    %114 = arith.truncf %113 : vector<512x128xf32> to vector<512x128xbf16>
    %c7 = arith.constant 7 : index
    %c0_91 = arith.constant 0 : index
    %c0_92 = arith.constant 0 : index
    %115 = vector.load %arg7[%c7, %c0_91, %c0_92] : memref<9x128x128xbf16, #tpu.memory_space<vmem>>, vector<1x128x128xbf16>
    %116 = vector.shape_cast %115 : vector<1x128x128xbf16> to vector<128x128xbf16>
    %cst_93 = arith.constant dense<0.000000e+00> : vector<512x128xf32>
    %117 = tpu.matmul %114, %116, %cst_93 {dimension_numbers = #tpu.dot_dimension_numbers<[1], [0], [0], [1], [0, 0, 1, 1], [], []>} : vector<512x128xbf16>, vector<128x128xbf16>, vector<512x128xf32> -> vector<512x128xf32>
    %118 = arith.addf %111, %117 : vector<512x128xf32>
    %c0_94 = arith.constant 0 : index
    %c2_95 = arith.constant 2 : index
    %c2_96 = arith.constant 2 : index
    %c0_97 = arith.constant 0 : index
    %119 = vector.load %arg16[%c0_94, %c2_95, %c2_96, %c0_97] : memref<2x18x18x128xf32, #tpu.memory_space<vmem>>, vector<2x16x16x128xf32>
    %120 = vector.shape_cast %119 : vector<2x16x16x128xf32> to vector<512x128xf32>
    %121 = arith.truncf %120 : vector<512x128xf32> to vector<512x128xbf16>
    %c8 = arith.constant 8 : index
    %c0_98 = arith.constant 0 : index
    %c0_99 = arith.constant 0 : index
    %122 = vector.load %arg7[%c8, %c0_98, %c0_99] : memref<9x128x128xbf16, #tpu.memory_space<vmem>>, vector<1x128x128xbf16>
    %123 = vector.shape_cast %122 : vector<1x128x128xbf16> to vector<128x128xbf16>
    %cst_100 = arith.constant dense<0.000000e+00> : vector<512x128xf32>
    %124 = tpu.matmul %121, %123, %cst_100 {dimension_numbers = #tpu.dot_dimension_numbers<[1], [0], [0], [1], [0, 0, 1, 1], [], []>} : vector<512x128xbf16>, vector<128x128xbf16>, vector<512x128xf32> -> vector<512x128xf32>
    %125 = arith.addf %118, %124 : vector<512x128xf32>
    %c0_101 = arith.constant 0 : index
    %c0_102 = arith.constant 0 : index
    %126 = vector.load %arg8[%c0_101, %c0_102] : memref<1x128xf32, #tpu.memory_space<vmem>>, vector<1x128xf32>
    %127 = vector.broadcast %126 : vector<1x128xf32> to vector<512x128xf32>
    %128 = arith.addf %125, %127 : vector<512x128xf32>
    %c0_103 = arith.constant 0 : index
    %c0_104 = arith.constant 0 : index
    %129 = vector.load %arg9[%c0_103, %c0_104] : memref<1x128xf32, #tpu.memory_space<vmem>>, vector<1x128xf32>
    %c0_105 = arith.constant 0 : index
    %c0_106 = arith.constant 0 : index
    %130 = vector.load %arg10[%c0_105, %c0_106] : memref<1x128xf32, #tpu.memory_space<vmem>>, vector<1x128xf32>
    %cst_107 = arith.constant dense<0.000000e+00> : vector<128xf32>
    %131 = vector.multi_reduction <add>, %128, %cst_107 [0] : vector<512x128xf32> to vector<128xf32>
    %132 = vector.shape_cast %131 : vector<128xf32> to vector<1x128xf32>
    %cst_108 = arith.constant 5.120000e+02 : f32
    %133 = vector.broadcast %cst_108 : f32 to vector<1x128xf32>
    %134 = arith.divf %132, %133 : vector<1x128xf32>
    %135 = vector.broadcast %134 : vector<1x128xf32> to vector<512x128xf32>
    %136 = arith.subf %128, %135 : vector<512x128xf32>
    %137 = arith.mulf %136, %136 : vector<512x128xf32>
    %cst_109 = arith.constant dense<0.000000e+00> : vector<128xf32>
    %138 = vector.multi_reduction <add>, %137, %cst_109 [0] : vector<512x128xf32> to vector<128xf32>
    %139 = vector.shape_cast %138 : vector<128xf32> to vector<1x128xf32>
    %cst_110 = arith.constant 5.120000e+02 : f32
    %140 = vector.broadcast %cst_110 : f32 to vector<1x128xf32>
    %141 = arith.divf %139, %140 : vector<1x128xf32>
    %cst_111 = arith.constant 9.99999974E-6 : f32
    %142 = vector.broadcast %cst_111 : f32 to vector<1x128xf32>
    %143 = arith.addf %141, %142 : vector<1x128xf32>
    %144 = math.rsqrt %143 : vector<1x128xf32>
    %145 = arith.mulf %129, %144 : vector<1x128xf32>
    %146 = arith.mulf %134, %145 : vector<1x128xf32>
    %147 = arith.subf %130, %146 : vector<1x128xf32>
    %148 = vector.broadcast %145 : vector<1x128xf32> to vector<512x128xf32>
    %149 = arith.mulf %128, %148 : vector<512x128xf32>
    %150 = vector.broadcast %147 : vector<1x128xf32> to vector<512x128xf32>
    %151 = arith.addf %149, %150 : vector<512x128xf32>
    %cst_112 = arith.constant 0.000000e+00 : f32
    %152 = vector.broadcast %cst_112 : f32 to vector<512x128xf32>
    %153 = arith.maximumf %151, %152 : vector<512x128xf32>
    %154 = arith.truncf %153 : vector<512x128xf32> to vector<512x128xbf16>
    %c0_113 = arith.constant 0 : index
    %c0_114 = arith.constant 0 : index
    %155 = vector.load %arg11[%c0_113, %c0_114] : memref<128x256xbf16, #tpu.memory_space<vmem>>, vector<128x256xbf16>
    %cst_115 = arith.constant dense<0.000000e+00> : vector<512x256xf32>
    %156 = tpu.matmul %154, %155, %cst_115 {dimension_numbers = #tpu.dot_dimension_numbers<[1], [0], [0], [1], [0, 0, 1, 1], [], []>} : vector<512x128xbf16>, vector<128x256xbf16>, vector<512x256xf32> -> vector<512x256xf32>
    %c0_116 = arith.constant 0 : index
    %c0_117 = arith.constant 0 : index
    %157 = vector.load %arg12[%c0_116, %c0_117] : memref<1x256xf32, #tpu.memory_space<vmem>>, vector<1x256xf32>
    %158 = vector.broadcast %157 : vector<1x256xf32> to vector<512x256xf32>
    %159 = arith.addf %156, %158 : vector<512x256xf32>
    %160 = arith.truncf %1 : vector<512x128xf32> to vector<512x128xbf16>
    %c0_118 = arith.constant 0 : index
    %c0_119 = arith.constant 0 : index
    %161 = vector.load %arg13[%c0_118, %c0_119] : memref<128x256xbf16, #tpu.memory_space<vmem>>, vector<128x256xbf16>
    %cst_120 = arith.constant dense<0.000000e+00> : vector<512x256xf32>
    %162 = tpu.matmul %160, %161, %cst_120 {dimension_numbers = #tpu.dot_dimension_numbers<[1], [0], [0], [1], [0, 0, 1, 1], [], []>} : vector<512x128xbf16>, vector<128x256xbf16>, vector<512x256xf32> -> vector<512x256xf32>
    %c0_121 = arith.constant 0 : index
    %c0_122 = arith.constant 0 : index
    %163 = vector.load %arg14[%c0_121, %c0_122] : memref<1x256xf32, #tpu.memory_space<vmem>>, vector<1x256xf32>
    %164 = vector.broadcast %163 : vector<1x256xf32> to vector<512x256xf32>
    %165 = arith.addf %162, %164 : vector<512x256xf32>
    %166 = arith.addf %159, %165 : vector<512x256xf32>
    %167 = vector.shape_cast %166 : vector<512x256xf32> to vector<2x16x16x256xf32>
    %c0_123 = arith.constant 0 : index
    %c0_124 = arith.constant 0 : index
    %c0_125 = arith.constant 0 : index
    %c0_126 = arith.constant 0 : index
    %168 = vector.load %arg15[%c0_123, %c0_124, %c0_125, %c0_126] : memref<2x16x16x256xf32, #tpu.memory_space<vmem>>, vector<2x16x16x256xf32>
    tpu.vector_store %arg15[%c0_123, %c0_124, %c0_125, %c0_126], %167 {strides = array<i32>} : memref<2x16x16x256xf32, #tpu.memory_space<vmem>>, vector<2x16x16x256xf32>,
    return
  }
}

</mosaic_0001>

<llo_original>
// kernel: tpu_custom_call.1
$region0: #{tpu_custom_call.1}
  #allocation0 [shape = 'u32[]', space=smem, size = 0x4, offset = 0x4, fixed_abs, tag = 'smem constant byte address 0x4 - core index']
  #allocation1 [shape = 'u32[144,128]{1,0:T(1,128)}', space=vmem, size = 0x12000, scoped, tag = 'internal scratch']
  #allocation2 [shape = 'f32[2,18,18,128]{3,2,1,0:T(8,128)}', space=vmem, size = 0x6c000, scoped, tag = 'scratch operand']
  %s0 = inlined_call_operand.hbm [shape: f32[2,16,16,128], index: 0, kind: input, shape index: {}]
  %s1 = inlined_call_operand.vmem [shape: f32[1,128], index: 1, kind: input, shape index: {}]
  %s2 = inlined_call_operand.vmem [shape: f32[1,128], index: 2, kind: input, shape index: {}]
  %s3 = inlined_call_operand.hbm [shape: bf16[128,128], index: 3, kind: input, shape index: {}]
  %s4 = inlined_call_operand.vmem [shape: f32[1,128], index: 4, kind: input, shape index: {}]
  %s5 = inlined_call_operand.vmem [shape: f32[1,128], index: 5, kind: input, shape index: {}]
  %s6 = inlined_call_operand.vmem [shape: f32[1,128], index: 6, kind: input, shape index: {}]
  %s7 = inlined_call_operand.hbm [shape: bf16[9,128,128], index: 7, kind: input, shape index: {}]
  %s8 = inlined_call_operand.vmem [shape: f32[1,128], index: 8, kind: input, shape index: {}]
  %s9 = inlined_call_operand.vmem [shape: f32[1,128], index: 9, kind: input, shape index: {}]
  %s10 = inlined_call_operand.vmem [shape: f32[1,128], index: 10, kind: input, shape index: {}]
  %s11 = inlined_call_operand.hbm [shape: bf16[128,256], index: 11, kind: input, shape index: {}]
  %s12 = inlined_call_operand.vmem [shape: f32[1,256], index: 12, kind: input, shape index: {}]
  %s13 = inlined_call_operand.hbm [shape: bf16[128,256], index: 13, kind: input, shape index: {}]
  %s14 = inlined_call_operand.vmem [shape: f32[1,256], index: 14, kind: input, shape index: {}]
  %s15 = inlined_call_operand.hbm [shape: f32[2,16,16,256], index: 15, kind: output, shape index: {}]
  %s16 = sld [smem:[#allocation0]]
  $region90: #{tpu_custom_call.1} parent=0
    _
  %s18 = ssub.s32 1, %s16
  %s19 = scalar_select 0, %s18, %s16
  $region1: #{tpu_custom_call.1} parent=0
    #allocation3 [shape = 'u8[262144]{0}', space=vmem, size = 0x40000, scoped, tag = 'input window, operand 0, single buffered']
    #allocation4 [shape = 's32[1]{0}', space=sflag, size = 0x4, scoped, tag = 'scoped memory for tpu_custom_call.1']
    #allocation5 [shape = 's32[1]{0}', space=sflag, size = 0x4, scoped, tag = 'scoped memory for tpu_custom_call.1']
    #allocation6 [shape = 'u8[32768]{0}', space=vmem, size = 0x8000, scoped, tag = 'input window, operand 3, single buffered']
    #allocation7 [shape = 's32[1]{0}', space=sflag, size = 0x4, scoped, tag = 'scoped memory for tpu_custom_call.1']
    #allocation8 [shape = 'u8[294912]{0}', space=vmem, size = 0x48000, scoped, tag = 'input window, operand 7, single buffered']
    #allocation9 [shape = 'u8[65536]{0}', space=vmem, size = 0x10000, scoped, tag = 'input window, operand 11, single buffered']
    #allocation10 [shape = 's32[1]{0}', space=sflag, size = 0x4, scoped, tag = 'scoped memory for tpu_custom_call.1']
    #allocation11 [shape = 'u8[65536]{0}', space=vmem, size = 0x10000, scoped, tag = 'input window, operand 13, single buffered']
    #allocation12 [shape = 'u8[524288]{0}', space=vmem, size = 0x80000, scoped, tag = 'output window, operand 0, single buffered']
    %20 = vsyncpa [#allocation4], 0
    %21 = vsyncpa [#allocation7], 0
    %22 = vsyncpa [#allocation10], 0
    %23 = vsyncpa [#allocation5], 0
    // Predicated region
    $region2: #{tpu_custom_call.1} parent=1 // pred_check
      _
    $region3: #{tpu_custom_call.1} parent=1 // pred_check_branch
      %25 = sbr.rel (0) target = $region5
    $region4: #{tpu_custom_call.1} parent=1 // pred_region
      %s27 = ssub.s32 8192, 8192
      %28 = vsyncadd [#allocation4], %s27
      %s29 = sshll.u32 [#allocation3], 4
      %s30 = int_to_ptr.vmem [resolvable:$true] %s29
      %35 = dma.hbm_to_vmem [thread:$0]  %s0, 8192, %s30, [#allocation4], 128, 128, 8
    $region5: #{tpu_custom_call.1} parent=1 // pred_fallthru
      _
    // Predicated region
    $region6: #{tpu_custom_call.1} parent=1 // pred_check
      _
    $region7: #{tpu_custom_call.1} parent=1 // pred_check_branch
      %37 = sbr.rel (0) target = $region9
    $region8: #{tpu_custom_call.1} parent=1 // pred_region
      _
    $region9: #{tpu_custom_call.1} parent=1 // pred_fallthru
      _
    // Predicated region
    $region10: #{tpu_custom_call.1} parent=1 // pred_check
      _
    $region11: #{tpu_custom_call.1} parent=1 // pred_check_branch
      %39 = sbr.rel (0) target = $region13
    $region12: #{tpu_custom_call.1} parent=1 // pred_region
      _
    $region13: #{tpu_custom_call.1} parent=1 // pred_fallthru
      _
    // Predicated region
    $region14: #{tpu_custom_call.1} parent=1 // pred_check
      _
    $region15: #{tpu_custom_call.1} parent=1 // pred_check_branch
      %41 = sbr.rel (0) target = $region17
    $region16: #{tpu_custom_call.1} parent=1 // pred_region
      %s43 = ssub.s32 1024, 1024
      %44 = vsyncadd [#allocation7], %s43
      %s45 = sshll.u32 [#allocation6], 4
      %s46 = int_to_ptr.vmem [resolvable:$true] %s45
      %51 = dma.hbm_to_vmem [thread:$0]  %s3, 1024, %s46, [#allocation7], 64, 64, 4
    $region17: #{tpu_custom_call.1} parent=1 // pred_fallthru
      _
    // Predicated region
    $region18: #{tpu_custom_call.1} parent=1 // pred_check
      _
    $region19: #{tpu_custom_call.1} parent=1 // pred_check_branch
      %53 = sbr.rel (0) target = $region21
    $region20: #{tpu_custom_call.1} parent=1 // pred_region
      _
    $region21: #{tpu_custom_call.1} parent=1 // pred_fallthru
      _
    // Predicated region
    $region22: #{tpu_custom_call.1} parent=1 // pred_check
      _
    $region23: #{tpu_custom_call.1} parent=1 // pred_check_branch
      %55 = sbr.rel (0) target = $region25
    $region24: #{tpu_custom_call.1} parent=1 // pred_region
      _
    $region25: #{tpu_custom_call.1} parent=1 // pred_fallthru
      _
    // Predicated region
    $region26: #{tpu_custom_call.1} parent=1 // pred_check
      _
    $region27: #{tpu_custom_call.1} parent=1 // pred_check_branch
      %57 = sbr.rel (0) target = $region29
    $region28: #{tpu_custom_call.1} parent=1 // pred_region
      _
    $region29: #{tpu_custom_call.1} parent=1 // pred_fallthru
      _
    // Predicated region
    $region30: #{tpu_custom_call.1} parent=1 // pred_check
      _
    $region31: #{tpu_custom_call.1} parent=1 // pred_check_branch
      %59 = sbr.rel (0) target = $region33
    $region32: #{tpu_custom_call.1} parent=1 // pred_region
      %s61 = ssub.s32 9216, 9216
      %62 = vsyncadd [#allocation7], %s61
      %s63 = sshll.u32 [#allocation8], 4
      %s64 = int_to_ptr.vmem [resolvable:$true] %s63
      %69 = dma.hbm_to_vmem [thread:$0]  %s7, 9216, %s64, [#allocation7], 64, 64, 4
    $region33: #{tpu_custom_call.1} parent=1 // pred_fallthru
      _
    // Predicated region
    $region34: #{tpu_custom_call.1} parent=1 // pred_check
      _
    $region35: #{tpu_custom_call.1} parent=1 // pred_check_branch
      %71 = sbr.rel (0) target = $region37
    $region36: #{tpu_custom_call.1} parent=1 // pred_region
      _
    $region37: #{tpu_custom_call.1} parent=1 // pred_fallthru
      _
    // Predicated region
    $region38: #{tpu_custom_call.1} parent=1 // pred_check
      _
    $region39: #{tpu_custom_call.1} parent=1 // pred_check_branch
      %73 = sbr.rel (0) target = $region41
    $region40: #{tpu_custom_call.1} parent=1 // pred_region
      _
    $region41: #{tpu_custom_call.1} parent=1 // pred_fallthru
      _
    // Predicated region
    $region42: #{tpu_custom_call.1} parent=1 // pred_check
      _
    $region43: #{tpu_custom_call.1} parent=1 // pred_check_branch
      %75 = sbr.rel (0) target = $region45
    $region44: #{tpu_custom_call.1} parent=1 // pred_region
      _
    $region45: #{tpu_custom_call.1} parent=1 // pred_fallthru
      _
    // Predicated region
    $region46: #{tpu_custom_call.1} parent=1 // pred_check
      _
    $region47: #{tpu_custom_call.1} parent=1 // pred_check_branch
      %77 = sbr.rel (0) target = $region49
    $region48: #{tpu_custom_call.1} parent=1 // pred_region
      %s79 = ssub.s32 2048, 2048
      %80 = vsyncadd [#allocation10], %s79
      %s81 = sshll.u32 [#allocation9], 4
      %s82 = int_to_ptr.vmem [resolvable:$true] %s81
      %87 = dma.hbm_to_vmem [thread:$0]  %s11, 2048, %s82, [#allocation10], 128, 128, 8
    $region49: #{tpu_custom_call.1} parent=1 // pred_fallthru
      _
    // Predicated region
    $region50: #{tpu_custom_call.1} parent=1 // pred_check
      _
    $region51: #{tpu_custom_call.1} parent=1 // pred_check_branch
      %89 = sbr.rel (0) target = $region53
    $region52: #{tpu_custom_call.1} parent=1 // pred_region
      _
    $region53: #{tpu_custom_call.1} parent=1 // pred_fallthru
      _
    // Predicated region
    $region54: #{tpu_custom_call.1} parent=1 // pred_check
      _
    $region55: #{tpu_custom_call.1} parent=1 // pred_check_branch
      %91 = sbr.rel (0) target = $region57
    $region56: #{tpu_custom_call.1} parent=1 // pred_region
      %s93 = ssub.s32 2048, 2048
      %94 = vsyncadd [#allocation10], %s93
      %s95 = sshll.u32 [#allocation11], 4
      %s96 = int_to_ptr.vmem [resolvable:$true] %s95
      %101 = dma.hbm_to_vmem [thread:$0]  %s13, 2048, %s96, [#allocation10], 128, 128, 8
    $region57: #{tpu_custom_call.1} parent=1 // pred_fallthru
      _
    // Predicated region
    $region58: #{tpu_custom_call.1} parent=1 // pred_check
      _
    $region59: #{tpu_custom_call.1} parent=1 // pred_check_branch
      %103 = sbr.rel (0) target = $region61
    $region60: #{tpu_custom_call.1} parent=1 // pred_region
      _
    $region61: #{tpu_custom_call.1} parent=1 // pred_fallthru
      _
    // Predicated region
    $region62: #{tpu_custom_call.1} parent=1 // pred_check
      _
    $region63: #{tpu_custom_call.1} parent=1 // pred_check_branch
      %105 = sbr.rel (0) target = $region65
    $region64: #{tpu_custom_call.1} parent=1 // pred_region
      %106 = dma.done [#allocation4], 8192
    $region65: #{tpu_custom_call.1} parent=1 // pred_fallthru
      _
    // Predicated region
    $region66: #{tpu_custom_call.1} parent=1 // pred_check
      _
    $region67: #{tpu_custom_call.1} parent=1 // pred_check_branch
      %108 = sbr.rel (0) target = $region69
    $region68: #{tpu_custom_call.1} parent=1 // pred_region
      %109 = dma.done [#allocation7], 1024
    $region69: #{tpu_custom_call.1} parent=1 // pred_fallthru
      _
    // Predicated region
    $region70: #{tpu_custom_call.1} parent=1 // pred_check
      _
    $region71: #{tpu_custom_call.1} parent=1 // pred_check_branch
      %111 = sbr.rel (0) target = $region73
    $region72: #{tpu_custom_call.1} parent=1 // pred_region
      %112 = dma.done [#allocation7], 9216
    $region73: #{tpu_custom_call.1} parent=1 // pred_fallthru
      _
    // Predicated region
    $region74: #{tpu_custom_call.1} parent=1 // pred_check
      _
    $region75: #{tpu_custom_call.1} parent=1 // pred_check_branch
      %114 = sbr.rel (0) target = $region77
    $region76: #{tpu_custom_call.1} parent=1 // pred_region
      %115 = dma.done [#allocation10], 2048
    $region77: #{tpu_custom_call.1} parent=1 // pred_fallthru
      _
    // Predicated region
    $region78: #{tpu_custom_call.1} parent=1 // pred_check
      _
    $region79: #{tpu_custom_call.1} parent=1 // pred_check_branch
      %117 = sbr.rel (0) target = $region81
    $region80: #{tpu_custom_call.1} parent=1 // pred_region
      %118 = dma.done [#allocation10], 2048
    $region81: #{tpu_custom_call.1} parent=1 // pred_fallthru
      _
    %v120 = vld [vmem:[#allocation3] sm:$0xff]
    %v121 = vld [vmem:[#allocation3 + $0x8] sm:$0xff]
    %v122 = vld [vmem:[#allocation3 + $0x10] sm:$0xff]
    %v123 = vld [vmem:[#allocation3 + $0x18] sm:$0xff]
    %v124 = vld [vmem:[#allocation3 + $0x20] sm:$0xff]
    %v125 = vld [vmem:[#allocation3 + $0x28] sm:$0xff]
    %v126 = vld [vmem:[#allocation3 + $0x30] sm:$0xff]
    %v127 = vld [vmem:[#allocation3 + $0x38] sm:$0xff]
    %v128 = vld [vmem:[#allocation3 + $0x40] sm:$0xff]
    %v129 = vld [vmem:[#allocation3 + $0x48] sm:$0xff]
    %v130 = vld [vmem:[#allocation3 + $0x50] sm:$0xff]
    %v131 = vld [vmem:[#allocation3 + $0x58] sm:$0xff]
    %v132 = vld [vmem:[#allocation3 + $0x60] sm:$0xff]
    %v133 = vld [vmem:[#allocation3 + $0x68] sm:$0xff]
    %v134 = vld [vmem:[#allocation3 + $0x70] sm:$0xff]
    %v135 = vld [vmem:[#allocation3 + $0x78] sm:$0xff]
    %v136 = vld [vmem:[#allocation3 + $0x80] sm:$0xff]
    %v137 = vld [vmem:[#allocation3 + $0x88] sm:$0xff]
    %v138 = vld [vmem:[#allocation3 + $0x90] sm:$0xff]
    %v139 = vld [vmem:[#allocation3 + $0x98] sm:$0xff]
    %v140 = vld [vmem:[#allocation3 + $0xa0] sm:$0xff]
    %v141 = vld [vmem:[#allocation3 + $0xa8] sm:$0xff]
    %v142 = vld [vmem:[#allocation3 + $0xb0] sm:$0xff]
    %v143 = vld [vmem:[#allocation3 + $0xb8] sm:$0xff]
    %v144 = vld [vmem:[#allocation3 + $0xc0] sm:$0xff]
    %v145 = vld [vmem:[#allocation3 + $0xc8] sm:$0xff]
    %v146 = vld [vmem:[#allocation3 + $0xd0] sm:$0xff]
    %v147 = vld [vmem:[#allocation3 + $0xd8] sm:$0xff]
    %v148 = vld [vmem:[#allocation3 + $0xe0] sm:$0xff]
    %v149 = vld [vmem:[#allocation3 + $0xe8] sm:$0xff]
    %v150 = vld [vmem:[#allocation3 + $0xf0] sm:$0xff]
    %v151 = vld [vmem:[#allocation3 + $0xf8] sm:$0xff]
    %v152 = vld [vmem:[#allocation3 + $0x100] sm:$0xff]
    %v153 = vld [vmem:[#allocation3 + $0x108] sm:$0xff]
    %v154 = vld [vmem:[#allocation3 + $0x110] sm:$0xff]
    %v155 = vld [vmem:[#allocation3 + $0x118] sm:$0xff]
    %v156 = vld [vmem:[#allocation3 + $0x120] sm:$0xff]
    %v157 = vld [vmem:[#allocation3 + $0x128] sm:$0xff]
    %v158 = vld [vmem:[#allocation3 + $0x130] sm:$0xff]
    %v159 = vld [vmem:[#allocation3 + $0x138] sm:$0xff]
    %v160 = vld [vmem:[#allocation3 + $0x140] sm:$0xff]
    %v161 = vld [vmem:[#allocation3 + $0x148] sm:$0xff]
    %v162 = vld [vmem:[#allocation3 + $0x150] sm:$0xff]
    %v163 = vld [vmem:[#allocation3 + $0x158] sm:$0xff]
    %v164 = vld [vmem:[#allocation3 + $0x160] sm:$0xff]
    %v165 = vld [vmem:[#allocation3 + $0x168] sm:$0xff]
    %v166 = vld [vmem:[#allocation3 + $0x170] sm:$0xff]
    %v167 = vld [vmem:[#allocation3 + $0x178] sm:$0xff]
    %v168 = vld [vmem:[#allocation3 + $0x180] sm:$0xff]
    %v169 = vld [vmem:[#allocation3 + $0x188] sm:$0xff]
    %v170 = vld [vmem:[#allocation3 + $0x190] sm:$0xff]
    %v171 = vld [vmem:[#allocation3 + $0x198] sm:$0xff]
    %v172 = vld [vmem:[#allocation3 + $0x1a0] sm:$0xff]
    %v173 = vld [vmem:[#allocation3 + $0x1a8] sm:$0xff]
    %v174 = vld [vmem:[#allocation3 + $0x1b0] sm:$0xff]
    %v175 = vld [vmem:[#allocation3 + $0x1b8] sm:$0xff]
    %v176 = vld [vmem:[#allocation3 + $0x1c0] sm:$0xff]
    %v177 = vld [vmem:[#allocation3 + $0x1c8] sm:$0xff]
    %v178 = vld [vmem:[#allocation3 + $0x1d0] sm:$0xff]
    %v179 = vld [vmem:[#allocation3 + $0x1d8] sm:$0xff]
    %v180 = vld [vmem:[#allocation3 + $0x1e0] sm:$0xff]
    %v181 = vld [vmem:[#allocation3 + $0x1e8] sm:$0xff]
    %v182 = vld [vmem:[#allocation3 + $0x1f0] sm:$0xff]
    %v183 = vld [vmem:[#allocation3 + $0x1f8] sm:$0xff]
    %v184 = vld [vmem:[%s1] sm:$0x1]
    %v185 = vld [vmem:[%s2] sm:$0x1]
    %v186 = vadd.f32 %v120, %v121
    %v187 = vadd.f32 %v186, %v122
    %v188 = vadd.f32 %v187, %v123
    %v189 = vadd.f32 %v188, %v124
    %v190 = vadd.f32 %v189, %v125
    %v191 = vadd.f32 %v190, %v126
    %v192 = vadd.f32 %v191, %v127
    %v193 = vadd.f32 %v192, %v128
    %v194 = vadd.f32 %v193, %v129
    %v195 = vadd.f32 %v194, %v130
    %v196 = vadd.f32 %v195, %v131
    %v197 = vadd.f32 %v196, %v132
    %v198 = vadd.f32 %v197, %v133
    %v199 = vadd.f32 %v198, %v134
    %v200 = vadd.f32 %v199, %v135
    %v201 = vadd.f32 %v200, %v136
    %v202 = vadd.f32 %v201, %v137
    %v203 = vadd.f32 %v202, %v138
    %v204 = vadd.f32 %v203, %v139
    %v205 = vadd.f32 %v204, %v140
    %v206 = vadd.f32 %v205, %v141
    %v207 = vadd.f32 %v206, %v142
    %v208 = vadd.f32 %v207, %v143
    %v209 = vadd.f32 %v208, %v144
    %v210 = vadd.f32 %v209, %v145
    %v211 = vadd.f32 %v210, %v146
    %v212 = vadd.f32 %v211, %v147
    %v213 = vadd.f32 %v212, %v148
    %v214 = vadd.f32 %v213, %v149
    %v215 = vadd.f32 %v214, %v150
    %v216 = vadd.f32 %v215, %v151
    %v217 = vadd.f32 %v216, %v152
    %v218 = vadd.f32 %v217, %v153
    %v219 = vadd.f32 %v218, %v154
    %v220 = vadd.f32 %v219, %v155
    %v221 = vadd.f32 %v220, %v156
    %v222 = vadd.f32 %v221, %v157
    %v223 = vadd.f32 %v222, %v158
    %v224 = vadd.f32 %v223, %v159
    %v225 = vadd.f32 %v224, %v160
    %v226 = vadd.f32 %v225, %v161
    %v227 = vadd.f32 %v226, %v162
    %v228 = vadd.f32 %v227, %v163
    %v229 = vadd.f32 %v228, %v164
    %v230 = vadd.f32 %v229, %v165
    %v231 = vadd.f32 %v230, %v166
    %v232 = vadd.f32 %v231, %v167
    %v233 = vadd.f32 %v232, %v168
    %v234 = vadd.f32 %v233, %v169
    %v235 = vadd.f32 %v234, %v170
    %v236 = vadd.f32 %v235, %v171
    %v237 = vadd.f32 %v236, %v172
    %v238 = vadd.f32 %v237, %v173
    %v239 = vadd.f32 %v238, %v174
    %v240 = vadd.f32 %v239, %v175
    %v241 = vadd.f32 %v240, %v176
    %v242 = vadd.f32 %v241, %v177
    %v243 = vadd.f32 %v242, %v178
    %v244 = vadd.f32 %v243, %v179
    %v245 = vadd.f32 %v244, %v180
    %v246 = vadd.f32 %v245, %v181
    %v247 = vadd.f32 %v246, %v182
    %v248 = vadd.f32 %v247, %v183
    %v249 = vrot.slane %v248, 4
    %v250 = vadd.f32 %v248, %v249
    %v251 = vrot.slane %v250, 2
    %v252 = vadd.f32 %v250, %v251
    %v253 = vrot.slane %v252, 1
    %v254 = vadd.f32 %v252, %v253
    %v255 = vrcp.pop 512.0
    %v256 = vmul.f32 %v254, %v255
    %v257 = vsub.f32 %v120, %v256
    %v258 = vsub.f32 %v121, %v256
    %v259 = vsub.f32 %v122, %v256
    %v260 = vsub.f32 %v123, %v256
    %v261 = vsub.f32 %v124, %v256
    %v262 = vsub.f32 %v125, %v256
    %v263 = vsub.f32 %v126, %v256
    %v264 = vsub.f32 %v127, %v256
    %v265 = vsub.f32 %v128, %v256
    %v266 = vsub.f32 %v129, %v256
    %v267 = vsub.f32 %v130, %v256
    %v268 = vsub.f32 %v131, %v256
    %v269 = vsub.f32 %v132, %v256
    %v270 = vsub.f32 %v133, %v256
    %v271 = vsub.f32 %v134, %v256
    %v272 = vsub.f32 %v135, %v256
    %v273 = vsub.f32 %v136, %v256
    %v274 = vsub.f32 %v137, %v256
    %v275 = vsub.f32 %v138, %v256
    %v276 = vsub.f32 %v139, %v256
    %v277 = vsub.f32 %v140, %v256
    %v278 = vsub.f32 %v141, %v256
    %v279 = vsub.f32 %v142, %v256
    %v280 = vsub.f32 %v143, %v256
    %v281 = vsub.f32 %v144, %v256
    %v282 = vsub.f32 %v145, %v256
    %v283 = vsub.f32 %v146, %v256
    %v284 = vsub.f32 %v147, %v256
    %v285 = vsub.f32 %v148, %v256
    %v286 = vsub.f32 %v149, %v256
    %v287 = vsub.f32 %v150, %v256
    %v288 = vsub.f32 %v151, %v256
    %v289 = vsub.f32 %v152, %v256
    %v290 = vsub.f32 %v153, %v256
    %v291 = vsub.f32 %v154, %v256
    %v292 = vsub.f32 %v155, %v256
    %v293 = vsub.f32 %v156, %v256
    %v294 = vsub.f32 %v157, %v256
    %v295 = vsub.f32 %v158, %v256
    %v296 = vsub.f32 %v159, %v256
    %v297 = vsub.f32 %v160, %v256
    %v298 = vsub.f32 %v161, %v256
    %v299 = vsub.f32 %v162, %v256
    %v300 = vsub.f32 %v163, %v256
    %v301 = vsub.f32 %v164, %v256
    %v302 = vsub.f32 %v165, %v256
    %v303 = vsub.f32 %v166, %v256
    %v304 = vsub.f32 %v167, %v256
    %v305 = vsub.f32 %v168, %v256
    %v306 = vsub.f32 %v169, %v256
    %v307 = vsub.f32 %v170, %v256
    %v308 = vsub.f32 %v171, %v256
    %v309 = vsub.f32 %v172, %v256
    %v310 = vsub.f32 %v173, %v256
    %v311 = vsub.f32 %v174, %v256
    %v312 = vsub.f32 %v175, %v256
    %v313 = vsub.f32 %v176, %v256
    %v314 = vsub.f32 %v177, %v256
    %v315 = vsub.f32 %v178, %v256
    %v316 = vsub.f32 %v179, %v256
    %v317 = vsub.f32 %v180, %v256
    %v318 = vsub.f32 %v181, %v256
    %v319 = vsub.f32 %v182, %v256
    %v320 = vsub.f32 %v183, %v256
    %v321 = vmul.f32 %v257, %v257
    %v322 = vmul.f32 %v258, %v258
    %v323 = vmul.f32 %v259, %v259
    %v324 = vmul.f32 %v260, %v260
    %v325 = vmul.f32 %v261, %v261
    %v326 = vmul.f32 %v262, %v262
    %v327 = vmul.f32 %v263, %v263
    %v328 = vmul.f32 %v264, %v264
    %v329 = vmul.f32 %v265, %v265
    %v330 = vmul.f32 %v266, %v266
    %v331 = vmul.f32 %v267, %v267
    %v332 = vmul.f32 %v268, %v268
    %v333 = vmul.f32 %v269, %v269
    %v334 = vmul.f32 %v270, %v270
    %v335 = vmul.f32 %v271, %v271
    %v336 = vmul.f32 %v272, %v272
    %v337 = vmul.f32 %v273, %v273
    %v338 = vmul.f32 %v274, %v274
    %v339 = vmul.f32 %v275, %v275
    %v340 = vmul.f32 %v276, %v276
    %v341 = vmul.f32 %v277, %v277
    %v342 = vmul.f32 %v278, %v278
    %v343 = vmul.f32 %v279, %v279
    %v344 = vmul.f32 %v280, %v280
    %v345 = vmul.f32 %v281, %v281
    %v346 = vmul.f32 %v282, %v282
    %v347 = vmul.f32 %v283, %v283
    %v348 = vmul.f32 %v284, %v284
    %v349 = vmul.f32 %v285, %v285
    %v350 = vmul.f32 %v286, %v286
    %v351 = vmul.f32 %v287, %v287
    %v352 = vmul.f32 %v288, %v288
    %v353 = vmul.f32 %v289, %v289
    %v354 = vmul.f32 %v290, %v290
    %v355 = vmul.f32 %v291, %v291
    %v356 = vmul.f32 %v292, %v292
    %v357 = vmul.f32 %v293, %v293
    %v358 = vmul.f32 %v294, %v294
    %v359 = vmul.f32 %v295, %v295
    %v360 = vmul.f32 %v296, %v296
    %v361 = vmul.f32 %v297, %v297
    %v362 = vmul.f32 %v298, %v298
    %v363 = vmul.f32 %v299, %v299
    %v364 = vmul.f32 %v300, %v300
    %v365 = vmul.f32 %v301, %v301
    %v366 = vmul.f32 %v302, %v302
    %v367 = vmul.f32 %v303, %v303
    %v368 = vmul.f32 %v304, %v304
    %v369 = vmul.f32 %v305, %v305
    %v370 = vmul.f32 %v306, %v306
    %v371 = vmul.f32 %v307, %v307
    %v372 = vmul.f32 %v308, %v308
    %v373 = vmul.f32 %v309, %v309
    %v374 = vmul.f32 %v310, %v310
    %v375 = vmul.f32 %v311, %v311
    %v376 = vmul.f32 %v312, %v312
    %v377 = vmul.f32 %v313, %v313
    %v378 = vmul.f32 %v314, %v314
    %v379 = vmul.f32 %v315, %v315
    %v380 = vmul.f32 %v316, %v316
    %v381 = vmul.f32 %v317, %v317
    %v382 = vmul.f32 %v318, %v318
    %v383 = vmul.f32 %v319, %v319
    %v384 = vmul.f32 %v320, %v320
    %v385 = vadd.f32 %v321, %v322
    %v386 = vadd.f32 %v385, %v323
    %v387 = vadd.f32 %v386, %v324
    %v388 = vadd.f32 %v387, %v325
    %v389 = vadd.f32 %v388, %v326
    %v390 = vadd.f32 %v389, %v327
    %v391 = vadd.f32 %v390, %v328
    %v392 = vadd.f32 %v391, %v329
    %v393 = vadd.f32 %v392, %v330
    %v394 = vadd.f32 %v393, %v331
    %v395 = vadd.f32 %v394, %v332
    %v396 = vadd.f32 %v395, %v333
    %v397 = vadd.f32 %v396, %v334
    %v398 = vadd.f32 %v397, %v335
    %v399 = vadd.f32 %v398, %v336
    %v400 = vadd.f32 %v399, %v337
    %v401 = vadd.f32 %v400, %v338
    %v402 = vadd.f32 %v401, %v339
    %v403 = vadd.f32 %v402, %v340
    %v404 = vadd.f32 %v403, %v341
    %v405 = vadd.f32 %v404, %v342
    %v406 = vadd.f32 %v405, %v343
    %v407 = vadd.f32 %v406, %v344
    %v408 = vadd.f32 %v407, %v345
    %v409 = vadd.f32 %v408, %v346
    %v410 = vadd.f32 %v409, %v347
    %v411 = vadd.f32 %v410, %v348
    %v412 = vadd.f32 %v411, %v349
    %v413 = vadd.f32 %v412, %v350
    %v414 = vadd.f32 %v413, %v351
    %v415 = vadd.f32 %v414, %v352
    %v416 = vadd.f32 %v415, %v353
    %v417 = vadd.f32 %v416, %v354
    %v418 = vadd.f32 %v417, %v355
    %v419 = vadd.f32 %v418, %v356
    %v420 = vadd.f32 %v419, %v357
    %v421 = vadd.f32 %v420, %v358
    %v422 = vadd.f32 %v421, %v359
    %v423 = vadd.f32 %v422, %v360
    %v424 = vadd.f32 %v423, %v361
    %v425 = vadd.f32 %v424, %v362
    %v426 = vadd.f32 %v425, %v363
    %v427 = vadd.f32 %v426, %v364
    %v428 = vadd.f32 %v427, %v365
    %v429 = vadd.f32 %v428, %v366
    %v430 = vadd.f32 %v429, %v367
    %v431 = vadd.f32 %v430, %v368
    %v432 = vadd.f32 %v431, %v369
    %v433 = vadd.f32 %v432, %v370
    %v434 = vadd.f32 %v433, %v371
    %v435 = vadd.f32 %v434, %v372
    %v436 = vadd.f32 %v435, %v373
    %v437 = vadd.f32 %v436, %v374
    %v438 = vadd.f32 %v437, %v375
    %v439 = vadd.f32 %v438, %v376
    %v440 = vadd.f32 %v439, %v377
    %v441 = vadd.f32 %v440, %v378
    %v442 = vadd.f32 %v441, %v379
    %v443 = vadd.f32 %v442, %v380
    %v444 = vadd.f32 %v443, %v381
    %v445 = vadd.f32 %v444, %v382
    %v446 = vadd.f32 %v445, %v383
    %v447 = vadd.f32 %v446, %v384
    %v448 = vrot.slane %v447, 4
    %v449 = vadd.f32 %v447, %v448
    %v450 = vrot.slane %v449, 2
    %v451 = vadd.f32 %v449, %v450
    %v452 = vrot.slane %v451, 1
    %v453 = vadd.f32 %v451, %v452
    %v454 = vmul.f32 %v453, %v255
    %v455 = vadd.f32 %v454, 1e-05
    %v456 = vrsqrt.pop %v455
    %v457 = vmul.f32 %v184, %v456
    %v458 = vmul.f32 %v256, %v457
    %v459 = vsub.f32 %v185, %v458
    %v461 = vlaneseq
    %v462 = vshrl.u32 %v461, 7
    %v463 = vsub.s32 0, %v462
    %v464 = vrot.slane %v457, %v463
    %v466 = vmul.f32 %v120, %v464
    %v467 = vmul.f32 %v121, %v464
    %v468 = vmul.f32 %v122, %v464
    %v469 = vmul.f32 %v123, %v464
    %v470 = vmul.f32 %v124, %v464
    %v471 = vmul.f32 %v125, %v464
    %v472 = vmul.f32 %v126, %v464
    %v473 = vmul.f32 %v127, %v464
    %v474 = vmul.f32 %v128, %v464
    %v475 = vmul.f32 %v129, %v464
    %v476 = vmul.f32 %v130, %v464
    %v477 = vmul.f32 %v131, %v464
    %v478 = vmul.f32 %v132, %v464
    %v479 = vmul.f32 %v133, %v464
    %v480 = vmul.f32 %v134, %v464
    %v481 = vmul.f32 %v135, %v464
    %v482 = vmul.f32 %v136, %v464
    %v483 = vmul.f32 %v137, %v464
    %v484 = vmul.f32 %v138, %v464
    %v485 = vmul.f32 %v139, %v464
    %v486 = vmul.f32 %v140, %v464
    %v487 = vmul.f32 %v141, %v464
    %v488 = vmul.f32 %v142, %v464
    %v489 = vmul.f32 %v143, %v464
    %v490 = vmul.f32 %v144, %v464
    %v491 = vmul.f32 %v145, %v464
    %v492 = vmul.f32 %v146, %v464
    %v493 = vmul.f32 %v147, %v464
    %v494 = vmul.f32 %v148, %v464
    %v495 = vmul.f32 %v149, %v464
    %v496 = vmul.f32 %v150, %v464
    %v497 = vmul.f32 %v151, %v464
    %v498 = vmul.f32 %v152, %v464
    %v499 = vmul.f32 %v153, %v464
    %v500 = vmul.f32 %v154, %v464
    %v501 = vmul.f32 %v155, %v464
    %v502 = vmul.f32 %v156, %v464
    %v503 = vmul.f32 %v157, %v464
    %v504 = vmul.f32 %v158, %v464
    %v505 = vmul.f32 %v159, %v464
    %v506 = vmul.f32 %v160, %v464
    %v507 = vmul.f32 %v161, %v464
    %v508 = vmul.f32 %v162, %v464
    %v509 = vmul.f32 %v163, %v464
    %v510 = vmul.f32 %v164, %v464
    %v511 = vmul.f32 %v165, %v464
    %v512 = vmul.f32 %v166, %v464
    %v513 = vmul.f32 %v167, %v464
    %v514 = vmul.f32 %v168, %v464
    %v515 = vmul.f32 %v169, %v464
    %v516 = vmul.f32 %v170, %v464
    %v517 = vmul.f32 %v171, %v464
    %v518 = vmul.f32 %v172, %v464
    %v519 = vmul.f32 %v173, %v464
    %v520 = vmul.f32 %v174, %v464
    %v521 = vmul.f32 %v175, %v464
    %v522 = vmul.f32 %v176, %v464
    %v523 = vmul.f32 %v177, %v464
    %v524 = vmul.f32 %v178, %v464
    %v525 = vmul.f32 %v179, %v464
    %v526 = vmul.f32 %v180, %v464
    %v527 = vmul.f32 %v181, %v464
    %v528 = vmul.f32 %v182, %v464
    %v529 = vmul.f32 %v183, %v464
    %v531 = vlaneseq
    %v532 = vshrl.u32 %v531, 7
    %v533 = vsub.s32 0, %v532
    %v534 = vrot.slane %v459, %v533
    %v536 = vadd.f32 %v466, %v534
    %v537 = vadd.f32 %v467, %v534
    %v538 = vadd.f32 %v468, %v534
    %v539 = vadd.f32 %v469, %v534
    %v540 = vadd.f32 %v470, %v534
    %v541 = vadd.f32 %v471, %v534
    %v542 = vadd.f32 %v472, %v534
    %v543 = vadd.f32 %v473, %v534
    %v544 = vadd.f32 %v474, %v534
    %v545 = vadd.f32 %v475, %v534
    %v546 = vadd.f32 %v476, %v534
    %v547 = vadd.f32 %v477, %v534
    %v548 = vadd.f32 %v478, %v534
    %v549 = vadd.f32 %v479, %v534
    %v550 = vadd.f32 %v480, %v534
    %v551 = vadd.f32 %v481, %v534
    %v552 = vadd.f32 %v482, %v534
    %v553 = vadd.f32 %v483, %v534
    %v554 = vadd.f32 %v484, %v534
    %v555 = vadd.f32 %v485, %v534
    %v556 = vadd.f32 %v486, %v534
    %v557 = vadd.f32 %v487, %v534
    %v558 = vadd.f32 %v488, %v534
    %v559 = vadd.f32 %v489, %v534
    %v560 = vadd.f32 %v490, %v534
    %v561 = vadd.f32 %v491, %v534
    %v562 = vadd.f32 %v492, %v534
    %v563 = vadd.f32 %v493, %v534
    %v564 = vadd.f32 %v494, %v534
    %v565 = vadd.f32 %v495, %v534
    %v566 = vadd.f32 %v496, %v534
    %v567 = vadd.f32 %v497, %v534
    %v568 = vadd.f32 %v498, %v534
    %v569 = vadd.f32 %v499, %v534
    %v570 = vadd.f32 %v500, %v534
    %v571 = vadd.f32 %v501, %v534
    %v572 = vadd.f32 %v502, %v534
    %v573 = vadd.f32 %v503, %v534
    %v574 = vadd.f32 %v504, %v534
    %v575 = vadd.f32 %v505, %v534
    %v576 = vadd.f32 %v506, %v534
    %v577 = vadd.f32 %v507, %v534
    %v578 = vadd.f32 %v508, %v534
    %v579 = vadd.f32 %v509, %v534
    %v580 = vadd.f32 %v510, %v534
    %v581 = vadd.f32 %v511, %v534
    %v582 = vadd.f32 %v512, %v534
    %v583 = vadd.f32 %v513, %v534
    %v584 = vadd.f32 %v514, %v534
    %v585 = vadd.f32 %v515, %v534
    %v586 = vadd.f32 %v516, %v534
    %v587 = vadd.f32 %v517, %v534
    %v588 = vadd.f32 %v518, %v534
    %v589 = vadd.f32 %v519, %v534
    %v590 = vadd.f32 %v520, %v534
    %v591 = vadd.f32 %v521, %v534
    %v592 = vadd.f32 %v522, %v534
    %v593 = vadd.f32 %v523, %v534
    %v594 = vadd.f32 %v524, %v534
    %v595 = vadd.f32 %v525, %v534
    %v596 = vadd.f32 %v526, %v534
    %v597 = vadd.f32 %v527, %v534
    %v598 = vadd.f32 %v528, %v534
    %v599 = vadd.f32 %v529, %v534
    %v600 = vmax.f32 %v536, 0.0
    %v601 = vmax.f32 %v537, 0.0
    %v602 = vmax.f32 %v538, 0.0
    %v603 = vmax.f32 %v539, 0.0
    %v604 = vmax.f32 %v540, 0.0
    %v605 = vmax.f32 %v541, 0.0
    %v606 = vmax.f32 %v542, 0.0
    %v607 = vmax.f32 %v543, 0.0
    %v608 = vmax.f32 %v544, 0.0
    %v609 = vmax.f32 %v545, 0.0
    %v610 = vmax.f32 %v546, 0.0
    %v611 = vmax.f32 %v547, 0.0
    %v612 = vmax.f32 %v548, 0.0
    %v613 = vmax.f32 %v549, 0.0
    %v614 = vmax.f32 %v550, 0.0
    %v615 = vmax.f32 %v551, 0.0
    %v616 = vmax.f32 %v552, 0.0
    %v617 = vmax.f32 %v553, 0.0
    %v618 = vmax.f32 %v554, 0.0
    %v619 = vmax.f32 %v555, 0.0
    %v620 = vmax.f32 %v556, 0.0
    %v621 = vmax.f32 %v557, 0.0
    %v622 = vmax.f32 %v558, 0.0
    %v623 = vmax.f32 %v559, 0.0
    %v624 = vmax.f32 %v560, 0.0
    %v625 = vmax.f32 %v561, 0.0
    %v626 = vmax.f32 %v562, 0.0
    %v627 = vmax.f32 %v563, 0.0
    %v628 = vmax.f32 %v564, 0.0
    %v629 = vmax.f32 %v565, 0.0
    %v630 = vmax.f32 %v566, 0.0
    %v631 = vmax.f32 %v567, 0.0
    %v632 = vmax.f32 %v568, 0.0
    %v633 = vmax.f32 %v569, 0.0
    %v634 = vmax.f32 %v570, 0.0
    %v635 = vmax.f32 %v571, 0.0
    %v636 = vmax.f32 %v572, 0.0
    %v637 = vmax.f32 %v573, 0.0
    %v638 = vmax.f32 %v574, 0.0
    %v639 = vmax.f32 %v575, 0.0
    %v640 = vmax.f32 %v576, 0.0
    %v641 = vmax.f32 %v577, 0.0
    %v642 = vmax.f32 %v578, 0.0
    %v643 = vmax.f32 %v579, 0.0
    %v644 = vmax.f32 %v580, 0.0
    %v645 = vmax.f32 %v581, 0.0
    %v646 = vmax.f32 %v582, 0.0
    %v647 = vmax.f32 %v583, 0.0
    %v648 = vmax.f32 %v584, 0.0
    %v649 = vmax.f32 %v585, 0.0
    %v650 = vmax.f32 %v586, 0.0
    %v651 = vmax.f32 %v587, 0.0
    %v652 = vmax.f32 %v588, 0.0
    %v653 = vmax.f32 %v589, 0.0
    %v654 = vmax.f32 %v590, 0.0
    %v655 = vmax.f32 %v591, 0.0
    %v656 = vmax.f32 %v592, 0.0
    %v657 = vmax.f32 %v593, 0.0
    %v658 = vmax.f32 %v594, 0.0
    %v659 = vmax.f32 %v595, 0.0
    %v660 = vmax.f32 %v596, 0.0
    %v661 = vmax.f32 %v597, 0.0
    %v662 = vmax.f32 %v598, 0.0
    %v663 = vmax.f32 %v599, 0.0
    %v664 = vpack.c.bf16 %v601, %v600
    %v665 = vpack.c.bf16 %v603, %v602
    %v666 = vpack.c.bf16 %v605, %v604
    %v667 = vpack.c.bf16 %v607, %v606
    %v668 = vpack.c.bf16 %v609, %v608
    %v669 = vpack.c.bf16 %v611, %v610
    %v670 = vpack.c.bf16 %v613, %v612
    %v671 = vpack.c.bf16 %v615, %v614
    %v672 = vpack.c.bf16 %v617, %v616
    %v673 = vpack.c.bf16 %v619, %v618
    %v674 = vpack.c.bf16 %v621, %v620
    %v675 = vpack.c.bf16 %v623, %v622
    %v676 = vpack.c.bf16 %v625, %v624
    %v677 = vpack.c.bf16 %v627, %v626
    %v678 = vpack.c.bf16 %v629, %v628
    %v679 = vpack.c.bf16 %v631, %v630
    %v680 = vpack.c.bf16 %v633, %v632
    %v681 = vpack.c.bf16 %v635, %v634
    %v682 = vpack.c.bf16 %v637, %v636
    %v683 = vpack.c.bf16 %v639, %v638
    %v684 = vpack.c.bf16 %v641, %v640
    %v685 = vpack.c.bf16 %v643, %v642
    %v686 = vpack.c.bf16 %v645, %v644
    %v687 = vpack.c.bf16 %v647, %v646
    %v688 = vpack.c.bf16 %v649, %v648
    %v689 = vpack.c.bf16 %v651, %v650
    %v690 = vpack.c.bf16 %v653, %v652
    %v691 = vpack.c.bf16 %v655, %v654
    %v692 = vpack.c.bf16 %v657, %v656
    %v693 = vpack.c.bf16 %v659, %v658
    %v694 = vpack.c.bf16 %v661, %v660
    %v695 = vpack.c.bf16 %v663, %v662
    %v696 = vld [vmem:[#allocation6] sm:$0xf]
    %v697 = vld [vmem:[#allocation6 + $0x4] sm:$0xf]
    %v698 = vld [vmem:[#allocation6 + $0x8] sm:$0xf]
    %v699 = vld [vmem:[#allocation6 + $0xc] sm:$0xf]
    %v700 = vld [vmem:[#allocation6 + $0x10] sm:$0xf]
    %v701 = vld [vmem:[#allocation6 + $0x14] sm:$0xf]
    %v702 = vld [vmem:[#allocation6 + $0x18] sm:$0xf]
    %v703 = vld [vmem:[#allocation6 + $0x1c] sm:$0xf]
    %v704 = vld [vmem:[#allocation6 + $0x20] sm:$0xf]
    %v705 = vld [vmem:[#allocation6 + $0x24] sm:$0xf]
    %v706 = vld [vmem:[#allocation6 + $0x28] sm:$0xf]
    %v707 = vld [vmem:[#allocation6 + $0x2c] sm:$0xf]
    %v708 = vld [vmem:[#allocation6 + $0x30] sm:$0xf]
    %v709 = vld [vmem:[#allocation6 + $0x34] sm:$0xf]
    %v710 = vld [vmem:[#allocation6 + $0x38] sm:$0xf]
    %v711 = vld [vmem:[#allocation6 + $0x3c] sm:$0xf]
    %v712 = vld [vmem:[%s4] sm:$0x1]
    %v714 = vlaneseq
    %v715 = vshrl.u32 %v714, 7
    %v716 = vsub.s32 0, %v715
    %v717 = vrot.slane %v712, %v716
    %v735 = vunpack.c.l.b16 %v696
    %v736 = vunpack.c.l.b16 %v697
    %v737 = vunpack.c.l.b16 %v698
    %v738 = vunpack.c.l.b16 %v699
    %v739 = vunpack.c.l.b16 %v700
    %v740 = vunpack.c.l.b16 %v701
    %v741 = vunpack.c.l.b16 %v702
    %v742 = vunpack.c.l.b16 %v703
    %v743 = vunpack.c.l.b16 %v704
    %v744 = vunpack.c.l.b16 %v705
    %v745 = vunpack.c.l.b16 %v706
    %v746 = vunpack.c.l.b16 %v707
    %v747 = vunpack.c.l.b16 %v708
    %v748 = vunpack.c.l.b16 %v709
    %v749 = vunpack.c.l.b16 %v710
    %v750 = vunpack.c.l.b16 %v711
    %v751 = vpack.c.b16 %v736, %v735
    %v752 = vpack.c.b16 %v738, %v737
    %v753 = vpack.c.b16 %v740, %v739
    %v754 = vpack.c.b16 %v742, %v741
    %v755 = vpack.c.b16 %v744, %v743
    %v756 = vpack.c.b16 %v746, %v745
    %v757 = vpack.c.b16 %v748, %v747
    %v758 = vpack.c.b16 %v750, %v749
    %767 = vmatprep.subr.bf16.mxu0 0
    %768 = vmatpush1.bf16.msra.mxu0 %v751
    %769 = vmatprep.subr.bf16.mxu0 0
    %770 = vmatpush1.bf16.msra.mxu0 %v752
    %771 = vmatprep.subr.bf16.mxu0 0
    %772 = vmatpush1.bf16.msra.mxu0 %v753
    %773 = vmatprep.subr.bf16.mxu0 0
    %774 = vmatpush1.bf16.msra.mxu0 %v754
    %775 = vmatprep.subr.bf16.mxu0 0
    %776 = vmatpush1.bf16.msra.mxu0 %v755
    %777 = vmatprep.subr.bf16.mxu0 0
    %778 = vmatpush1.bf16.msra.mxu0 %v756
    %779 = vmatprep.subr.bf16.mxu0 0
    %780 = vmatpush1.bf16.msra.mxu0 %v757
    %781 = vmatprep.subr.bf16.mxu0 0
    %782 = vmatpush1.bf16.msra.mxu0 %v758
    %783 = vmatprep.subr.bf16.mxu0 0
    %784 = vmatpush1.bf16.msra.mxu0 0
    %785 = vmatprep.subr.bf16.mxu0 0
    %786 = vmatpush1.bf16.msra.mxu0 0
    %787 = vmatprep.subr.bf16.mxu0 0
    %788 = vmatpush1.bf16.msra.mxu0 0
    %789 = vmatprep.subr.bf16.mxu0 0
    %790 = vmatpush1.bf16.msra.mxu0 0
    %791 = vmatprep.subr.bf16.mxu0 0
    %792 = vmatpush1.bf16.msra.mxu0 0
    %793 = vmatprep.subr.bf16.mxu0 0
    %794 = vmatpush1.bf16.msra.mxu0 0
    %795 = vmatprep.subr.bf16.mxu0 0
    %796 = vmatpush1.bf16.msra.mxu0 0
    %797 = vmatprep.subr.bf16.mxu0 0
    %798 = vmatpush1.bf16.msra.mxu0 0
    %799 = vmatprep.mubr.bf16.mxu0 0
    %800 = vmatmul.mubr.bf16.gmra.mrb[0].mxu0 %v664
    %v801 = vpop.f32.mrb[0].mxu0
    %v802 = vadd.f32 %v717, %v801
    %v803 = vpop.f32.mrb[0].mxu0
    %v804 = vpop.f32.mrb[0].mxu0
    %v805 = vadd.f32 %v717, %v804
    %v806 = vpop.f32.mrb[0].mxu0
    %807 = vmatprep.mubr.bf16.mxu0 0
    %808 = vmatmul.mubr.bf16.gmra.mrb[0].mxu0 %v665
    %v809 = vpop.f32.mrb[0].mxu0
    %v810 = vadd.f32 %v717, %v809
    %v811 = vpop.f32.mrb[0].mxu0
    %v812 = vpop.f32.mrb[0].mxu0
    %v813 = vadd.f32 %v717, %v812
    %v814 = vpop.f32.mrb[0].mxu0
    %815 = vmatprep.mubr.bf16.mxu0 0
    %816 = vmatmul.mubr.bf16.gmra.mrb[0].mxu0 %v666
    %v817 = vpop.f32.mrb[0].mxu0
    %v818 = vadd.f32 %v717, %v817
    %v819 = vpop.f32.mrb[0].mxu0
    %v820 = vpop.f32.mrb[0].mxu0
    %v821 = vadd.f32 %v717, %v820
    %v822 = vpop.f32.mrb[0].mxu0
    %823 = vmatprep.mubr.bf16.mxu0 0
    %824 = vmatmul.mubr.bf16.gmra.mrb[0].mxu0 %v667
    %v825 = vpop.f32.mrb[0].mxu0
    %v826 = vadd.f32 %v717, %v825
    %v827 = vpop.f32.mrb[0].mxu0
    %v828 = vpop.f32.mrb[0].mxu0
    %v829 = vadd.f32 %v717, %v828
    %v830 = vpop.f32.mrb[0].mxu0
    %831 = vmatprep.mubr.bf16.mxu0 0
    %832 = vmatmul.mubr.bf16.gmra.mrb[0].mxu0 %v668
    %v833 = vpop.f32.mrb[0].mxu0
    %v834 = vadd.f32 %v717, %v833
    %v835 = vpop.f32.mrb[0].mxu0
    %v836 = vpop.f32.mrb[0].mxu0
    %v837 = vadd.f32 %v717, %v836
    %v838 = vpop.f32.mrb[0].mxu0
    %839 = vmatprep.mubr.bf16.mxu0 0
    %840 = vmatmul.mubr.bf16.gmra.mrb[0].mxu0 %v669
    %v841 = vpop.f32.mrb[0].mxu0
    %v842 = vadd.f32 %v717, %v841
    %v843 = vpop.f32.mrb[0].mxu0
    %v844 = vpop.f32.mrb[0].mxu0
    %v845 = vadd.f32 %v717, %v844
    %v846 = vpop.f32.mrb[0].mxu0
    %847 = vmatprep.mubr.bf16.mxu0 0
    %848 = vmatmul.mubr.bf16.gmra.mrb[0].mxu0 %v670
    %v849 = vpop.f32.mrb[0].mxu0
    %v850 = vadd.f32 %v717, %v849
    %v851 = vpop.f32.mrb[0].mxu0
    %v852 = vpop.f32.mrb[0].mxu0
    %v853 = vadd.f32 %v717, %v852
    %v854 = vpop.f32.mrb[0].mxu0
    %855 = vmatprep.mubr.bf16.mxu0 0
    %856 = vmatmul.mubr.bf16.gmra.mrb[0].mxu0 %v671
    %v857 = vpop.f32.mrb[0].mxu0
    %v858 = vadd.f32 %v717, %v857
    %v859 = vpop.f32.mrb[0].mxu0
    %v860 = vpop.f32.mrb[0].mxu0
    %v861 = vadd.f32 %v717, %v860
    %v862 = vpop.f32.mrb[0].mxu0
    %863 = vmatprep.mubr.bf16.mxu0 0
    %864 = vmatmul.mubr.bf16.gmra.mrb[0].mxu0 %v672
    %v865 = vpop.f32.mrb[0].mxu0
    %v866 = vadd.f32 %v717, %v865
    %v867 = vpop.f32.mrb[0].mxu0
    %v868 = vpop.f32.mrb[0].mxu0
    %v869 = vadd.f32 %v717, %v868
    %v870 = vpop.f32.mrb[0].mxu0
    %871 = vmatprep.mubr.bf16.mxu0 0
    %872 = vmatmul.mubr.bf16.gmra.mrb[0].mxu0 %v673
    %v873 = vpop.f32.mrb[0].mxu0
    %v874 = vadd.f32 %v717, %v873
    %v875 = vpop.f32.mrb[0].mxu0
    %v876 = vpop.f32.mrb[0].mxu0
    %v877 = vadd.f32 %v717, %v876
    %v878 = vpop.f32.mrb[0].mxu0
    %879 = vmatprep.mubr.bf16.mxu0 0
    %880 = vmatmul.mubr.bf16.gmra.mrb[0].mxu0 %v674
    %v881 = vpop.f32.mrb[0].mxu0
    %v882 = vadd.f32 %v717, %v881
    %v883 = vpop.f32.mrb[0].mxu0
    %v884 = vpop.f32.mrb[0].mxu0
    %v885 = vadd.f32 %v717, %v884
    %v886 = vpop.f32.mrb[0].mxu0
    %887 = vmatprep.mubr.bf16.mxu0 0
    %888 = vmatmul.mubr.bf16.gmra.mrb[0].mxu0 %v675
    %v889 = vpop.f32.mrb[0].mxu0
    %v890 = vadd.f32 %v717, %v889
    %v891 = vpop.f32.mrb[0].mxu0
    %v892 = vpop.f32.mrb[0].mxu0
    %v893 = vadd.f32 %v717, %v892
    %v894 = vpop.f32.mrb[0].mxu0
    %895 = vmatprep.mubr.bf16.mxu0 0
    %896 = vmatmul.mubr.bf16.gmra.mrb[0].mxu0 %v676
    %v897 = vpop.f32.mrb[0].mxu0
    %v898 = vadd.f32 %v717, %v897
    %v899 = vpop.f32.mrb[0].mxu0
    %v900 = vpop.f32.mrb[0].mxu0
    %v901 = vadd.f32 %v717, %v900
    %v902 = vpop.f32.mrb[0].mxu0
    %903 = vmatprep.mubr.bf16.mxu0 0
    %904 = vmatmul.mubr.bf16.gmra.mrb[0].mxu0 %v677
    %v905 = vpop.f32.mrb[0].mxu0
    %v906 = vadd.f32 %v717, %v905
    %v907 = vpop.f32.mrb[0].mxu0
    %v908 = vpop.f32.mrb[0].mxu0
    %v909 = vadd.f32 %v717, %v908
    %v910 = vpop.f32.mrb[0].mxu0
    %911 = vmatprep.mubr.bf16.mxu0 0
    %912 = vmatmul.mubr.bf16.gmra.mrb[0].mxu0 %v678
    %v913 = vpop.f32.mrb[0].mxu0
    %v914 = vadd.f32 %v717, %v913
    %v915 = vpop.f32.mrb[0].mxu0
    %v916 = vpop.f32.mrb[0].mxu0
    %v917 = vadd.f32 %v717, %v916
    %v918 = vpop.f32.mrb[0].mxu0
    %919 = vmatprep.mubr.bf16.mxu0 0
    %920 = vmatmul.mubr.bf16.gmra.mrb[0].mxu0 %v679
    %v921 = vpop.f32.mrb[0].mxu0
    %v922 = vadd.f32 %v717, %v921
    %v923 = vpop.f32.mrb[0].mxu0
    %v924 = vpop.f32.mrb[0].mxu0
    %v925 = vadd.f32 %v717, %v924
    %v926 = vpop.f32.mrb[0].mxu0
    %927 = vmatprep.mubr.bf16.mxu0 0
    %928 = vmatmul.mubr.bf16.gmra.mrb[0].mxu0 %v680
    %v929 = vpop.f32.mrb[0].mxu0
    %v930 = vadd.f32 %v717, %v929
    %v931 = vpop.f32.mrb[0].mxu0
    %v932 = vpop.f32.mrb[0].mxu0
    %v933 = vadd.f32 %v717, %v932
    %v934 = vpop.f32.mrb[0].mxu0
    %935 = vmatprep.mubr.bf16.mxu0 0
    %936 = vmatmul.mubr.bf16.gmra.mrb[0].mxu0 %v681
    %v937 = vpop.f32.mrb[0].mxu0
    %v938 = vadd.f32 %v717, %v937
    %v939 = vpop.f32.mrb[0].mxu0
    %v940 = vpop.f32.mrb[0].mxu0
    %v941 = vadd.f32 %v717, %v940
    %v942 = vpop.f32.mrb[0].mxu0
    %943 = vmatprep.mubr.bf16.mxu0 0
    %944 = vmatmul.mubr.bf16.gmra.mrb[0].mxu0 %v682
    %v945 = vpop.f32.mrb[0].mxu0
    %v946 = vadd.f32 %v717, %v945
    %v947 = vpop.f32.mrb[0].mxu0
    %v948 = vpop.f32.mrb[0].mxu0
    %v949 = vadd.f32 %v717, %v948
    %v950 = vpop.f32.mrb[0].mxu0
    %951 = vmatprep.mubr.bf16.mxu0 0
    %952 = vmatmul.mubr.bf16.gmra.mrb[0].mxu0 %v683
    %v953 = vpop.f32.mrb[0].mxu0
    %v954 = vadd.f32 %v717, %v953
    %v955 = vpop.f32.mrb[0].mxu0
    %v956 = vpop.f32.mrb[0].mxu0
    %v957 = vadd.f32 %v717, %v956
    %v958 = vpop.f32.mrb[0].mxu0
    %959 = vmatprep.mubr.bf16.mxu0 0
    %960 = vmatmul.mubr.bf16.gmra.mrb[0].mxu0 %v684
    %v961 = vpop.f32.mrb[0].mxu0
    %v962 = vadd.f32 %v717, %v961
    %v963 = vpop.f32.mrb[0].mxu0
    %v964 = vpop.f32.mrb[0].mxu0
    %v965 = vadd.f32 %v717, %v964
    %v966 = vpop.f32.mrb[0].mxu0
    %967 = vmatprep.mubr.bf16.mxu0 0
    %968 = vmatmul.mubr.bf16.gmra.mrb[0].mxu0 %v685
    %v969 = vpop.f32.mrb[0].mxu0
    %v970 = vadd.f32 %v717, %v969
    %v971 = vpop.f32.mrb[0].mxu0
    %v972 = vpop.f32.mrb[0].mxu0
    %v973 = vadd.f32 %v717, %v972
    %v974 = vpop.f32.mrb[0].mxu0
    %975 = vmatprep.mubr.bf16.mxu0 0
    %976 = vmatmul.mubr.bf16.gmra.mrb[0].mxu0 %v686
    %v977 = vpop.f32.mrb[0].mxu0
    %v978 = vadd.f32 %v717, %v977
    %v979 = vpop.f32.mrb[0].mxu0
    %v980 = vpop.f32.mrb[0].mxu0
    %v981 = vadd.f32 %v717, %v980
    %v982 = vpop.f32.mrb[0].mxu0
    %983 = vmatprep.mubr.bf16.mxu0 0
    %984 = vmatmul.mubr.bf16.gmra.mrb[0].mxu0 %v687
    %v985 = vpop.f32.mrb[0].mxu0
    %v986 = vadd.f32 %v717, %v985
    %v987 = vpop.f32.mrb[0].mxu0
    %v988 = vpop.f32.mrb[0].mxu0
    %v989 = vadd.f32 %v717, %v988
    %v990 = vpop.f32.mrb[0].mxu0
    %991 = vmatprep.mubr.bf16.mxu0 0
    %992 = vmatmul.mubr.bf16.gmra.mrb[0].mxu0 %v688
    %v993 = vpop.f32.mrb[0].mxu0
    %v994 = vadd.f32 %v717, %v993
    %v995 = vpop.f32.mrb[0].mxu0
    %v996 = vpop.f32.mrb[0].mxu0
    %v997 = vadd.f32 %v717, %v996
    %v998 = vpop.f32.mrb[0].mxu0
    %999 = vmatprep.mubr.bf16.mxu0 0
    %1000 = vmatmul.mubr.bf16.gmra.mrb[0].mxu0 %v689
    %v1001 = vpop.f32.mrb[0].mxu0
    %v1002 = vadd.f32 %v717, %v1001
    %v1003 = vpop.f32.mrb[0].mxu0
    %v1004 = vpop.f32.mrb[0].mxu0
    %v1005 = vadd.f32 %v717, %v1004
    %v1006 = vpop.f32.mrb[0].mxu0
    %1007 = vmatprep.mubr.bf16.mxu0 0
    %1008 = vmatmul.mubr.bf16.gmra.mrb[0].mxu0 %v690
    %v1009 = vpop.f32.mrb[0].mxu0
    %v1010 = vadd.f32 %v717, %v1009
    %v1011 = vpop.f32.mrb[0].mxu0
    %v1012 = vpop.f32.mrb[0].mxu0
    %v1013 = vadd.f32 %v717, %v1012
    %v1014 = vpop.f32.mrb[0].mxu0
    %1015 = vmatprep.mubr.bf16.mxu0 0
    %1016 = vmatmul.mubr.bf16.gmra.mrb[0].mxu0 %v691
    %v1017 = vpop.f32.mrb[0].mxu0
    %v1018 = vadd.f32 %v717, %v1017
    %v1019 = vpop.f32.mrb[0].mxu0
    %v1020 = vpop.f32.mrb[0].mxu0
    %v1021 = vadd.f32 %v717, %v1020
    %v1022 = vpop.f32.mrb[0].mxu0
    %1023 = vmatprep.mubr.bf16.mxu0 0
    %1024 = vmatmul.mubr.bf16.gmra.mrb[0].mxu0 %v692
    %v1025 = vpop.f32.mrb[0].mxu0
    %v1026 = vadd.f32 %v717, %v1025
    %v1027 = vpop.f32.mrb[0].mxu0
    %v1028 = vpop.f32.mrb[0].mxu0
    %v1029 = vadd.f32 %v717, %v1028
    %v1030 = vpop.f32.mrb[0].mxu0
    %1031 = vmatprep.mubr.bf16.mxu0 0
    %1032 = vmatmul.mubr.bf16.gmra.mrb[0].mxu0 %v693
    %v1033 = vpop.f32.mrb[0].mxu0
    %v1034 = vadd.f32 %v717, %v1033
    %v1035 = vpop.f32.mrb[0].mxu0
    %v1036 = vpop.f32.mrb[0].mxu0
    %v1037 = vadd.f32 %v717, %v1036
    %v1038 = vpop.f32.mrb[0].mxu0
    %1039 = vmatprep.mubr.bf16.mxu0 0
    %1040 = vmatmul.mubr.bf16.gmra.mrb[0].mxu0 %v694
    %v1041 = vpop.f32.mrb[0].mxu0
    %v1042 = vadd.f32 %v717, %v1041
    %v1043 = vpop.f32.mrb[0].mxu0
    %v1044 = vpop.f32.mrb[0].mxu0
    %v1045 = vadd.f32 %v717, %v1044
    %v1046 = vpop.f32.mrb[0].mxu0
    %1047 = vmatprep.mubr.bf16.mxu0 0
    %1048 = vmatmul.mubr.bf16.gmra.mrb[0].mxu0 %v695
    %v1049 = vpop.f32.mrb[0].mxu0
    %v1050 = vadd.f32 %v717, %v1049
    %v1051 = vpop.f32.mrb[0].mxu0
    %v1052 = vpop.f32.mrb[0].mxu0
    %v1053 = vadd.f32 %v717, %v1052
    %v1054 = vpop.f32.mrb[0].mxu0
    %1055 = vdwg.mxu0
    %v1056 = vld [vmem:[%s5] sm:$0x1]
    %v1057 = vld [vmem:[%s6] sm:$0x1]
    %v1058 = vadd.f32 %v802, %v805
    %v1059 = vadd.f32 %v1058, %v810
    %v1060 = vadd.f32 %v1059, %v813
    %v1061 = vadd.f32 %v1060, %v818
    %v1062 = vadd.f32 %v1061, %v821
    %v1063 = vadd.f32 %v1062, %v826
    %v1064 = vadd.f32 %v1063, %v829
    %v1065 = vadd.f32 %v1064, %v834
    %v1066 = vadd.f32 %v1065, %v837
    %v1067 = vadd.f32 %v1066, %v842
    %v1068 = vadd.f32 %v1067, %v845
    %v1069 = vadd.f32 %v1068, %v850
    %v1070 = vadd.f32 %v1069, %v853
    %v1071 = vadd.f32 %v1070, %v858
    %v1072 = vadd.f32 %v1071, %v861
    %v1073 = vadd.f32 %v1072, %v866
    %v1074 = vadd.f32 %v1073, %v869
    %v1075 = vadd.f32 %v1074, %v874
    %v1076 = vadd.f32 %v1075, %v877
    %v1077 = vadd.f32 %v1076, %v882
    %v1078 = vadd.f32 %v1077, %v885
    %v1079 = vadd.f32 %v1078, %v890
    %v1080 = vadd.f32 %v1079, %v893
    %v1081 = vadd.f32 %v1080, %v898
    %v1082 = vadd.f32 %v1081, %v901
    %v1083 = vadd.f32 %v1082, %v906
    %v1084 = vadd.f32 %v1083, %v909
    %v1085 = vadd.f32 %v1084, %v914
    %v1086 = vadd.f32 %v1085, %v917
    %v1087 = vadd.f32 %v1086, %v922
    %v1088 = vadd.f32 %v1087, %v925
    %v1089 = vadd.f32 %v1088, %v930
    %v1090 = vadd.f32 %v1089, %v933
    %v1091 = vadd.f32 %v1090, %v938
    %v1092 = vadd.f32 %v1091, %v941
    %v1093 = vadd.f32 %v1092, %v946
    %v1094 = vadd.f32 %v1093, %v949
    %v1095 = vadd.f32 %v1094, %v954
    %v1096 = vadd.f32 %v1095, %v957
    %v1097 = vadd.f32 %v1096, %v962
    %v1098 = vadd.f32 %v1097, %v965
    %v1099 = vadd.f32 %v1098, %v970
    %v1100 = vadd.f32 %v1099, %v973
    %v1101 = vadd.f32 %v1100, %v978
    %v1102 = vadd.f32 %v1101, %v981
    %v1103 = vadd.f32 %v1102, %v986
    %v1104 = vadd.f32 %v1103, %v989
    %v1105 = vadd.f32 %v1104, %v994
    %v1106 = vadd.f32 %v1105, %v997
    %v1107 = vadd.f32 %v1106, %v1002
    %v1108 = vadd.f32 %v1107, %v1005
    %v1109 = vadd.f32 %v1108, %v1010
    %v1110 = vadd.f32 %v1109, %v1013
    %v1111 = vadd.f32 %v1110, %v1018
    %v1112 = vadd.f32 %v1111, %v1021
    %v1113 = vadd.f32 %v1112, %v1026
    %v1114 = vadd.f32 %v1113, %v1029
    %v1115 = vadd.f32 %v1114, %v1034
    %v1116 = vadd.f32 %v1115, %v1037
    %v1117 = vadd.f32 %v1116, %v1042
    %v1118 = vadd.f32 %v1117, %v1045
    %v1119 = vadd.f32 %v1118, %v1050
    %v1120 = vadd.f32 %v1119, %v1053
    %v1121 = vrot.slane %v1120, 4
    %v1122 = vadd.f32 %v1120, %v1121
    %v1123 = vrot.slane %v1122, 2
    %v1124 = vadd.f32 %v1122, %v1123
    %v1125 = vrot.slane %v1124, 1
    %v1126 = vadd.f32 %v1124, %v1125
    %v1127 = vmul.f32 %v1126, %v255
    %v1128 = vsub.f32 %v802, %v1127
    %v1129 = vsub.f32 %v805, %v1127
    %v1130 = vsub.f32 %v810, %v1127
    %v1131 = vsub.f32 %v813, %v1127
    %v1132 = vsub.f32 %v818, %v1127
    %v1133 = vsub.f32 %v821, %v1127
    %v1134 = vsub.f32 %v826, %v1127
    %v1135 = vsub.f32 %v829, %v1127
    %v1136 = vsub.f32 %v834, %v1127
    %v1137 = vsub.f32 %v837, %v1127
    %v1138 = vsub.f32 %v842, %v1127
    %v1139 = vsub.f32 %v845, %v1127
    %v1140 = vsub.f32 %v850, %v1127
    %v1141 = vsub.f32 %v853, %v1127
    %v1142 = vsub.f32 %v858, %v1127
    %v1143 = vsub.f32 %v861, %v1127
    %v1144 = vsub.f32 %v866, %v1127
    %v1145 = vsub.f32 %v869, %v1127
    %v1146 = vsub.f32 %v874, %v1127
    %v1147 = vsub.f32 %v877, %v1127
    %v1148 = vsub.f32 %v882, %v1127
    %v1149 = vsub.f32 %v885, %v1127
    %v1150 = vsub.f32 %v890, %v1127
    %v1151 = vsub.f32 %v893, %v1127
    %v1152 = vsub.f32 %v898, %v1127
    %v1153 = vsub.f32 %v901, %v1127
    %v1154 = vsub.f32 %v906, %v1127
    %v1155 = vsub.f32 %v909, %v1127
    %v1156 = vsub.f32 %v914, %v1127
    %v1157 = vsub.f32 %v917, %v1127
    %v1158 = vsub.f32 %v922, %v1127
    %v1159 = vsub.f32 %v925, %v1127
    %v1160 = vsub.f32 %v930, %v1127
    %v1161 = vsub.f32 %v933, %v1127
    %v1162 = vsub.f32 %v938, %v1127
    %v1163 = vsub.f32 %v941, %v1127
    %v1164 = vsub.f32 %v946, %v1127
    %v1165 = vsub.f32 %v949, %v1127
    %v1166 = vsub.f32 %v954, %v1127
    %v1167 = vsub.f32 %v957, %v1127
    %v1168 = vsub.f32 %v962, %v1127
    %v1169 = vsub.f32 %v965, %v1127
    %v1170 = vsub.f32 %v970, %v1127
    %v1171 = vsub.f32 %v973, %v1127
    %v1172 = vsub.f32 %v978, %v1127
    %v1173 = vsub.f32 %v981, %v1127
    %v1174 = vsub.f32 %v986, %v1127
    %v1175 = vsub.f32 %v989, %v1127
    %v1176 = vsub.f32 %v994, %v1127
    %v1177 = vsub.f32 %v997, %v1127
    %v1178 = vsub.f32 %v1002, %v1127
    %v1179 = vsub.f32 %v1005, %v1127
    %v1180 = vsub.f32 %v1010, %v1127
    %v1181 = vsub.f32 %v1013, %v1127
    %v1182 = vsub.f32 %v1018, %v1127
    %v1183 = vsub.f32 %v1021, %v1127
    %v1184 = vsub.f32 %v1026, %v1127
    %v1185 = vsub.f32 %v1029, %v1127
    %v1186 = vsub.f32 %v1034, %v1127
    %v1187 = vsub.f32 %v1037, %v1127
    %v1188 = vsub.f32 %v1042, %v1127
    %v1189 = vsub.f32 %v1045, %v1127
    %v1190 = vsub.f32 %v1050, %v1127
    %v1191 = vsub.f32 %v1053, %v1127
    %v1192 = vmul.f32 %v1128, %v1128
    %v1193 = vmul.f32 %v1129, %v1129
    %v1194 = vmul.f32 %v1130, %v1130
    %v1195 = vmul.f32 %v1131, %v1131
    %v1196 = vmul.f32 %v1132, %v1132
    %v1197 = vmul.f32 %v1133, %v1133
    %v1198 = vmul.f32 %v1134, %v1134
    %v1199 = vmul.f32 %v1135, %v1135
    %v1200 = vmul.f32 %v1136, %v1136
    %v1201 = vmul.f32 %v1137, %v1137
    %v1202 = vmul.f32 %v1138, %v1138
    %v1203 = vmul.f32 %v1139, %v1139
    %v1204 = vmul.f32 %v1140, %v1140
    %v1205 = vmul.f32 %v1141, %v1141
    %v1206 = vmul.f32 %v1142, %v1142
    %v1207 = vmul.f32 %v1143, %v1143
    %v1208 = vmul.f32 %v1144, %v1144
    %v1209 = vmul.f32 %v1145, %v1145
    %v1210 = vmul.f32 %v1146, %v1146
    %v1211 = vmul.f32 %v1147, %v1147
    %v1212 = vmul.f32 %v1148, %v1148
    %v1213 = vmul.f32 %v1149, %v1149
    %v1214 = vmul.f32 %v1150, %v1150
    %v1215 = vmul.f32 %v1151, %v1151
    %v1216 = vmul.f32 %v1152, %v1152
    %v1217 = vmul.f32 %v1153, %v1153
    %v1218 = vmul.f32 %v1154, %v1154
    %v1219 = vmul.f32 %v1155, %v1155
    %v1220 = vmul.f32 %v1156, %v1156
    %v1221 = vmul.f32 %v1157, %v1157
    %v1222 = vmul.f32 %v1158, %v1158
    %v1223 = vmul.f32 %v1159, %v1159
    %v1224 = vmul.f32 %v1160, %v1160
    %v1225 = vmul.f32 %v1161, %v1161
    %v1226 = vmul.f32 %v1162, %v1162
    %v1227 = vmul.f32 %v1163, %v1163
    %v1228 = vmul.f32 %v1164, %v1164
    %v1229 = vmul.f32 %v1165, %v1165
    %v1230 = vmul.f32 %v1166, %v1166
    %v1231 = vmul.f32 %v1167, %v1167
    %v1232 = vmul.f32 %v1168, %v1168
    %v1233 = vmul.f32 %v1169, %v1169
    %v1234 = vmul.f32 %v1170, %v1170
    %v1235 = vmul.f32 %v1171, %v1171
    %v1236 = vmul.f32 %v1172, %v1172
    %v1237 = vmul.f32 %v1173, %v1173
    %v1238 = vmul.f32 %v1174, %v1174
    %v1239 = vmul.f32 %v1175, %v1175
    %v1240 = vmul.f32 %v1176, %v1176
    %v1241 = vmul.f32 %v1177, %v1177
    %v1242 = vmul.f32 %v1178, %v1178
    %v1243 = vmul.f32 %v1179, %v1179
    %v1244 = vmul.f32 %v1180, %v1180
    %v1245 = vmul.f32 %v1181, %v1181
    %v1246 = vmul.f32 %v1182, %v1182
    %v1247 = vmul.f32 %v1183, %v1183
    %v1248 = vmul.f32 %v1184, %v1184
    %v1249 = vmul.f32 %v1185, %v1185
    %v1250 = vmul.f32 %v1186, %v1186
    %v1251 = vmul.f32 %v1187, %v1187
    %v1252 = vmul.f32 %v1188, %v1188
    %v1253 = vmul.f32 %v1189, %v1189
    %v1254 = vmul.f32 %v1190, %v1190
    %v1255 = vmul.f32 %v1191, %v1191
    %v1256 = vadd.f32 %v1192, %v1193
    %v1257 = vadd.f32 %v1256, %v1194
    %v1258 = vadd.f32 %v1257, %v1195
    %v1259 = vadd.f32 %v1258, %v1196
    %v1260 = vadd.f32 %v1259, %v1197
    %v1261 = vadd.f32 %v1260, %v1198
    %v1262 = vadd.f32 %v1261, %v1199
    %v1263 = vadd.f32 %v1262, %v1200
    %v1264 = vadd.f32 %v1263, %v1201
    %v1265 = vadd.f32 %v1264, %v1202
    %v1266 = vadd.f32 %v1265, %v1203
    %v1267 = vadd.f32 %v1266, %v1204
    %v1268 = vadd.f32 %v1267, %v1205
    %v1269 = vadd.f32 %v1268, %v1206
    %v1270 = vadd.f32 %v1269, %v1207
    %v1271 = vadd.f32 %v1270, %v1208
    %v1272 = vadd.f32 %v1271, %v1209
    %v1273 = vadd.f32 %v1272, %v1210
    %v1274 = vadd.f32 %v1273, %v1211
    %v1275 = vadd.f32 %v1274, %v1212
    %v1276 = vadd.f32 %v1275, %v1213
    %v1277 = vadd.f32 %v1276, %v1214
    %v1278 = vadd.f32 %v1277, %v1215
    %v1279 = vadd.f32 %v1278, %v1216
    %v1280 = vadd.f32 %v1279, %v1217
    %v1281 = vadd.f32 %v1280, %v1218
    %v1282 = vadd.f32 %v1281, %v1219
    %v1283 = vadd.f32 %v1282, %v1220
    %v1284 = vadd.f32 %v1283, %v1221
    %v1285 = vadd.f32 %v1284, %v1222
    %v1286 = vadd.f32 %v1285, %v1223
    %v1287 = vadd.f32 %v1286, %v1224
    %v1288 = vadd.f32 %v1287, %v1225
    %v1289 = vadd.f32 %v1288, %v1226
    %v1290 = vadd.f32 %v1289, %v1227
    %v1291 = vadd.f32 %v1290, %v1228
    %v1292 = vadd.f32 %v1291, %v1229
    %v1293 = vadd.f32 %v1292, %v1230
    %v1294 = vadd.f32 %v1293, %v1231
    %v1295 = vadd.f32 %v1294, %v1232
    %v1296 = vadd.f32 %v1295, %v1233
    %v1297 = vadd.f32 %v1296, %v1234
    %v1298 = vadd.f32 %v1297, %v1235
    %v1299 = vadd.f32 %v1298, %v1236
    %v1300 = vadd.f32 %v1299, %v1237
    %v1301 = vadd.f32 %v1300, %v1238
    %v1302 = vadd.f32 %v1301, %v1239
    %v1303 = vadd.f32 %v1302, %v1240
    %v1304 = vadd.f32 %v1303, %v1241
    %v1305 = vadd.f32 %v1304, %v1242
    %v1306 = vadd.f32 %v1305, %v1243
    %v1307 = vadd.f32 %v1306, %v1244
    %v1308 = vadd.f32 %v1307, %v1245
    %v1309 = vadd.f32 %v1308, %v1246
    %v1310 = vadd.f32 %v1309, %v1247
    %v1311 = vadd.f32 %v1310, %v1248
    %v1312 = vadd.f32 %v1311, %v1249
    %v1313 = vadd.f32 %v1312, %v1250
    %v1314 = vadd.f32 %v1313, %v1251
    %v1315 = vadd.f32 %v1314, %v1252
    %v1316 = vadd.f32 %v1315, %v1253
    %v1317 = vadd.f32 %v1316, %v1254
    %v1318 = vadd.f32 %v1317, %v1255
    %v1319 = vrot.slane %v1318, 4
    %v1320 = vadd.f32 %v1318, %v1319
    %v1321 = vrot.slane %v1320, 2
    %v1322 = vadd.f32 %v1320, %v1321
    %v1323 = vrot.slane %v1322, 1
    %v1324 = vadd.f32 %v1322, %v1323
    %v1325 = vmul.f32 %v1324, %v255
    %v1326 = vadd.f32 %v1325, 1e-05
    %v1327 = vrsqrt.pop %v1326
    %v1328 = vmul.f32 %v1056, %v1327
    %v1329 = vmul.f32 %v1127, %v1328
    %v1330 = vsub.f32 %v1057, %v1329
    %v1332 = vlaneseq
    %v1333 = vshrl.u32 %v1332, 7
    %v1334 = vsub.s32 0, %v1333
    %v1335 = vrot.slane %v1328, %v1334
    %v1337 = vmul.f32 %v802, %v1335
    %v1338 = vmul.f32 %v805, %v1335
    %v1339 = vmul.f32 %v810, %v1335
    %v1340 = vmul.f32 %v813, %v1335
    %v1341 = vmul.f32 %v818, %v1335
    %v1342 = vmul.f32 %v821, %v1335
    %v1343 = vmul.f32 %v826, %v1335
    %v1344 = vmul.f32 %v829, %v1335
    %v1345 = vmul.f32 %v834, %v1335
    %v1346 = vmul.f32 %v837, %v1335
    %v1347 = vmul.f32 %v842, %v1335
    %v1348 = vmul.f32 %v845, %v1335
    %v1349 = vmul.f32 %v850, %v1335
    %v1350 = vmul.f32 %v853, %v1335
    %v1351 = vmul.f32 %v858, %v1335
    %v1352 = vmul.f32 %v861, %v1335
    %v1353 = vmul.f32 %v866, %v1335
    %v1354 = vmul.f32 %v869, %v1335
    %v1355 = vmul.f32 %v874, %v1335
    %v1356 = vmul.f32 %v877, %v1335
    %v1357 = vmul.f32 %v882, %v1335
    %v1358 = vmul.f32 %v885, %v1335
    %v1359 = vmul.f32 %v890, %v1335
    %v1360 = vmul.f32 %v893, %v1335
    %v1361 = vmul.f32 %v898, %v1335
    %v1362 = vmul.f32 %v901, %v1335
    %v1363 = vmul.f32 %v906, %v1335
    %v1364 = vmul.f32 %v909, %v1335
    %v1365 = vmul.f32 %v914, %v1335
    %v1366 = vmul.f32 %v917, %v1335
    %v1367 = vmul.f32 %v922, %v1335
    %v1368 = vmul.f32 %v925, %v1335
    %v1369 = vmul.f32 %v930, %v1335
    %v1370 = vmul.f32 %v933, %v1335
    %v1371 = vmul.f32 %v938, %v1335
    %v1372 = vmul.f32 %v941, %v1335
    %v1373 = vmul.f32 %v946, %v1335
    %v1374 = vmul.f32 %v949, %v1335
    %v1375 = vmul.f32 %v954, %v1335
    %v1376 = vmul.f32 %v957, %v1335
    %v1377 = vmul.f32 %v962, %v1335
    %v1378 = vmul.f32 %v965, %v1335
    %v1379 = vmul.f32 %v970, %v1335
    %v1380 = vmul.f32 %v973, %v1335
    %v1381 = vmul.f32 %v978, %v1335
    %v1382 = vmul.f32 %v981, %v1335
    %v1383 = vmul.f32 %v986, %v1335
    %v1384 = vmul.f32 %v989, %v1335
    %v1385 = vmul.f32 %v994, %v1335
    %v1386 = vmul.f32 %v997, %v1335
    %v1387 = vmul.f32 %v1002, %v1335
    %v1388 = vmul.f32 %v1005, %v1335
    %v1389 = vmul.f32 %v1010, %v1335
    %v1390 = vmul.f32 %v1013, %v1335
    %v1391 = vmul.f32 %v1018, %v1335
    %v1392 = vmul.f32 %v1021, %v1335
    %v1393 = vmul.f32 %v1026, %v1335
    %v1394 = vmul.f32 %v1029, %v1335
    %v1395 = vmul.f32 %v1034, %v1335
    %v1396 = vmul.f32 %v1037, %v1335
    %v1397 = vmul.f32 %v1042, %v1335
    %v1398 = vmul.f32 %v1045, %v1335
    %v1399 = vmul.f32 %v1050, %v1335
    %v1400 = vmul.f32 %v1053, %v1335
    %v1402 = vlaneseq
    %v1403 = vshrl.u32 %v1402, 7
    %v1404 = vsub.s32 0, %v1403
    %v1405 = vrot.slane %v1330, %v1404
    %v1407 = vadd.f32 %v1337, %v1405
    %v1408 = vadd.f32 %v1338, %v1405
    %v1409 = vadd.f32 %v1339, %v1405
    %v1410 = vadd.f32 %v1340, %v1405
    %v1411 = vadd.f32 %v1341, %v1405
    %v1412 = vadd.f32 %v1342, %v1405
    %v1413 = vadd.f32 %v1343, %v1405
    %v1414 = vadd.f32 %v1344, %v1405
    %v1415 = vadd.f32 %v1345, %v1405
    %v1416 = vadd.f32 %v1346, %v1405
    %v1417 = vadd.f32 %v1347, %v1405
    %v1418 = vadd.f32 %v1348, %v1405
    %v1419 = vadd.f32 %v1349, %v1405
    %v1420 = vadd.f32 %v1350, %v1405
    %v1421 = vadd.f32 %v1351, %v1405
    %v1422 = vadd.f32 %v1352, %v1405
    %v1423 = vadd.f32 %v1353, %v1405
    %v1424 = vadd.f32 %v1354, %v1405
    %v1425 = vadd.f32 %v1355, %v1405
    %v1426 = vadd.f32 %v1356, %v1405
    %v1427 = vadd.f32 %v1357, %v1405
    %v1428 = vadd.f32 %v1358, %v1405
    %v1429 = vadd.f32 %v1359, %v1405
    %v1430 = vadd.f32 %v1360, %v1405
    %v1431 = vadd.f32 %v1361, %v1405
    %v1432 = vadd.f32 %v1362, %v1405
    %v1433 = vadd.f32 %v1363, %v1405
    %v1434 = vadd.f32 %v1364, %v1405
    %v1435 = vadd.f32 %v1365, %v1405
    %v1436 = vadd.f32 %v1366, %v1405
    %v1437 = vadd.f32 %v1367, %v1405
    %v1438 = vadd.f32 %v1368, %v1405
    %v1439 = vadd.f32 %v1369, %v1405
    %v1440 = vadd.f32 %v1370, %v1405
    %v1441 = vadd.f32 %v1371, %v1405
    %v1442 = vadd.f32 %v1372, %v1405
    %v1443 = vadd.f32 %v1373, %v1405
    %v1444 = vadd.f32 %v1374, %v1405
    %v1445 = vadd.f32 %v1375, %v1405
    %v1446 = vadd.f32 %v1376, %v1405
    %v1447 = vadd.f32 %v1377, %v1405
    %v1448 = vadd.f32 %v1378, %v1405
    %v1449 = vadd.f32 %v1379, %v1405
    %v1450 = vadd.f32 %v1380, %v1405
    %v1451 = vadd.f32 %v1381, %v1405
    %v1452 = vadd.f32 %v1382, %v1405
    %v1453 = vadd.f32 %v1383, %v1405
    %v1454 = vadd.f32 %v1384, %v1405
    %v1455 = vadd.f32 %v1385, %v1405
    %v1456 = vadd.f32 %v1386, %v1405
    %v1457 = vadd.f32 %v1387, %v1405
    %v1458 = vadd.f32 %v1388, %v1405
    %v1459 = vadd.f32 %v1389, %v1405
    %v1460 = vadd.f32 %v1390, %v1405
    %v1461 = vadd.f32 %v1391, %v1405
    %v1462 = vadd.f32 %v1392, %v1405
    %v1463 = vadd.f32 %v1393, %v1405
    %v1464 = vadd.f32 %v1394, %v1405
    %v1465 = vadd.f32 %v1395, %v1405
    %v1466 = vadd.f32 %v1396, %v1405
    %v1467 = vadd.f32 %v1397, %v1405
    %v1468 = vadd.f32 %v1398, %v1405
    %v1469 = vadd.f32 %v1399, %v1405
    %v1470 = vadd.f32 %v1400, %v1405
    %v1471 = vmax.f32 %v1407, 0.0
    %v1472 = vmax.f32 %v1408, 0.0
    %v1473 = vmax.f32 %v1409, 0.0
    %v1474 = vmax.f32 %v1410, 0.0
    %v1475 = vmax.f32 %v1411, 0.0
    %v1476 = vmax.f32 %v1412, 0.0
    %v1477 = vmax.f32 %v1413, 0.0
    %v1478 = vmax.f32 %v1414, 0.0
    %v1479 = vmax.f32 %v1415, 0.0
    %v1480 = vmax.f32 %v1416, 0.0
    %v1481 = vmax.f32 %v1417, 0.0
    %v1482 = vmax.f32 %v1418, 0.0
    %v1483 = vmax.f32 %v1419, 0.0
    %v1484 = vmax.f32 %v1420, 0.0
    %v1485 = vmax.f32 %v1421, 0.0
    %v1486 = vmax.f32 %v1422, 0.0
    %v1487 = vmax.f32 %v1423, 0.0
    %v1488 = vmax.f32 %v1424, 0.0
    %v1489 = vmax.f32 %v1425, 0.0
    %v1490 = vmax.f32 %v1426, 0.0
    %v1491 = vmax.f32 %v1427, 0.0
    %v1492 = vmax.f32 %v1428, 0.0
    %v1493 = vmax.f32 %v1429, 0.0
    %v1494 = vmax.f32 %v1430, 0.0
    %v1495 = vmax.f32 %v1431, 0.0
    %v1496 = vmax.f32 %v1432, 0.0
    %v1497 = vmax.f32 %v1433, 0.0
    %v1498 = vmax.f32 %v1434, 0.0
    %v1499 = vmax.f32 %v1435, 0.0
    %v1500 = vmax.f32 %v1436, 0.0
    %v1501 = vmax.f32 %v1437, 0.0
    %v1502 = vmax.f32 %v1438, 0.0
    %v1503 = vmax.f32 %v1439, 0.0
    %v1504 = vmax.f32 %v1440, 0.0
    %v1505 = vmax.f32 %v1441, 0.0
    %v1506 = vmax.f32 %v1442, 0.0
    %v1507 = vmax.f32 %v1443, 0.0
    %v1508 = vmax.f32 %v1444, 0.0
    %v1509 = vmax.f32 %v1445, 0.0
    %v1510 = vmax.f32 %v1446, 0.0
    %v1511 = vmax.f32 %v1447, 0.0
    %v1512 = vmax.f32 %v1448, 0.0
    %v1513 = vmax.f32 %v1449, 0.0
    %v1514 = vmax.f32 %v1450, 0.0
    %v1515 = vmax.f32 %v1451, 0.0
    %v1516 = vmax.f32 %v1452, 0.0
    %v1517 = vmax.f32 %v1453, 0.0
    %v1518 = vmax.f32 %v1454, 0.0
    %v1519 = vmax.f32 %v1455, 0.0
    %v1520 = vmax.f32 %v1456, 0.0
    %v1521 = vmax.f32 %v1457, 0.0
    %v1522 = vmax.f32 %v1458, 0.0
    %v1523 = vmax.f32 %v1459, 0.0
    %v1524 = vmax.f32 %v1460, 0.0
    %v1525 = vmax.f32 %v1461, 0.0
    %v1526 = vmax.f32 %v1462, 0.0
    %v1527 = vmax.f32 %v1463, 0.0
    %v1528 = vmax.f32 %v1464, 0.0
    %v1529 = vmax.f32 %v1465, 0.0
    %v1530 = vmax.f32 %v1466, 0.0
    %v1531 = vmax.f32 %v1467, 0.0
    %v1532 = vmax.f32 %v1468, 0.0
    %v1533 = vmax.f32 %v1469, 0.0
    %v1534 = vmax.f32 %v1470, 0.0
    %1535 = vst [vmem:[#allocation2] sm:$0xff] 0.0
    %1536 = vst [vmem:[#allocation2 + $0x8] sm:$0xff] 0.0
    %1537 = vst [vmem:[#allocation2 + $0x10] sm:$0x3] 0.0
    %1538 = vst [vmem:[#allocation2 + $0x18] sm:$0xff] 0.0
    %1539 = vst [vmem:[#allocation2 + $0x20] sm:$0xff] 0.0
    %1540 = vst [vmem:[#allocation2 + $0x28] sm:$0x3] 0.0
    %1541 = vst [vmem:[#allocation2 + $0x30] sm:$0xff] 0.0
    %1542 = vst [vmem:[#allocation2 + $0x38] sm:$0xff] 0.0
    %1543 = vst [vmem:[#allocation2 + $0x40] sm:$0x3] 0.0
    %1544 = vst [vmem:[#allocation2 + $0x48] sm:$0xff] 0.0
    %1545 = vst [vmem:[#allocation2 + $0x50] sm:$0xff] 0.0
    %1546 = vst [vmem:[#allocation2 + $0x58] sm:$0x3] 0.0
    %1547 = vst [vmem:[#allocation2 + $0x60] sm:$0xff] 0.0
    %1548 = vst [vmem:[#allocation2 + $0x68] sm:$0xff] 0.0
    %1549 = vst [vmem:[#allocation2 + $0x70] sm:$0x3] 0.0
    %1550 = vst [vmem:[#allocation2 + $0x78] sm:$0xff] 0.0
    %1551 = vst [vmem:[#allocation2 + $0x80] sm:$0xff] 0.0
    %1552 = vst [vmem:[#allocation2 + $0x88] sm:$0x3] 0.0
    %1553 = vst [vmem:[#allocation2 + $0x90] sm:$0xff] 0.0
    %1554 = vst [vmem:[#allocation2 + $0x98] sm:$0xff] 0.0
    %1555 = vst [vmem:[#allocation2 + $0xa0] sm:$0x3] 0.0
    %1556 = vst [vmem:[#allocation2 + $0xa8] sm:$0xff] 0.0
    %1557 = vst [vmem:[#allocation2 + $0xb0] sm:$0xff] 0.0
    %1558 = vst [vmem:[#allocation2 + $0xb8] sm:$0x3] 0.0
    %1559 = vst [vmem:[#allocation2 + $0xc0] sm:$0xff] 0.0
    %1560 = vst [vmem:[#allocation2 + $0xc8] sm:$0xff] 0.0
    %1561 = vst [vmem:[#allocation2 + $0xd0] sm:$0x3] 0.0
    %1562 = vst [vmem:[#allocation2 + $0xd8] sm:$0xff] 0.0
    %1563 = vst [vmem:[#allocation2 + $0xe0] sm:$0xff] 0.0
    %1564 = vst [vmem:[#allocation2 + $0xe8] sm:$0x3] 0.0
    %1565 = vst [vmem:[#allocation2 + $0xf0] sm:$0xff] 0.0
    %1566 = vst [vmem:[#allocation2 + $0xf8] sm:$0xff] 0.0
    %1567 = vst [vmem:[#allocation2 + $0x100] sm:$0x3] 0.0
    %1568 = vst [vmem:[#allocation2 + $0x108] sm:$0xff] 0.0
    %1569 = vst [vmem:[#allocation2 + $0x110] sm:$0xff] 0.0
    %1570 = vst [vmem:[#allocation2 + $0x118] sm:$0x3] 0.0
    %1571 = vst [vmem:[#allocation2 + $0x120] sm:$0xff] 0.0
    %1572 = vst [vmem:[#allocation2 + $0x128] sm:$0xff] 0.0
    %1573 = vst [vmem:[#allocation2 + $0x130] sm:$0x3] 0.0
    %1574 = vst [vmem:[#allocation2 + $0x138] sm:$0xff] 0.0
    %1575 = vst [vmem:[#allocation2 + $0x140] sm:$0xff] 0.0
    %1576 = vst [vmem:[#allocation2 + $0x148] sm:$0x3] 0.0
    %1577 = vst [vmem:[#allocation2 + $0x150] sm:$0xff] 0.0
    %1578 = vst [vmem:[#allocation2 + $0x158] sm:$0xff] 0.0
    %1579 = vst [vmem:[#allocation2 + $0x160] sm:$0x3] 0.0
    %1580 = vst [vmem:[#allocation2 + $0x168] sm:$0xff] 0.0
    %1581 = vst [vmem:[#allocation2 + $0x170] sm:$0xff] 0.0
    %1582 = vst [vmem:[#allocation2 + $0x178] sm:$0x3] 0.0
    %1583 = vst [vmem:[#allocation2 + $0x180] sm:$0xff] 0.0
    %1584 = vst [vmem:[#allocation2 + $0x188] sm:$0xff] 0.0
    %1585 = vst [vmem:[#allocation2 + $0x190] sm:$0x3] 0.0
    %1586 = vst [vmem:[#allocation2 + $0x198] sm:$0xff] 0.0
    %1587 = vst [vmem:[#allocation2 + $0x1a0] sm:$0xff] 0.0
    %1588 = vst [vmem:[#allocation2 + $0x1a8] sm:$0x3] 0.0
    %1589 = vst [vmem:[#allocation2 + $0x1b0] sm:$0xff] 0.0
    %1590 = vst [vmem:[#allocation2 + $0x1b8] sm:$0xff] 0.0
    %1591 = vst [vmem:[#allocation2 + $0x1c0] sm:$0x3] 0.0
    %1592 = vst [vmem:[#allocation2 + $0x1c8] sm:$0xff] 0.0
    %1593 = vst [vmem:[#allocation2 + $0x1d0] sm:$0xff] 0.0
    %1594 = vst [vmem:[#allocation2 + $0x1d8] sm:$0x3] 0.0
    %1595 = vst [vmem:[#allocation2 + $0x1e0] sm:$0xff] 0.0
    %1596 = vst [vmem:[#allocation2 + $0x1e8] sm:$0xff] 0.0
    %1597 = vst [vmem:[#allocation2 + $0x1f0] sm:$0x3] 0.0
    %1598 = vst [vmem:[#allocation2 + $0x1f8] sm:$0xff] 0.0
    %1599 = vst [vmem:[#allocation2 + $0x200] sm:$0xff] 0.0
    %1600 = vst [vmem:[#allocation2 + $0x208] sm:$0x3] 0.0
    %1601 = vst [vmem:[#allocation2 + $0x210] sm:$0xff] 0.0
    %1602 = vst [vmem:[#allocation2 + $0x218] sm:$0xff] 0.0
    %1603 = vst [vmem:[#allocation2 + $0x220] sm:$0x3] 0.0
    %1604 = vst [vmem:[#allocation2 + $0x228] sm:$0xff] 0.0
    %1605 = vst [vmem:[#allocation2 + $0x230] sm:$0xff] 0.0
    %1606 = vst [vmem:[#allocation2 + $0x238] sm:$0x3] 0.0
    %1607 = vst [vmem:[#allocation2 + $0x240] sm:$0xff] 0.0
    %1608 = vst [vmem:[#allocation2 + $0x248] sm:$0xff] 0.0
    %1609 = vst [vmem:[#allocation2 + $0x250] sm:$0x3] 0.0
    %1610 = vst [vmem:[#allocation2 + $0x258] sm:$0xff] 0.0
    %1611 = vst [vmem:[#allocation2 + $0x260] sm:$0xff] 0.0
    %1612 = vst [vmem:[#allocation2 + $0x268] sm:$0x3] 0.0
    %1613 = vst [vmem:[#allocation2 + $0x270] sm:$0xff] 0.0
    %1614 = vst [vmem:[#allocation2 + $0x278] sm:$0xff] 0.0
    %1615 = vst [vmem:[#allocation2 + $0x280] sm:$0x3] 0.0
    %1616 = vst [vmem:[#allocation2 + $0x288] sm:$0xff] 0.0
    %1617 = vst [vmem:[#allocation2 + $0x290] sm:$0xff] 0.0
    %1618 = vst [vmem:[#allocation2 + $0x298] sm:$0x3] 0.0
    %1619 = vst [vmem:[#allocation2 + $0x2a0] sm:$0xff] 0.0
    %1620 = vst [vmem:[#allocation2 + $0x2a8] sm:$0xff] 0.0
    %1621 = vst [vmem:[#allocation2 + $0x2b0] sm:$0x3] 0.0
    %1622 = vst [vmem:[#allocation2 + $0x2b8] sm:$0xff] 0.0
    %1623 = vst [vmem:[#allocation2 + $0x2c0] sm:$0xff] 0.0
    %1624 = vst [vmem:[#allocation2 + $0x2c8] sm:$0x3] 0.0
    %1625 = vst [vmem:[#allocation2 + $0x2d0] sm:$0xff] 0.0
    %1626 = vst [vmem:[#allocation2 + $0x2d8] sm:$0xff] 0.0
    %1627 = vst [vmem:[#allocation2 + $0x2e0] sm:$0x3] 0.0
    %1628 = vst [vmem:[#allocation2 + $0x2e8] sm:$0xff] 0.0
    %1629 = vst [vmem:[#allocation2 + $0x2f0] sm:$0xff] 0.0
    %1630 = vst [vmem:[#allocation2 + $0x2f8] sm:$0x3] 0.0
    %1631 = vst [vmem:[#allocation2 + $0x300] sm:$0xff] 0.0
    %1632 = vst [vmem:[#allocation2 + $0x308] sm:$0xff] 0.0
    %1633 = vst [vmem:[#allocation2 + $0x310] sm:$0x3] 0.0
    %1634 = vst [vmem:[#allocation2 + $0x318] sm:$0xff] 0.0
    %1635 = vst [vmem:[#allocation2 + $0x320] sm:$0xff] 0.0
    %1636 = vst [vmem:[#allocation2 + $0x328] sm:$0x3] 0.0
    %1637 = vst [vmem:[#allocation2 + $0x330] sm:$0xff] 0.0
    %1638 = vst [vmem:[#allocation2 + $0x338] sm:$0xff] 0.0
    %1639 = vst [vmem:[#allocation2 + $0x340] sm:$0x3] 0.0
    %1640 = vst [vmem:[#allocation2 + $0x348] sm:$0xff] 0.0
    %1641 = vst [vmem:[#allocation2 + $0x350] sm:$0xff] 0.0
    %1642 = vst [vmem:[#allocation2 + $0x358] sm:$0x3] 0.0
    %s1643 = scalar_lea.vmem [#allocation2], 24
    %1644 = vst [vmem:[%s1643 + $0x1] sm:$0xff] %v1471
    %1645 = vst [vmem:[%s1643 + $0x9] sm:$0xff] %v1472
    %1646 = vst [vmem:[%s1643 + $0x19] sm:$0xff] %v1473
    %1647 = vst [vmem:[%s1643 + $0x21] sm:$0xff] %v1474
    %1648 = vst [vmem:[%s1643 + $0x31] sm:$0xff] %v1475
    %1649 = vst [vmem:[%s1643 + $0x39] sm:$0xff] %v1476
    %1650 = vst [vmem:[%s1643 + $0x49] sm:$0xff] %v1477
    %1651 = vst [vmem:[%s1643 + $0x51] sm:$0xff] %v1478
    %1652 = vst [vmem:[%s1643 + $0x61] sm:$0xff] %v1479
    %1653 = vst [vmem:[%s1643 + $0x69] sm:$0xff] %v1480
    %1654 = vst [vmem:[%s1643 + $0x79] sm:$0xff] %v1481
    %1655 = vst [vmem:[%s1643 + $0x81] sm:$0xff] %v1482
    %1656 = vst [vmem:[%s1643 + $0x91] sm:$0xff] %v1483
    %1657 = vst [vmem:[%s1643 + $0x99] sm:$0xff] %v1484
    %1658 = vst [vmem:[%s1643 + $0xa9] sm:$0xff] %v1485
    %1659 = vst [vmem:[%s1643 + $0xb1] sm:$0xff] %v1486
    %1660 = vst [vmem:[%s1643 + $0xc1] sm:$0xff] %v1487
    %1661 = vst [vmem:[%s1643 + $0xc9] sm:$0xff] %v1488
    %1662 = vst [vmem:[%s1643 + $0xd9] sm:$0xff] %v1489
    %1663 = vst [vmem:[%s1643 + $0xe1] sm:$0xff] %v1490
    %1664 = vst [vmem:[%s1643 + $0xf1] sm:$0xff] %v1491
    %1665 = vst [vmem:[%s1643 + $0xf9] sm:$0xff] %v1492
    %1666 = vst [vmem:[%s1643 + $0x109] sm:$0xff] %v1493
    %1667 = vst [vmem:[%s1643 + $0x111] sm:$0xff] %v1494
    %1668 = vst [vmem:[%s1643 + $0x121] sm:$0xff] %v1495
    %1669 = vst [vmem:[%s1643 + $0x129] sm:$0xff] %v1496
    %1670 = vst [vmem:[%s1643 + $0x139] sm:$0xff] %v1497
    %1671 = vst [vmem:[%s1643 + $0x141] sm:$0xff] %v1498
    %1672 = vst [vmem:[%s1643 + $0x151] sm:$0xff] %v1499
    %1673 = vst [vmem:[%s1643 + $0x159] sm:$0xff] %v1500
    %1674 = vst [vmem:[%s1643 + $0x169] sm:$0xff] %v1501
    %1675 = vst [vmem:[%s1643 + $0x171] sm:$0xff] %v1502
    %1676 = vst [vmem:[%s1643 + $0x1b1] sm:$0xff] %v1503
    %1677 = vst [vmem:[%s1643 + $0x1b9] sm:$0xff] %v1504
    %1678 = vst [vmem:[%s1643 + $0x1c9] sm:$0xff] %v1505
    %1679 = vst [vmem:[%s1643 + $0x1d1] sm:$0xff] %v1506
    %1680 = vst [vmem:[%s1643 + $0x1e1] sm:$0xff] %v1507
    %1681 = vst [vmem:[%s1643 + $0x1e9] sm:$0xff] %v1508
    %1682 = vst [vmem:[%s1643 + $0x1f9] sm:$0xff] %v1509
    %1683 = vst [vmem:[%s1643 + $0x201] sm:$0xff] %v1510
    %1684 = vst [vmem:[%s1643 + $0x211] sm:$0xff] %v1511
    %1685 = vst [vmem:[%s1643 + $0x219] sm:$0xff] %v1512
    %1686 = vst [vmem:[%s1643 + $0x229] sm:$0xff] %v1513
    %1687 = vst [vmem:[%s1643 + $0x231] sm:$0xff] %v1514
    %1688 = vst [vmem:[%s1643 + $0x241] sm:$0xff] %v1515
    %1689 = vst [vmem:[%s1643 + $0x249] sm:$0xff] %v1516
    %1690 = vst [vmem:[%s1643 + $0x259] sm:$0xff] %v1517
    %1691 = vst [vmem:[%s1643 + $0x261] sm:$0xff] %v1518
    %1692 = vst [vmem:[%s1643 + $0x271] sm:$0xff] %v1519
    %1693 = vst [vmem:[%s1643 + $0x279] sm:$0xff] %v1520
    %1694 = vst [vmem:[%s1643 + $0x289] sm:$0xff] %v1521
    %1695 = vst [vmem:[%s1643 + $0x291] sm:$0xff] %v1522
    %1696 = vst [vmem:[%s1643 + $0x2a1] sm:$0xff] %v1523
    %1697 = vst [vmem:[%s1643 + $0x2a9] sm:$0xff] %v1524
    %1698 = vst [vmem:[%s1643 + $0x2b9] sm:$0xff] %v1525
    %1699 = vst [vmem:[%s1643 + $0x2c1] sm:$0xff] %v1526
    %1700 = vst [vmem:[%s1643 + $0x2d1] sm:$0xff] %v1527
    %1701 = vst [vmem:[%s1643 + $0x2d9] sm:$0xff] %v1528
    %1702 = vst [vmem:[%s1643 + $0x2e9] sm:$0xff] %v1529
    %1703 = vst [vmem:[%s1643 + $0x2f1] sm:$0xff] %v1530
    %1704 = vst [vmem:[%s1643 + $0x301] sm:$0xff] %v1531
    %1705 = vst [vmem:[%s1643 + $0x309] sm:$0xff] %v1532
    %1706 = vst [vmem:[%s1643 + $0x319] sm:$0xff] %v1533
    %1707 = vst [vmem:[%s1643 + $0x321] sm:$0xff] %v1534
    %v1708 = vld [vmem:[#allocation2] sm:$0xff]
    %v1709 = vld [vmem:[#allocation2 + $0x8] sm:$0xff]
    %v1710 = vld [vmem:[#allocation2 + $0x18] sm:$0xff]
    %v1711 = vld [vmem:[#allocation2 + $0x20] sm:$0xff]
    %v1712 = vld [vmem:[#allocation2 + $0x30] sm:$0xff]
    %v1713 = vld [vmem:[#allocation2 + $0x38] sm:$0xff]
    %v1714 = vld [vmem:[#allocation2 + $0x48] sm:$0xff]
    %v1715 = vld [vmem:[#allocation2 + $0x50] sm:$0xff]
    %v1716 = vld [vmem:[#allocation2 + $0x60] sm:$0xff]
    %v1717 = vld [vmem:[#allocation2 + $0x68] sm:$0xff]
    %v1718 = vld [vmem:[#allocation2 + $0x78] sm:$0xff]
    %v1719 = vld [vmem:[#allocation2 + $0x80] sm:$0xff]
    %v1720 = vld [vmem:[#allocation2 + $0x90] sm:$0xff]
    %v1721 = vld [vmem:[#allocation2 + $0x98] sm:$0xff]
    %v1722 = vld [vmem:[#allocation2 + $0xa8] sm:$0xff]
    %v1723 = vld [vmem:[#allocation2 + $0xb0] sm:$0xff]
    %v1724 = vld [vmem:[#allocation2 + $0xc0] sm:$0xff]
    %v1725 = vld [vmem:[#allocation2 + $0xc8] sm:$0xff]
    %v1726 = vld [vmem:[#allocation2 + $0xd8] sm:$0xff]
    %v1727 = vld [vmem:[#allocation2 + $0xe0] sm:$0xff]
    %v1728 = vld [vmem:[#allocation2 + $0xf0] sm:$0xff]
    %v1729 = vld [vmem:[#allocation2 + $0xf8] sm:$0xff]
    %v1730 = vld [vmem:[#allocation2 + $0x108] sm:$0xff]
    %v1731 = vld [vmem:[#allocation2 + $0x110] sm:$0xff]
    %v1732 = vld [vmem:[#allocation2 + $0x120] sm:$0xff]
    %v1733 = vld [vmem:[#allocation2 + $0x128] sm:$0xff]
    %v1734 = vld [vmem:[#allocation2 + $0x138] sm:$0xff]
    %v1735 = vld [vmem:[#allocation2 + $0x140] sm:$0xff]
    %v1736 = vld [vmem:[#allocation2 + $0x150] sm:$0xff]
    %v1737 = vld [vmem:[#allocation2 + $0x158] sm:$0xff]
    %v1738 = vld [vmem:[#allocation2 + $0x168] sm:$0xff]
    %v1739 = vld [vmem:[#allocation2 + $0x170] sm:$0xff]
    %v1740 = vld [vmem:[#allocation2 + $0x1b0] sm:$0xff]
    %v1741 = vld [vmem:[#allocation2 + $0x1b8] sm:$0xff]
    %v1742 = vld [vmem:[#allocation2 + $0x1c8] sm:$0xff]
    %v1743 = vld [vmem:[#allocation2 + $0x1d0] sm:$0xff]
    %v1744 = vld [vmem:[#allocation2 + $0x1e0] sm:$0xff]
    %v1745 = vld [vmem:[#allocation2 + $0x1e8] sm:$0xff]
    %v1746 = vld [vmem:[#allocation2 + $0x1f8] sm:$0xff]
    %v1747 = vld [vmem:[#allocation2 + $0x200] sm:$0xff]
    %v1748 = vld [vmem:[#allocation2 + $0x210] sm:$0xff]
    %v1749 = vld [vmem:[#allocation2 + $0x218] sm:$0xff]
    %v1750 = vld [vmem:[#allocation2 + $0x228] sm:$0xff]
    %v1751 = vld [vmem:[#allocation2 + $0x230] sm:$0xff]
    %v1752 = vld [vmem:[#allocation2 + $0x240] sm:$0xff]
    %v1753 = vld [vmem:[#allocation2 + $0x248] sm:$0xff]
    %v1754 = vld [vmem:[#allocation2 + $0x258] sm:$0xff]
    %v1755 = vld [vmem:[#allocation2 + $0x260] sm:$0xff]
    %v1756 = vld [vmem:[#allocation2 + $0x270] sm:$0xff]
    %v1757 = vld [vmem:[#allocation2 + $0x278] sm:$0xff]
    %v1758 = vld [vmem:[#allocation2 + $0x288] sm:$0xff]
    %v1759 = vld [vmem:[#allocation2 + $0x290] sm:$0xff]
    %v1760 = vld [vmem:[#allocation2 + $0x2a0] sm:$0xff]
    %v1761 = vld [vmem:[#allocation2 + $0x2a8] sm:$0xff]
    %v1762 = vld [vmem:[#allocation2 + $0x2b8] sm:$0xff]
    %v1763 = vld [vmem:[#allocation2 + $0x2c0] sm:$0xff]
    %v1764 = vld [vmem:[#allocation2 + $0x2d0] sm:$0xff]
    %v1765 = vld [vmem:[#allocation2 + $0x2d8] sm:$0xff]
    %v1766 = vld [vmem:[#allocation2 + $0x2e8] sm:$0xff]
    %v1767 = vld [vmem:[#allocation2 + $0x2f0] sm:$0xff]
    %v1768 = vld [vmem:[#allocation2 + $0x300] sm:$0xff]
    %v1769 = vld [vmem:[#allocation2 + $0x308] sm:$0xff]
    %v1770 = vld [vmem:[#allocation2 + $0x318] sm:$0xff]
    %v1771 = vld [vmem:[#allocation2 + $0x320] sm:$0xff]
    %v1772 = vpack.c.bf16 %v1709, %v1708
    %v1773 = vpack.c.bf16 %v1711, %v1710
    %v1774 = vpack.c.bf16 %v1713, %v1712
    %v1775 = vpack.c.bf16 %v1715, %v1714
    %v1776 = vpack.c.bf16 %v1717, %v1716
    %v1777 = vpack.c.bf16 %v1719, %v1718
    %v1778 = vpack.c.bf16 %v1721, %v1720
    %v1779 = vpack.c.bf16 %v1723, %v1722
    %v1780 = vpack.c.bf16 %v1725, %v1724
    %v1781 = vpack.c.bf16 %v1727, %v1726
    %v1782 = vpack.c.bf16 %v1729, %v1728
    %v1783 = vpack.c.bf16 %v1731, %v1730
    %v1784 = vpack.c.bf16 %v1733, %v1732
    %v1785 = vpack.c.bf16 %v1735, %v1734
    %v1786 = vpack.c.bf16 %v1737, %v1736
    %v1787 = vpack.c.bf16 %v1739, %v1738
    %v1788 = vpack.c.bf16 %v1741, %v1740
    %v1789 = vpack.c.bf16 %v1743, %v1742
    %v1790 = vpack.c.bf16 %v1745, %v1744
    %v1791 = vpack.c.bf16 %v1747, %v1746
    %v1792 = vpack.c.bf16 %v1749, %v1748
    %v1793 = vpack.c.bf16 %v1751, %v1750
    %v1794 = vpack.c.bf16 %v1753, %v1752
    %v1795 = vpack.c.bf16 %v1755, %v1754
    %v1796 = vpack.c.bf16 %v1757, %v1756
    %v1797 = vpack.c.bf16 %v1759, %v1758
    %v1798 = vpack.c.bf16 %v1761, %v1760
    %v1799 = vpack.c.bf16 %v1763, %v1762
    %v1800 = vpack.c.bf16 %v1765, %v1764
    %v1801 = vpack.c.bf16 %v1767, %v1766
    %v1802 = vpack.c.bf16 %v1769, %v1768
    %v1803 = vpack.c.bf16 %v1771, %v1770
    %v1804 = vld [vmem:[#allocation8] sm:$0xf]
    %v1805 = vld [vmem:[#allocation8 + $0x4] sm:$0xf]
    %v1806 = vld [vmem:[#allocation8 + $0x8] sm:$0xf]
    %v1807 = vld [vmem:[#allocation8 + $0xc] sm:$0xf]
    %v1808 = vld [vmem:[#allocation8 + $0x10] sm:$0xf]
    %v1809 = vld [vmem:[#allocation8 + $0x14] sm:$0xf]
    %v1810 = vld [vmem:[#allocation8 + $0x18] sm:$0xf]
    %v1811 = vld [vmem:[#allocation8 + $0x1c] sm:$0xf]
    %v1812 = vld [vmem:[#allocation8 + $0x20] sm:$0xf]
    %v1813 = vld [vmem:[#allocation8 + $0x24] sm:$0xf]
    %v1814 = vld [vmem:[#allocation8 + $0x28] sm:$0xf]
    %v1815 = vld [vmem:[#allocation8 + $0x2c] sm:$0xf]
    %v1816 = vld [vmem:[#allocation8 + $0x30] sm:$0xf]
    %v1817 = vld [vmem:[#allocation8 + $0x34] sm:$0xf]
    %v1818 = vld [vmem:[#allocation8 + $0x38] sm:$0xf]
    %v1819 = vld [vmem:[#allocation8 + $0x3c] sm:$0xf]
    %v1820 = vld [vmem:[#allocation2 + $0x1] sm:$0xff]
    %v1821 = vld [vmem:[#allocation2 + $0x9] sm:$0xff]
    %v1822 = vld [vmem:[#allocation2 + $0x19] sm:$0xff]
    %v1823 = vld [vmem:[#allocation2 + $0x21] sm:$0xff]
    %v1824 = vld [vmem:[#allocation2 + $0x31] sm:$0xff]
    %v1825 = vld [vmem:[#allocation2 + $0x39] sm:$0xff]
    %v1826 = vld [vmem:[#allocation2 + $0x49] sm:$0xff]
    %v1827 = vld [vmem:[#allocation2 + $0x51] sm:$0xff]
    %v1828 = vld [vmem:[#allocation2 + $0x61] sm:$0xff]
    %v1829 = vld [vmem:[#allocation2 + $0x69] sm:$0xff]
    %v1830 = vld [vmem:[#allocation2 + $0x79] sm:$0xff]
    %v1831 = vld [vmem:[#allocation2 + $0x81] sm:$0xff]
    %v1832 = vld [vmem:[#allocation2 + $0x91] sm:$0xff]
    %v1833 = vld [vmem:[#allocation2 + $0x99] sm:$0xff]
    %v1834 = vld [vmem:[#allocation2 + $0xa9] sm:$0xff]
    %v1835 = vld [vmem:[#allocation2 + $0xb1] sm:$0xff]
    %v1836 = vld [vmem:[#allocation2 + $0xc1] sm:$0xff]
    %v1837 = vld [vmem:[#allocation2 + $0xc9] sm:$0xff]
    %v1838 = vld [vmem:[#allocation2 + $0xd9] sm:$0xff]
    %v1839 = vld [vmem:[#allocation2 + $0xe1] sm:$0xff]
    %v1840 = vld [vmem:[#allocation2 + $0xf1] sm:$0xff]
    %v1841 = vld [vmem:[#allocation2 + $0xf9] sm:$0xff]
    %v1842 = vld [vmem:[#allocation2 + $0x109] sm:$0xff]
    %v1843 = vld [vmem:[#allocation2 + $0x111] sm:$0xff]
    %v1844 = vld [vmem:[#allocation2 + $0x121] sm:$0xff]
    %v1845 = vld [vmem:[#allocation2 + $0x129] sm:$0xff]
    %v1846 = vld [vmem:[#allocation2 + $0x139] sm:$0xff]
    %v1847 = vld [vmem:[#allocation2 + $0x141] sm:$0xff]
    %v1848 = vld [vmem:[#allocation2 + $0x151] sm:$0xff]
    %v1849 = vld [vmem:[#allocation2 + $0x159] sm:$0xff]
    %v1850 = vld [vmem:[#allocation2 + $0x169] sm:$0xff]
    %v1851 = vld [vmem:[#allocation2 + $0x171] sm:$0xff]
    %v1852 = vld [vmem:[#allocation2 + $0x1b1] sm:$0xff]
    %v1853 = vld [vmem:[#allocation2 + $0x1b9] sm:$0xff]
    %v1854 = vld [vmem:[#allocation2 + $0x1c9] sm:$0xff]
    %v1855 = vld [vmem:[#allocation2 + $0x1d1] sm:$0xff]
    %v1856 = vld [vmem:[#allocation2 + $0x1e1] sm:$0xff]
    %v1857 = vld [vmem:[#allocation2 + $0x1e9] sm:$0xff]
    %v1858 = vld [vmem:[#allocation2 + $0x1f9] sm:$0xff]
    %v1859 = vld [vmem:[#allocation2 + $0x201] sm:$0xff]
    %v1860 = vld [vmem:[#allocation2 + $0x211] sm:$0xff]
    %v1861 = vld [vmem:[#allocation2 + $0x219] sm:$0xff]
    %v1862 = vld [vmem:[#allocation2 + $0x229] sm:$0xff]
    %v1863 = vld [vmem:[#allocation2 + $0x231] sm:$0xff]
    %v1864 = vld [vmem:[#allocation2 + $0x241] sm:$0xff]
    %v1865 = vld [vmem:[#allocation2 + $0x249] sm:$0xff]
    %v1866 = vld [vmem:[#allocation2 + $0x259] sm:$0xff]
    %v1867 = vld [vmem:[#allocation2 + $0x261] sm:$0xff]
    %v1868 = vld [vmem:[#allocation2 + $0x271] sm:$0xff]
    %v1869 = vld [vmem:[#allocation2 + $0x279] sm:$0xff]
    %v1870 = vld [vmem:[#allocation2 + $0x289] sm:$0xff]
    %v1871 = vld [vmem:[#allocation2 + $0x291] sm:$0xff]
    %v1872 = vld [vmem:[#allocation2 + $0x2a1] sm:$0xff]
    %v1873 = vld [vmem:[#allocation2 + $0x2a9] sm:$0xff]
    %v1874 = vld [vmem:[#allocation2 + $0x2b9] sm:$0xff]
    %v1875 = vld [vmem:[#allocation2 + $0x2c1] sm:$0xff]
    %v1876 = vld [vmem:[#allocation2 + $0x2d1] sm:$0xff]
    %v1877 = vld [vmem:[#allocation2 + $0x2d9] sm:$0xff]
    %v1878 = vld [vmem:[#allocation2 + $0x2e9] sm:$0xff]
    %v1879 = vld [vmem:[#allocation2 + $0x2f1] sm:$0xff]
    %v1880 = vld [vmem:[#allocation2 + $0x301] sm:$0xff]
    %v1881 = vld [vmem:[#allocation2 + $0x309] sm:$0xff]
    %v1882 = vld [vmem:[#allocation2 + $0x319] sm:$0xff]
    %v1883 = vld [vmem:[#allocation2 + $0x321] sm:$0xff]
    %v1884 = vpack.c.bf16 %v1821, %v1820
    %v1885 = vpack.c.bf16 %v1823, %v1822
    %v1886 = vpack.c.bf16 %v1825, %v1824
    %v1887 = vpack.c.bf16 %v1827, %v1826
    %v1888 = vpack.c.bf16 %v1829, %v1828
    %v1889 = vpack.c.bf16 %v1831, %v1830
    %v1890 = vpack.c.bf16 %v1833, %v1832
    %v1891 = vpack.c.bf16 %v1835, %v1834
    %v1892 = vpack.c.bf16 %v1837, %v1836
    %v1893 = vpack.c.bf16 %v1839, %v1838
    %v1894 = vpack.c.bf16 %v1841, %v1840
    %v1895 = vpack.c.bf16 %v1843, %v1842
    %v1896 = vpack.c.bf16 %v1845, %v1844
    %v1897 = vpack.c.bf16 %v1847, %v1846
    %v1898 = vpack.c.bf16 %v1849, %v1848
    %v1899 = vpack.c.bf16 %v1851, %v1850
    %v1900 = vpack.c.bf16 %v1853, %v1852
    %v1901 = vpack.c.bf16 %v1855, %v1854
    %v1902 = vpack.c.bf16 %v1857, %v1856
    %v1903 = vpack.c.bf16 %v1859, %v1858
    %v1904 = vpack.c.bf16 %v1861, %v1860
    %v1905 = vpack.c.bf16 %v1863, %v1862
    %v1906 = vpack.c.bf16 %v1865, %v1864
    %v1907 = vpack.c.bf16 %v1867, %v1866
    %v1908 = vpack.c.bf16 %v1869, %v1868
    %v1909 = vpack.c.bf16 %v1871, %v1870
    %v1910 = vpack.c.bf16 %v1873, %v1872
    %v1911 = vpack.c.bf16 %v1875, %v1874
    %v1912 = vpack.c.bf16 %v1877, %v1876
    %v1913 = vpack.c.bf16 %v1879, %v1878
    %v1914 = vpack.c.bf16 %v1881, %v1880
    %v1915 = vpack.c.bf16 %v1883, %v1882
    %s1916 = scalar_lea.vmem [#allocation8], 64
    %v1917 = vld [vmem:[%s1916] sm:$0xf]
    %v1918 = vld [vmem:[%s1916 + $0x4] sm:$0xf]
    %v1919 = vld [vmem:[%s1916 + $0x8] sm:$0xf]
    %v1920 = vld [vmem:[%s1916 + $0xc] sm:$0xf]
    %v1921 = vld [vmem:[%s1916 + $0x10] sm:$0xf]
    %v1922 = vld [vmem:[%s1916 + $0x14] sm:$0xf]
    %v1923 = vld [vmem:[%s1916 + $0x18] sm:$0xf]
    %v1924 = vld [vmem:[%s1916 + $0x1c] sm:$0xf]
    %v1925 = vld [vmem:[%s1916 + $0x20] sm:$0xf]
    %v1926 = vld [vmem:[%s1916 + $0x24] sm:$0xf]
    %v1927 = vld [vmem:[%s1916 + $0x28] sm:$0xf]
    %v1928 = vld [vmem:[%s1916 + $0x2c] sm:$0xf]
    %v1929 = vld [vmem:[%s1916 + $0x30] sm:$0xf]
    %v1930 = vld [vmem:[%s1916 + $0x34] sm:$0xf]
    %v1931 = vld [vmem:[%s1916 + $0x38] sm:$0xf]
    %v1932 = vld [vmem:[%s1916 + $0x3c] sm:$0xf]
    %v1949 = vunpack.c.l.b16 %v1917
    %v1950 = vunpack.c.l.b16 %v1918
    %v1951 = vunpack.c.l.b16 %v1919
    %v1952 = vunpack.c.l.b16 %v1920
    %v1953 = vunpack.c.l.b16 %v1921
    %v1954 = vunpack.c.l.b16 %v1922
    %v1955 = vunpack.c.l.b16 %v1923
    %v1956 = vunpack.c.l.b16 %v1924
    %v1957 = vunpack.c.l.b16 %v1925
    %v1958 = vunpack.c.l.b16 %v1926
    %v1959 = vunpack.c.l.b16 %v1927
    %v1960 = vunpack.c.l.b16 %v1928
    %v1961 = vunpack.c.l.b16 %v1929
    %v1962 = vunpack.c.l.b16 %v1930
    %v1963 = vunpack.c.l.b16 %v1931
    %v1964 = vunpack.c.l.b16 %v1932
    %v1965 = vpack.c.b16 %v1950, %v1949
    %v1966 = vpack.c.b16 %v1952, %v1951
    %v1967 = vpack.c.b16 %v1954, %v1953
    %v1968 = vpack.c.b16 %v1956, %v1955
    %v1969 = vpack.c.b16 %v1958, %v1957
    %v1970 = vpack.c.b16 %v1960, %v1959
    %v1971 = vpack.c.b16 %v1962, %v1961
    %v1972 = vpack.c.b16 %v1964, %v1963
    %1981 = vmatprep.subr.bf16.mxu0 0
    %1982 = vmatpush1.bf16.msra.mxu0 %v1965
    %1983 = vmatprep.subr.bf16.mxu0 0
    %1984 = vmatpush1.bf16.msra.mxu0 %v1966
    %1985 = vmatprep.subr.bf16.mxu0 0
    %1986 = vmatpush1.bf16.msra.mxu0 %v1967
    %1987 = vmatprep.subr.bf16.mxu0 0
    %1988 = vmatpush1.bf16.msra.mxu0 %v1968
    %1989 = vmatprep.subr.bf16.mxu0 0
    %1990 = vmatpush1.bf16.msra.mxu0 %v1969
    %1991 = vmatprep.subr.bf16.mxu0 0
    %1992 = vmatpush1.bf16.msra.mxu0 %v1970
    %1993 = vmatprep.subr.bf16.mxu0 0
    %1994 = vmatpush1.bf16.msra.mxu0 %v1971
    %1995 = vmatprep.subr.bf16.mxu0 0
    %1996 = vmatpush1.bf16.msra.mxu0 %v1972
    %1997 = vmatprep.subr.bf16.mxu0 0
    %1998 = vmatpush1.bf16.msra.mxu0 0
    %1999 = vmatprep.subr.bf16.mxu0 0
    %2000 = vmatpush1.bf16.msra.mxu0 0
    %2001 = vmatprep.subr.bf16.mxu0 0
    %2002 = vmatpush1.bf16.msra.mxu0 0
    %2003 = vmatprep.subr.bf16.mxu0 0
    %2004 = vmatpush1.bf16.msra.mxu0 0
    %2005 = vmatprep.subr.bf16.mxu0 0
    %2006 = vmatpush1.bf16.msra.mxu0 0
    %2007 = vmatprep.subr.bf16.mxu0 0
    %2008 = vmatpush1.bf16.msra.mxu0 0
    %2009 = vmatprep.subr.bf16.mxu0 0
    %2010 = vmatpush1.bf16.msra.mxu0 0
    %2011 = vmatprep.subr.bf16.mxu0 0
    %2012 = vmatpush1.bf16.msra.mxu0 0
    %2013 = vmatprep.mubr.bf16.mxu0 0
    %2014 = vmatmul.mubr.bf16.gmra.mrb[0].mxu0 %v1884
    %v2015 = vpop.f32.mrb[0].mxu0
    %v2016 = vadd.f32 0.0, %v2015
    %v2017 = vpop.f32.mrb[0].mxu0
    %v2018 = vpop.f32.mrb[0].mxu0
    %v2019 = vadd.f32 0.0, %v2018
    %v2020 = vpop.f32.mrb[0].mxu0
    %2021 = vmatprep.mubr.bf16.mxu0 0
    %2022 = vmatmul.mubr.bf16.gmra.mrb[0].mxu0 %v1885
    %v2023 = vpop.f32.mrb[0].mxu0
    %v2024 = vadd.f32 0.0, %v2023
    %v2025 = vpop.f32.mrb[0].mxu0
    %v2026 = vpop.f32.mrb[0].mxu0
    %v2027 = vadd.f32 0.0, %v2026
    %v2028 = vpop.f32.mrb[0].mxu0
    %2029 = vmatprep.mubr.bf16.mxu0 0
    %2030 = vmatmul.mubr.bf16.gmra.mrb[0].mxu0 %v1886
    %v2031 = vpop.f32.mrb[0].mxu0
    %v2032 = vadd.f32 0.0, %v2031
    %v2033 = vpop.f32.mrb[0].mxu0
    %v2034 = vpop.f32.mrb[0].mxu0
    %v2035 = vadd.f32 0.0, %v2034
    %v2036 = vpop.f32.mrb[0].mxu0
    %2037 = vmatprep.mubr.bf16.mxu0 0
    %2038 = vmatmul.mubr.bf16.gmra.mrb[0].mxu0 %v1887
    %v2039 = vpop.f32.mrb[0].mxu0
    %v2040 = vadd.f32 0.0, %v2039
    %v2041 = vpop.f32.mrb[0].mxu0
    %v2042 = vpop.f32.mrb[0].mxu0
    %v2043 = vadd.f32 0.0, %v2042
    %v2044 = vpop.f32.mrb[0].mxu0
    %2045 = vmatprep.mubr.bf16.mxu0 0
    %2046 = vmatmul.mubr.bf16.gmra.mrb[0].mxu0 %v1888
    %v2047 = vpop.f32.mrb[0].mxu0
    %v2048 = vadd.f32 0.0, %v2047
    %v2049 = vpop.f32.mrb[0].mxu0
    %v2050 = vpop.f32.mrb[0].mxu0
    %v2051 = vadd.f32 0.0, %v2050
    %v2052 = vpop.f32.mrb[0].mxu0
    %2053 = vmatprep.mubr.bf16.mxu0 0
    %2054 = vmatmul.mubr.bf16.gmra.mrb[0].mxu0 %v1889
    %v2055 = vpop.f32.mrb[0].mxu0
    %v2056 = vadd.f32 0.0, %v2055
    %v2057 = vpop.f32.mrb[0].mxu0
    %v2058 = vpop.f32.mrb[0].mxu0
    %v2059 = vadd.f32 0.0, %v2058
    %v2060 = vpop.f32.mrb[0].mxu0
    %2061 = vmatprep.mubr.bf16.mxu0 0
    %2062 = vmatmul.mubr.bf16.gmra.mrb[0].mxu0 %v1890
    %v2063 = vpop.f32.mrb[0].mxu0
    %v2064 = vadd.f32 0.0, %v2063
    %v2065 = vpop.f32.mrb[0].mxu0
    %v2066 = vpop.f32.mrb[0].mxu0
    %v2067 = vadd.f32 0.0, %v2066
    %v2068 = vpop.f32.mrb[0].mxu0
    %2069 = vmatprep.mubr.bf16.mxu0 0
    %2070 = vmatmul.mubr.bf16.gmra.mrb[0].mxu0 %v1891
    %v2071 = vpop.f32.mrb[0].mxu0
    %v2072 = vadd.f32 0.0, %v2071
    %v2073 = vpop.f32.mrb[0].mxu0
    %v2074 = vpop.f32.mrb[0].mxu0
    %v2075 = vadd.f32 0.0, %v2074
    %v2076 = vpop.f32.mrb[0].mxu0
    %2077 = vmatprep.mubr.bf16.mxu0 0
    %2078 = vmatmul.mubr.bf16.gmra.mrb[0].mxu0 %v1892
    %v2079 = vpop.f32.mrb[0].mxu0
    %v2080 = vadd.f32 0.0, %v2079
    %v2081 = vpop.f32.mrb[0].mxu0
    %v2082 = vpop.f32.mrb[0].mxu0
    %v2083 = vadd.f32 0.0, %v2082
    %v2084 = vpop.f32.mrb[0].mxu0
    %2085 = vmatprep.mubr.bf16.mxu0 0
    %2086 = vmatmul.mubr.bf16.gmra.mrb[0].mxu0 %v1893
    %v2087 = vpop.f32.mrb[0].mxu0
    %v2088 = vadd.f32 0.0, %v2087
    %v2089 = vpop.f32.mrb[0].mxu0
    %v2090 = vpop.f32.mrb[0].mxu0
    %v2091 = vadd.f32 0.0, %v2090
    %v2092 = vpop.f32.mrb[0].mxu0
    %2093 = vmatprep.mubr.bf16.mxu0 0
    %2094 = vmatmul.mubr.bf16.gmra.mrb[0].mxu0 %v1894
    %v2095 = vpop.f32.mrb[0].mxu0
    %v2096 = vadd.f32 0.0, %v2095
    %v2097 = vpop.f32.mrb[0].mxu0
    %v2098 = vpop.f32.mrb[0].mxu0
    %v2099 = vadd.f32 0.0, %v2098
    %v2100 = vpop.f32.mrb[0].mxu0
    %2101 = vmatprep.mubr.bf16.mxu0 0
    %2102 = vmatmul.mubr.bf16.gmra.mrb[0].mxu0 %v1895
    %v2103 = vpop.f32.mrb[0].mxu0
    %v2104 = vadd.f32 0.0, %v2103
    %v2105 = vpop.f32.mrb[0].mxu0
    %v2106 = vpop.f32.mrb[0].mxu0
    %v2107 = vadd.f32 0.0, %v2106
    %v2108 = vpop.f32.mrb[0].mxu0
    %2109 = vmatprep.mubr.bf16.mxu0 0
    %2110 = vmatmul.mubr.bf16.gmra.mrb[0].mxu0 %v1896
    %v2111 = vpop.f32.mrb[0].mxu0
    %v2112 = vadd.f32 0.0, %v2111
    %v2113 = vpop.f32.mrb[0].mxu0
    %v2114 = vpop.f32.mrb[0].mxu0
    %v2115 = vadd.f32 0.0, %v2114
    %v2116 = vpop.f32.mrb[0].mxu0
    %2117 = vmatprep.mubr.bf16.mxu0 0
    %2118 = vmatmul.mubr.bf16.gmra.mrb[0].mxu0 %v1897
    %v2119 = vpop.f32.mrb[0].mxu0
    %v2120 = vadd.f32 0.0, %v2119
    %v2121 = vpop.f32.mrb[0].mxu0
    %v2122 = vpop.f32.mrb[0].mxu0
    %v2123 = vadd.f32 0.0, %v2122
    %v2124 = vpop.f32.mrb[0].mxu0
    %2125 = vmatprep.mubr.bf16.mxu0 0
    %2126 = vmatmul.mubr.bf16.gmra.mrb[0].mxu0 %v1898
    %v2127 = vpop.f32.mrb[0].mxu0
    %v2128 = vadd.f32 0.0, %v2127
    %v2129 = vpop.f32.mrb[0].mxu0
    %v2130 = vpop.f32.mrb[0].mxu0
    %v2131 = vadd.f32 0.0, %v2130
    %v2132 = vpop.f32.mrb[0].mxu0
    %2133 = vmatprep.mubr.bf16.mxu0 0
    %2134 = vmatmul.mubr.bf16.gmra.mrb[0].mxu0 %v1899
    %v2135 = vpop.f32.mrb[0].mxu0
    %v2136 = vadd.f32 0.0, %v2135
    %v2137 = vpop.f32.mrb[0].mxu0
    %v2138 = vpop.f32.mrb[0].mxu0
    %v2139 = vadd.f32 0.0, %v2138
    %v2140 = vpop.f32.mrb[0].mxu0
    %2141 = vmatprep.mubr.bf16.mxu0 0
    %2142 = vmatmul.mubr.bf16.gmra.mrb[0].mxu0 %v1900
    %v2143 = vpop.f32.mrb[0].mxu0
    %v2144 = vadd.f32 0.0, %v2143
    %v2145 = vpop.f32.mrb[0].mxu0
    %v2146 = vpop.f32.mrb[0].mxu0
    %v2147 = vadd.f32 0.0, %v2146
    %v2148 = vpop.f32.mrb[0].mxu0
    %2149 = vmatprep.mubr.bf16.mxu0 0
    %2150 = vmatmul.mubr.bf16.gmra.mrb[0].mxu0 %v1901
    %v2151 = vpop.f32.mrb[0].mxu0
    %v2152 = vadd.f32 0.0, %v2151
    %v2153 = vpop.f32.mrb[0].mxu0
    %v2154 = vpop.f32.mrb[0].mxu0
    %v2155 = vadd.f32 0.0, %v2154
    %v2156 = vpop.f32.mrb[0].mxu0
    %2157 = vmatprep.mubr.bf16.mxu0 0
    %2158 = vmatmul.mubr.bf16.gmra.mrb[0].mxu0 %v1902
    %v2159 = vpop.f32.mrb[0].mxu0
    %v2160 = vadd.f32 0.0, %v2159
    %v2161 = vpop.f32.mrb[0].mxu0
    %v2162 = vpop.f32.mrb[0].mxu0
    %v2163 = vadd.f32 0.0, %v2162
    %v2164 = vpop.f32.mrb[0].mxu0
    %2165 = vmatprep.mubr.bf16.mxu0 0
    %2166 = vmatmul.mubr.bf16.gmra.mrb[0].mxu0 %v1903
    %v2167 = vpop.f32.mrb[0].mxu0
    %v2168 = vadd.f32 0.0, %v2167
    %v2169 = vpop.f32.mrb[0].mxu0
    %v2170 = vpop.f32.mrb[0].mxu0
    %v2171 = vadd.f32 0.0, %v2170
    %v2172 = vpop.f32.mrb[0].mxu0
    %2173 = vmatprep.mubr.bf16.mxu0 0
    %2174 = vmatmul.mubr.bf16.gmra.mrb[0].mxu0 %v1904
    %v2175 = vpop.f32.mrb[0].mxu0
    %v2176 = vadd.f32 0.0, %v2175
    %v2177 = vpop.f32.mrb[0].mxu0
    %v2178 = vpop.f32.mrb[0].mxu0
    %v2179 = vadd.f32 0.0, %v2178
    %v2180 = vpop.f32.mrb[0].mxu0
    %2181 = vmatprep.mubr.bf16.mxu0 0
    %2182 = vmatmul.mubr.bf16.gmra.mrb[0].mxu0 %v1905
    %v2183 = vpop.f32.mrb[0].mxu0
    %v2184 = vadd.f32 0.0, %v2183
    %v2185 = vpop.f32.mrb[0].mxu0
    %v2186 = vpop.f32.mrb[0].mxu0
    %v2187 = vadd.f32 0.0, %v2186
    %v2188 = vpop.f32.mrb[0].mxu0
    %2189 = vmatprep.mubr.bf16.mxu0 0
    %2190 = vmatmul.mubr.bf16.gmra.mrb[0].mxu0 %v1906
    %v2191 = vpop.f32.mrb[0].mxu0
    %v2192 = vadd.f32 0.0, %v2191
    %v2193 = vpop.f32.mrb[0].mxu0
    %v2194 = vpop.f32.mrb[0].mxu0
    %v2195 = vadd.f32 0.0, %v2194
    %v2196 = vpop.f32.mrb[0].mxu0
    %2197 = vmatprep.mubr.bf16.mxu0 0
    %2198 = vmatmul.mubr.bf16.gmra.mrb[0].mxu0 %v1907
    %v2199 = vpop.f32.mrb[0].mxu0
    %v2200 = vadd.f32 0.0, %v2199
    %v2201 = vpop.f32.mrb[0].mxu0
    %v2202 = vpop.f32.mrb[0].mxu0
    %v2203 = vadd.f32 0.0, %v2202
    %v2204 = vpop.f32.mrb[0].mxu0
    %2205 = vmatprep.mubr.bf16.mxu0 0
    %2206 = vmatmul.mubr.bf16.gmra.mrb[0].mxu0 %v1908
    %v2207 = vpop.f32.mrb[0].mxu0
    %v2208 = vadd.f32 0.0, %v2207
    %v2209 = vpop.f32.mrb[0].mxu0
    %v2210 = vpop.f32.mrb[0].mxu0
    %v2211 = vadd.f32 0.0, %v2210
    %v2212 = vpop.f32.mrb[0].mxu0
    %2213 = vmatprep.mubr.bf16.mxu0 0
    %2214 = vmatmul.mubr.bf16.gmra.mrb[0].mxu0 %v1909
    %v2215 = vpop.f32.mrb[0].mxu0
    %v2216 = vadd.f32 0.0, %v2215
    %v2217 = vpop.f32.mrb[0].mxu0
    %v2218 = vpop.f32.mrb[0].mxu0
    %v2219 = vadd.f32 0.0, %v2218
    %v2220 = vpop.f32.mrb[0].mxu0
    %2221 = vmatprep.mubr.bf16.mxu0 0
    %2222 = vmatmul.mubr.bf16.gmra.mrb[0].mxu0 %v1910
    %v2223 = vpop.f32.mrb[0].mxu0
    %v2224 = vadd.f32 0.0, %v2223
    %v2225 = vpop.f32.mrb[0].mxu0
    %v2226 = vpop.f32.mrb[0].mxu0
    %v2227 = vadd.f32 0.0, %v2226
    %v2228 = vpop.f32.mrb[0].mxu0
    %2229 = vmatprep.mubr.bf16.mxu0 0
    %2230 = vmatmul.mubr.bf16.gmra.mrb[0].mxu0 %v1911
    %v2231 = vpop.f32.mrb[0].mxu0
    %v2232 = vadd.f32 0.0, %v2231
    %v2233 = vpop.f32.mrb[0].mxu0
    %v2234 = vpop.f32.mrb[0].mxu0
    %v2235 = vadd.f32 0.0, %v2234
    %v2236 = vpop.f32.mrb[0].mxu0
    %2237 = vmatprep.mubr.bf16.mxu0 0
    %2238 = vmatmul.mubr.bf16.gmra.mrb[0].mxu0 %v1912
    %v2239 = vpop.f32.mrb[0].mxu0
    %v2240 = vadd.f32 0.0, %v2239
    %v2241 = vpop.f32.mrb[0].mxu0
    %v2242 = vpop.f32.mrb[0].mxu0
    %v2243 = vadd.f32 0.0, %v2242
    %v2244 = vpop.f32.mrb[0].mxu0
    %2245 = vmatprep.mubr.bf16.mxu0 0
    %2246 = vmatmul.mubr.bf16.gmra.mrb[0].mxu0 %v1913
    %v2247 = vpop.f32.mrb[0].mxu0
    %v2248 = vadd.f32 0.0, %v2247
    %v2249 = vpop.f32.mrb[0].mxu0
    %v2250 = vpop.f32.mrb[0].mxu0
    %v2251 = vadd.f32 0.0, %v2250
    %v2252 = vpop.f32.mrb[0].mxu0
    %2253 = vmatprep.mubr.bf16.mxu0 0
    %2254 = vmatmul.mubr.bf16.gmra.mrb[0].mxu0 %v1914
    %v2255 = vpop.f32.mrb[0].mxu0
    %v2256 = vadd.f32 0.0, %v2255
    %v2257 = vpop.f32.mrb[0].mxu0
    %v2258 = vpop.f32.mrb[0].mxu0
    %v2259 = vadd.f32 0.0, %v2258
    %v2260 = vpop.f32.mrb[0].mxu0
    %2261 = vmatprep.mubr.bf16.mxu0 0
    %2262 = vmatmul.mubr.bf16.gmra.mrb[0].mxu0 %v1915
    %v2263 = vpop.f32.mrb[0].mxu0
    %v2264 = vadd.f32 0.0, %v2263
    %v2265 = vpop.f32.mrb[0].mxu0
    %v2266 = vpop.f32.mrb[0].mxu0
    %v2267 = vadd.f32 0.0, %v2266
    %v2268 = vpop.f32.mrb[0].mxu0
    %2269 = vdwg.mxu0
    %v2286 = vunpack.c.l.b16 %v1804
    %v2287 = vunpack.c.l.b16 %v1805
    %v2288 = vunpack.c.l.b16 %v1806
    %v2289 = vunpack.c.l.b16 %v1807
    %v2290 = vunpack.c.l.b16 %v1808
    %v2291 = vunpack.c.l.b16 %v1809
    %v2292 = vunpack.c.l.b16 %v1810
    %v2293 = vunpack.c.l.b16 %v1811
    %v2294 = vunpack.c.l.b16 %v1812
    %v2295 = vunpack.c.l.b16 %v1813
    %v2296 = vunpack.c.l.b16 %v1814
    %v2297 = vunpack.c.l.b16 %v1815
    %v2298 = vunpack.c.l.b16 %v1816
    %v2299 = vunpack.c.l.b16 %v1817
    %v2300 = vunpack.c.l.b16 %v1818
    %v2301 = vunpack.c.l.b16 %v1819
    %v2302 = vpack.c.b16 %v2287, %v2286
    %v2303 = vpack.c.b16 %v2289, %v2288
    %v2304 = vpack.c.b16 %v2291, %v2290
    %v2305 = vpack.c.b16 %v2293, %v2292
    %v2306 = vpack.c.b16 %v2295, %v2294
    %v2307 = vpack.c.b16 %v2297, %v2296
    %v2308 = vpack.c.b16 %v2299, %v2298
    %v2309 = vpack.c.b16 %v2301, %v2300
    %2318 = vmatprep.subr.bf16.mxu0 0
    %2319 = vmatpush1.bf16.msra.mxu0 %v2302
    %2320 = vmatprep.subr.bf16.mxu0 0
    %2321 = vmatpush1.bf16.msra.mxu0 %v2303
    %2322 = vmatprep.subr.bf16.mxu0 0
    %2323 = vmatpush1.bf16.msra.mxu0 %v2304
    %2324 = vmatprep.subr.bf16.mxu0 0
    %2325 = vmatpush1.bf16.msra.mxu0 %v2305
    %2326 = vmatprep.subr.bf16.mxu0 0
    %2327 = vmatpush1.bf16.msra.mxu0 %v2306
    %2328 = vmatprep.subr.bf16.mxu0 0
    %2329 = vmatpush1.bf16.msra.mxu0 %v2307
    %2330 = vmatprep.subr.bf16.mxu0 0
    %2331 = vmatpush1.bf16.msra.mxu0 %v2308
    %2332 = vmatprep.subr.bf16.mxu0 0
    %2333 = vmatpush1.bf16.msra.mxu0 %v2309
    %2334 = vmatprep.subr.bf16.mxu0 0
    %2335 = vmatpush1.bf16.msra.mxu0 0
    %2336 = vmatprep.subr.bf16.mxu0 0
    %2337 = vmatpush1.bf16.msra.mxu0 0
    %2338 = vmatprep.subr.bf16.mxu0 0
    %2339 = vmatpush1.bf16.msra.mxu0 0
    %2340 = vmatprep.subr.bf16.mxu0 0
    %2341 = vmatpush1.bf16.msra.mxu0 0
    %2342 = vmatprep.subr.bf16.mxu0 0
    %2343 = vmatpush1.bf16.msra.mxu0 0
    %2344 = vmatprep.subr.bf16.mxu0 0
    %2345 = vmatpush1.bf16.msra.mxu0 0
    %2346 = vmatprep.subr.bf16.mxu0 0
    %2347 = vmatpush1.bf16.msra.mxu0 0
    %2348 = vmatprep.subr.bf16.mxu0 0
    %2349 = vmatpush1.bf16.msra.mxu0 0
    %2350 = vmatprep.mubr.bf16.mxu0 0
    %2351 = vmatmul.mubr.bf16.gmra.mrb[0].mxu0 %v1772
    %v2352 = vpop.f32.mrb[0].mxu0
    %v2353 = vadd.f32 %v2016, %v2352
    %v2354 = vpop.f32.mrb[0].mxu0
    %v2355 = vpop.f32.mrb[0].mxu0
    %v2356 = vadd.f32 %v2019, %v2355
    %v2357 = vpop.f32.mrb[0].mxu0
    %2358 = vmatprep.mubr.bf16.mxu0 0
    %2359 = vmatmul.mubr.bf16.gmra.mrb[0].mxu0 %v1773
    %v2360 = vpop.f32.mrb[0].mxu0
    %v2361 = vadd.f32 %v2024, %v2360
    %v2362 = vpop.f32.mrb[0].mxu0
    %v2363 = vpop.f32.mrb[0].mxu0
    %v2364 = vadd.f32 %v2027, %v2363
    %v2365 = vpop.f32.mrb[0].mxu0
    %2366 = vmatprep.mubr.bf16.mxu0 0
    %2367 = vmatmul.mubr.bf16.gmra.mrb[0].mxu0 %v1774
    %v2368 = vpop.f32.mrb[0].mxu0
    %v2369 = vadd.f32 %v2032, %v2368
    %v2370 = vpop.f32.mrb[0].mxu0
    %v2371 = vpop.f32.mrb[0].mxu0
    %v2372 = vadd.f32 %v2035, %v2371
    %v2373 = vpop.f32.mrb[0].mxu0
    %2374 = vmatprep.mubr.bf16.mxu0 0
    %2375 = vmatmul.mubr.bf16.gmra.mrb[0].mxu0 %v1775
    %v2376 = vpop.f32.mrb[0].mxu0
    %v2377 = vadd.f32 %v2040, %v2376
    %v2378 = vpop.f32.mrb[0].mxu0
    %v2379 = vpop.f32.mrb[0].mxu0
    %v2380 = vadd.f32 %v2043, %v2379
    %v2381 = vpop.f32.mrb[0].mxu0
    %2382 = vmatprep.mubr.bf16.mxu0 0
    %2383 = vmatmul.mubr.bf16.gmra.mrb[0].mxu0 %v1776
    %v2384 = vpop.f32.mrb[0].mxu0
    %v2385 = vadd.f32 %v2048, %v2384
    %v2386 = vpop.f32.mrb[0].mxu0
    %v2387 = vpop.f32.mrb[0].mxu0
    %v2388 = vadd.f32 %v2051, %v2387
    %v2389 = vpop.f32.mrb[0].mxu0
    %2390 = vmatprep.mubr.bf16.mxu0 0
    %2391 = vmatmul.mubr.bf16.gmra.mrb[0].mxu0 %v1777
    %v2392 = vpop.f32.mrb[0].mxu0
    %v2393 = vadd.f32 %v2056, %v2392
    %v2394 = vpop.f32.mrb[0].mxu0
    %v2395 = vpop.f32.mrb[0].mxu0
    %v2396 = vadd.f32 %v2059, %v2395
    %v2397 = vpop.f32.mrb[0].mxu0
    %2398 = vmatprep.mubr.bf16.mxu0 0
    %2399 = vmatmul.mubr.bf16.gmra.mrb[0].mxu0 %v1778
    %v2400 = vpop.f32.mrb[0].mxu0
    %v2401 = vadd.f32 %v2064, %v2400
    %v2402 = vpop.f32.mrb[0].mxu0
    %v2403 = vpop.f32.mrb[0].mxu0
    %v2404 = vadd.f32 %v2067, %v2403
    %v2405 = vpop.f32.mrb[0].mxu0
    %2406 = vmatprep.mubr.bf16.mxu0 0
    %2407 = vmatmul.mubr.bf16.gmra.mrb[0].mxu0 %v1779
    %v2408 = vpop.f32.mrb[0].mxu0
    %v2409 = vadd.f32 %v2072, %v2408
    %v2410 = vpop.f32.mrb[0].mxu0
    %v2411 = vpop.f32.mrb[0].mxu0
    %v2412 = vadd.f32 %v2075, %v2411
    %v2413 = vpop.f32.mrb[0].mxu0
    %2414 = vmatprep.mubr.bf16.mxu0 0
    %2415 = vmatmul.mubr.bf16.gmra.mrb[0].mxu0 %v1780
    %v2416 = vpop.f32.mrb[0].mxu0
    %v2417 = vadd.f32 %v2080, %v2416
    %v2418 = vpop.f32.mrb[0].mxu0
    %v2419 = vpop.f32.mrb[0].mxu0
    %v2420 = vadd.f32 %v2083, %v2419
    %v2421 = vpop.f32.mrb[0].mxu0
    %2422 = vmatprep.mubr.bf16.mxu0 0
    %2423 = vmatmul.mubr.bf16.gmra.mrb[0].mxu0 %v1781
    %v2424 = vpop.f32.mrb[0].mxu0
    %v2425 = vadd.f32 %v2088, %v2424
    %v2426 = vpop.f32.mrb[0].mxu0
    %v2427 = vpop.f32.mrb[0].mxu0
    %v2428 = vadd.f32 %v2091, %v2427
    %v2429 = vpop.f32.mrb[0].mxu0
    %2430 = vmatprep.mubr.bf16.mxu0 0
    %2431 = vmatmul.mubr.bf16.gmra.mrb[0].mxu0 %v1782
    %v2432 = vpop.f32.mrb[0].mxu0
    %v2433 = vadd.f32 %v2096, %v2432
    %v2434 = vpop.f32.mrb[0].mxu0
    %v2435 = vpop.f32.mrb[0].mxu0
    %v2436 = vadd.f32 %v2099, %v2435
    %v2437 = vpop.f32.mrb[0].mxu0
    %2438 = vmatprep.mubr.bf16.mxu0 0
    %2439 = vmatmul.mubr.bf16.gmra.mrb[0].mxu0 %v1783
    %v2440 = vpop.f32.mrb[0].mxu0
    %v2441 = vadd.f32 %v2104, %v2440
    %v2442 = vpop.f32.mrb[0].mxu0
    %v2443 = vpop.f32.mrb[0].mxu0
    %v2444 = vadd.f32 %v2107, %v2443
    %v2445 = vpop.f32.mrb[0].mxu0
    %2446 = vmatprep.mubr.bf16.mxu0 0
    %2447 = vmatmul.mubr.bf16.gmra.mrb[0].mxu0 %v1784
    %v2448 = vpop.f32.mrb[0].mxu0
    %v2449 = vadd.f32 %v2112, %v2448
    %v2450 = vpop.f32.mrb[0].mxu0
    %v2451 = vpop.f32.mrb[0].mxu0
    %v2452 = vadd.f32 %v2115, %v2451
    %v2453 = vpop.f32.mrb[0].mxu0
    %2454 = vmatprep.mubr.bf16.mxu0 0
    %2455 = vmatmul.mubr.bf16.gmra.mrb[0].mxu0 %v1785
    %v2456 = vpop.f32.mrb[0].mxu0
    %v2457 = vadd.f32 %v2120, %v2456
    %v2458 = vpop.f32.mrb[0].mxu0
    %v2459 = vpop.f32.mrb[0].mxu0
    %v2460 = vadd.f32 %v2123, %v2459
    %v2461 = vpop.f32.mrb[0].mxu0
    %2462 = vmatprep.mubr.bf16.mxu0 0
    %2463 = vmatmul.mubr.bf16.gmra.mrb[0].mxu0 %v1786
    %v2464 = vpop.f32.mrb[0].mxu0
    %v2465 = vadd.f32 %v2128, %v2464
    %v2466 = vpop.f32.mrb[0].mxu0
    %v2467 = vpop.f32.mrb[0].mxu0
    %v2468 = vadd.f32 %v2131, %v2467
    %v2469 = vpop.f32.mrb[0].mxu0
    %2470 = vmatprep.mubr.bf16.mxu0 0
    %2471 = vmatmul.mubr.bf16.gmra.mrb[0].mxu0 %v1787
    %v2472 = vpop.f32.mrb[0].mxu0
    %v2473 = vadd.f32 %v2136, %v2472
    %v2474 = vpop.f32.mrb[0].mxu0
    %v2475 = vpop.f32.mrb[0].mxu0
    %v2476 = vadd.f32 %v2139, %v2475
    %v2477 = vpop.f32.mrb[0].mxu0
    %2478 = vmatprep.mubr.bf16.mxu0 0
    %2479 = vmatmul.mubr.bf16.gmra.mrb[0].mxu0 %v1788
    %v2480 = vpop.f32.mrb[0].mxu0
    %v2481 = vadd.f32 %v2144, %v2480
    %v2482 = vpop.f32.mrb[0].mxu0
    %v2483 = vpop.f32.mrb[0].mxu0
    %v2484 = vadd.f32 %v2147, %v2483
    %v2485 = vpop.f32.mrb[0].mxu0
    %2486 = vmatprep.mubr.bf16.mxu0 0
    %2487 = vmatmul.mubr.bf16.gmra.mrb[0].mxu0 %v1789
    %v2488 = vpop.f32.mrb[0].mxu0
    %v2489 = vadd.f32 %v2152, %v2488
    %v2490 = vpop.f32.mrb[0].mxu0
    %v2491 = vpop.f32.mrb[0].mxu0
    %v2492 = vadd.f32 %v2155, %v2491
    %v2493 = vpop.f32.mrb[0].mxu0
    %2494 = vmatprep.mubr.bf16.mxu0 0
    %2495 = vmatmul.mubr.bf16.gmra.mrb[0].mxu0 %v1790
    %v2496 = vpop.f32.mrb[0].mxu0
    %v2497 = vadd.f32 %v2160, %v2496
    %v2498 = vpop.f32.mrb[0].mxu0
    %v2499 = vpop.f32.mrb[0].mxu0
    %v2500 = vadd.f32 %v2163, %v2499
    %v2501 = vpop.f32.mrb[0].mxu0
    %2502 = vmatprep.mubr.bf16.mxu0 0
    %2503 = vmatmul.mubr.bf16.gmra.mrb[0].mxu0 %v1791
    %v2504 = vpop.f32.mrb[0].mxu0
    %v2505 = vadd.f32 %v2168, %v2504
    %v2506 = vpop.f32.mrb[0].mxu0
    %v2507 = vpop.f32.mrb[0].mxu0
    %v2508 = vadd.f32 %v2171, %v2507
    %v2509 = vpop.f32.mrb[0].mxu0
    %2510 = vmatprep.mubr.bf16.mxu0 0
    %2511 = vmatmul.mubr.bf16.gmra.mrb[0].mxu0 %v1792
    %v2512 = vpop.f32.mrb[0].mxu0
    %v2513 = vadd.f32 %v2176, %v2512
    %v2514 = vpop.f32.mrb[0].mxu0
    %v2515 = vpop.f32.mrb[0].mxu0
    %v2516 = vadd.f32 %v2179, %v2515
    %v2517 = vpop.f32.mrb[0].mxu0
    %2518 = vmatprep.mubr.bf16.mxu0 0
    %2519 = vmatmul.mubr.bf16.gmra.mrb[0].mxu0 %v1793
    %v2520 = vpop.f32.mrb[0].mxu0
    %v2521 = vadd.f32 %v2184, %v2520
    %v2522 = vpop.f32.mrb[0].mxu0
    %v2523 = vpop.f32.mrb[0].mxu0
    %v2524 = vadd.f32 %v2187, %v2523
    %v2525 = vpop.f32.mrb[0].mxu0
    %2526 = vmatprep.mubr.bf16.mxu0 0
    %2527 = vmatmul.mubr.bf16.gmra.mrb[0].mxu0 %v1794
    %v2528 = vpop.f32.mrb[0].mxu0
    %v2529 = vadd.f32 %v2192, %v2528
    %v2530 = vpop.f32.mrb[0].mxu0
    %v2531 = vpop.f32.mrb[0].mxu0
    %v2532 = vadd.f32 %v2195, %v2531
    %v2533 = vpop.f32.mrb[0].mxu0
    %2534 = vmatprep.mubr.bf16.mxu0 0
    %2535 = vmatmul.mubr.bf16.gmra.mrb[0].mxu0 %v1795
    %v2536 = vpop.f32.mrb[0].mxu0
    %v2537 = vadd.f32 %v2200, %v2536
    %v2538 = vpop.f32.mrb[0].mxu0
    %v2539 = vpop.f32.mrb[0].mxu0
    %v2540 = vadd.f32 %v2203, %v2539
    %v2541 = vpop.f32.mrb[0].mxu0
    %2542 = vmatprep.mubr.bf16.mxu0 0
    %2543 = vmatmul.mubr.bf16.gmra.mrb[0].mxu0 %v1796
    %v2544 = vpop.f32.mrb[0].mxu0
    %v2545 = vadd.f32 %v2208, %v2544
    %v2546 = vpop.f32.mrb[0].mxu0
    %v2547 = vpop.f32.mrb[0].mxu0
    %v2548 = vadd.f32 %v2211, %v2547
    %v2549 = vpop.f32.mrb[0].mxu0
    %2550 = vmatprep.mubr.bf16.mxu0 0
    %2551 = vmatmul.mubr.bf16.gmra.mrb[0].mxu0 %v1797
    %v2552 = vpop.f32.mrb[0].mxu0
    %v2553 = vadd.f32 %v2216, %v2552
    %v2554 = vpop.f32.mrb[0].mxu0
    %v2555 = vpop.f32.mrb[0].mxu0
    %v2556 = vadd.f32 %v2219, %v2555
    %v2557 = vpop.f32.mrb[0].mxu0
    %2558 = vmatprep.mubr.bf16.mxu0 0
    %2559 = vmatmul.mubr.bf16.gmra.mrb[0].mxu0 %v1798
    %v2560 = vpop.f32.mrb[0].mxu0
    %v2561 = vadd.f32 %v2224, %v2560
    %v2562 = vpop.f32.mrb[0].mxu0
    %v2563 = vpop.f32.mrb[0].mxu0
    %v2564 = vadd.f32 %v2227, %v2563
    %v2565 = vpop.f32.mrb[0].mxu0
    %2566 = vmatprep.mubr.bf16.mxu0 0
    %2567 = vmatmul.mubr.bf16.gmra.mrb[0].mxu0 %v1799
    %v2568 = vpop.f32.mrb[0].mxu0
    %v2569 = vadd.f32 %v2232, %v2568
    %v2570 = vpop.f32.mrb[0].mxu0
    %v2571 = vpop.f32.mrb[0].mxu0
    %v2572 = vadd.f32 %v2235, %v2571
    %v2573 = vpop.f32.mrb[0].mxu0
    %2574 = vmatprep.mubr.bf16.mxu0 0
    %2575 = vmatmul.mubr.bf16.gmra.mrb[0].mxu0 %v1800
    %v2576 = vpop.f32.mrb[0].mxu0
    %v2577 = vadd.f32 %v2240, %v2576
    %v2578 = vpop.f32.mrb[0].mxu0
    %v2579 = vpop.f32.mrb[0].mxu0
    %v2580 = vadd.f32 %v2243, %v2579
    %v2581 = vpop.f32.mrb[0].mxu0
    %2582 = vmatprep.mubr.bf16.mxu0 0
    %2583 = vmatmul.mubr.bf16.gmra.mrb[0].mxu0 %v1801
    %v2584 = vpop.f32.mrb[0].mxu0
    %v2585 = vadd.f32 %v2248, %v2584
    %v2586 = vpop.f32.mrb[0].mxu0
    %v2587 = vpop.f32.mrb[0].mxu0
    %v2588 = vadd.f32 %v2251, %v2587
    %v2589 = vpop.f32.mrb[0].mxu0
    %2590 = vmatprep.mubr.bf16.mxu0 0
    %2591 = vmatmul.mubr.bf16.gmra.mrb[0].mxu0 %v1802
    %v2592 = vpop.f32.mrb[0].mxu0
    %v2593 = vadd.f32 %v2256, %v2592
    %v2594 = vpop.f32.mrb[0].mxu0
    %v2595 = vpop.f32.mrb[0].mxu0
    %v2596 = vadd.f32 %v2259, %v2595
    %v2597 = vpop.f32.mrb[0].mxu0
    %2598 = vmatprep.mubr.bf16.mxu0 0
    %2599 = vmatmul.mubr.bf16.gmra.mrb[0].mxu0 %v1803
    %v2600 = vpop.f32.mrb[0].mxu0
    %v2601 = vadd.f32 %v2264, %v2600
    %v2602 = vpop.f32.mrb[0].mxu0
    %v2603 = vpop.f32.mrb[0].mxu0
    %v2604 = vadd.f32 %v2267, %v2603
    %v2605 = vpop.f32.mrb[0].mxu0
    %2606 = vdwg.mxu0
    %v2607 = vld [vmem:[#allocation2 + $0x2] sm:$0xff]
    %v2608 = vld [vmem:[#allocation2 + $0xa] sm:$0xff]
    %v2609 = vld [vmem:[#allocation2 + $0x1a] sm:$0xff]
    %v2610 = vld [vmem:[#allocation2 + $0x22] sm:$0xff]
    %v2611 = vld [vmem:[#allocation2 + $0x32] sm:$0xff]
    %v2612 = vld [vmem:[#allocation2 + $0x3a] sm:$0xff]
    %v2613 = vld [vmem:[#allocation2 + $0x4a] sm:$0xff]
    %v2614 = vld [vmem:[#allocation2 + $0x52] sm:$0xff]
    %v2615 = vld [vmem:[#allocation2 + $0x62] sm:$0xff]
    %v2616 = vld [vmem:[#allocation2 + $0x6a] sm:$0xff]
    %v2617 = vld [vmem:[#allocation2 + $0x7a] sm:$0xff]
    %v2618 = vld [vmem:[#allocation2 + $0x82] sm:$0xff]
    %v2619 = vld [vmem:[#allocation2 + $0x92] sm:$0xff]
    %v2620 = vld [vmem:[#allocation2 + $0x9a] sm:$0xff]
    %v2621 = vld [vmem:[#allocation2 + $0xaa] sm:$0xff]
    %v2622 = vld [vmem:[#allocation2 + $0xb2] sm:$0xff]
    %v2623 = vld [vmem:[#allocation2 + $0xc2] sm:$0xff]
    %v2624 = vld [vmem:[#allocation2 + $0xca] sm:$0xff]
    %v2625 = vld [vmem:[#allocation2 + $0xda] sm:$0xff]
    %v2626 = vld [vmem:[#allocation2 + $0xe2] sm:$0xff]
    %v2627 = vld [vmem:[#allocation2 + $0xf2] sm:$0xff]
    %v2628 = vld [vmem:[#allocation2 + $0xfa] sm:$0xff]
    %v2629 = vld [vmem:[#allocation2 + $0x10a] sm:$0xff]
    %v2630 = vld [vmem:[#allocation2 + $0x112] sm:$0xff]
    %v2631 = vld [vmem:[#allocation2 + $0x122] sm:$0xff]
    %v2632 = vld [vmem:[#allocation2 + $0x12a] sm:$0xff]
    %v2633 = vld [vmem:[#allocation2 + $0x13a] sm:$0xff]
    %v2634 = vld [vmem:[#allocation2 + $0x142] sm:$0xff]
    %v2635 = vld [vmem:[#allocation2 + $0x152] sm:$0xff]
    %v2636 = vld [vmem:[#allocation2 + $0x15a] sm:$0xff]
    %v2637 = vld [vmem:[#allocation2 + $0x16a] sm:$0xff]
    %v2638 = vld [vmem:[#allocation2 + $0x172] sm:$0xff]
    %v2639 = vld [vmem:[#allocation2 + $0x1b2] sm:$0xff]
    %v2640 = vld [vmem:[#allocation2 + $0x1ba] sm:$0xff]
    %v2641 = vld [vmem:[#allocation2 + $0x1ca] sm:$0xff]
    %v2642 = vld [vmem:[#allocation2 + $0x1d2] sm:$0xff]
    %v2643 = vld [vmem:[#allocation2 + $0x1e2] sm:$0xff]
    %v2644 = vld [vmem:[#allocation2 + $0x1ea] sm:$0xff]
    %v2645 = vld [vmem:[#allocation2 + $0x1fa] sm:$0xff]
    %v2646 = vld [vmem:[#allocation2 + $0x202] sm:$0xff]
    %v2647 = vld [vmem:[#allocation2 + $0x212] sm:$0xff]
    %v2648 = vld [vmem:[#allocation2 + $0x21a] sm:$0xff]
    %v2649 = vld [vmem:[#allocation2 + $0x22a] sm:$0xff]
    %v2650 = vld [vmem:[#allocation2 + $0x232] sm:$0xff]
    %v2651 = vld [vmem:[#allocation2 + $0x242] sm:$0xff]
    %v2652 = vld [vmem:[#allocation2 + $0x24a] sm:$0xff]
    %v2653 = vld [vmem:[#allocation2 + $0x25a] sm:$0xff]
    %v2654 = vld [vmem:[#allocation2 + $0x262] sm:$0xff]
    %v2655 = vld [vmem:[#allocation2 + $0x272] sm:$0xff]
    %v2656 = vld [vmem:[#allocation2 + $0x27a] sm:$0xff]
    %v2657 = vld [vmem:[#allocation2 + $0x28a] sm:$0xff]
    %v2658 = vld [vmem:[#allocation2 + $0x292] sm:$0xff]
    %v2659 = vld [vmem:[#allocation2 + $0x2a2] sm:$0xff]
    %v2660 = vld [vmem:[#allocation2 + $0x2aa] sm:$0xff]
    %v2661 = vld [vmem:[#allocation2 + $0x2ba] sm:$0xff]
    %v2662 = vld [vmem:[#allocation2 + $0x2c2] sm:$0xff]
    %v2663 = vld [vmem:[#allocation2 + $0x2d2] sm:$0xff]
    %v2664 = vld [vmem:[#allocation2 + $0x2da] sm:$0xff]
    %v2665 = vld [vmem:[#allocation2 + $0x2ea] sm:$0xff]
    %v2666 = vld [vmem:[#allocation2 + $0x2f2] sm:$0xff]
    %v2667 = vld [vmem:[#allocation2 + $0x302] sm:$0xff]
    %v2668 = vld [vmem:[#allocation2 + $0x30a] sm:$0xff]
    %v2669 = vld [vmem:[#allocation2 + $0x31a] sm:$0xff]
    %v2670 = vld [vmem:[#allocation2 + $0x322] sm:$0xff]
    %v2671 = vpack.c.bf16 %v2608, %v2607
    %v2672 = vpack.c.bf16 %v2610, %v2609
    %v2673 = vpack.c.bf16 %v2612, %v2611
    %v2674 = vpack.c.bf16 %v2614, %v2613
    %v2675 = vpack.c.bf16 %v2616, %v2615
    %v2676 = vpack.c.bf16 %v2618, %v2617
    %v2677 = vpack.c.bf16 %v2620, %v2619
    %v2678 = vpack.c.bf16 %v2622, %v2621
    %v2679 = vpack.c.bf16 %v2624, %v2623
    %v2680 = vpack.c.bf16 %v2626, %v2625
    %v2681 = vpack.c.bf16 %v2628, %v2627
    %v2682 = vpack.c.bf16 %v2630, %v2629
    %v2683 = vpack.c.bf16 %v2632, %v2631
    %v2684 = vpack.c.bf16 %v2634, %v2633
    %v2685 = vpack.c.bf16 %v2636, %v2635
    %v2686 = vpack.c.bf16 %v2638, %v2637
    %v2687 = vpack.c.bf16 %v2640, %v2639
    %v2688 = vpack.c.bf16 %v2642, %v2641
    %v2689 = vpack.c.bf16 %v2644, %v2643
    %v2690 = vpack.c.bf16 %v2646, %v2645
    %v2691 = vpack.c.bf16 %v2648, %v2647
    %v2692 = vpack.c.bf16 %v2650, %v2649
    %v2693 = vpack.c.bf16 %v2652, %v2651
    %v2694 = vpack.c.bf16 %v2654, %v2653
    %v2695 = vpack.c.bf16 %v2656, %v2655
    %v2696 = vpack.c.bf16 %v2658, %v2657
    %v2697 = vpack.c.bf16 %v2660, %v2659
    %v2698 = vpack.c.bf16 %v2662, %v2661
    %v2699 = vpack.c.bf16 %v2664, %v2663
    %v2700 = vpack.c.bf16 %v2666, %v2665
    %v2701 = vpack.c.bf16 %v2668, %v2667
    %v2702 = vpack.c.bf16 %v2670, %v2669
    %s2703 = scalar_lea.vmem [#allocation8], 128
    %v2704 = vld [vmem:[%s2703] sm:$0xf]
    %v2705 = vld [vmem:[%s2703 + $0x4] sm:$0xf]
    %v2706 = vld [vmem:[%s2703 + $0x8] sm:$0xf]
    %v2707 = vld [vmem:[%s2703 + $0xc] sm:$0xf]
    %v2708 = vld [vmem:[%s2703 + $0x10] sm:$0xf]
    %v2709 = vld [vmem:[%s2703 + $0x14] sm:$0xf]
    %v2710 = vld [vmem:[%s2703 + $0x18] sm:$0xf]
    %v2711 = vld [vmem:[%s2703 + $0x1c] sm:$0xf]
    %v2712 = vld [vmem:[%s2703 + $0x20] sm:$0xf]
    %v2713 = vld [vmem:[%s2703 + $0x24] sm:$0xf]
    %v2714 = vld [vmem:[%s2703 + $0x28] sm:$0xf]
    %v2715 = vld [vmem:[%s2703 + $0x2c] sm:$0xf]
    %v2716 = vld [vmem:[%s2703 + $0x30] sm:$0xf]
    %v2717 = vld [vmem:[%s2703 + $0x34] sm:$0xf]
    %v2718 = vld [vmem:[%s2703 + $0x38] sm:$0xf]
    %v2719 = vld [vmem:[%s2703 + $0x3c] sm:$0xf]
    %v2736 = vunpack.c.l.b16 %v2704
    %v2737 = vunpack.c.l.b16 %v2705
    %v2738 = vunpack.c.l.b16 %v2706
    %v2739 = vunpack.c.l.b16 %v2707
    %v2740 = vunpack.c.l.b16 %v2708
    %v2741 = vunpack.c.l.b16 %v2709
    %v2742 = vunpack.c.l.b16 %v2710
    %v2743 = vunpack.c.l.b16 %v2711
    %v2744 = vunpack.c.l.b16 %v2712
    %v2745 = vunpack.c.l.b16 %v2713
    %v2746 = vunpack.c.l.b16 %v2714
    %v2747 = vunpack.c.l.b16 %v2715
    %v2748 = vunpack.c.l.b16 %v2716
    %v2749 = vunpack.c.l.b16 %v2717
    %v2750 = vunpack.c.l.b16 %v2718
    %v2751 = vunpack.c.l.b16 %v2719
    %v2752 = vpack.c.b16 %v2737, %v2736
    %v2753 = vpack.c.b16 %v2739, %v2738
    %v2754 = vpack.c.b16 %v2741, %v2740
    %v2755 = vpack.c.b16 %v2743, %v2742
    %v2756 = vpack.c.b16 %v2745, %v2744
    %v2757 = vpack.c.b16 %v2747, %v2746
    %v2758 = vpack.c.b16 %v2749, %v2748
    %v2759 = vpack.c.b16 %v2751, %v2750
    %2768 = vmatprep.subr.bf16.mxu0 0
    %2769 = vmatpush1.bf16.msra.mxu0 %v2752
    %2770 = vmatprep.subr.bf16.mxu0 0
    %2771 = vmatpush1.bf16.msra.mxu0 %v2753
    %2772 = vmatprep.subr.bf16.mxu0 0
    %2773 = vmatpush1.bf16.msra.mxu0 %v2754
    %2774 = vmatprep.subr.bf16.mxu0 0
    %2775 = vmatpush1.bf16.msra.mxu0 %v2755
    %2776 = vmatprep.subr.bf16.mxu0 0
    %2777 = vmatpush1.bf16.msra.mxu0 %v2756
    %2778 = vmatprep.subr.bf16.mxu0 0
    %2779 = vmatpush1.bf16.msra.mxu0 %v2757
    %2780 = vmatprep.subr.bf16.mxu0 0
    %2781 = vmatpush1.bf16.msra.mxu0 %v2758
    %2782 = vmatprep.subr.bf16.mxu0 0
    %2783 = vmatpush1.bf16.msra.mxu0 %v2759
    %2784 = vmatprep.subr.bf16.mxu0 0
    %2785 = vmatpush1.bf16.msra.mxu0 0
    %2786 = vmatprep.subr.bf16.mxu0 0
    %2787 = vmatpush1.bf16.msra.mxu0 0
    %2788 = vmatprep.subr.bf16.mxu0 0
    %2789 = vmatpush1.bf16.msra.mxu0 0
    %2790 = vmatprep.subr.bf16.mxu0 0
    %2791 = vmatpush1.bf16.msra.mxu0 0
    %2792 = vmatprep.subr.bf16.mxu0 0
    %2793 = vmatpush1.bf16.msra.mxu0 0
    %2794 = vmatprep.subr.bf16.mxu0 0
    %2795 = vmatpush1.bf16.msra.mxu0 0
    %2796 = vmatprep.subr.bf16.mxu0 0
    %2797 = vmatpush1.bf16.msra.mxu0 0
    %2798 = vmatprep.subr.bf16.mxu0 0
    %2799 = vmatpush1.bf16.msra.mxu0 0
    %2800 = vmatprep.mubr.bf16.mxu0 0
    %2801 = vmatmul.mubr.bf16.gmra.mrb[0].mxu0 %v2671
    %v2802 = vpop.f32.mrb[0].mxu0
    %v2803 = vadd.f32 0.0, %v2802
    %v2804 = vpop.f32.mrb[0].mxu0
    %v2805 = vpop.f32.mrb[0].mxu0
    %v2806 = vadd.f32 0.0, %v2805
    %v2807 = vpop.f32.mrb[0].mxu0
    %2808 = vmatprep.mubr.bf16.mxu0 0
    %2809 = vmatmul.mubr.bf16.gmra.mrb[0].mxu0 %v2672
    %v2810 = vpop.f32.mrb[0].mxu0
    %v2811 = vadd.f32 0.0, %v2810
    %v2812 = vpop.f32.mrb[0].mxu0
    %v2813 = vpop.f32.mrb[0].mxu0
    %v2814 = vadd.f32 0.0, %v2813
    %v2815 = vpop.f32.mrb[0].mxu0
    %2816 = vmatprep.mubr.bf16.mxu0 0
    %2817 = vmatmul.mubr.bf16.gmra.mrb[0].mxu0 %v2673
    %v2818 = vpop.f32.mrb[0].mxu0
    %v2819 = vadd.f32 0.0, %v2818
    %v2820 = vpop.f32.mrb[0].mxu0
    %v2821 = vpop.f32.mrb[0].mxu0
    %v2822 = vadd.f32 0.0, %v2821
    %v2823 = vpop.f32.mrb[0].mxu0
    %2824 = vmatprep.mubr.bf16.mxu0 0
    %2825 = vmatmul.mubr.bf16.gmra.mrb[0].mxu0 %v2674
    %v2826 = vpop.f32.mrb[0].mxu0
    %v2827 = vadd.f32 0.0, %v2826
    %v2828 = vpop.f32.mrb[0].mxu0
    %v2829 = vpop.f32.mrb[0].mxu0
    %v2830 = vadd.f32 0.0, %v2829
    %v2831 = vpop.f32.mrb[0].mxu0
    %2832 = vmatprep.mubr.bf16.mxu0 0
    %2833 = vmatmul.mubr.bf16.gmra.mrb[0].mxu0 %v2675
    %v2834 = vpop.f32.mrb[0].mxu0
    %v2835 = vadd.f32 0.0, %v2834
    %v2836 = vpop.f32.mrb[0].mxu0
    %v2837 = vpop.f32.mrb[0].mxu0
    %v2838 = vadd.f32 0.0, %v2837
    %v2839 = vpop.f32.mrb[0].mxu0
    %2840 = vmatprep.mubr.bf16.mxu0 0
    %2841 = vmatmul.mubr.bf16.gmra.mrb[0].mxu0 %v2676
    %v2842 = vpop.f32.mrb[0].mxu0
    %v2843 = vadd.f32 0.0, %v2842
    %v2844 = vpop.f32.mrb[0].mxu0
    %v2845 = vpop.f32.mrb[0].mxu0
    %v2846 = vadd.f32 0.0, %v2845
    %v2847 = vpop.f32.mrb[0].mxu0
    %2848 = vmatprep.mubr.bf16.mxu0 0
    %2849 = vmatmul.mubr.bf16.gmra.mrb[0].mxu0 %v2677
    %v2850 = vpop.f32.mrb[0].mxu0
    %v2851 = vadd.f32 0.0, %v2850
    %v2852 = vpop.f32.mrb[0].mxu0
    %v2853 = vpop.f32.mrb[0].mxu0
    %v2854 = vadd.f32 0.0, %v2853
    %v2855 = vpop.f32.mrb[0].mxu0
    %2856 = vmatprep.mubr.bf16.mxu0 0
    %2857 = vmatmul.mubr.bf16.gmra.mrb[0].mxu0 %v2678
    %v2858 = vpop.f32.mrb[0].mxu0
    %v2859 = vadd.f32 0.0, %v2858
    %v2860 = vpop.f32.mrb[0].mxu0
    %v2861 = vpop.f32.mrb[0].mxu0
    %v2862 = vadd.f32 0.0, %v2861
    %v2863 = vpop.f32.mrb[0].mxu0
    %2864 = vmatprep.mubr.bf16.mxu0 0
    %2865 = vmatmul.mubr.bf16.gmra.mrb[0].mxu0 %v2679
    %v2866 = vpop.f32.mrb[0].mxu0
    %v2867 = vadd.f32 0.0, %v2866
    %v2868 = vpop.f32.mrb[0].mxu0
    %v2869 = vpop.f32.mrb[0].mxu0
    %v2870 = vadd.f32 0.0, %v2869
    %v2871 = vpop.f32.mrb[0].mxu0
    %2872 = vmatprep.mubr.bf16.mxu0 0
    %2873 = vmatmul.mubr.bf16.gmra.mrb[0].mxu0 %v2680
    %v2874 = vpop.f32.mrb[0].mxu0
    %v2875 = vadd.f32 0.0, %v2874
    %v2876 = vpop.f32.mrb[0].mxu0
    %v2877 = vpop.f32.mrb[0].mxu0
    %v2878 = vadd.f32 0.0, %v2877
    %v2879 = vpop.f32.mrb[0].mxu0
    %2880 = vmatprep.mubr.bf16.mxu0 0
    %2881 = vmatmul.mubr.bf16.gmra.mrb[0].mxu0 %v2681
    %v2882 = vpop.f32.mrb[0].mxu0
    %v2883 = vadd.f32 0.0, %v2882
    %v2884 = vpop.f32.mrb[0].mxu0
    %v2885 = vpop.f32.mrb[0].mxu0
    %v2886 = vadd.f32 0.0, %v2885
    %v2887 = vpop.f32.mrb[0].mxu0
    %2888 = vmatprep.mubr.bf16.mxu0 0
    %2889 = vmatmul.mubr.bf16.gmra.mrb[0].mxu0 %v2682
    %v2890 = vpop.f32.mrb[0].mxu0
    %v2891 = vadd.f32 0.0, %v2890
    %v2892 = vpop.f32.mrb[0].mxu0
    %v2893 = vpop.f32.mrb[0].mxu0
    %v2894 = vadd.f32 0.0, %v2893
    %v2895 = vpop.f32.mrb[0].mxu0
    %2896 = vmatprep.mubr.bf16.mxu0 0
    %2897 = vmatmul.mubr.bf16.gmra.mrb[0].mxu0 %v2683
    %v2898 = vpop.f32.mrb[0].mxu0
    %v2899 = vadd.f32 0.0, %v2898
    %v2900 = vpop.f32.mrb[0].mxu0
    %v2901 = vpop.f32.mrb[0].mxu0
    %v2902 = vadd.f32 0.0, %v2901
    %v2903 = vpop.f32.mrb[0].mxu0
    %2904 = vmatprep.mubr.bf16.mxu0 0
    %2905 = vmatmul.mubr.bf16.gmra.mrb[0].mxu0 %v2684
    %v2906 = vpop.f32.mrb[0].mxu0
    %v2907 = vadd.f32 0.0, %v2906
    %v2908 = vpop.f32.mrb[0].mxu0
    %v2909 = vpop.f32.mrb[0].mxu0
    %v2910 = vadd.f32 0.0, %v2909
    %v2911 = vpop.f32.mrb[0].mxu0
    %2912 = vmatprep.mubr.bf16.mxu0 0
    %2913 = vmatmul.mubr.bf16.gmra.mrb[0].mxu0 %v2685
    %v2914 = vpop.f32.mrb[0].mxu0
    %v2915 = vadd.f32 0.0, %v2914
    %v2916 = vpop.f32.mrb[0].mxu0
    %v2917 = vpop.f32.mrb[0].mxu0
    %v2918 = vadd.f32 0.0, %v2917
    %v2919 = vpop.f32.mrb[0].mxu0
    %2920 = vmatprep.mubr.bf16.mxu0 0
    %2921 = vmatmul.mubr.bf16.gmra.mrb[0].mxu0 %v2686
    %v2922 = vpop.f32.mrb[0].mxu0
    %v2923 = vadd.f32 0.0, %v2922
    %v2924 = vpop.f32.mrb[0].mxu0
    %v2925 = vpop.f32.mrb[0].mxu0
    %v2926 = vadd.f32 0.0, %v2925
    %v2927 = vpop.f32.mrb[0].mxu0
    %2928 = vmatprep.mubr.bf16.mxu0 0
    %2929 = vmatmul.mubr.bf16.gmra.mrb[0].mxu0 %v2687
    %v2930 = vpop.f32.mrb[0].mxu0
    %v2931 = vadd.f32 0.0, %v2930
    %v2932 = vpop.f32.mrb[0].mxu0
    %v2933 = vpop.f32.mrb[0].mxu0
    %v2934 = vadd.f32 0.0, %v2933
    %v2935 = vpop.f32.mrb[0].mxu0
    %2936 = vmatprep.mubr.bf16.mxu0 0
    %2937 = vmatmul.mubr.bf16.gmra.mrb[0].mxu0 %v2688
    %v2938 = vpop.f32.mrb[0].mxu0
    %v2939 = vadd.f32 0.0, %v2938
    %v2940 = vpop.f32.mrb[0].mxu0
    %v2941 = vpop.f32.mrb[0].mxu0
    %v2942 = vadd.f32 0.0, %v2941
    %v2943 = vpop.f32.mrb[0].mxu0
    %2944 = vmatprep.mubr.bf16.mxu0 0
    %2945 = vmatmul.mubr.bf16.gmra.mrb[0].mxu0 %v2689
    %v2946 = vpop.f32.mrb[0].mxu0
    %v2947 = vadd.f32 0.0, %v2946
    %v2948 = vpop.f32.mrb[0].mxu0
    %v2949 = vpop.f32.mrb[0].mxu0
    %v2950 = vadd.f32 0.0, %v2949
    %v2951 = vpop.f32.mrb[0].mxu0
    %2952 = vmatprep.mubr.bf16.mxu0 0
    %2953 = vmatmul.mubr.bf16.gmra.mrb[0].mxu0 %v2690
    %v2954 = vpop.f32.mrb[0].mxu0
    %v2955 = vadd.f32 0.0, %v2954
    %v2956 = vpop.f32.mrb[0].mxu0
    %v2957 = vpop.f32.mrb[0].mxu0
    %v2958 = vadd.f32 0.0, %v2957
    %v2959 = vpop.f32.mrb[0].mxu0
    %2960 = vmatprep.mubr.bf16.mxu0 0
    %2961 = vmatmul.mubr.bf16.gmra.mrb[0].mxu0 %v2691
    %v2962 = vpop.f32.mrb[0].mxu0
    %v2963 = vadd.f32 0.0, %v2962
    %v2964 = vpop.f32.mrb[0].mxu0
    %v2965 = vpop.f32.mrb[0].mxu0
    %v2966 = vadd.f32 0.0, %v2965
    %v2967 = vpop.f32.mrb[0].mxu0
    %2968 = vmatprep.mubr.bf16.mxu0 0
    %2969 = vmatmul.mubr.bf16.gmra.mrb[0].mxu0 %v2692
    %v2970 = vpop.f32.mrb[0].mxu0
    %v2971 = vadd.f32 0.0, %v2970
    %v2972 = vpop.f32.mrb[0].mxu0
    %v2973 = vpop.f32.mrb[0].mxu0
    %v2974 = vadd.f32 0.0, %v2973
    %v2975 = vpop.f32.mrb[0].mxu0
    %2976 = vmatprep.mubr.bf16.mxu0 0
    %2977 = vmatmul.mubr.bf16.gmra.mrb[0].mxu0 %v2693
    %v2978 = vpop.f32.mrb[0].mxu0
    %v2979 = vadd.f32 0.0, %v2978
    %v2980 = vpop.f32.mrb[0].mxu0
    %v2981 = vpop.f32.mrb[0].mxu0
    %v2982 = vadd.f32 0.0, %v2981
    %v2983 = vpop.f32.mrb[0].mxu0
    %2984 = vmatprep.mubr.bf16.mxu0 0
    %2985 = vmatmul.mubr.bf16.gmra.mrb[0].mxu0 %v2694
    %v2986 = vpop.f32.mrb[0].mxu0
    %v2987 = vadd.f32 0.0, %v2986
    %v2988 = vpop.f32.mrb[0].mxu0
    %v2989 = vpop.f32.mrb[0].mxu0
    %v2990 = vadd.f32 0.0, %v2989
    %v2991 = vpop.f32.mrb[0].mxu0
    %2992 = vmatprep.mubr.bf16.mxu0 0
    %2993 = vmatmul.mubr.bf16.gmra.mrb[0].mxu0 %v2695
    %v2994 = vpop.f32.mrb[0].mxu0
    %v2995 = vadd.f32 0.0, %v2994
    %v2996 = vpop.f32.mrb[0].mxu0
    %v2997 = vpop.f32.mrb[0].mxu0
    %v2998 = vadd.f32 0.0, %v2997
    %v2999 = vpop.f32.mrb[0].mxu0
    %3000 = vmatprep.mubr.bf16.mxu0 0
    %3001 = vmatmul.mubr.bf16.gmra.mrb[0].mxu0 %v2696
    %v3002 = vpop.f32.mrb[0].mxu0
    %v3003 = vadd.f32 0.0, %v3002
    %v3004 = vpop.f32.mrb[0].mxu0
    %v3005 = vpop.f32.mrb[0].mxu0
    %v3006 = vadd.f32 0.0, %v3005
    %v3007 = vpop.f32.mrb[0].mxu0
    %3008 = vmatprep.mubr.bf16.mxu0 0
    %3009 = vmatmul.mubr.bf16.gmra.mrb[0].mxu0 %v2697
    %v3010 = vpop.f32.mrb[0].mxu0
    %v3011 = vadd.f32 0.0, %v3010
    %v3012 = vpop.f32.mrb[0].mxu0
    %v3013 = vpop.f32.mrb[0].mxu0
    %v3014 = vadd.f32 0.0, %v3013
    %v3015 = vpop.f32.mrb[0].mxu0
    %3016 = vmatprep.mubr.bf16.mxu0 0
    %3017 = vmatmul.mubr.bf16.gmra.mrb[0].mxu0 %v2698
    %v3018 = vpop.f32.mrb[0].mxu0
    %v3019 = vadd.f32 0.0, %v3018
    %v3020 = vpop.f32.mrb[0].mxu0
    %v3021 = vpop.f32.mrb[0].mxu0
    %v3022 = vadd.f32 0.0, %v3021
    %v3023 = vpop.f32.mrb[0].mxu0
    %3024 = vmatprep.mubr.bf16.mxu0 0
    %3025 = vmatmul.mubr.bf16.gmra.mrb[0].mxu0 %v2699
    %v3026 = vpop.f32.mrb[0].mxu0
    %v3027 = vadd.f32 0.0, %v3026
    %v3028 = vpop.f32.mrb[0].mxu0
    %v3029 = vpop.f32.mrb[0].mxu0
    %v3030 = vadd.f32 0.0, %v3029
    %v3031 = vpop.f32.mrb[0].mxu0
    %3032 = vmatprep.mubr.bf16.mxu0 0
    %3033 = vmatmul.mubr.bf16.gmra.mrb[0].mxu0 %v2700
    %v3034 = vpop.f32.mrb[0].mxu0
    %v3035 = vadd.f32 0.0, %v3034
    %v3036 = vpop.f32.mrb[0].mxu0
    %v3037 = vpop.f32.mrb[0].mxu0
    %v3038 = vadd.f32 0.0, %v3037
    %v3039 = vpop.f32.mrb[0].mxu0
    %3040 = vmatprep.mubr.bf16.mxu0 0
    %3041 = vmatmul.mubr.bf16.gmra.mrb[0].mxu0 %v2701
    %v3042 = vpop.f32.mrb[0].mxu0
    %v3043 = vadd.f32 0.0, %v3042
    %v3044 = vpop.f32.mrb[0].mxu0
    %v3045 = vpop.f32.mrb[0].mxu0
    %v3046 = vadd.f32 0.0, %v3045
    %v3047 = vpop.f32.mrb[0].mxu0
    %3048 = vmatprep.mubr.bf16.mxu0 0
    %3049 = vmatmul.mubr.bf16.gmra.mrb[0].mxu0 %v2702
    %v3050 = vpop.f32.mrb[0].mxu0
    %v3051 = vadd.f32 0.0, %v3050
    %v3052 = vpop.f32.mrb[0].mxu0
    %v3053 = vpop.f32.mrb[0].mxu0
    %v3054 = vadd.f32 0.0, %v3053
    %v3055 = vpop.f32.mrb[0].mxu0
    %3056 = vdwg.mxu0
    %v3057 = vadd.f32 %v2353, %v2803
    %v3058 = vadd.f32 %v2356, %v2806
    %v3059 = vadd.f32 %v2361, %v2811
    %v3060 = vadd.f32 %v2364, %v2814
    %v3061 = vadd.f32 %v2369, %v2819
    %v3062 = vadd.f32 %v2372, %v2822
    %v3063 = vadd.f32 %v2377, %v2827
    %v3064 = vadd.f32 %v2380, %v2830
    %v3065 = vadd.f32 %v2385, %v2835
    %v3066 = vadd.f32 %v2388, %v2838
    %v3067 = vadd.f32 %v2393, %v2843
    %v3068 = vadd.f32 %v2396, %v2846
    %v3069 = vadd.f32 %v2401, %v2851
    %v3070 = vadd.f32 %v2404, %v2854
    %v3071 = vadd.f32 %v2409, %v2859
    %v3072 = vadd.f32 %v2412, %v2862
    %v3073 = vadd.f32 %v2417, %v2867
    %v3074 = vadd.f32 %v2420, %v2870
    %v3075 = vadd.f32 %v2425, %v2875
    %v3076 = vadd.f32 %v2428, %v2878
    %v3077 = vadd.f32 %v2433, %v2883
    %v3078 = vadd.f32 %v2436, %v2886
    %v3079 = vadd.f32 %v2441, %v2891
    %v3080 = vadd.f32 %v2444, %v2894
    %v3081 = vadd.f32 %v2449, %v2899
    %v3082 = vadd.f32 %v2452, %v2902
    %v3083 = vadd.f32 %v2457, %v2907
    %v3084 = vadd.f32 %v2460, %v2910
    %v3085 = vadd.f32 %v2465, %v2915
    %v3086 = vadd.f32 %v2468, %v2918
    %v3087 = vadd.f32 %v2473, %v2923
    %v3088 = vadd.f32 %v2476, %v2926
    %v3089 = vadd.f32 %v2481, %v2931
    %v3090 = vadd.f32 %v2484, %v2934
    %v3091 = vadd.f32 %v2489, %v2939
    %v3092 = vadd.f32 %v2492, %v2942
    %v3093 = vadd.f32 %v2497, %v2947
    %v3094 = vadd.f32 %v2500, %v2950
    %v3095 = vadd.f32 %v2505, %v2955
    %v3096 = vadd.f32 %v2508, %v2958
    %v3097 = vadd.f32 %v2513, %v2963
    %v3098 = vadd.f32 %v2516, %v2966
    %v3099 = vadd.f32 %v2521, %v2971
    %v3100 = vadd.f32 %v2524, %v2974
    %v3101 = vadd.f32 %v2529, %v2979
    %v3102 = vadd.f32 %v2532, %v2982
    %v3103 = vadd.f32 %v2537, %v2987
    %v3104 = vadd.f32 %v2540, %v2990
    %v3105 = vadd.f32 %v2545, %v2995
    %v3106 = vadd.f32 %v2548, %v2998
    %v3107 = vadd.f32 %v2553, %v3003
    %v3108 = vadd.f32 %v2556, %v3006
    %v3109 = vadd.f32 %v2561, %v3011
    %v3110 = vadd.f32 %v2564, %v3014
    %v3111 = vadd.f32 %v2569, %v3019
    %v3112 = vadd.f32 %v2572, %v3022
    %v3113 = vadd.f32 %v2577, %v3027
    %v3114 = vadd.f32 %v2580, %v3030
    %v3115 = vadd.f32 %v2585, %v3035
    %v3116 = vadd.f32 %v2588, %v3038
    %v3117 = vadd.f32 %v2593, %v3043
    %v3118 = vadd.f32 %v2596, %v3046
    %v3119 = vadd.f32 %v2601, %v3051
    %v3120 = vadd.f32 %v2604, %v3054
    %v3121 = vld [vmem:[%s1643] sm:$0xff]
    %v3122 = vld [vmem:[%s1643 + $0x8] sm:$0xff]
    %v3123 = vld [vmem:[%s1643 + $0x18] sm:$0xff]
    %v3124 = vld [vmem:[%s1643 + $0x20] sm:$0xff]
    %v3125 = vld [vmem:[%s1643 + $0x30] sm:$0xff]
    %v3126 = vld [vmem:[%s1643 + $0x38] sm:$0xff]
    %v3127 = vld [vmem:[%s1643 + $0x48] sm:$0xff]
    %v3128 = vld [vmem:[%s1643 + $0x50] sm:$0xff]
    %v3129 = vld [vmem:[%s1643 + $0x60] sm:$0xff]
    %v3130 = vld [vmem:[%s1643 + $0x68] sm:$0xff]
    %v3131 = vld [vmem:[%s1643 + $0x78] sm:$0xff]
    %v3132 = vld [vmem:[%s1643 + $0x80] sm:$0xff]
    %v3133 = vld [vmem:[%s1643 + $0x90] sm:$0xff]
    %v3134 = vld [vmem:[%s1643 + $0x98] sm:$0xff]
    %v3135 = vld [vmem:[%s1643 + $0xa8] sm:$0xff]
    %v3136 = vld [vmem:[%s1643 + $0xb0] sm:$0xff]
    %v3137 = vld [vmem:[%s1643 + $0xc0] sm:$0xff]
    %v3138 = vld [vmem:[%s1643 + $0xc8] sm:$0xff]
    %v3139 = vld [vmem:[%s1643 + $0xd8] sm:$0xff]
    %v3140 = vld [vmem:[%s1643 + $0xe0] sm:$0xff]
    %v3141 = vld [vmem:[%s1643 + $0xf0] sm:$0xff]
    %v3142 = vld [vmem:[%s1643 + $0xf8] sm:$0xff]
    %v3143 = vld [vmem:[%s1643 + $0x108] sm:$0xff]
    %v3144 = vld [vmem:[%s1643 + $0x110] sm:$0xff]
    %v3145 = vld [vmem:[%s1643 + $0x120] sm:$0xff]
    %v3146 = vld [vmem:[%s1643 + $0x128] sm:$0xff]
    %v3147 = vld [vmem:[%s1643 + $0x138] sm:$0xff]
    %v3148 = vld [vmem:[%s1643 + $0x140] sm:$0xff]
    %v3149 = vld [vmem:[%s1643 + $0x150] sm:$0xff]
    %v3150 = vld [vmem:[%s1643 + $0x158] sm:$0xff]
    %v3151 = vld [vmem:[%s1643 + $0x168] sm:$0xff]
    %v3152 = vld [vmem:[%s1643 + $0x170] sm:$0xff]
    %v3153 = vld [vmem:[%s1643 + $0x1b0] sm:$0xff]
    %v3154 = vld [vmem:[%s1643 + $0x1b8] sm:$0xff]
    %v3155 = vld [vmem:[%s1643 + $0x1c8] sm:$0xff]
    %v3156 = vld [vmem:[%s1643 + $0x1d0] sm:$0xff]
    %v3157 = vld [vmem:[%s1643 + $0x1e0] sm:$0xff]
    %v3158 = vld [vmem:[%s1643 + $0x1e8] sm:$0xff]
    %v3159 = vld [vmem:[%s1643 + $0x1f8] sm:$0xff]
    %v3160 = vld [vmem:[%s1643 + $0x200] sm:$0xff]
    %v3161 = vld [vmem:[%s1643 + $0x210] sm:$0xff]
    %v3162 = vld [vmem:[%s1643 + $0x218] sm:$0xff]
    %v3163 = vld [vmem:[%s1643 + $0x228] sm:$0xff]
    %v3164 = vld [vmem:[%s1643 + $0x230] sm:$0xff]
    %v3165 = vld [vmem:[%s1643 + $0x240] sm:$0xff]
    %v3166 = vld [vmem:[%s1643 + $0x248] sm:$0xff]
    %v3167 = vld [vmem:[%s1643 + $0x258] sm:$0xff]
    %v3168 = vld [vmem:[%s1643 + $0x260] sm:$0xff]
    %v3169 = vld [vmem:[%s1643 + $0x270] sm:$0xff]
    %v3170 = vld [vmem:[%s1643 + $0x278] sm:$0xff]
    %v3171 = vld [vmem:[%s1643 + $0x288] sm:$0xff]
    %v3172 = vld [vmem:[%s1643 + $0x290] sm:$0xff]
    %v3173 = vld [vmem:[%s1643 + $0x2a0] sm:$0xff]
    %v3174 = vld [vmem:[%s1643 + $0x2a8] sm:$0xff]
    %v3175 = vld [vmem:[%s1643 + $0x2b8] sm:$0xff]
    %v3176 = vld [vmem:[%s1643 + $0x2c0] sm:$0xff]
    %v3177 = vld [vmem:[%s1643 + $0x2d0] sm:$0xff]
    %v3178 = vld [vmem:[%s1643 + $0x2d8] sm:$0xff]
    %v3179 = vld [vmem:[%s1643 + $0x2e8] sm:$0xff]
    %v3180 = vld [vmem:[%s1643 + $0x2f0] sm:$0xff]
    %v3181 = vld [vmem:[%s1643 + $0x300] sm:$0xff]
    %v3182 = vld [vmem:[%s1643 + $0x308] sm:$0xff]
    %v3183 = vld [vmem:[%s1643 + $0x318] sm:$0xff]
    %v3184 = vld [vmem:[%s1643 + $0x320] sm:$0xff]
    %v3185 = vpack.c.bf16 %v3122, %v3121
    %v3186 = vpack.c.bf16 %v3124, %v3123
    %v3187 = vpack.c.bf16 %v3126, %v3125
    %v3188 = vpack.c.bf16 %v3128, %v3127
    %v3189 = vpack.c.bf16 %v3130, %v3129
    %v3190 = vpack.c.bf16 %v3132, %v3131
    %v3191 = vpack.c.bf16 %v3134, %v3133
    %v3192 = vpack.c.bf16 %v3136, %v3135
    %v3193 = vpack.c.bf16 %v3138, %v3137
    %v3194 = vpack.c.bf16 %v3140, %v3139
    %v3195 = vpack.c.bf16 %v3142, %v3141
    %v3196 = vpack.c.bf16 %v3144, %v3143
    %v3197 = vpack.c.bf16 %v3146, %v3145
    %v3198 = vpack.c.bf16 %v3148, %v3147
    %v3199 = vpack.c.bf16 %v3150, %v3149
    %v3200 = vpack.c.bf16 %v3152, %v3151
    %v3201 = vpack.c.bf16 %v3154, %v3153
    %v3202 = vpack.c.bf16 %v3156, %v3155
    %v3203 = vpack.c.bf16 %v3158, %v3157
    %v3204 = vpack.c.bf16 %v3160, %v3159
    %v3205 = vpack.c.bf16 %v3162, %v3161
    %v3206 = vpack.c.bf16 %v3164, %v3163
    %v3207 = vpack.c.bf16 %v3166, %v3165
    %v3208 = vpack.c.bf16 %v3168, %v3167
    %v3209 = vpack.c.bf16 %v3170, %v3169
    %v3210 = vpack.c.bf16 %v3172, %v3171
    %v3211 = vpack.c.bf16 %v3174, %v3173
    %v3212 = vpack.c.bf16 %v3176, %v3175
    %v3213 = vpack.c.bf16 %v3178, %v3177
    %v3214 = vpack.c.bf16 %v3180, %v3179
    %v3215 = vpack.c.bf16 %v3182, %v3181
    %v3216 = vpack.c.bf16 %v3184, %v3183
    %s3217 = scalar_lea.vmem [#allocation8], 192
    %v3218 = vld [vmem:[%s3217] sm:$0xf]
    %v3219 = vld [vmem:[%s3217 + $0x4] sm:$0xf]
    %v3220 = vld [vmem:[%s3217 + $0x8] sm:$0xf]
    %v3221 = vld [vmem:[%s3217 + $0xc] sm:$0xf]
    %v3222 = vld [vmem:[%s3217 + $0x10] sm:$0xf]
    %v3223 = vld [vmem:[%s3217 + $0x14] sm:$0xf]
    %v3224 = vld [vmem:[%s3217 + $0x18] sm:$0xf]
    %v3225 = vld [vmem:[%s3217 + $0x1c] sm:$0xf]
    %v3226 = vld [vmem:[%s3217 + $0x20] sm:$0xf]
    %v3227 = vld [vmem:[%s3217 + $0x24] sm:$0xf]
    %v3228 = vld [vmem:[%s3217 + $0x28] sm:$0xf]
    %v3229 = vld [vmem:[%s3217 + $0x2c] sm:$0xf]
    %v3230 = vld [vmem:[%s3217 + $0x30] sm:$0xf]
    %v3231 = vld [vmem:[%s3217 + $0x34] sm:$0xf]
    %v3232 = vld [vmem:[%s3217 + $0x38] sm:$0xf]
    %v3233 = vld [vmem:[%s3217 + $0x3c] sm:$0xf]
    %v3250 = vunpack.c.l.b16 %v3218
    %v3251 = vunpack.c.l.b16 %v3219
    %v3252 = vunpack.c.l.b16 %v3220
    %v3253 = vunpack.c.l.b16 %v3221
    %v3254 = vunpack.c.l.b16 %v3222
    %v3255 = vunpack.c.l.b16 %v3223
    %v3256 = vunpack.c.l.b16 %v3224
    %v3257 = vunpack.c.l.b16 %v3225
    %v3258 = vunpack.c.l.b16 %v3226
    %v3259 = vunpack.c.l.b16 %v3227
    %v3260 = vunpack.c.l.b16 %v3228
    %v3261 = vunpack.c.l.b16 %v3229
    %v3262 = vunpack.c.l.b16 %v3230
    %v3263 = vunpack.c.l.b16 %v3231
    %v3264 = vunpack.c.l.b16 %v3232
    %v3265 = vunpack.c.l.b16 %v3233
    %v3266 = vpack.c.b16 %v3251, %v3250
    %v3267 = vpack.c.b16 %v3253, %v3252
    %v3268 = vpack.c.b16 %v3255, %v3254
    %v3269 = vpack.c.b16 %v3257, %v3256
    %v3270 = vpack.c.b16 %v3259, %v3258
    %v3271 = vpack.c.b16 %v3261, %v3260
    %v3272 = vpack.c.b16 %v3263, %v3262
    %v3273 = vpack.c.b16 %v3265, %v3264
    %3282 = vmatprep.subr.bf16.mxu0 0
    %3283 = vmatpush1.bf16.msra.mxu0 %v3266
    %3284 = vmatprep.subr.bf16.mxu0 0
    %3285 = vmatpush1.bf16.msra.mxu0 %v3267
    %3286 = vmatprep.subr.bf16.mxu0 0
    %3287 = vmatpush1.bf16.msra.mxu0 %v3268
    %3288 = vmatprep.subr.bf16.mxu0 0
    %3289 = vmatpush1.bf16.msra.mxu0 %v3269
    %3290 = vmatprep.subr.bf16.mxu0 0
    %3291 = vmatpush1.bf16.msra.mxu0 %v3270
    %3292 = vmatprep.subr.bf16.mxu0 0
    %3293 = vmatpush1.bf16.msra.mxu0 %v3271
    %3294 = vmatprep.subr.bf16.mxu0 0
    %3295 = vmatpush1.bf16.msra.mxu0 %v3272
    %3296 = vmatprep.subr.bf16.mxu0 0
    %3297 = vmatpush1.bf16.msra.mxu0 %v3273
    %3298 = vmatprep.subr.bf16.mxu0 0
    %3299 = vmatpush1.bf16.msra.mxu0 0
    %3300 = vmatprep.subr.bf16.mxu0 0
    %3301 = vmatpush1.bf16.msra.mxu0 0
    %3302 = vmatprep.subr.bf16.mxu0 0
    %3303 = vmatpush1.bf16.msra.mxu0 0
    %3304 = vmatprep.subr.bf16.mxu0 0
    %3305 = vmatpush1.bf16.msra.mxu0 0
    %3306 = vmatprep.subr.bf16.mxu0 0
    %3307 = vmatpush1.bf16.msra.mxu0 0
    %3308 = vmatprep.subr.bf16.mxu0 0
    %3309 = vmatpush1.bf16.msra.mxu0 0
    %3310 = vmatprep.subr.bf16.mxu0 0
    %3311 = vmatpush1.bf16.msra.mxu0 0
    %3312 = vmatprep.subr.bf16.mxu0 0
    %3313 = vmatpush1.bf16.msra.mxu0 0
    %3314 = vmatprep.mubr.bf16.mxu0 0
    %3315 = vmatmul.mubr.bf16.gmra.mrb[0].mxu0 %v3185
    %v3316 = vpop.f32.mrb[0].mxu0
    %v3317 = vadd.f32 0.0, %v3316
    %v3318 = vpop.f32.mrb[0].mxu0
    %v3319 = vpop.f32.mrb[0].mxu0
    %v3320 = vadd.f32 0.0, %v3319
    %v3321 = vpop.f32.mrb[0].mxu0
    %3322 = vmatprep.mubr.bf16.mxu0 0
    %3323 = vmatmul.mubr.bf16.gmra.mrb[0].mxu0 %v3186
    %v3324 = vpop.f32.mrb[0].mxu0
    %v3325 = vadd.f32 0.0, %v3324
    %v3326 = vpop.f32.mrb[0].mxu0
    %v3327 = vpop.f32.mrb[0].mxu0
    %v3328 = vadd.f32 0.0, %v3327
    %v3329 = vpop.f32.mrb[0].mxu0
    %3330 = vmatprep.mubr.bf16.mxu0 0
    %3331 = vmatmul.mubr.bf16.gmra.mrb[0].mxu0 %v3187
    %v3332 = vpop.f32.mrb[0].mxu0
    %v3333 = vadd.f32 0.0, %v3332
    %v3334 = vpop.f32.mrb[0].mxu0
    %v3335 = vpop.f32.mrb[0].mxu0
    %v3336 = vadd.f32 0.0, %v3335
    %v3337 = vpop.f32.mrb[0].mxu0
    %3338 = vmatprep.mubr.bf16.mxu0 0
    %3339 = vmatmul.mubr.bf16.gmra.mrb[0].mxu0 %v3188
    %v3340 = vpop.f32.mrb[0].mxu0
    %v3341 = vadd.f32 0.0, %v3340
    %v3342 = vpop.f32.mrb[0].mxu0
    %v3343 = vpop.f32.mrb[0].mxu0
    %v3344 = vadd.f32 0.0, %v3343
    %v3345 = vpop.f32.mrb[0].mxu0
    %3346 = vmatprep.mubr.bf16.mxu0 0
    %3347 = vmatmul.mubr.bf16.gmra.mrb[0].mxu0 %v3189
    %v3348 = vpop.f32.mrb[0].mxu0
    %v3349 = vadd.f32 0.0, %v3348
    %v3350 = vpop.f32.mrb[0].mxu0
    %v3351 = vpop.f32.mrb[0].mxu0
    %v3352 = vadd.f32 0.0, %v3351
    %v3353 = vpop.f32.mrb[0].mxu0
    %3354 = vmatprep.mubr.bf16.mxu0 0
    %3355 = vmatmul.mubr.bf16.gmra.mrb[0].mxu0 %v3190
    %v3356 = vpop.f32.mrb[0].mxu0
    %v3357 = vadd.f32 0.0, %v3356
    %v3358 = vpop.f32.mrb[0].mxu0
    %v3359 = vpop.f32.mrb[0].mxu0
    %v3360 = vadd.f32 0.0, %v3359
    %v3361 = vpop.f32.mrb[0].mxu0
    %3362 = vmatprep.mubr.bf16.mxu0 0
    %3363 = vmatmul.mubr.bf16.gmra.mrb[0].mxu0 %v3191
    %v3364 = vpop.f32.mrb[0].mxu0
    %v3365 = vadd.f32 0.0, %v3364
    %v3366 = vpop.f32.mrb[0].mxu0
    %v3367 = vpop.f32.mrb[0].mxu0
    %v3368 = vadd.f32 0.0, %v3367
    %v3369 = vpop.f32.mrb[0].mxu0
    %3370 = vmatprep.mubr.bf16.mxu0 0
    %3371 = vmatmul.mubr.bf16.gmra.mrb[0].mxu0 %v3192
    %v3372 = vpop.f32.mrb[0].mxu0
    %v3373 = vadd.f32 0.0, %v3372
    %v3374 = vpop.f32.mrb[0].mxu0
    %v3375 = vpop.f32.mrb[0].mxu0
    %v3376 = vadd.f32 0.0, %v3375
    %v3377 = vpop.f32.mrb[0].mxu0
    %3378 = vmatprep.mubr.bf16.mxu0 0
    %3379 = vmatmul.mubr.bf16.gmra.mrb[0].mxu0 %v3193
    %v3380 = vpop.f32.mrb[0].mxu0
    %v3381 = vadd.f32 0.0, %v3380
    %v3382 = vpop.f32.mrb[0].mxu0
    %v3383 = vpop.f32.mrb[0].mxu0
    %v3384 = vadd.f32 0.0, %v3383
    %v3385 = vpop.f32.mrb[0].mxu0
    %3386 = vmatprep.mubr.bf16.mxu0 0
    %3387 = vmatmul.mubr.bf16.gmra.mrb[0].mxu0 %v3194
    %v3388 = vpop.f32.mrb[0].mxu0
    %v3389 = vadd.f32 0.0, %v3388
    %v3390 = vpop.f32.mrb[0].mxu0
    %v3391 = vpop.f32.mrb[0].mxu0
    %v3392 = vadd.f32 0.0, %v3391
    %v3393 = vpop.f32.mrb[0].mxu0
    %3394 = vmatprep.mubr.bf16.mxu0 0
    %3395 = vmatmul.mubr.bf16.gmra.mrb[0].mxu0 %v3195
    %v3396 = vpop.f32.mrb[0].mxu0
    %v3397 = vadd.f32 0.0, %v3396
    %v3398 = vpop.f32.mrb[0].mxu0
    %v3399 = vpop.f32.mrb[0].mxu0
    %v3400 = vadd.f32 0.0, %v3399
    %v3401 = vpop.f32.mrb[0].mxu0
    %3402 = vmatprep.mubr.bf16.mxu0 0
    %3403 = vmatmul.mubr.bf16.gmra.mrb[0].mxu0 %v3196
    %v3404 = vpop.f32.mrb[0].mxu0
    %v3405 = vadd.f32 0.0, %v3404
    %v3406 = vpop.f32.mrb[0].mxu0
    %v3407 = vpop.f32.mrb[0].mxu0
    %v3408 = vadd.f32 0.0, %v3407
    %v3409 = vpop.f32.mrb[0].mxu0
    %3410 = vmatprep.mubr.bf16.mxu0 0
    %3411 = vmatmul.mubr.bf16.gmra.mrb[0].mxu0 %v3197
    %v3412 = vpop.f32.mrb[0].mxu0
    %v3413 = vadd.f32 0.0, %v3412
    %v3414 = vpop.f32.mrb[0].mxu0
    %v3415 = vpop.f32.mrb[0].mxu0
    %v3416 = vadd.f32 0.0, %v3415
    %v3417 = vpop.f32.mrb[0].mxu0
    %3418 = vmatprep.mubr.bf16.mxu0 0
    %3419 = vmatmul.mubr.bf16.gmra.mrb[0].mxu0 %v3198
    %v3420 = vpop.f32.mrb[0].mxu0
    %v3421 = vadd.f32 0.0, %v3420
    %v3422 = vpop.f32.mrb[0].mxu0
    %v3423 = vpop.f32.mrb[0].mxu0
    %v3424 = vadd.f32 0.0, %v3423
    %v3425 = vpop.f32.mrb[0].mxu0
    %3426 = vmatprep.mubr.bf16.mxu0 0
    %3427 = vmatmul.mubr.bf16.gmra.mrb[0].mxu0 %v3199
    %v3428 = vpop.f32.mrb[0].mxu0
    %v3429 = vadd.f32 0.0, %v3428
    %v3430 = vpop.f32.mrb[0].mxu0
    %v3431 = vpop.f32.mrb[0].mxu0
    %v3432 = vadd.f32 0.0, %v3431
    %v3433 = vpop.f32.mrb[0].mxu0
    %3434 = vmatprep.mubr.bf16.mxu0 0
    %3435 = vmatmul.mubr.bf16.gmra.mrb[0].mxu0 %v3200
    %v3436 = vpop.f32.mrb[0].mxu0
    %v3437 = vadd.f32 0.0, %v3436
    %v3438 = vpop.f32.mrb[0].mxu0
    %v3439 = vpop.f32.mrb[0].mxu0
    %v3440 = vadd.f32 0.0, %v3439
    %v3441 = vpop.f32.mrb[0].mxu0
    %3442 = vmatprep.mubr.bf16.mxu0 0
    %3443 = vmatmul.mubr.bf16.gmra.mrb[0].mxu0 %v3201
    %v3444 = vpop.f32.mrb[0].mxu0
    %v3445 = vadd.f32 0.0, %v3444
    %v3446 = vpop.f32.mrb[0].mxu0
    %v3447 = vpop.f32.mrb[0].mxu0
    %v3448 = vadd.f32 0.0, %v3447
    %v3449 = vpop.f32.mrb[0].mxu0
    %3450 = vmatprep.mubr.bf16.mxu0 0
    %3451 = vmatmul.mubr.bf16.gmra.mrb[0].mxu0 %v3202
    %v3452 = vpop.f32.mrb[0].mxu0
    %v3453 = vadd.f32 0.0, %v3452
    %v3454 = vpop.f32.mrb[0].mxu0
    %v3455 = vpop.f32.mrb[0].mxu0
    %v3456 = vadd.f32 0.0, %v3455
    %v3457 = vpop.f32.mrb[0].mxu0
    %3458 = vmatprep.mubr.bf16.mxu0 0
    %3459 = vmatmul.mubr.bf16.gmra.mrb[0].mxu0 %v3203
    %v3460 = vpop.f32.mrb[0].mxu0
    %v3461 = vadd.f32 0.0, %v3460
    %v3462 = vpop.f32.mrb[0].mxu0
    %v3463 = vpop.f32.mrb[0].mxu0
    %v3464 = vadd.f32 0.0, %v3463
    %v3465 = vpop.f32.mrb[0].mxu0
    %3466 = vmatprep.mubr.bf16.mxu0 0
    %3467 = vmatmul.mubr.bf16.gmra.mrb[0].mxu0 %v3204
    %v3468 = vpop.f32.mrb[0].mxu0
    %v3469 = vadd.f32 0.0, %v3468
    %v3470 = vpop.f32.mrb[0].mxu0
    %v3471 = vpop.f32.mrb[0].mxu0
    %v3472 = vadd.f32 0.0, %v3471
    %v3473 = vpop.f32.mrb[0].mxu0
    %3474 = vmatprep.mubr.bf16.mxu0 0
    %3475 = vmatmul.mubr.bf16.gmra.mrb[0].mxu0 %v3205
    %v3476 = vpop.f32.mrb[0].mxu0
    %v3477 = vadd.f32 0.0, %v3476
    %v3478 = vpop.f32.mrb[0].mxu0
    %v3479 = vpop.f32.mrb[0].mxu0
    %v3480 = vadd.f32 0.0, %v3479
    %v3481 = vpop.f32.mrb[0].mxu0
    %3482 = vmatprep.mubr.bf16.mxu0 0
    %3483 = vmatmul.mubr.bf16.gmra.mrb[0].mxu0 %v3206
    %v3484 = vpop.f32.mrb[0].mxu0
    %v3485 = vadd.f32 0.0, %v3484
    %v3486 = vpop.f32.mrb[0].mxu0
    %v3487 = vpop.f32.mrb[0].mxu0
    %v3488 = vadd.f32 0.0, %v3487
    %v3489 = vpop.f32.mrb[0].mxu0
    %3490 = vmatprep.mubr.bf16.mxu0 0
    %3491 = vmatmul.mubr.bf16.gmra.mrb[0].mxu0 %v3207
    %v3492 = vpop.f32.mrb[0].mxu0
    %v3493 = vadd.f32 0.0, %v3492
    %v3494 = vpop.f32.mrb[0].mxu0
    %v3495 = vpop.f32.mrb[0].mxu0
    %v3496 = vadd.f32 0.0, %v3495
    %v3497 = vpop.f32.mrb[0].mxu0
    %3498 = vmatprep.mubr.bf16.mxu0 0
    %3499 = vmatmul.mubr.bf16.gmra.mrb[0].mxu0 %v3208
    %v3500 = vpop.f32.mrb[0].mxu0
    %v3501 = vadd.f32 0.0, %v3500
    %v3502 = vpop.f32.mrb[0].mxu0
    %v3503 = vpop.f32.mrb[0].mxu0
    %v3504 = vadd.f32 0.0, %v3503
    %v3505 = vpop.f32.mrb[0].mxu0
    %3506 = vmatprep.mubr.bf16.mxu0 0
    %3507 = vmatmul.mubr.bf16.gmra.mrb[0].mxu0 %v3209
    %v3508 = vpop.f32.mrb[0].mxu0
    %v3509 = vadd.f32 0.0, %v3508
    %v3510 = vpop.f32.mrb[0].mxu0
    %v3511 = vpop.f32.mrb[0].mxu0
    %v3512 = vadd.f32 0.0, %v3511
    %v3513 = vpop.f32.mrb[0].mxu0
    %3514 = vmatprep.mubr.bf16.mxu0 0
    %3515 = vmatmul.mubr.bf16.gmra.mrb[0].mxu0 %v3210
    %v3516 = vpop.f32.mrb[0].mxu0
    %v3517 = vadd.f32 0.0, %v3516
    %v3518 = vpop.f32.mrb[0].mxu0
    %v3519 = vpop.f32.mrb[0].mxu0
    %v3520 = vadd.f32 0.0, %v3519
    %v3521 = vpop.f32.mrb[0].mxu0
    %3522 = vmatprep.mubr.bf16.mxu0 0
    %3523 = vmatmul.mubr.bf16.gmra.mrb[0].mxu0 %v3211
    %v3524 = vpop.f32.mrb[0].mxu0
    %v3525 = vadd.f32 0.0, %v3524
    %v3526 = vpop.f32.mrb[0].mxu0
    %v3527 = vpop.f32.mrb[0].mxu0
    %v3528 = vadd.f32 0.0, %v3527
    %v3529 = vpop.f32.mrb[0].mxu0
    %3530 = vmatprep.mubr.bf16.mxu0 0
    %3531 = vmatmul.mubr.bf16.gmra.mrb[0].mxu0 %v3212
    %v3532 = vpop.f32.mrb[0].mxu0
    %v3533 = vadd.f32 0.0, %v3532
    %v3534 = vpop.f32.mrb[0].mxu0
    %v3535 = vpop.f32.mrb[0].mxu0
    %v3536 = vadd.f32 0.0, %v3535
    %v3537 = vpop.f32.mrb[0].mxu0
    %3538 = vmatprep.mubr.bf16.mxu0 0
    %3539 = vmatmul.mubr.bf16.gmra.mrb[0].mxu0 %v3213
    %v3540 = vpop.f32.mrb[0].mxu0
    %v3541 = vadd.f32 0.0, %v3540
    %v3542 = vpop.f32.mrb[0].mxu0
    %v3543 = vpop.f32.mrb[0].mxu0
    %v3544 = vadd.f32 0.0, %v3543
    %v3545 = vpop.f32.mrb[0].mxu0
    %3546 = vmatprep.mubr.bf16.mxu0 0
    %3547 = vmatmul.mubr.bf16.gmra.mrb[0].mxu0 %v3214
    %v3548 = vpop.f32.mrb[0].mxu0
    %v3549 = vadd.f32 0.0, %v3548
    %v3550 = vpop.f32.mrb[0].mxu0
    %v3551 = vpop.f32.mrb[0].mxu0
    %v3552 = vadd.f32 0.0, %v3551
    %v3553 = vpop.f32.mrb[0].mxu0
    %3554 = vmatprep.mubr.bf16.mxu0 0
    %3555 = vmatmul.mubr.bf16.gmra.mrb[0].mxu0 %v3215
    %v3556 = vpop.f32.mrb[0].mxu0
    %v3557 = vadd.f32 0.0, %v3556
    %v3558 = vpop.f32.mrb[0].mxu0
    %v3559 = vpop.f32.mrb[0].mxu0
    %v3560 = vadd.f32 0.0, %v3559
    %v3561 = vpop.f32.mrb[0].mxu0
    %3562 = vmatprep.mubr.bf16.mxu0 0
    %3563 = vmatmul.mubr.bf16.gmra.mrb[0].mxu0 %v3216
    %v3564 = vpop.f32.mrb[0].mxu0
    %v3565 = vadd.f32 0.0, %v3564
    %v3566 = vpop.f32.mrb[0].mxu0
    %v3567 = vpop.f32.mrb[0].mxu0
    %v3568 = vadd.f32 0.0, %v3567
    %v3569 = vpop.f32.mrb[0].mxu0
    %3570 = vdwg.mxu0
    %v3571 = vadd.f32 %v3057, %v3317
    %v3572 = vadd.f32 %v3058, %v3320
    %v3573 = vadd.f32 %v3059, %v3325
    %v3574 = vadd.f32 %v3060, %v3328
    %v3575 = vadd.f32 %v3061, %v3333
    %v3576 = vadd.f32 %v3062, %v3336
    %v3577 = vadd.f32 %v3063, %v3341
    %v3578 = vadd.f32 %v3064, %v3344
    %v3579 = vadd.f32 %v3065, %v3349
    %v3580 = vadd.f32 %v3066, %v3352
    %v3581 = vadd.f32 %v3067, %v3357
    %v3582 = vadd.f32 %v3068, %v3360
    %v3583 = vadd.f32 %v3069, %v3365
    %v3584 = vadd.f32 %v3070, %v3368
    %v3585 = vadd.f32 %v3071, %v3373
    %v3586 = vadd.f32 %v3072, %v3376
    %v3587 = vadd.f32 %v3073, %v3381
    %v3588 = vadd.f32 %v3074, %v3384
    %v3589 = vadd.f32 %v3075, %v3389
    %v3590 = vadd.f32 %v3076, %v3392
    %v3591 = vadd.f32 %v3077, %v3397
    %v3592 = vadd.f32 %v3078, %v3400
    %v3593 = vadd.f32 %v3079, %v3405
    %v3594 = vadd.f32 %v3080, %v3408
    %v3595 = vadd.f32 %v3081, %v3413
    %v3596 = vadd.f32 %v3082, %v3416
    %v3597 = vadd.f32 %v3083, %v3421
    %v3598 = vadd.f32 %v3084, %v3424
    %v3599 = vadd.f32 %v3085, %v3429
    %v3600 = vadd.f32 %v3086, %v3432
    %v3601 = vadd.f32 %v3087, %v3437
    %v3602 = vadd.f32 %v3088, %v3440
    %v3603 = vadd.f32 %v3089, %v3445
    %v3604 = vadd.f32 %v3090, %v3448
    %v3605 = vadd.f32 %v3091, %v3453
    %v3606 = vadd.f32 %v3092, %v3456
    %v3607 = vadd.f32 %v3093, %v3461
    %v3608 = vadd.f32 %v3094, %v3464
    %v3609 = vadd.f32 %v3095, %v3469
    %v3610 = vadd.f32 %v3096, %v3472
    %v3611 = vadd.f32 %v3097, %v3477
    %v3612 = vadd.f32 %v3098, %v3480
    %v3613 = vadd.f32 %v3099, %v3485
    %v3614 = vadd.f32 %v3100, %v3488
    %v3615 = vadd.f32 %v3101, %v3493
    %v3616 = vadd.f32 %v3102, %v3496
    %v3617 = vadd.f32 %v3103, %v3501
    %v3618 = vadd.f32 %v3104, %v3504
    %v3619 = vadd.f32 %v3105, %v3509
    %v3620 = vadd.f32 %v3106, %v3512
    %v3621 = vadd.f32 %v3107, %v3517
    %v3622 = vadd.f32 %v3108, %v3520
    %v3623 = vadd.f32 %v3109, %v3525
    %v3624 = vadd.f32 %v3110, %v3528
    %v3625 = vadd.f32 %v3111, %v3533
    %v3626 = vadd.f32 %v3112, %v3536
    %v3627 = vadd.f32 %v3113, %v3541
    %v3628 = vadd.f32 %v3114, %v3544
    %v3629 = vadd.f32 %v3115, %v3549
    %v3630 = vadd.f32 %v3116, %v3552
    %v3631 = vadd.f32 %v3117, %v3557
    %v3632 = vadd.f32 %v3118, %v3560
    %v3633 = vadd.f32 %v3119, %v3565
    %v3634 = vadd.f32 %v3120, %v3568
    %v3635 = vld [vmem:[%s1643 + $0x1] sm:$0xff]
    %v3636 = vld [vmem:[%s1643 + $0x9] sm:$0xff]
    %v3637 = vld [vmem:[%s1643 + $0x19] sm:$0xff]
    %v3638 = vld [vmem:[%s1643 + $0x21] sm:$0xff]
    %v3639 = vld [vmem:[%s1643 + $0x31] sm:$0xff]
    %v3640 = vld [vmem:[%s1643 + $0x39] sm:$0xff]
    %v3641 = vld [vmem:[%s1643 + $0x49] sm:$0xff]
    %v3642 = vld [vmem:[%s1643 + $0x51] sm:$0xff]
    %v3643 = vld [vmem:[%s1643 + $0x61] sm:$0xff]
    %v3644 = vld [vmem:[%s1643 + $0x69] sm:$0xff]
    %v3645 = vld [vmem:[%s1643 + $0x79] sm:$0xff]
    %v3646 = vld [vmem:[%s1643 + $0x81] sm:$0xff]
    %v3647 = vld [vmem:[%s1643 + $0x91] sm:$0xff]
    %v3648 = vld [vmem:[%s1643 + $0x99] sm:$0xff]
    %v3649 = vld [vmem:[%s1643 + $0xa9] sm:$0xff]
    %v3650 = vld [vmem:[%s1643 + $0xb1] sm:$0xff]
    %v3651 = vld [vmem:[%s1643 + $0xc1] sm:$0xff]
    %v3652 = vld [vmem:[%s1643 + $0xc9] sm:$0xff]
    %v3653 = vld [vmem:[%s1643 + $0xd9] sm:$0xff]
    %v3654 = vld [vmem:[%s1643 + $0xe1] sm:$0xff]
    %v3655 = vld [vmem:[%s1643 + $0xf1] sm:$0xff]
    %v3656 = vld [vmem:[%s1643 + $0xf9] sm:$0xff]
    %v3657 = vld [vmem:[%s1643 + $0x109] sm:$0xff]
    %v3658 = vld [vmem:[%s1643 + $0x111] sm:$0xff]
    %v3659 = vld [vmem:[%s1643 + $0x121] sm:$0xff]
    %v3660 = vld [vmem:[%s1643 + $0x129] sm:$0xff]
    %v3661 = vld [vmem:[%s1643 + $0x139] sm:$0xff]
    %v3662 = vld [vmem:[%s1643 + $0x141] sm:$0xff]
    %v3663 = vld [vmem:[%s1643 + $0x151] sm:$0xff]
    %v3664 = vld [vmem:[%s1643 + $0x159] sm:$0xff]
    %v3665 = vld [vmem:[%s1643 + $0x169] sm:$0xff]
    %v3666 = vld [vmem:[%s1643 + $0x171] sm:$0xff]
    %v3667 = vld [vmem:[%s1643 + $0x1b1] sm:$0xff]
    %v3668 = vld [vmem:[%s1643 + $0x1b9] sm:$0xff]
    %v3669 = vld [vmem:[%s1643 + $0x1c9] sm:$0xff]
    %v3670 = vld [vmem:[%s1643 + $0x1d1] sm:$0xff]
    %v3671 = vld [vmem:[%s1643 + $0x1e1] sm:$0xff]
    %v3672 = vld [vmem:[%s1643 + $0x1e9] sm:$0xff]
    %v3673 = vld [vmem:[%s1643 + $0x1f9] sm:$0xff]
    %v3674 = vld [vmem:[%s1643 + $0x201] sm:$0xff]
    %v3675 = vld [vmem:[%s1643 + $0x211] sm:$0xff]
    %v3676 = vld [vmem:[%s1643 + $0x219] sm:$0xff]
    %v3677 = vld [vmem:[%s1643 + $0x229] sm:$0xff]
    %v3678 = vld [vmem:[%s1643 + $0x231] sm:$0xff]
    %v3679 = vld [vmem:[%s1643 + $0x241] sm:$0xff]
    %v3680 = vld [vmem:[%s1643 + $0x249] sm:$0xff]
    %v3681 = vld [vmem:[%s1643 + $0x259] sm:$0xff]
    %v3682 = vld [vmem:[%s1643 + $0x261] sm:$0xff]
    %v3683 = vld [vmem:[%s1643 + $0x271] sm:$0xff]
    %v3684 = vld [vmem:[%s1643 + $0x279] sm:$0xff]
    %v3685 = vld [vmem:[%s1643 + $0x289] sm:$0xff]
    %v3686 = vld [vmem:[%s1643 + $0x291] sm:$0xff]
    %v3687 = vld [vmem:[%s1643 + $0x2a1] sm:$0xff]
    %v3688 = vld [vmem:[%s1643 + $0x2a9] sm:$0xff]
    %v3689 = vld [vmem:[%s1643 + $0x2b9] sm:$0xff]
    %v3690 = vld [vmem:[%s1643 + $0x2c1] sm:$0xff]
    %v3691 = vld [vmem:[%s1643 + $0x2d1] sm:$0xff]
    %v3692 = vld [vmem:[%s1643 + $0x2d9] sm:$0xff]
    %v3693 = vld [vmem:[%s1643 + $0x2e9] sm:$0xff]
    %v3694 = vld [vmem:[%s1643 + $0x2f1] sm:$0xff]
    %v3695 = vld [vmem:[%s1643 + $0x301] sm:$0xff]
    %v3696 = vld [vmem:[%s1643 + $0x309] sm:$0xff]
    %v3697 = vld [vmem:[%s1643 + $0x319] sm:$0xff]
    %v3698 = vld [vmem:[%s1643 + $0x321] sm:$0xff]
    %v3699 = vpack.c.bf16 %v3636, %v3635
    %v3700 = vpack.c.bf16 %v3638, %v3637
    %v3701 = vpack.c.bf16 %v3640, %v3639
    %v3702 = vpack.c.bf16 %v3642, %v3641
    %v3703 = vpack.c.bf16 %v3644, %v3643
    %v3704 = vpack.c.bf16 %v3646, %v3645
    %v3705 = vpack.c.bf16 %v3648, %v3647
    %v3706 = vpack.c.bf16 %v3650, %v3649
    %v3707 = vpack.c.bf16 %v3652, %v3651
    %v3708 = vpack.c.bf16 %v3654, %v3653
    %v3709 = vpack.c.bf16 %v3656, %v3655
    %v3710 = vpack.c.bf16 %v3658, %v3657
    %v3711 = vpack.c.bf16 %v3660, %v3659
    %v3712 = vpack.c.bf16 %v3662, %v3661
    %v3713 = vpack.c.bf16 %v3664, %v3663
    %v3714 = vpack.c.bf16 %v3666, %v3665
    %v3715 = vpack.c.bf16 %v3668, %v3667
    %v3716 = vpack.c.bf16 %v3670, %v3669
    %v3717 = vpack.c.bf16 %v3672, %v3671
    %v3718 = vpack.c.bf16 %v3674, %v3673
    %v3719 = vpack.c.bf16 %v3676, %v3675
    %v3720 = vpack.c.bf16 %v3678, %v3677
    %v3721 = vpack.c.bf16 %v3680, %v3679
    %v3722 = vpack.c.bf16 %v3682, %v3681
    %v3723 = vpack.c.bf16 %v3684, %v3683
    %v3724 = vpack.c.bf16 %v3686, %v3685
    %v3725 = vpack.c.bf16 %v3688, %v3687
    %v3726 = vpack.c.bf16 %v3690, %v3689
    %v3727 = vpack.c.bf16 %v3692, %v3691
    %v3728 = vpack.c.bf16 %v3694, %v3693
    %v3729 = vpack.c.bf16 %v3696, %v3695
    %v3730 = vpack.c.bf16 %v3698, %v3697
    %s3731 = scalar_lea.vmem [#allocation8], 256
    %v3732 = vld [vmem:[%s3731] sm:$0xf]
    %v3733 = vld [vmem:[%s3731 + $0x4] sm:$0xf]
    %v3734 = vld [vmem:[%s3731 + $0x8] sm:$0xf]
    %v3735 = vld [vmem:[%s3731 + $0xc] sm:$0xf]
    %v3736 = vld [vmem:[%s3731 + $0x10] sm:$0xf]
    %v3737 = vld [vmem:[%s3731 + $0x14] sm:$0xf]
    %v3738 = vld [vmem:[%s3731 + $0x18] sm:$0xf]
    %v3739 = vld [vmem:[%s3731 + $0x1c] sm:$0xf]
    %v3740 = vld [vmem:[%s3731 + $0x20] sm:$0xf]
    %v3741 = vld [vmem:[%s3731 + $0x24] sm:$0xf]
    %v3742 = vld [vmem:[%s3731 + $0x28] sm:$0xf]
    %v3743 = vld [vmem:[%s3731 + $0x2c] sm:$0xf]
    %v3744 = vld [vmem:[%s3731 + $0x30] sm:$0xf]
    %v3745 = vld [vmem:[%s3731 + $0x34] sm:$0xf]
    %v3746 = vld [vmem:[%s3731 + $0x38] sm:$0xf]
    %v3747 = vld [vmem:[%s3731 + $0x3c] sm:$0xf]
    %v3764 = vunpack.c.l.b16 %v3732
    %v3765 = vunpack.c.l.b16 %v3733
    %v3766 = vunpack.c.l.b16 %v3734
    %v3767 = vunpack.c.l.b16 %v3735
    %v3768 = vunpack.c.l.b16 %v3736
    %v3769 = vunpack.c.l.b16 %v3737
    %v3770 = vunpack.c.l.b16 %v3738
    %v3771 = vunpack.c.l.b16 %v3739
    %v3772 = vunpack.c.l.b16 %v3740
    %v3773 = vunpack.c.l.b16 %v3741
    %v3774 = vunpack.c.l.b16 %v3742
    %v3775 = vunpack.c.l.b16 %v3743
    %v3776 = vunpack.c.l.b16 %v3744
    %v3777 = vunpack.c.l.b16 %v3745
    %v3778 = vunpack.c.l.b16 %v3746
    %v3779 = vunpack.c.l.b16 %v3747
    %v3780 = vpack.c.b16 %v3765, %v3764
    %v3781 = vpack.c.b16 %v3767, %v3766
    %v3782 = vpack.c.b16 %v3769, %v3768
    %v3783 = vpack.c.b16 %v3771, %v3770
    %v3784 = vpack.c.b16 %v3773, %v3772
    %v3785 = vpack.c.b16 %v3775, %v3774
    %v3786 = vpack.c.b16 %v3777, %v3776
    %v3787 = vpack.c.b16 %v3779, %v3778
    %3796 = vmatprep.subr.bf16.mxu0 0
    %3797 = vmatpush1.bf16.msra.mxu0 %v3780
    %3798 = vmatprep.subr.bf16.mxu0 0
    %3799 = vmatpush1.bf16.msra.mxu0 %v3781
    %3800 = vmatprep.subr.bf16.mxu0 0
    %3801 = vmatpush1.bf16.msra.mxu0 %v3782
    %3802 = vmatprep.subr.bf16.mxu0 0
    %3803 = vmatpush1.bf16.msra.mxu0 %v3783
    %3804 = vmatprep.subr.bf16.mxu0 0
    %3805 = vmatpush1.bf16.msra.mxu0 %v3784
    %3806 = vmatprep.subr.bf16.mxu0 0
    %3807 = vmatpush1.bf16.msra.mxu0 %v3785
    %3808 = vmatprep.subr.bf16.mxu0 0
    %3809 = vmatpush1.bf16.msra.mxu0 %v3786
    %3810 = vmatprep.subr.bf16.mxu0 0
    %3811 = vmatpush1.bf16.msra.mxu0 %v3787
    %3812 = vmatprep.subr.bf16.mxu0 0
    %3813 = vmatpush1.bf16.msra.mxu0 0
    %3814 = vmatprep.subr.bf16.mxu0 0
    %3815 = vmatpush1.bf16.msra.mxu0 0
    %3816 = vmatprep.subr.bf16.mxu0 0
    %3817 = vmatpush1.bf16.msra.mxu0 0
    %3818 = vmatprep.subr.bf16.mxu0 0
    %3819 = vmatpush1.bf16.msra.mxu0 0
    %3820 = vmatprep.subr.bf16.mxu0 0
    %3821 = vmatpush1.bf16.msra.mxu0 0
    %3822 = vmatprep.subr.bf16.mxu0 0
    %3823 = vmatpush1.bf16.msra.mxu0 0
    %3824 = vmatprep.subr.bf16.mxu0 0
    %3825 = vmatpush1.bf16.msra.mxu0 0
    %3826 = vmatprep.subr.bf16.mxu0 0
    %3827 = vmatpush1.bf16.msra.mxu0 0
    %3828 = vmatprep.mubr.bf16.mxu0 0
    %3829 = vmatmul.mubr.bf16.gmra.mrb[0].mxu0 %v3699
    %v3830 = vpop.f32.mrb[0].mxu0
    %v3831 = vadd.f32 0.0, %v3830
    %v3832 = vpop.f32.mrb[0].mxu0
    %v3833 = vpop.f32.mrb[0].mxu0
    %v3834 = vadd.f32 0.0, %v3833
    %v3835 = vpop.f32.mrb[0].mxu0
    %3836 = vmatprep.mubr.bf16.mxu0 0
    %3837 = vmatmul.mubr.bf16.gmra.mrb[0].mxu0 %v3700
    %v3838 = vpop.f32.mrb[0].mxu0
    %v3839 = vadd.f32 0.0, %v3838
    %v3840 = vpop.f32.mrb[0].mxu0
    %v3841 = vpop.f32.mrb[0].mxu0
    %v3842 = vadd.f32 0.0, %v3841
    %v3843 = vpop.f32.mrb[0].mxu0
    %3844 = vmatprep.mubr.bf16.mxu0 0
    %3845 = vmatmul.mubr.bf16.gmra.mrb[0].mxu0 %v3701
    %v3846 = vpop.f32.mrb[0].mxu0
    %v3847 = vadd.f32 0.0, %v3846
    %v3848 = vpop.f32.mrb[0].mxu0
    %v3849 = vpop.f32.mrb[0].mxu0
    %v3850 = vadd.f32 0.0, %v3849
    %v3851 = vpop.f32.mrb[0].mxu0
    %3852 = vmatprep.mubr.bf16.mxu0 0
    %3853 = vmatmul.mubr.bf16.gmra.mrb[0].mxu0 %v3702
    %v3854 = vpop.f32.mrb[0].mxu0
    %v3855 = vadd.f32 0.0, %v3854
    %v3856 = vpop.f32.mrb[0].mxu0
    %v3857 = vpop.f32.mrb[0].mxu0
    %v3858 = vadd.f32 0.0, %v3857
    %v3859 = vpop.f32.mrb[0].mxu0
    %3860 = vmatprep.mubr.bf16.mxu0 0
    %3861 = vmatmul.mubr.bf16.gmra.mrb[0].mxu0 %v3703
    %v3862 = vpop.f32.mrb[0].mxu0
    %v3863 = vadd.f32 0.0, %v3862
    %v3864 = vpop.f32.mrb[0].mxu0
    %v3865 = vpop.f32.mrb[0].mxu0
    %v3866 = vadd.f32 0.0, %v3865
    %v3867 = vpop.f32.mrb[0].mxu0
    %3868 = vmatprep.mubr.bf16.mxu0 0
    %3869 = vmatmul.mubr.bf16.gmra.mrb[0].mxu0 %v3704
    %v3870 = vpop.f32.mrb[0].mxu0
    %v3871 = vadd.f32 0.0, %v3870
    %v3872 = vpop.f32.mrb[0].mxu0
    %v3873 = vpop.f32.mrb[0].mxu0
    %v3874 = vadd.f32 0.0, %v3873
    %v3875 = vpop.f32.mrb[0].mxu0
    %3876 = vmatprep.mubr.bf16.mxu0 0
    %3877 = vmatmul.mubr.bf16.gmra.mrb[0].mxu0 %v3705
    %v3878 = vpop.f32.mrb[0].mxu0
    %v3879 = vadd.f32 0.0, %v3878
    %v3880 = vpop.f32.mrb[0].mxu0
    %v3881 = vpop.f32.mrb[0].mxu0
    %v3882 = vadd.f32 0.0, %v3881
    %v3883 = vpop.f32.mrb[0].mxu0
    %3884 = vmatprep.mubr.bf16.mxu0 0
    %3885 = vmatmul.mubr.bf16.gmra.mrb[0].mxu0 %v3706
    %v3886 = vpop.f32.mrb[0].mxu0
    %v3887 = vadd.f32 0.0, %v3886
    %v3888 = vpop.f32.mrb[0].mxu0
    %v3889 = vpop.f32.mrb[0].mxu0
    %v3890 = vadd.f32 0.0, %v3889
    %v3891 = vpop.f32.mrb[0].mxu0
    %3892 = vmatprep.mubr.bf16.mxu0 0
    %3893 = vmatmul.mubr.bf16.gmra.mrb[0].mxu0 %v3707
    %v3894 = vpop.f32.mrb[0].mxu0
    %v3895 = vadd.f32 0.0, %v3894
    %v3896 = vpop.f32.mrb[0].mxu0
    %v3897 = vpop.f32.mrb[0].mxu0
    %v3898 = vadd.f32 0.0, %v3897
    %v3899 = vpop.f32.mrb[0].mxu0
    %3900 = vmatprep.mubr.bf16.mxu0 0
    %3901 = vmatmul.mubr.bf16.gmra.mrb[0].mxu0 %v3708
    %v3902 = vpop.f32.mrb[0].mxu0
    %v3903 = vadd.f32 0.0, %v3902
    %v3904 = vpop.f32.mrb[0].mxu0
    %v3905 = vpop.f32.mrb[0].mxu0
    %v3906 = vadd.f32 0.0, %v3905
    %v3907 = vpop.f32.mrb[0].mxu0
    %3908 = vmatprep.mubr.bf16.mxu0 0
    %3909 = vmatmul.mubr.bf16.gmra.mrb[0].mxu0 %v3709
    %v3910 = vpop.f32.mrb[0].mxu0
    %v3911 = vadd.f32 0.0, %v3910
    %v3912 = vpop.f32.mrb[0].mxu0
    %v3913 = vpop.f32.mrb[0].mxu0
    %v3914 = vadd.f32 0.0, %v3913
    %v3915 = vpop.f32.mrb[0].mxu0
    %3916 = vmatprep.mubr.bf16.mxu0 0
    %3917 = vmatmul.mubr.bf16.gmra.mrb[0].mxu0 %v3710
    %v3918 = vpop.f32.mrb[0].mxu0
    %v3919 = vadd.f32 0.0, %v3918
    %v3920 = vpop.f32.mrb[0].mxu0
    %v3921 = vpop.f32.mrb[0].mxu0
    %v3922 = vadd.f32 0.0, %v3921
    %v3923 = vpop.f32.mrb[0].mxu0
    %3924 = vmatprep.mubr.bf16.mxu0 0
    %3925 = vmatmul.mubr.bf16.gmra.mrb[0].mxu0 %v3711
    %v3926 = vpop.f32.mrb[0].mxu0
    %v3927 = vadd.f32 0.0, %v3926
    %v3928 = vpop.f32.mrb[0].mxu0
    %v3929 = vpop.f32.mrb[0].mxu0
    %v3930 = vadd.f32 0.0, %v3929
    %v3931 = vpop.f32.mrb[0].mxu0
    %3932 = vmatprep.mubr.bf16.mxu0 0
    %3933 = vmatmul.mubr.bf16.gmra.mrb[0].mxu0 %v3712
    %v3934 = vpop.f32.mrb[0].mxu0
    %v3935 = vadd.f32 0.0, %v3934
    %v3936 = vpop.f32.mrb[0].mxu0
    %v3937 = vpop.f32.mrb[0].mxu0
    %v3938 = vadd.f32 0.0, %v3937
    %v3939 = vpop.f32.mrb[0].mxu0
    %3940 = vmatprep.mubr.bf16.mxu0 0
    %3941 = vmatmul.mubr.bf16.gmra.mrb[0].mxu0 %v3713
    %v3942 = vpop.f32.mrb[0].mxu0
    %v3943 = vadd.f32 0.0, %v3942
    %v3944 = vpop.f32.mrb[0].mxu0
    %v3945 = vpop.f32.mrb[0].mxu0
    %v3946 = vadd.f32 0.0, %v3945
    %v3947 = vpop.f32.mrb[0].mxu0
    %3948 = vmatprep.mubr.bf16.mxu0 0
    %3949 = vmatmul.mubr.bf16.gmra.mrb[0].mxu0 %v3714
    %v3950 = vpop.f32.mrb[0].mxu0
    %v3951 = vadd.f32 0.0, %v3950
    %v3952 = vpop.f32.mrb[0].mxu0
    %v3953 = vpop.f32.mrb[0].mxu0
    %v3954 = vadd.f32 0.0, %v3953
    %v3955 = vpop.f32.mrb[0].mxu0
    %3956 = vmatprep.mubr.bf16.mxu0 0
    %3957 = vmatmul.mubr.bf16.gmra.mrb[0].mxu0 %v3715
    %v3958 = vpop.f32.mrb[0].mxu0
    %v3959 = vadd.f32 0.0, %v3958
    %v3960 = vpop.f32.mrb[0].mxu0
    %v3961 = vpop.f32.mrb[0].mxu0
    %v3962 = vadd.f32 0.0, %v3961
    %v3963 = vpop.f32.mrb[0].mxu0
    %3964 = vmatprep.mubr.bf16.mxu0 0
    %3965 = vmatmul.mubr.bf16.gmra.mrb[0].mxu0 %v3716
    %v3966 = vpop.f32.mrb[0].mxu0
    %v3967 = vadd.f32 0.0, %v3966
    %v3968 = vpop.f32.mrb[0].mxu0
    %v3969 = vpop.f32.mrb[0].mxu0
    %v3970 = vadd.f32 0.0, %v3969
    %v3971 = vpop.f32.mrb[0].mxu0
    %3972 = vmatprep.mubr.bf16.mxu0 0
    %3973 = vmatmul.mubr.bf16.gmra.mrb[0].mxu0 %v3717
    %v3974 = vpop.f32.mrb[0].mxu0
    %v3975 = vadd.f32 0.0, %v3974
    %v3976 = vpop.f32.mrb[0].mxu0
    %v3977 = vpop.f32.mrb[0].mxu0
    %v3978 = vadd.f32 0.0, %v3977
    %v3979 = vpop.f32.mrb[0].mxu0
    %3980 = vmatprep.mubr.bf16.mxu0 0
    %3981 = vmatmul.mubr.bf16.gmra.mrb[0].mxu0 %v3718
    %v3982 = vpop.f32.mrb[0].mxu0
    %v3983 = vadd.f32 0.0, %v3982
    %v3984 = vpop.f32.mrb[0].mxu0
    %v3985 = vpop.f32.mrb[0].mxu0
    %v3986 = vadd.f32 0.0, %v3985
    %v3987 = vpop.f32.mrb[0].mxu0
    %3988 = vmatprep.mubr.bf16.mxu0 0
    %3989 = vmatmul.mubr.bf16.gmra.mrb[0].mxu0 %v3719
    %v3990 = vpop.f32.mrb[0].mxu0
    %v3991 = vadd.f32 0.0, %v3990
    %v3992 = vpop.f32.mrb[0].mxu0
    %v3993 = vpop.f32.mrb[0].mxu0
    %v3994 = vadd.f32 0.0, %v3993
    %v3995 = vpop.f32.mrb[0].mxu0
    %3996 = vmatprep.mubr.bf16.mxu0 0
    %3997 = vmatmul.mubr.bf16.gmra.mrb[0].mxu0 %v3720
    %v3998 = vpop.f32.mrb[0].mxu0
    %v3999 = vadd.f32 0.0, %v3998
    %v4000 = vpop.f32.mrb[0].mxu0
    %v4001 = vpop.f32.mrb[0].mxu0
    %v4002 = vadd.f32 0.0, %v4001
    %v4003 = vpop.f32.mrb[0].mxu0
    %4004 = vmatprep.mubr.bf16.mxu0 0
    %4005 = vmatmul.mubr.bf16.gmra.mrb[0].mxu0 %v3721
    %v4006 = vpop.f32.mrb[0].mxu0
    %v4007 = vadd.f32 0.0, %v4006
    %v4008 = vpop.f32.mrb[0].mxu0
    %v4009 = vpop.f32.mrb[0].mxu0
    %v4010 = vadd.f32 0.0, %v4009
    %v4011 = vpop.f32.mrb[0].mxu0
    %4012 = vmatprep.mubr.bf16.mxu0 0
    %4013 = vmatmul.mubr.bf16.gmra.mrb[0].mxu0 %v3722
    %v4014 = vpop.f32.mrb[0].mxu0
    %v4015 = vadd.f32 0.0, %v4014
    %v4016 = vpop.f32.mrb[0].mxu0
    %v4017 = vpop.f32.mrb[0].mxu0
    %v4018 = vadd.f32 0.0, %v4017
    %v4019 = vpop.f32.mrb[0].mxu0
    %4020 = vmatprep.mubr.bf16.mxu0 0
    %4021 = vmatmul.mubr.bf16.gmra.mrb[0].mxu0 %v3723
    %v4022 = vpop.f32.mrb[0].mxu0
    %v4023 = vadd.f32 0.0, %v4022
    %v4024 = vpop.f32.mrb[0].mxu0
    %v4025 = vpop.f32.mrb[0].mxu0
    %v4026 = vadd.f32 0.0, %v4025
    %v4027 = vpop.f32.mrb[0].mxu0
    %4028 = vmatprep.mubr.bf16.mxu0 0
    %4029 = vmatmul.mubr.bf16.gmra.mrb[0].mxu0 %v3724
    %v4030 = vpop.f32.mrb[0].mxu0
    %v4031 = vadd.f32 0.0, %v4030
    %v4032 = vpop.f32.mrb[0].mxu0
    %v4033 = vpop.f32.mrb[0].mxu0
    %v4034 = vadd.f32 0.0, %v4033
    %v4035 = vpop.f32.mrb[0].mxu0
    %4036 = vmatprep.mubr.bf16.mxu0 0
    %4037 = vmatmul.mubr.bf16.gmra.mrb[0].mxu0 %v3725
    %v4038 = vpop.f32.mrb[0].mxu0
    %v4039 = vadd.f32 0.0, %v4038
    %v4040 = vpop.f32.mrb[0].mxu0
    %v4041 = vpop.f32.mrb[0].mxu0
    %v4042 = vadd.f32 0.0, %v4041
    %v4043 = vpop.f32.mrb[0].mxu0
    %4044 = vmatprep.mubr.bf16.mxu0 0
    %4045 = vmatmul.mubr.bf16.gmra.mrb[0].mxu0 %v3726
    %v4046 = vpop.f32.mrb[0].mxu0
    %v4047 = vadd.f32 0.0, %v4046
    %v4048 = vpop.f32.mrb[0].mxu0
    %v4049 = vpop.f32.mrb[0].mxu0
    %v4050 = vadd.f32 0.0, %v4049
    %v4051 = vpop.f32.mrb[0].mxu0
    %4052 = vmatprep.mubr.bf16.mxu0 0
    %4053 = vmatmul.mubr.bf16.gmra.mrb[0].mxu0 %v3727
    %v4054 = vpop.f32.mrb[0].mxu0
    %v4055 = vadd.f32 0.0, %v4054
    %v4056 = vpop.f32.mrb[0].mxu0
    %v4057 = vpop.f32.mrb[0].mxu0
    %v4058 = vadd.f32 0.0, %v4057
    %v4059 = vpop.f32.mrb[0].mxu0
    %4060 = vmatprep.mubr.bf16.mxu0 0
    %4061 = vmatmul.mubr.bf16.gmra.mrb[0].mxu0 %v3728
    %v4062 = vpop.f32.mrb[0].mxu0
    %v4063 = vadd.f32 0.0, %v4062
    %v4064 = vpop.f32.mrb[0].mxu0
    %v4065 = vpop.f32.mrb[0].mxu0
    %v4066 = vadd.f32 0.0, %v4065
    %v4067 = vpop.f32.mrb[0].mxu0
    %4068 = vmatprep.mubr.bf16.mxu0 0
    %4069 = vmatmul.mubr.bf16.gmra.mrb[0].mxu0 %v3729
    %v4070 = vpop.f32.mrb[0].mxu0
    %v4071 = vadd.f32 0.0, %v4070
    %v4072 = vpop.f32.mrb[0].mxu0
    %v4073 = vpop.f32.mrb[0].mxu0
    %v4074 = vadd.f32 0.0, %v4073
    %v4075 = vpop.f32.mrb[0].mxu0
    %4076 = vmatprep.mubr.bf16.mxu0 0
    %4077 = vmatmul.mubr.bf16.gmra.mrb[0].mxu0 %v3730
    %v4078 = vpop.f32.mrb[0].mxu0
    %v4079 = vadd.f32 0.0, %v4078
    %v4080 = vpop.f32.mrb[0].mxu0
    %v4081 = vpop.f32.mrb[0].mxu0
    %v4082 = vadd.f32 0.0, %v4081
    %v4083 = vpop.f32.mrb[0].mxu0
    %4084 = vdwg.mxu0
    %v4085 = vadd.f32 %v3571, %v3831
    %v4086 = vadd.f32 %v3572, %v3834
    %v4087 = vadd.f32 %v3573, %v3839
    %v4088 = vadd.f32 %v3574, %v3842
    %v4089 = vadd.f32 %v3575, %v3847
    %v4090 = vadd.f32 %v3576, %v3850
    %v4091 = vadd.f32 %v3577, %v3855
    %v4092 = vadd.f32 %v3578, %v3858
    %v4093 = vadd.f32 %v3579, %v3863
    %v4094 = vadd.f32 %v3580, %v3866
    %v4095 = vadd.f32 %v3581, %v3871
    %v4096 = vadd.f32 %v3582, %v3874
    %v4097 = vadd.f32 %v3583, %v3879
    %v4098 = vadd.f32 %v3584, %v3882
    %v4099 = vadd.f32 %v3585, %v3887
    %v4100 = vadd.f32 %v3586, %v3890
    %v4101 = vadd.f32 %v3587, %v3895
    %v4102 = vadd.f32 %v3588, %v3898
    %v4103 = vadd.f32 %v3589, %v3903
    %v4104 = vadd.f32 %v3590, %v3906
    %v4105 = vadd.f32 %v3591, %v3911
    %v4106 = vadd.f32 %v3592, %v3914
    %v4107 = vadd.f32 %v3593, %v3919
    %v4108 = vadd.f32 %v3594, %v3922
    %v4109 = vadd.f32 %v3595, %v3927
    %v4110 = vadd.f32 %v3596, %v3930
    %v4111 = vadd.f32 %v3597, %v3935
    %v4112 = vadd.f32 %v3598, %v3938
    %v4113 = vadd.f32 %v3599, %v3943
    %v4114 = vadd.f32 %v3600, %v3946
    %v4115 = vadd.f32 %v3601, %v3951
    %v4116 = vadd.f32 %v3602, %v3954
    %v4117 = vadd.f32 %v3603, %v3959
    %v4118 = vadd.f32 %v3604, %v3962
    %v4119 = vadd.f32 %v3605, %v3967
    %v4120 = vadd.f32 %v3606, %v3970
    %v4121 = vadd.f32 %v3607, %v3975
    %v4122 = vadd.f32 %v3608, %v3978
    %v4123 = vadd.f32 %v3609, %v3983
    %v4124 = vadd.f32 %v3610, %v3986
    %v4125 = vadd.f32 %v3611, %v3991
    %v4126 = vadd.f32 %v3612, %v3994
    %v4127 = vadd.f32 %v3613, %v3999
    %v4128 = vadd.f32 %v3614, %v4002
    %v4129 = vadd.f32 %v3615, %v4007
    %v4130 = vadd.f32 %v3616, %v4010
    %v4131 = vadd.f32 %v3617, %v4015
    %v4132 = vadd.f32 %v3618, %v4018
    %v4133 = vadd.f32 %v3619, %v4023
    %v4134 = vadd.f32 %v3620, %v4026
    %v4135 = vadd.f32 %v3621, %v4031
    %v4136 = vadd.f32 %v3622, %v4034
    %v4137 = vadd.f32 %v3623, %v4039
    %v4138 = vadd.f32 %v3624, %v4042
    %v4139 = vadd.f32 %v3625, %v4047
    %v4140 = vadd.f32 %v3626, %v4050
    %v4141 = vadd.f32 %v3627, %v4055
    %v4142 = vadd.f32 %v3628, %v4058
    %v4143 = vadd.f32 %v3629, %v4063
    %v4144 = vadd.f32 %v3630, %v4066
    %v4145 = vadd.f32 %v3631, %v4071
    %v4146 = vadd.f32 %v3632, %v4074
    %v4147 = vadd.f32 %v3633, %v4079
    %v4148 = vadd.f32 %v3634, %v4082
    %v4149 = vld [vmem:[%s1643 + $0x2] sm:$0xff]
    %v4150 = vld [vmem:[%s1643 + $0xa] sm:$0xff]
    %v4151 = vld [vmem:[%s1643 + $0x1a] sm:$0xff]
    %v4152 = vld [vmem:[%s1643 + $0x22] sm:$0xff]
    %v4153 = vld [vmem:[%s1643 + $0x32] sm:$0xff]
    %v4154 = vld [vmem:[%s1643 + $0x3a] sm:$0xff]
    %v4155 = vld [vmem:[%s1643 + $0x4a] sm:$0xff]
    %v4156 = vld [vmem:[%s1643 + $0x52] sm:$0xff]
    %v4157 = vld [vmem:[%s1643 + $0x62] sm:$0xff]
    %v4158 = vld [vmem:[%s1643 + $0x6a] sm:$0xff]
    %v4159 = vld [vmem:[%s1643 + $0x7a] sm:$0xff]
    %v4160 = vld [vmem:[%s1643 + $0x82] sm:$0xff]
    %v4161 = vld [vmem:[%s1643 + $0x92] sm:$0xff]
    %v4162 = vld [vmem:[%s1643 + $0x9a] sm:$0xff]
    %v4163 = vld [vmem:[%s1643 + $0xaa] sm:$0xff]
    %v4164 = vld [vmem:[%s1643 + $0xb2] sm:$0xff]
    %v4165 = vld [vmem:[%s1643 + $0xc2] sm:$0xff]
    %v4166 = vld [vmem:[%s1643 + $0xca] sm:$0xff]
    %v4167 = vld [vmem:[%s1643 + $0xda] sm:$0xff]
    %v4168 = vld [vmem:[%s1643 + $0xe2] sm:$0xff]
    %v4169 = vld [vmem:[%s1643 + $0xf2] sm:$0xff]
    %v4170 = vld [vmem:[%s1643 + $0xfa] sm:$0xff]
    %v4171 = vld [vmem:[%s1643 + $0x10a] sm:$0xff]
    %v4172 = vld [vmem:[%s1643 + $0x112] sm:$0xff]
    %v4173 = vld [vmem:[%s1643 + $0x122] sm:$0xff]
    %v4174 = vld [vmem:[%s1643 + $0x12a] sm:$0xff]
    %v4175 = vld [vmem:[%s1643 + $0x13a] sm:$0xff]
    %v4176 = vld [vmem:[%s1643 + $0x142] sm:$0xff]
    %v4177 = vld [vmem:[%s1643 + $0x152] sm:$0xff]
    %v4178 = vld [vmem:[%s1643 + $0x15a] sm:$0xff]
    %v4179 = vld [vmem:[%s1643 + $0x16a] sm:$0xff]
    %v4180 = vld [vmem:[%s1643 + $0x172] sm:$0xff]
    %v4181 = vld [vmem:[%s1643 + $0x1b2] sm:$0xff]
    %v4182 = vld [vmem:[%s1643 + $0x1ba] sm:$0xff]
    %v4183 = vld [vmem:[%s1643 + $0x1ca] sm:$0xff]
    %v4184 = vld [vmem:[%s1643 + $0x1d2] sm:$0xff]
    %v4185 = vld [vmem:[%s1643 + $0x1e2] sm:$0xff]
    %v4186 = vld [vmem:[%s1643 + $0x1ea] sm:$0xff]
    %v4187 = vld [vmem:[%s1643 + $0x1fa] sm:$0xff]
    %v4188 = vld [vmem:[%s1643 + $0x202] sm:$0xff]
    %v4189 = vld [vmem:[%s1643 + $0x212] sm:$0xff]
    %v4190 = vld [vmem:[%s1643 + $0x21a] sm:$0xff]
    %v4191 = vld [vmem:[%s1643 + $0x22a] sm:$0xff]
    %v4192 = vld [vmem:[%s1643 + $0x232] sm:$0xff]
    %v4193 = vld [vmem:[%s1643 + $0x242] sm:$0xff]
    %v4194 = vld [vmem:[%s1643 + $0x24a] sm:$0xff]
    %v4195 = vld [vmem:[%s1643 + $0x25a] sm:$0xff]
    %v4196 = vld [vmem:[%s1643 + $0x262] sm:$0xff]
    %v4197 = vld [vmem:[%s1643 + $0x272] sm:$0xff]
    %v4198 = vld [vmem:[%s1643 + $0x27a] sm:$0xff]
    %v4199 = vld [vmem:[%s1643 + $0x28a] sm:$0xff]
    %v4200 = vld [vmem:[%s1643 + $0x292] sm:$0xff]
    %v4201 = vld [vmem:[%s1643 + $0x2a2] sm:$0xff]
    %v4202 = vld [vmem:[%s1643 + $0x2aa] sm:$0xff]
    %v4203 = vld [vmem:[%s1643 + $0x2ba] sm:$0xff]
    %v4204 = vld [vmem:[%s1643 + $0x2c2] sm:$0xff]
    %v4205 = vld [vmem:[%s1643 + $0x2d2] sm:$0xff]
    %v4206 = vld [vmem:[%s1643 + $0x2da] sm:$0xff]
    %v4207 = vld [vmem:[%s1643 + $0x2ea] sm:$0xff]
    %v4208 = vld [vmem:[%s1643 + $0x2f2] sm:$0xff]
    %v4209 = vld [vmem:[%s1643 + $0x302] sm:$0xff]
    %v4210 = vld [vmem:[%s1643 + $0x30a] sm:$0xff]
    %v4211 = vld [vmem:[%s1643 + $0x31a] sm:$0xff]
    %v4212 = vld [vmem:[%s1643 + $0x322] sm:$0xff]
    %v4213 = vpack.c.bf16 %v4150, %v4149
    %v4214 = vpack.c.bf16 %v4152, %v4151
    %v4215 = vpack.c.bf16 %v4154, %v4153
    %v4216 = vpack.c.bf16 %v4156, %v4155
    %v4217 = vpack.c.bf16 %v4158, %v4157
    %v4218 = vpack.c.bf16 %v4160, %v4159
    %v4219 = vpack.c.bf16 %v4162, %v4161
    %v4220 = vpack.c.bf16 %v4164, %v4163
    %v4221 = vpack.c.bf16 %v4166, %v4165
    %v4222 = vpack.c.bf16 %v4168, %v4167
    %v4223 = vpack.c.bf16 %v4170, %v4169
    %v4224 = vpack.c.bf16 %v4172, %v4171
    %v4225 = vpack.c.bf16 %v4174, %v4173
    %v4226 = vpack.c.bf16 %v4176, %v4175
    %v4227 = vpack.c.bf16 %v4178, %v4177
    %v4228 = vpack.c.bf16 %v4180, %v4179
    %v4229 = vpack.c.bf16 %v4182, %v4181
    %v4230 = vpack.c.bf16 %v4184, %v4183
    %v4231 = vpack.c.bf16 %v4186, %v4185
    %v4232 = vpack.c.bf16 %v4188, %v4187
    %v4233 = vpack.c.bf16 %v4190, %v4189
    %v4234 = vpack.c.bf16 %v4192, %v4191
    %v4235 = vpack.c.bf16 %v4194, %v4193
    %v4236 = vpack.c.bf16 %v4196, %v4195
    %v4237 = vpack.c.bf16 %v4198, %v4197
    %v4238 = vpack.c.bf16 %v4200, %v4199
    %v4239 = vpack.c.bf16 %v4202, %v4201
    %v4240 = vpack.c.bf16 %v4204, %v4203
    %v4241 = vpack.c.bf16 %v4206, %v4205
    %v4242 = vpack.c.bf16 %v4208, %v4207
    %v4243 = vpack.c.bf16 %v4210, %v4209
    %v4244 = vpack.c.bf16 %v4212, %v4211
    %s4245 = scalar_lea.vmem [#allocation8], 320
    %v4246 = vld [vmem:[%s4245] sm:$0xf]
    %v4247 = vld [vmem:[%s4245 + $0x4] sm:$0xf]
    %v4248 = vld [vmem:[%s4245 + $0x8] sm:$0xf]
    %v4249 = vld [vmem:[%s4245 + $0xc] sm:$0xf]
    %v4250 = vld [vmem:[%s4245 + $0x10] sm:$0xf]
    %v4251 = vld [vmem:[%s4245 + $0x14] sm:$0xf]
    %v4252 = vld [vmem:[%s4245 + $0x18] sm:$0xf]
    %v4253 = vld [vmem:[%s4245 + $0x1c] sm:$0xf]
    %v4254 = vld [vmem:[%s4245 + $0x20] sm:$0xf]
    %v4255 = vld [vmem:[%s4245 + $0x24] sm:$0xf]
    %v4256 = vld [vmem:[%s4245 + $0x28] sm:$0xf]
    %v4257 = vld [vmem:[%s4245 + $0x2c] sm:$0xf]
    %v4258 = vld [vmem:[%s4245 + $0x30] sm:$0xf]
    %v4259 = vld [vmem:[%s4245 + $0x34] sm:$0xf]
    %v4260 = vld [vmem:[%s4245 + $0x38] sm:$0xf]
    %v4261 = vld [vmem:[%s4245 + $0x3c] sm:$0xf]
    %v4278 = vunpack.c.l.b16 %v4246
    %v4279 = vunpack.c.l.b16 %v4247
    %v4280 = vunpack.c.l.b16 %v4248
    %v4281 = vunpack.c.l.b16 %v4249
    %v4282 = vunpack.c.l.b16 %v4250
    %v4283 = vunpack.c.l.b16 %v4251
    %v4284 = vunpack.c.l.b16 %v4252
    %v4285 = vunpack.c.l.b16 %v4253
    %v4286 = vunpack.c.l.b16 %v4254
    %v4287 = vunpack.c.l.b16 %v4255
    %v4288 = vunpack.c.l.b16 %v4256
    %v4289 = vunpack.c.l.b16 %v4257
    %v4290 = vunpack.c.l.b16 %v4258
    %v4291 = vunpack.c.l.b16 %v4259
    %v4292 = vunpack.c.l.b16 %v4260
    %v4293 = vunpack.c.l.b16 %v4261
    %v4294 = vpack.c.b16 %v4279, %v4278
    %v4295 = vpack.c.b16 %v4281, %v4280
    %v4296 = vpack.c.b16 %v4283, %v4282
    %v4297 = vpack.c.b16 %v4285, %v4284
    %v4298 = vpack.c.b16 %v4287, %v4286
    %v4299 = vpack.c.b16 %v4289, %v4288
    %v4300 = vpack.c.b16 %v4291, %v4290
    %v4301 = vpack.c.b16 %v4293, %v4292
    %4310 = vmatprep.subr.bf16.mxu0 0
    %4311 = vmatpush1.bf16.msra.mxu0 %v4294
    %4312 = vmatprep.subr.bf16.mxu0 0
    %4313 = vmatpush1.bf16.msra.mxu0 %v4295
    %4314 = vmatprep.subr.bf16.mxu0 0
    %4315 = vmatpush1.bf16.msra.mxu0 %v4296
    %4316 = vmatprep.subr.bf16.mxu0 0
    %4317 = vmatpush1.bf16.msra.mxu0 %v4297
    %4318 = vmatprep.subr.bf16.mxu0 0
    %4319 = vmatpush1.bf16.msra.mxu0 %v4298
    %4320 = vmatprep.subr.bf16.mxu0 0
    %4321 = vmatpush1.bf16.msra.mxu0 %v4299
    %4322 = vmatprep.subr.bf16.mxu0 0
    %4323 = vmatpush1.bf16.msra.mxu0 %v4300
    %4324 = vmatprep.subr.bf16.mxu0 0
    %4325 = vmatpush1.bf16.msra.mxu0 %v4301
    %4326 = vmatprep.subr.bf16.mxu0 0
    %4327 = vmatpush1.bf16.msra.mxu0 0
    %4328 = vmatprep.subr.bf16.mxu0 0
    %4329 = vmatpush1.bf16.msra.mxu0 0
    %4330 = vmatprep.subr.bf16.mxu0 0
    %4331 = vmatpush1.bf16.msra.mxu0 0
    %4332 = vmatprep.subr.bf16.mxu0 0
    %4333 = vmatpush1.bf16.msra.mxu0 0
    %4334 = vmatprep.subr.bf16.mxu0 0
    %4335 = vmatpush1.bf16.msra.mxu0 0
    %4336 = vmatprep.subr.bf16.mxu0 0
    %4337 = vmatpush1.bf16.msra.mxu0 0
    %4338 = vmatprep.subr.bf16.mxu0 0
    %4339 = vmatpush1.bf16.msra.mxu0 0
    %4340 = vmatprep.subr.bf16.mxu0 0
    %4341 = vmatpush1.bf16.msra.mxu0 0
    %4342 = vmatprep.mubr.bf16.mxu0 0
    %4343 = vmatmul.mubr.bf16.gmra.mrb[0].mxu0 %v4213
    %v4344 = vpop.f32.mrb[0].mxu0
    %v4345 = vadd.f32 0.0, %v4344
    %v4346 = vpop.f32.mrb[0].mxu0
    %v4347 = vpop.f32.mrb[0].mxu0
    %v4348 = vadd.f32 0.0, %v4347
    %v4349 = vpop.f32.mrb[0].mxu0
    %4350 = vmatprep.mubr.bf16.mxu0 0
    %4351 = vmatmul.mubr.bf16.gmra.mrb[0].mxu0 %v4214
    %v4352 = vpop.f32.mrb[0].mxu0
    %v4353 = vadd.f32 0.0, %v4352
    %v4354 = vpop.f32.mrb[0].mxu0
    %v4355 = vpop.f32.mrb[0].mxu0
    %v4356 = vadd.f32 0.0, %v4355
    %v4357 = vpop.f32.mrb[0].mxu0
    %4358 = vmatprep.mubr.bf16.mxu0 0
    %4359 = vmatmul.mubr.bf16.gmra.mrb[0].mxu0 %v4215
    %v4360 = vpop.f32.mrb[0].mxu0
    %v4361 = vadd.f32 0.0, %v4360
    %v4362 = vpop.f32.mrb[0].mxu0
    %v4363 = vpop.f32.mrb[0].mxu0
    %v4364 = vadd.f32 0.0, %v4363
    %v4365 = vpop.f32.mrb[0].mxu0
    %4366 = vmatprep.mubr.bf16.mxu0 0
    %4367 = vmatmul.mubr.bf16.gmra.mrb[0].mxu0 %v4216
    %v4368 = vpop.f32.mrb[0].mxu0
    %v4369 = vadd.f32 0.0, %v4368
    %v4370 = vpop.f32.mrb[0].mxu0
    %v4371 = vpop.f32.mrb[0].mxu0
    %v4372 = vadd.f32 0.0, %v4371
    %v4373 = vpop.f32.mrb[0].mxu0
    %4374 = vmatprep.mubr.bf16.mxu0 0
    %4375 = vmatmul.mubr.bf16.gmra.mrb[0].mxu0 %v4217
    %v4376 = vpop.f32.mrb[0].mxu0
    %v4377 = vadd.f32 0.0, %v4376
    %v4378 = vpop.f32.mrb[0].mxu0
    %v4379 = vpop.f32.mrb[0].mxu0
    %v4380 = vadd.f32 0.0, %v4379
    %v4381 = vpop.f32.mrb[0].mxu0
    %4382 = vmatprep.mubr.bf16.mxu0 0
    %4383 = vmatmul.mubr.bf16.gmra.mrb[0].mxu0 %v4218
    %v4384 = vpop.f32.mrb[0].mxu0
    %v4385 = vadd.f32 0.0, %v4384
    %v4386 = vpop.f32.mrb[0].mxu0
    %v4387 = vpop.f32.mrb[0].mxu0
    %v4388 = vadd.f32 0.0, %v4387
    %v4389 = vpop.f32.mrb[0].mxu0
    %4390 = vmatprep.mubr.bf16.mxu0 0
    %4391 = vmatmul.mubr.bf16.gmra.mrb[0].mxu0 %v4219
    %v4392 = vpop.f32.mrb[0].mxu0
    %v4393 = vadd.f32 0.0, %v4392
    %v4394 = vpop.f32.mrb[0].mxu0
    %v4395 = vpop.f32.mrb[0].mxu0
    %v4396 = vadd.f32 0.0, %v4395
    %v4397 = vpop.f32.mrb[0].mxu0
    %4398 = vmatprep.mubr.bf16.mxu0 0
    %4399 = vmatmul.mubr.bf16.gmra.mrb[0].mxu0 %v4220
    %v4400 = vpop.f32.mrb[0].mxu0
    %v4401 = vadd.f32 0.0, %v4400
    %v4402 = vpop.f32.mrb[0].mxu0
    %v4403 = vpop.f32.mrb[0].mxu0
    %v4404 = vadd.f32 0.0, %v4403
    %v4405 = vpop.f32.mrb[0].mxu0
    %4406 = vmatprep.mubr.bf16.mxu0 0
    %4407 = vmatmul.mubr.bf16.gmra.mrb[0].mxu0 %v4221
    %v4408 = vpop.f32.mrb[0].mxu0
    %v4409 = vadd.f32 0.0, %v4408
    %v4410 = vpop.f32.mrb[0].mxu0
    %v4411 = vpop.f32.mrb[0].mxu0
    %v4412 = vadd.f32 0.0, %v4411
    %v4413 = vpop.f32.mrb[0].mxu0
    %4414 = vmatprep.mubr.bf16.mxu0 0
    %4415 = vmatmul.mubr.bf16.gmra.mrb[0].mxu0 %v4222
    %v4416 = vpop.f32.mrb[0].mxu0
    %v4417 = vadd.f32 0.0, %v4416
    %v4418 = vpop.f32.mrb[0].mxu0
    %v4419 = vpop.f32.mrb[0].mxu0
    %v4420 = vadd.f32 0.0, %v4419
    %v4421 = vpop.f32.mrb[0].mxu0
    %4422 = vmatprep.mubr.bf16.mxu0 0
    %4423 = vmatmul.mubr.bf16.gmra.mrb[0].mxu0 %v4223
    %v4424 = vpop.f32.mrb[0].mxu0
    %v4425 = vadd.f32 0.0, %v4424
    %v4426 = vpop.f32.mrb[0].mxu0
    %v4427 = vpop.f32.mrb[0].mxu0
    %v4428 = vadd.f32 0.0, %v4427
    %v4429 = vpop.f32.mrb[0].mxu0
    %4430 = vmatprep.mubr.bf16.mxu0 0
    %4431 = vmatmul.mubr.bf16.gmra.mrb[0].mxu0 %v4224
    %v4432 = vpop.f32.mrb[0].mxu0
    %v4433 = vadd.f32 0.0, %v4432
    %v4434 = vpop.f32.mrb[0].mxu0
    %v4435 = vpop.f32.mrb[0].mxu0
    %v4436 = vadd.f32 0.0, %v4435
    %v4437 = vpop.f32.mrb[0].mxu0
    %4438 = vmatprep.mubr.bf16.mxu0 0
    %4439 = vmatmul.mubr.bf16.gmra.mrb[0].mxu0 %v4225
    %v4440 = vpop.f32.mrb[0].mxu0
    %v4441 = vadd.f32 0.0, %v4440
    %v4442 = vpop.f32.mrb[0].mxu0
    %v4443 = vpop.f32.mrb[0].mxu0
    %v4444 = vadd.f32 0.0, %v4443
    %v4445 = vpop.f32.mrb[0].mxu0
    %4446 = vmatprep.mubr.bf16.mxu0 0
    %4447 = vmatmul.mubr.bf16.gmra.mrb[0].mxu0 %v4226
    %v4448 = vpop.f32.mrb[0].mxu0
    %v4449 = vadd.f32 0.0, %v4448
    %v4450 = vpop.f32.mrb[0].mxu0
    %v4451 = vpop.f32.mrb[0].mxu0
    %v4452 = vadd.f32 0.0, %v4451
    %v4453 = vpop.f32.mrb[0].mxu0
    %4454 = vmatprep.mubr.bf16.mxu0 0
    %4455 = vmatmul.mubr.bf16.gmra.mrb[0].mxu0 %v4227
    %v4456 = vpop.f32.mrb[0].mxu0
    %v4457 = vadd.f32 0.0, %v4456
    %v4458 = vpop.f32.mrb[0].mxu0
    %v4459 = vpop.f32.mrb[0].mxu0
    %v4460 = vadd.f32 0.0, %v4459
    %v4461 = vpop.f32.mrb[0].mxu0
    %4462 = vmatprep.mubr.bf16.mxu0 0
    %4463 = vmatmul.mubr.bf16.gmra.mrb[0].mxu0 %v4228
    %v4464 = vpop.f32.mrb[0].mxu0
    %v4465 = vadd.f32 0.0, %v4464
    %v4466 = vpop.f32.mrb[0].mxu0
    %v4467 = vpop.f32.mrb[0].mxu0
    %v4468 = vadd.f32 0.0, %v4467
    %v4469 = vpop.f32.mrb[0].mxu0
    %4470 = vmatprep.mubr.bf16.mxu0 0
    %4471 = vmatmul.mubr.bf16.gmra.mrb[0].mxu0 %v4229
    %v4472 = vpop.f32.mrb[0].mxu0
    %v4473 = vadd.f32 0.0, %v4472
    %v4474 = vpop.f32.mrb[0].mxu0
    %v4475 = vpop.f32.mrb[0].mxu0
    %v4476 = vadd.f32 0.0, %v4475
    %v4477 = vpop.f32.mrb[0].mxu0
    %4478 = vmatprep.mubr.bf16.mxu0 0
    %4479 = vmatmul.mubr.bf16.gmra.mrb[0].mxu0 %v4230
    %v4480 = vpop.f32.mrb[0].mxu0
    %v4481 = vadd.f32 0.0, %v4480
    %v4482 = vpop.f32.mrb[0].mxu0
    %v4483 = vpop.f32.mrb[0].mxu0
    %v4484 = vadd.f32 0.0, %v4483
    %v4485 = vpop.f32.mrb[0].mxu0
    %4486 = vmatprep.mubr.bf16.mxu0 0
    %4487 = vmatmul.mubr.bf16.gmra.mrb[0].mxu0 %v4231
    %v4488 = vpop.f32.mrb[0].mxu0
    %v4489 = vadd.f32 0.0, %v4488
    %v4490 = vpop.f32.mrb[0].mxu0
    %v4491 = vpop.f32.mrb[0].mxu0
    %v4492 = vadd.f32 0.0, %v4491
    %v4493 = vpop.f32.mrb[0].mxu0
    %4494 = vmatprep.mubr.bf16.mxu0 0
    %4495 = vmatmul.mubr.bf16.gmra.mrb[0].mxu0 %v4232
    %v4496 = vpop.f32.mrb[0].mxu0
    %v4497 = vadd.f32 0.0, %v4496
    %v4498 = vpop.f32.mrb[0].mxu0
    %v4499 = vpop.f32.mrb[0].mxu0
    %v4500 = vadd.f32 0.0, %v4499
    %v4501 = vpop.f32.mrb[0].mxu0
    %4502 = vmatprep.mubr.bf16.mxu0 0
    %4503 = vmatmul.mubr.bf16.gmra.mrb[0].mxu0 %v4233
    %v4504 = vpop.f32.mrb[0].mxu0
    %v4505 = vadd.f32 0.0, %v4504
    %v4506 = vpop.f32.mrb[0].mxu0
    %v4507 = vpop.f32.mrb[0].mxu0
    %v4508 = vadd.f32 0.0, %v4507
    %v4509 = vpop.f32.mrb[0].mxu0
    %4510 = vmatprep.mubr.bf16.mxu0 0
    %4511 = vmatmul.mubr.bf16.gmra.mrb[0].mxu0 %v4234
    %v4512 = vpop.f32.mrb[0].mxu0
    %v4513 = vadd.f32 0.0, %v4512
    %v4514 = vpop.f32.mrb[0].mxu0
    %v4515 = vpop.f32.mrb[0].mxu0
    %v4516 = vadd.f32 0.0, %v4515
    %v4517 = vpop.f32.mrb[0].mxu0
    %4518 = vmatprep.mubr.bf16.mxu0 0
    %4519 = vmatmul.mubr.bf16.gmra.mrb[0].mxu0 %v4235
    %v4520 = vpop.f32.mrb[0].mxu0
    %v4521 = vadd.f32 0.0, %v4520
    %v4522 = vpop.f32.mrb[0].mxu0
    %v4523 = vpop.f32.mrb[0].mxu0
    %v4524 = vadd.f32 0.0, %v4523
    %v4525 = vpop.f32.mrb[0].mxu0
    %4526 = vmatprep.mubr.bf16.mxu0 0
    %4527 = vmatmul.mubr.bf16.gmra.mrb[0].mxu0 %v4236
    %v4528 = vpop.f32.mrb[0].mxu0
    %v4529 = vadd.f32 0.0, %v4528
    %v4530 = vpop.f32.mrb[0].mxu0
    %v4531 = vpop.f32.mrb[0].mxu0
    %v4532 = vadd.f32 0.0, %v4531
    %v4533 = vpop.f32.mrb[0].mxu0
    %4534 = vmatprep.mubr.bf16.mxu0 0
    %4535 = vmatmul.mubr.bf16.gmra.mrb[0].mxu0 %v4237
    %v4536 = vpop.f32.mrb[0].mxu0
    %v4537 = vadd.f32 0.0, %v4536
    %v4538 = vpop.f32.mrb[0].mxu0
    %v4539 = vpop.f32.mrb[0].mxu0
    %v4540 = vadd.f32 0.0, %v4539
    %v4541 = vpop.f32.mrb[0].mxu0
    %4542 = vmatprep.mubr.bf16.mxu0 0
    %4543 = vmatmul.mubr.bf16.gmra.mrb[0].mxu0 %v4238
    %v4544 = vpop.f32.mrb[0].mxu0
    %v4545 = vadd.f32 0.0, %v4544
    %v4546 = vpop.f32.mrb[0].mxu0
    %v4547 = vpop.f32.mrb[0].mxu0
    %v4548 = vadd.f32 0.0, %v4547
    %v4549 = vpop.f32.mrb[0].mxu0
    %4550 = vmatprep.mubr.bf16.mxu0 0
    %4551 = vmatmul.mubr.bf16.gmra.mrb[0].mxu0 %v4239
    %v4552 = vpop.f32.mrb[0].mxu0
    %v4553 = vadd.f32 0.0, %v4552
    %v4554 = vpop.f32.mrb[0].mxu0
    %v4555 = vpop.f32.mrb[0].mxu0
    %v4556 = vadd.f32 0.0, %v4555
    %v4557 = vpop.f32.mrb[0].mxu0
    %4558 = vmatprep.mubr.bf16.mxu0 0
    %4559 = vmatmul.mubr.bf16.gmra.mrb[0].mxu0 %v4240
    %v4560 = vpop.f32.mrb[0].mxu0
    %v4561 = vadd.f32 0.0, %v4560
    %v4562 = vpop.f32.mrb[0].mxu0
    %v4563 = vpop.f32.mrb[0].mxu0
    %v4564 = vadd.f32 0.0, %v4563
    %v4565 = vpop.f32.mrb[0].mxu0
    %4566 = vmatprep.mubr.bf16.mxu0 0
    %4567 = vmatmul.mubr.bf16.gmra.mrb[0].mxu0 %v4241
    %v4568 = vpop.f32.mrb[0].mxu0
    %v4569 = vadd.f32 0.0, %v4568
    %v4570 = vpop.f32.mrb[0].mxu0
    %v4571 = vpop.f32.mrb[0].mxu0
    %v4572 = vadd.f32 0.0, %v4571
    %v4573 = vpop.f32.mrb[0].mxu0
    %4574 = vmatprep.mubr.bf16.mxu0 0
    %4575 = vmatmul.mubr.bf16.gmra.mrb[0].mxu0 %v4242
    %v4576 = vpop.f32.mrb[0].mxu0
    %v4577 = vadd.f32 0.0, %v4576
    %v4578 = vpop.f32.mrb[0].mxu0
    %v4579 = vpop.f32.mrb[0].mxu0
    %v4580 = vadd.f32 0.0, %v4579
    %v4581 = vpop.f32.mrb[0].mxu0
    %4582 = vmatprep.mubr.bf16.mxu0 0
    %4583 = vmatmul.mubr.bf16.gmra.mrb[0].mxu0 %v4243
    %v4584 = vpop.f32.mrb[0].mxu0
    %v4585 = vadd.f32 0.0, %v4584
    %v4586 = vpop.f32.mrb[0].mxu0
    %v4587 = vpop.f32.mrb[0].mxu0
    %v4588 = vadd.f32 0.0, %v4587
    %v4589 = vpop.f32.mrb[0].mxu0
    %4590 = vmatprep.mubr.bf16.mxu0 0
    %4591 = vmatmul.mubr.bf16.gmra.mrb[0].mxu0 %v4244
    %v4592 = vpop.f32.mrb[0].mxu0
    %v4593 = vadd.f32 0.0, %v4592
    %v4594 = vpop.f32.mrb[0].mxu0
    %v4595 = vpop.f32.mrb[0].mxu0
    %v4596 = vadd.f32 0.0, %v4595
    %v4597 = vpop.f32.mrb[0].mxu0
    %4598 = vdwg.mxu0
    %v4599 = vadd.f32 %v4085, %v4345
    %v4600 = vadd.f32 %v4086, %v4348
    %v4601 = vadd.f32 %v4087, %v4353
    %v4602 = vadd.f32 %v4088, %v4356
    %v4603 = vadd.f32 %v4089, %v4361
    %v4604 = vadd.f32 %v4090, %v4364
    %v4605 = vadd.f32 %v4091, %v4369
    %v4606 = vadd.f32 %v4092, %v4372
    %v4607 = vadd.f32 %v4093, %v4377
    %v4608 = vadd.f32 %v4094, %v4380
    %v4609 = vadd.f32 %v4095, %v4385
    %v4610 = vadd.f32 %v4096, %v4388
    %v4611 = vadd.f32 %v4097, %v4393
    %v4612 = vadd.f32 %v4098, %v4396
    %v4613 = vadd.f32 %v4099, %v4401
    %v4614 = vadd.f32 %v4100, %v4404
    %v4615 = vadd.f32 %v4101, %v4409
    %v4616 = vadd.f32 %v4102, %v4412
    %v4617 = vadd.f32 %v4103, %v4417
    %v4618 = vadd.f32 %v4104, %v4420
    %v4619 = vadd.f32 %v4105, %v4425
    %v4620 = vadd.f32 %v4106, %v4428
    %v4621 = vadd.f32 %v4107, %v4433
    %v4622 = vadd.f32 %v4108, %v4436
    %v4623 = vadd.f32 %v4109, %v4441
    %v4624 = vadd.f32 %v4110, %v4444
    %v4625 = vadd.f32 %v4111, %v4449
    %v4626 = vadd.f32 %v4112, %v4452
    %v4627 = vadd.f32 %v4113, %v4457
    %v4628 = vadd.f32 %v4114, %v4460
    %v4629 = vadd.f32 %v4115, %v4465
    %v4630 = vadd.f32 %v4116, %v4468
    %v4631 = vadd.f32 %v4117, %v4473
    %v4632 = vadd.f32 %v4118, %v4476
    %v4633 = vadd.f32 %v4119, %v4481
    %v4634 = vadd.f32 %v4120, %v4484
    %v4635 = vadd.f32 %v4121, %v4489
    %v4636 = vadd.f32 %v4122, %v4492
    %v4637 = vadd.f32 %v4123, %v4497
    %v4638 = vadd.f32 %v4124, %v4500
    %v4639 = vadd.f32 %v4125, %v4505
    %v4640 = vadd.f32 %v4126, %v4508
    %v4641 = vadd.f32 %v4127, %v4513
    %v4642 = vadd.f32 %v4128, %v4516
    %v4643 = vadd.f32 %v4129, %v4521
    %v4644 = vadd.f32 %v4130, %v4524
    %v4645 = vadd.f32 %v4131, %v4529
    %v4646 = vadd.f32 %v4132, %v4532
    %v4647 = vadd.f32 %v4133, %v4537
    %v4648 = vadd.f32 %v4134, %v4540
    %v4649 = vadd.f32 %v4135, %v4545
    %v4650 = vadd.f32 %v4136, %v4548
    %v4651 = vadd.f32 %v4137, %v4553
    %v4652 = vadd.f32 %v4138, %v4556
    %v4653 = vadd.f32 %v4139, %v4561
    %v4654 = vadd.f32 %v4140, %v4564
    %v4655 = vadd.f32 %v4141, %v4569
    %v4656 = vadd.f32 %v4142, %v4572
    %v4657 = vadd.f32 %v4143, %v4577
    %v4658 = vadd.f32 %v4144, %v4580
    %v4659 = vadd.f32 %v4145, %v4585
    %v4660 = vadd.f32 %v4146, %v4588
    %v4661 = vadd.f32 %v4147, %v4593
    %v4662 = vadd.f32 %v4148, %v4596
    %s4663 = scalar_lea.vmem [#allocation2], 48
    %v4664 = vld [vmem:[%s4663] sm:$0xff]
    %v4665 = vld [vmem:[%s4663 + $0x8] sm:$0xff]
    %v4666 = vld [vmem:[%s4663 + $0x18] sm:$0xff]
    %v4667 = vld [vmem:[%s4663 + $0x20] sm:$0xff]
    %v4668 = vld [vmem:[%s4663 + $0x30] sm:$0xff]
    %v4669 = vld [vmem:[%s4663 + $0x38] sm:$0xff]
    %v4670 = vld [vmem:[%s4663 + $0x48] sm:$0xff]
    %v4671 = vld [vmem:[%s4663 + $0x50] sm:$0xff]
    %v4672 = vld [vmem:[%s4663 + $0x60] sm:$0xff]
    %v4673 = vld [vmem:[%s4663 + $0x68] sm:$0xff]
    %v4674 = vld [vmem:[%s4663 + $0x78] sm:$0xff]
    %v4675 = vld [vmem:[%s4663 + $0x80] sm:$0xff]
    %v4676 = vld [vmem:[%s4663 + $0x90] sm:$0xff]
    %v4677 = vld [vmem:[%s4663 + $0x98] sm:$0xff]
    %v4678 = vld [vmem:[%s4663 + $0xa8] sm:$0xff]
    %v4679 = vld [vmem:[%s4663 + $0xb0] sm:$0xff]
    %v4680 = vld [vmem:[%s4663 + $0xc0] sm:$0xff]
    %v4681 = vld [vmem:[%s4663 + $0xc8] sm:$0xff]
    %v4682 = vld [vmem:[%s4663 + $0xd8] sm:$0xff]
    %v4683 = vld [vmem:[%s4663 + $0xe0] sm:$0xff]
    %v4684 = vld [vmem:[%s4663 + $0xf0] sm:$0xff]
    %v4685 = vld [vmem:[%s4663 + $0xf8] sm:$0xff]
    %v4686 = vld [vmem:[%s4663 + $0x108] sm:$0xff]
    %v4687 = vld [vmem:[%s4663 + $0x110] sm:$0xff]
    %v4688 = vld [vmem:[%s4663 + $0x120] sm:$0xff]
    %v4689 = vld [vmem:[%s4663 + $0x128] sm:$0xff]
    %v4690 = vld [vmem:[%s4663 + $0x138] sm:$0xff]
    %v4691 = vld [vmem:[%s4663 + $0x140] sm:$0xff]
    %v4692 = vld [vmem:[%s4663 + $0x150] sm:$0xff]
    %v4693 = vld [vmem:[%s4663 + $0x158] sm:$0xff]
    %v4694 = vld [vmem:[%s4663 + $0x168] sm:$0xff]
    %v4695 = vld [vmem:[%s4663 + $0x170] sm:$0xff]
    %v4696 = vld [vmem:[%s4663 + $0x1b0] sm:$0xff]
    %v4697 = vld [vmem:[%s4663 + $0x1b8] sm:$0xff]
    %v4698 = vld [vmem:[%s4663 + $0x1c8] sm:$0xff]
    %v4699 = vld [vmem:[%s4663 + $0x1d0] sm:$0xff]
    %v4700 = vld [vmem:[%s4663 + $0x1e0] sm:$0xff]
    %v4701 = vld [vmem:[%s4663 + $0x1e8] sm:$0xff]
    %v4702 = vld [vmem:[%s4663 + $0x1f8] sm:$0xff]
    %v4703 = vld [vmem:[%s4663 + $0x200] sm:$0xff]
    %v4704 = vld [vmem:[%s4663 + $0x210] sm:$0xff]
    %v4705 = vld [vmem:[%s4663 + $0x218] sm:$0xff]
    %v4706 = vld [vmem:[%s4663 + $0x228] sm:$0xff]
    %v4707 = vld [vmem:[%s4663 + $0x230] sm:$0xff]
    %v4708 = vld [vmem:[%s4663 + $0x240] sm:$0xff]
    %v4709 = vld [vmem:[%s4663 + $0x248] sm:$0xff]
    %v4710 = vld [vmem:[%s4663 + $0x258] sm:$0xff]
    %v4711 = vld [vmem:[%s4663 + $0x260] sm:$0xff]
    %v4712 = vld [vmem:[%s4663 + $0x270] sm:$0xff]
    %v4713 = vld [vmem:[%s4663 + $0x278] sm:$0xff]
    %v4714 = vld [vmem:[%s4663 + $0x288] sm:$0xff]
    %v4715 = vld [vmem:[%s4663 + $0x290] sm:$0xff]
    %v4716 = vld [vmem:[%s4663 + $0x2a0] sm:$0xff]
    %v4717 = vld [vmem:[%s4663 + $0x2a8] sm:$0xff]
    %v4718 = vld [vmem:[%s4663 + $0x2b8] sm:$0xff]
    %v4719 = vld [vmem:[%s4663 + $0x2c0] sm:$0xff]
    %v4720 = vld [vmem:[%s4663 + $0x2d0] sm:$0xff]
    %v4721 = vld [vmem:[%s4663 + $0x2d8] sm:$0xff]
    %v4722 = vld [vmem:[%s4663 + $0x2e8] sm:$0xff]
    %v4723 = vld [vmem:[%s4663 + $0x2f0] sm:$0xff]
    %v4724 = vld [vmem:[%s4663 + $0x300] sm:$0xff]
    %v4725 = vld [vmem:[%s4663 + $0x308] sm:$0xff]
    %v4726 = vld [vmem:[%s4663 + $0x318] sm:$0xff]
    %v4727 = vld [vmem:[%s4663 + $0x320] sm:$0xff]
    %v4728 = vpack.c.bf16 %v4665, %v4664
    %v4729 = vpack.c.bf16 %v4667, %v4666
    %v4730 = vpack.c.bf16 %v4669, %v4668
    %v4731 = vpack.c.bf16 %v4671, %v4670
    %v4732 = vpack.c.bf16 %v4673, %v4672
    %v4733 = vpack.c.bf16 %v4675, %v4674
    %v4734 = vpack.c.bf16 %v4677, %v4676
    %v4735 = vpack.c.bf16 %v4679, %v4678
    %v4736 = vpack.c.bf16 %v4681, %v4680
    %v4737 = vpack.c.bf16 %v4683, %v4682
    %v4738 = vpack.c.bf16 %v4685, %v4684
    %v4739 = vpack.c.bf16 %v4687, %v4686
    %v4740 = vpack.c.bf16 %v4689, %v4688
    %v4741 = vpack.c.bf16 %v4691, %v4690
    %v4742 = vpack.c.bf16 %v4693, %v4692
    %v4743 = vpack.c.bf16 %v4695, %v4694
    %v4744 = vpack.c.bf16 %v4697, %v4696
    %v4745 = vpack.c.bf16 %v4699, %v4698
    %v4746 = vpack.c.bf16 %v4701, %v4700
    %v4747 = vpack.c.bf16 %v4703, %v4702
    %v4748 = vpack.c.bf16 %v4705, %v4704
    %v4749 = vpack.c.bf16 %v4707, %v4706
    %v4750 = vpack.c.bf16 %v4709, %v4708
    %v4751 = vpack.c.bf16 %v4711, %v4710
    %v4752 = vpack.c.bf16 %v4713, %v4712
    %v4753 = vpack.c.bf16 %v4715, %v4714
    %v4754 = vpack.c.bf16 %v4717, %v4716
    %v4755 = vpack.c.bf16 %v4719, %v4718
    %v4756 = vpack.c.bf16 %v4721, %v4720
    %v4757 = vpack.c.bf16 %v4723, %v4722
    %v4758 = vpack.c.bf16 %v4725, %v4724
    %v4759 = vpack.c.bf16 %v4727, %v4726
    %s4760 = scalar_lea.vmem [#allocation8], 384
    %v4761 = vld [vmem:[%s4760] sm:$0xf]
    %v4762 = vld [vmem:[%s4760 + $0x4] sm:$0xf]
    %v4763 = vld [vmem:[%s4760 + $0x8] sm:$0xf]
    %v4764 = vld [vmem:[%s4760 + $0xc] sm:$0xf]
    %v4765 = vld [vmem:[%s4760 + $0x10] sm:$0xf]
    %v4766 = vld [vmem:[%s4760 + $0x14] sm:$0xf]
    %v4767 = vld [vmem:[%s4760 + $0x18] sm:$0xf]
    %v4768 = vld [vmem:[%s4760 + $0x1c] sm:$0xf]
    %v4769 = vld [vmem:[%s4760 + $0x20] sm:$0xf]
    %v4770 = vld [vmem:[%s4760 + $0x24] sm:$0xf]
    %v4771 = vld [vmem:[%s4760 + $0x28] sm:$0xf]
    %v4772 = vld [vmem:[%s4760 + $0x2c] sm:$0xf]
    %v4773 = vld [vmem:[%s4760 + $0x30] sm:$0xf]
    %v4774 = vld [vmem:[%s4760 + $0x34] sm:$0xf]
    %v4775 = vld [vmem:[%s4760 + $0x38] sm:$0xf]
    %v4776 = vld [vmem:[%s4760 + $0x3c] sm:$0xf]
    %v4793 = vunpack.c.l.b16 %v4761
    %v4794 = vunpack.c.l.b16 %v4762
    %v4795 = vunpack.c.l.b16 %v4763
    %v4796 = vunpack.c.l.b16 %v4764
    %v4797 = vunpack.c.l.b16 %v4765
    %v4798 = vunpack.c.l.b16 %v4766
    %v4799 = vunpack.c.l.b16 %v4767
    %v4800 = vunpack.c.l.b16 %v4768
    %v4801 = vunpack.c.l.b16 %v4769
    %v4802 = vunpack.c.l.b16 %v4770
    %v4803 = vunpack.c.l.b16 %v4771
    %v4804 = vunpack.c.l.b16 %v4772
    %v4805 = vunpack.c.l.b16 %v4773
    %v4806 = vunpack.c.l.b16 %v4774
    %v4807 = vunpack.c.l.b16 %v4775
    %v4808 = vunpack.c.l.b16 %v4776
    %v4809 = vpack.c.b16 %v4794, %v4793
    %v4810 = vpack.c.b16 %v4796, %v4795
    %v4811 = vpack.c.b16 %v4798, %v4797
    %v4812 = vpack.c.b16 %v4800, %v4799
    %v4813 = vpack.c.b16 %v4802, %v4801
    %v4814 = vpack.c.b16 %v4804, %v4803
    %v4815 = vpack.c.b16 %v4806, %v4805
    %v4816 = vpack.c.b16 %v4808, %v4807
    %4825 = vmatprep.subr.bf16.mxu0 0
    %4826 = vmatpush1.bf16.msra.mxu0 %v4809
    %4827 = vmatprep.subr.bf16.mxu0 0
    %4828 = vmatpush1.bf16.msra.mxu0 %v4810
    %4829 = vmatprep.subr.bf16.mxu0 0
    %4830 = vmatpush1.bf16.msra.mxu0 %v4811
    %4831 = vmatprep.subr.bf16.mxu0 0
    %4832 = vmatpush1.bf16.msra.mxu0 %v4812
    %4833 = vmatprep.subr.bf16.mxu0 0
    %4834 = vmatpush1.bf16.msra.mxu0 %v4813
    %4835 = vmatprep.subr.bf16.mxu0 0
    %4836 = vmatpush1.bf16.msra.mxu0 %v4814
    %4837 = vmatprep.subr.bf16.mxu0 0
    %4838 = vmatpush1.bf16.msra.mxu0 %v4815
    %4839 = vmatprep.subr.bf16.mxu0 0
    %4840 = vmatpush1.bf16.msra.mxu0 %v4816
    %4841 = vmatprep.subr.bf16.mxu0 0
    %4842 = vmatpush1.bf16.msra.mxu0 0
    %4843 = vmatprep.subr.bf16.mxu0 0
    %4844 = vmatpush1.bf16.msra.mxu0 0
    %4845 = vmatprep.subr.bf16.mxu0 0
    %4846 = vmatpush1.bf16.msra.mxu0 0
    %4847 = vmatprep.subr.bf16.mxu0 0
    %4848 = vmatpush1.bf16.msra.mxu0 0
    %4849 = vmatprep.subr.bf16.mxu0 0
    %4850 = vmatpush1.bf16.msra.mxu0 0
    %4851 = vmatprep.subr.bf16.mxu0 0
    %4852 = vmatpush1.bf16.msra.mxu0 0
    %4853 = vmatprep.subr.bf16.mxu0 0
    %4854 = vmatpush1.bf16.msra.mxu0 0
    %4855 = vmatprep.subr.bf16.mxu0 0
    %4856 = vmatpush1.bf16.msra.mxu0 0
    %4857 = vmatprep.mubr.bf16.mxu0 0
    %4858 = vmatmul.mubr.bf16.gmra.mrb[0].mxu0 %v4728
    %v4859 = vpop.f32.mrb[0].mxu0
    %v4860 = vadd.f32 0.0, %v4859
    %v4861 = vpop.f32.mrb[0].mxu0
    %v4862 = vpop.f32.mrb[0].mxu0
    %v4863 = vadd.f32 0.0, %v4862
    %v4864 = vpop.f32.mrb[0].mxu0
    %4865 = vmatprep.mubr.bf16.mxu0 0
    %4866 = vmatmul.mubr.bf16.gmra.mrb[0].mxu0 %v4729
    %v4867 = vpop.f32.mrb[0].mxu0
    %v4868 = vadd.f32 0.0, %v4867
    %v4869 = vpop.f32.mrb[0].mxu0
    %v4870 = vpop.f32.mrb[0].mxu0
    %v4871 = vadd.f32 0.0, %v4870
    %v4872 = vpop.f32.mrb[0].mxu0
    %4873 = vmatprep.mubr.bf16.mxu0 0
    %4874 = vmatmul.mubr.bf16.gmra.mrb[0].mxu0 %v4730
    %v4875 = vpop.f32.mrb[0].mxu0
    %v4876 = vadd.f32 0.0, %v4875
    %v4877 = vpop.f32.mrb[0].mxu0
    %v4878 = vpop.f32.mrb[0].mxu0
    %v4879 = vadd.f32 0.0, %v4878
    %v4880 = vpop.f32.mrb[0].mxu0
    %4881 = vmatprep.mubr.bf16.mxu0 0
    %4882 = vmatmul.mubr.bf16.gmra.mrb[0].mxu0 %v4731
    %v4883 = vpop.f32.mrb[0].mxu0
    %v4884 = vadd.f32 0.0, %v4883
    %v4885 = vpop.f32.mrb[0].mxu0
    %v4886 = vpop.f32.mrb[0].mxu0
    %v4887 = vadd.f32 0.0, %v4886
    %v4888 = vpop.f32.mrb[0].mxu0
    %4889 = vmatprep.mubr.bf16.mxu0 0
    %4890 = vmatmul.mubr.bf16.gmra.mrb[0].mxu0 %v4732
    %v4891 = vpop.f32.mrb[0].mxu0
    %v4892 = vadd.f32 0.0, %v4891
    %v4893 = vpop.f32.mrb[0].mxu0
    %v4894 = vpop.f32.mrb[0].mxu0
    %v4895 = vadd.f32 0.0, %v4894
    %v4896 = vpop.f32.mrb[0].mxu0
    %4897 = vmatprep.mubr.bf16.mxu0 0
    %4898 = vmatmul.mubr.bf16.gmra.mrb[0].mxu0 %v4733
    %v4899 = vpop.f32.mrb[0].mxu0
    %v4900 = vadd.f32 0.0, %v4899
    %v4901 = vpop.f32.mrb[0].mxu0
    %v4902 = vpop.f32.mrb[0].mxu0
    %v4903 = vadd.f32 0.0, %v4902
    %v4904 = vpop.f32.mrb[0].mxu0
    %4905 = vmatprep.mubr.bf16.mxu0 0
    %4906 = vmatmul.mubr.bf16.gmra.mrb[0].mxu0 %v4734
    %v4907 = vpop.f32.mrb[0].mxu0
    %v4908 = vadd.f32 0.0, %v4907
    %v4909 = vpop.f32.mrb[0].mxu0
    %v4910 = vpop.f32.mrb[0].mxu0
    %v4911 = vadd.f32 0.0, %v4910
    %v4912 = vpop.f32.mrb[0].mxu0
    %4913 = vmatprep.mubr.bf16.mxu0 0
    %4914 = vmatmul.mubr.bf16.gmra.mrb[0].mxu0 %v4735
    %v4915 = vpop.f32.mrb[0].mxu0
    %v4916 = vadd.f32 0.0, %v4915
    %v4917 = vpop.f32.mrb[0].mxu0
    %v4918 = vpop.f32.mrb[0].mxu0
    %v4919 = vadd.f32 0.0, %v4918
    %v4920 = vpop.f32.mrb[0].mxu0
    %4921 = vmatprep.mubr.bf16.mxu0 0
    %4922 = vmatmul.mubr.bf16.gmra.mrb[0].mxu0 %v4736
    %v4923 = vpop.f32.mrb[0].mxu0
    %v4924 = vadd.f32 0.0, %v4923
    %v4925 = vpop.f32.mrb[0].mxu0
    %v4926 = vpop.f32.mrb[0].mxu0
    %v4927 = vadd.f32 0.0, %v4926
    %v4928 = vpop.f32.mrb[0].mxu0
    %4929 = vmatprep.mubr.bf16.mxu0 0
    %4930 = vmatmul.mubr.bf16.gmra.mrb[0].mxu0 %v4737
    %v4931 = vpop.f32.mrb[0].mxu0
    %v4932 = vadd.f32 0.0, %v4931
    %v4933 = vpop.f32.mrb[0].mxu0
    %v4934 = vpop.f32.mrb[0].mxu0
    %v4935 = vadd.f32 0.0, %v4934
    %v4936 = vpop.f32.mrb[0].mxu0
    %4937 = vmatprep.mubr.bf16.mxu0 0
    %4938 = vmatmul.mubr.bf16.gmra.mrb[0].mxu0 %v4738
    %v4939 = vpop.f32.mrb[0].mxu0
    %v4940 = vadd.f32 0.0, %v4939
    %v4941 = vpop.f32.mrb[0].mxu0
    %v4942 = vpop.f32.mrb[0].mxu0
    %v4943 = vadd.f32 0.0, %v4942
    %v4944 = vpop.f32.mrb[0].mxu0
    %4945 = vmatprep.mubr.bf16.mxu0 0
    %4946 = vmatmul.mubr.bf16.gmra.mrb[0].mxu0 %v4739
    %v4947 = vpop.f32.mrb[0].mxu0
    %v4948 = vadd.f32 0.0, %v4947
    %v4949 = vpop.f32.mrb[0].mxu0
    %v4950 = vpop.f32.mrb[0].mxu0
    %v4951 = vadd.f32 0.0, %v4950
    %v4952 = vpop.f32.mrb[0].mxu0
    %4953 = vmatprep.mubr.bf16.mxu0 0
    %4954 = vmatmul.mubr.bf16.gmra.mrb[0].mxu0 %v4740
    %v4955 = vpop.f32.mrb[0].mxu0
    %v4956 = vadd.f32 0.0, %v4955
    %v4957 = vpop.f32.mrb[0].mxu0
    %v4958 = vpop.f32.mrb[0].mxu0
    %v4959 = vadd.f32 0.0, %v4958
    %v4960 = vpop.f32.mrb[0].mxu0
    %4961 = vmatprep.mubr.bf16.mxu0 0
    %4962 = vmatmul.mubr.bf16.gmra.mrb[0].mxu0 %v4741
    %v4963 = vpop.f32.mrb[0].mxu0
    %v4964 = vadd.f32 0.0, %v4963
    %v4965 = vpop.f32.mrb[0].mxu0
    %v4966 = vpop.f32.mrb[0].mxu0
    %v4967 = vadd.f32 0.0, %v4966
    %v4968 = vpop.f32.mrb[0].mxu0
    %4969 = vmatprep.mubr.bf16.mxu0 0
    %4970 = vmatmul.mubr.bf16.gmra.mrb[0].mxu0 %v4742
    %v4971 = vpop.f32.mrb[0].mxu0
    %v4972 = vadd.f32 0.0, %v4971
    %v4973 = vpop.f32.mrb[0].mxu0
    %v4974 = vpop.f32.mrb[0].mxu0
    %v4975 = vadd.f32 0.0, %v4974
    %v4976 = vpop.f32.mrb[0].mxu0
    %4977 = vmatprep.mubr.bf16.mxu0 0
    %4978 = vmatmul.mubr.bf16.gmra.mrb[0].mxu0 %v4743
    %v4979 = vpop.f32.mrb[0].mxu0
    %v4980 = vadd.f32 0.0, %v4979
    %v4981 = vpop.f32.mrb[0].mxu0
    %v4982 = vpop.f32.mrb[0].mxu0
    %v4983 = vadd.f32 0.0, %v4982
    %v4984 = vpop.f32.mrb[0].mxu0
    %4985 = vmatprep.mubr.bf16.mxu0 0
    %4986 = vmatmul.mubr.bf16.gmra.mrb[0].mxu0 %v4744
    %v4987 = vpop.f32.mrb[0].mxu0
    %v4988 = vadd.f32 0.0, %v4987
    %v4989 = vpop.f32.mrb[0].mxu0
    %v4990 = vpop.f32.mrb[0].mxu0
    %v4991 = vadd.f32 0.0, %v4990
    %v4992 = vpop.f32.mrb[0].mxu0
    %4993 = vmatprep.mubr.bf16.mxu0 0
    %4994 = vmatmul.mubr.bf16.gmra.mrb[0].mxu0 %v4745
    %v4995 = vpop.f32.mrb[0].mxu0
    %v4996 = vadd.f32 0.0, %v4995
    %v4997 = vpop.f32.mrb[0].mxu0
    %v4998 = vpop.f32.mrb[0].mxu0
    %v4999 = vadd.f32 0.0, %v4998
    %v5000 = vpop.f32.mrb[0].mxu0
    %5001 = vmatprep.mubr.bf16.mxu0 0
    %5002 = vmatmul.mubr.bf16.gmra.mrb[0].mxu0 %v4746
    %v5003 = vpop.f32.mrb[0].mxu0
    %v5004 = vadd.f32 0.0, %v5003
    %v5005 = vpop.f32.mrb[0].mxu0
    %v5006 = vpop.f32.mrb[0].mxu0
    %v5007 = vadd.f32 0.0, %v5006
    %v5008 = vpop.f32.mrb[0].mxu0
    %5009 = vmatprep.mubr.bf16.mxu0 0
    %5010 = vmatmul.mubr.bf16.gmra.mrb[0].mxu0 %v4747
    %v5011 = vpop.f32.mrb[0].mxu0
    %v5012 = vadd.f32 0.0, %v5011
    %v5013 = vpop.f32.mrb[0].mxu0
    %v5014 = vpop.f32.mrb[0].mxu0
    %v5015 = vadd.f32 0.0, %v5014
    %v5016 = vpop.f32.mrb[0].mxu0
    %5017 = vmatprep.mubr.bf16.mxu0 0
    %5018 = vmatmul.mubr.bf16.gmra.mrb[0].mxu0 %v4748
    %v5019 = vpop.f32.mrb[0].mxu0
    %v5020 = vadd.f32 0.0, %v5019
    %v5021 = vpop.f32.mrb[0].mxu0
    %v5022 = vpop.f32.mrb[0].mxu0
    %v5023 = vadd.f32 0.0, %v5022
    %v5024 = vpop.f32.mrb[0].mxu0
    %5025 = vmatprep.mubr.bf16.mxu0 0
    %5026 = vmatmul.mubr.bf16.gmra.mrb[0].mxu0 %v4749
    %v5027 = vpop.f32.mrb[0].mxu0
    %v5028 = vadd.f32 0.0, %v5027
    %v5029 = vpop.f32.mrb[0].mxu0
    %v5030 = vpop.f32.mrb[0].mxu0
    %v5031 = vadd.f32 0.0, %v5030
    %v5032 = vpop.f32.mrb[0].mxu0
    %5033 = vmatprep.mubr.bf16.mxu0 0
    %5034 = vmatmul.mubr.bf16.gmra.mrb[0].mxu0 %v4750
    %v5035 = vpop.f32.mrb[0].mxu0
    %v5036 = vadd.f32 0.0, %v5035
    %v5037 = vpop.f32.mrb[0].mxu0
    %v5038 = vpop.f32.mrb[0].mxu0
    %v5039 = vadd.f32 0.0, %v5038
    %v5040 = vpop.f32.mrb[0].mxu0
    %5041 = vmatprep.mubr.bf16.mxu0 0
    %5042 = vmatmul.mubr.bf16.gmra.mrb[0].mxu0 %v4751
    %v5043 = vpop.f32.mrb[0].mxu0
    %v5044 = vadd.f32 0.0, %v5043
    %v5045 = vpop.f32.mrb[0].mxu0
    %v5046 = vpop.f32.mrb[0].mxu0
    %v5047 = vadd.f32 0.0, %v5046
    %v5048 = vpop.f32.mrb[0].mxu0
    %5049 = vmatprep.mubr.bf16.mxu0 0
    %5050 = vmatmul.mubr.bf16.gmra.mrb[0].mxu0 %v4752
    %v5051 = vpop.f32.mrb[0].mxu0
    %v5052 = vadd.f32 0.0, %v5051
    %v5053 = vpop.f32.mrb[0].mxu0
    %v5054 = vpop.f32.mrb[0].mxu0
    %v5055 = vadd.f32 0.0, %v5054
    %v5056 = vpop.f32.mrb[0].mxu0
    %5057 = vmatprep.mubr.bf16.mxu0 0
    %5058 = vmatmul.mubr.bf16.gmra.mrb[0].mxu0 %v4753
    %v5059 = vpop.f32.mrb[0].mxu0
    %v5060 = vadd.f32 0.0, %v5059
    %v5061 = vpop.f32.mrb[0].mxu0
    %v5062 = vpop.f32.mrb[0].mxu0
    %v5063 = vadd.f32 0.0, %v5062
    %v5064 = vpop.f32.mrb[0].mxu0
    %5065 = vmatprep.mubr.bf16.mxu0 0
    %5066 = vmatmul.mubr.bf16.gmra.mrb[0].mxu0 %v4754
    %v5067 = vpop.f32.mrb[0].mxu0
    %v5068 = vadd.f32 0.0, %v5067
    %v5069 = vpop.f32.mrb[0].mxu0
    %v5070 = vpop.f32.mrb[0].mxu0
    %v5071 = vadd.f32 0.0, %v5070
    %v5072 = vpop.f32.mrb[0].mxu0
    %5073 = vmatprep.mubr.bf16.mxu0 0
    %5074 = vmatmul.mubr.bf16.gmra.mrb[0].mxu0 %v4755
    %v5075 = vpop.f32.mrb[0].mxu0
    %v5076 = vadd.f32 0.0, %v5075
    %v5077 = vpop.f32.mrb[0].mxu0
    %v5078 = vpop.f32.mrb[0].mxu0
    %v5079 = vadd.f32 0.0, %v5078
    %v5080 = vpop.f32.mrb[0].mxu0
    %5081 = vmatprep.mubr.bf16.mxu0 0
    %5082 = vmatmul.mubr.bf16.gmra.mrb[0].mxu0 %v4756
    %v5083 = vpop.f32.mrb[0].mxu0
    %v5084 = vadd.f32 0.0, %v5083
    %v5085 = vpop.f32.mrb[0].mxu0
    %v5086 = vpop.f32.mrb[0].mxu0
    %v5087 = vadd.f32 0.0, %v5086
    %v5088 = vpop.f32.mrb[0].mxu0
    %5089 = vmatprep.mubr.bf16.mxu0 0
    %5090 = vmatmul.mubr.bf16.gmra.mrb[0].mxu0 %v4757
    %v5091 = vpop.f32.mrb[0].mxu0
    %v5092 = vadd.f32 0.0, %v5091
    %v5093 = vpop.f32.mrb[0].mxu0
    %v5094 = vpop.f32.mrb[0].mxu0
    %v5095 = vadd.f32 0.0, %v5094
    %v5096 = vpop.f32.mrb[0].mxu0
    %5097 = vmatprep.mubr.bf16.mxu0 0
    %5098 = vmatmul.mubr.bf16.gmra.mrb[0].mxu0 %v4758
    %v5099 = vpop.f32.mrb[0].mxu0
    %v5100 = vadd.f32 0.0, %v5099
    %v5101 = vpop.f32.mrb[0].mxu0
    %v5102 = vpop.f32.mrb[0].mxu0
    %v5103 = vadd.f32 0.0, %v5102
    %v5104 = vpop.f32.mrb[0].mxu0
    %5105 = vmatprep.mubr.bf16.mxu0 0
    %5106 = vmatmul.mubr.bf16.gmra.mrb[0].mxu0 %v4759
    %v5107 = vpop.f32.mrb[0].mxu0
    %v5108 = vadd.f32 0.0, %v5107
    %v5109 = vpop.f32.mrb[0].mxu0
    %v5110 = vpop.f32.mrb[0].mxu0
    %v5111 = vadd.f32 0.0, %v5110
    %v5112 = vpop.f32.mrb[0].mxu0
    %5113 = vdwg.mxu0
    %v5114 = vadd.f32 %v4599, %v4860
    %v5115 = vadd.f32 %v4600, %v4863
    %v5116 = vadd.f32 %v4601, %v4868
    %v5117 = vadd.f32 %v4602, %v4871
    %v5118 = vadd.f32 %v4603, %v4876
    %v5119 = vadd.f32 %v4604, %v4879
    %v5120 = vadd.f32 %v4605, %v4884
    %v5121 = vadd.f32 %v4606, %v4887
    %v5122 = vadd.f32 %v4607, %v4892
    %v5123 = vadd.f32 %v4608, %v4895
    %v5124 = vadd.f32 %v4609, %v4900
    %v5125 = vadd.f32 %v4610, %v4903
    %v5126 = vadd.f32 %v4611, %v4908
    %v5127 = vadd.f32 %v4612, %v4911
    %v5128 = vadd.f32 %v4613, %v4916
    %v5129 = vadd.f32 %v4614, %v4919
    %v5130 = vadd.f32 %v4615, %v4924
    %v5131 = vadd.f32 %v4616, %v4927
    %v5132 = vadd.f32 %v4617, %v4932
    %v5133 = vadd.f32 %v4618, %v4935
    %v5134 = vadd.f32 %v4619, %v4940
    %v5135 = vadd.f32 %v4620, %v4943
    %v5136 = vadd.f32 %v4621, %v4948
    %v5137 = vadd.f32 %v4622, %v4951
    %v5138 = vadd.f32 %v4623, %v4956
    %v5139 = vadd.f32 %v4624, %v4959
    %v5140 = vadd.f32 %v4625, %v4964
    %v5141 = vadd.f32 %v4626, %v4967
    %v5142 = vadd.f32 %v4627, %v4972
    %v5143 = vadd.f32 %v4628, %v4975
    %v5144 = vadd.f32 %v4629, %v4980
    %v5145 = vadd.f32 %v4630, %v4983
    %v5146 = vadd.f32 %v4631, %v4988
    %v5147 = vadd.f32 %v4632, %v4991
    %v5148 = vadd.f32 %v4633, %v4996
    %v5149 = vadd.f32 %v4634, %v4999
    %v5150 = vadd.f32 %v4635, %v5004
    %v5151 = vadd.f32 %v4636, %v5007
    %v5152 = vadd.f32 %v4637, %v5012
    %v5153 = vadd.f32 %v4638, %v5015
    %v5154 = vadd.f32 %v4639, %v5020
    %v5155 = vadd.f32 %v4640, %v5023
    %v5156 = vadd.f32 %v4641, %v5028
    %v5157 = vadd.f32 %v4642, %v5031
    %v5158 = vadd.f32 %v4643, %v5036
    %v5159 = vadd.f32 %v4644, %v5039
    %v5160 = vadd.f32 %v4645, %v5044
    %v5161 = vadd.f32 %v4646, %v5047
    %v5162 = vadd.f32 %v4647, %v5052
    %v5163 = vadd.f32 %v4648, %v5055
    %v5164 = vadd.f32 %v4649, %v5060
    %v5165 = vadd.f32 %v4650, %v5063
    %v5166 = vadd.f32 %v4651, %v5068
    %v5167 = vadd.f32 %v4652, %v5071
    %v5168 = vadd.f32 %v4653, %v5076
    %v5169 = vadd.f32 %v4654, %v5079
    %v5170 = vadd.f32 %v4655, %v5084
    %v5171 = vadd.f32 %v4656, %v5087
    %v5172 = vadd.f32 %v4657, %v5092
    %v5173 = vadd.f32 %v4658, %v5095
    %v5174 = vadd.f32 %v4659, %v5100
    %v5175 = vadd.f32 %v4660, %v5103
    %v5176 = vadd.f32 %v4661, %v5108
    %v5177 = vadd.f32 %v4662, %v5111
    %v5178 = vld [vmem:[%s4663 + $0x1] sm:$0xff]
    %v5179 = vld [vmem:[%s4663 + $0x9] sm:$0xff]
    %v5180 = vld [vmem:[%s4663 + $0x19] sm:$0xff]
    %v5181 = vld [vmem:[%s4663 + $0x21] sm:$0xff]
    %v5182 = vld [vmem:[%s4663 + $0x31] sm:$0xff]
    %v5183 = vld [vmem:[%s4663 + $0x39] sm:$0xff]
    %v5184 = vld [vmem:[%s4663 + $0x49] sm:$0xff]
    %v5185 = vld [vmem:[%s4663 + $0x51] sm:$0xff]
    %v5186 = vld [vmem:[%s4663 + $0x61] sm:$0xff]
    %v5187 = vld [vmem:[%s4663 + $0x69] sm:$0xff]
    %v5188 = vld [vmem:[%s4663 + $0x79] sm:$0xff]
    %v5189 = vld [vmem:[%s4663 + $0x81] sm:$0xff]
    %v5190 = vld [vmem:[%s4663 + $0x91] sm:$0xff]
    %v5191 = vld [vmem:[%s4663 + $0x99] sm:$0xff]
    %v5192 = vld [vmem:[%s4663 + $0xa9] sm:$0xff]
    %v5193 = vld [vmem:[%s4663 + $0xb1] sm:$0xff]
    %v5194 = vld [vmem:[%s4663 + $0xc1] sm:$0xff]
    %v5195 = vld [vmem:[%s4663 + $0xc9] sm:$0xff]
    %v5196 = vld [vmem:[%s4663 + $0xd9] sm:$0xff]
    %v5197 = vld [vmem:[%s4663 + $0xe1] sm:$0xff]
    %v5198 = vld [vmem:[%s4663 + $0xf1] sm:$0xff]
    %v5199 = vld [vmem:[%s4663 + $0xf9] sm:$0xff]
    %v5200 = vld [vmem:[%s4663 + $0x109] sm:$0xff]
    %v5201 = vld [vmem:[%s4663 + $0x111] sm:$0xff]
    %v5202 = vld [vmem:[%s4663 + $0x121] sm:$0xff]
    %v5203 = vld [vmem:[%s4663 + $0x129] sm:$0xff]
    %v5204 = vld [vmem:[%s4663 + $0x139] sm:$0xff]
    %v5205 = vld [vmem:[%s4663 + $0x141] sm:$0xff]
    %v5206 = vld [vmem:[%s4663 + $0x151] sm:$0xff]
    %v5207 = vld [vmem:[%s4663 + $0x159] sm:$0xff]
    %v5208 = vld [vmem:[%s4663 + $0x169] sm:$0xff]
    %v5209 = vld [vmem:[%s4663 + $0x171] sm:$0xff]
    %v5210 = vld [vmem:[%s4663 + $0x1b1] sm:$0xff]
    %v5211 = vld [vmem:[%s4663 + $0x1b9] sm:$0xff]
    %v5212 = vld [vmem:[%s4663 + $0x1c9] sm:$0xff]
    %v5213 = vld [vmem:[%s4663 + $0x1d1] sm:$0xff]
    %v5214 = vld [vmem:[%s4663 + $0x1e1] sm:$0xff]
    %v5215 = vld [vmem:[%s4663 + $0x1e9] sm:$0xff]
    %v5216 = vld [vmem:[%s4663 + $0x1f9] sm:$0xff]
    %v5217 = vld [vmem:[%s4663 + $0x201] sm:$0xff]
    %v5218 = vld [vmem:[%s4663 + $0x211] sm:$0xff]
    %v5219 = vld [vmem:[%s4663 + $0x219] sm:$0xff]
    %v5220 = vld [vmem:[%s4663 + $0x229] sm:$0xff]
    %v5221 = vld [vmem:[%s4663 + $0x231] sm:$0xff]
    %v5222 = vld [vmem:[%s4663 + $0x241] sm:$0xff]
    %v5223 = vld [vmem:[%s4663 + $0x249] sm:$0xff]
    %v5224 = vld [vmem:[%s4663 + $0x259] sm:$0xff]
    %v5225 = vld [vmem:[%s4663 + $0x261] sm:$0xff]
    %v5226 = vld [vmem:[%s4663 + $0x271] sm:$0xff]
    %v5227 = vld [vmem:[%s4663 + $0x279] sm:$0xff]
    %v5228 = vld [vmem:[%s4663 + $0x289] sm:$0xff]
    %v5229 = vld [vmem:[%s4663 + $0x291] sm:$0xff]
    %v5230 = vld [vmem:[%s4663 + $0x2a1] sm:$0xff]
    %v5231 = vld [vmem:[%s4663 + $0x2a9] sm:$0xff]
    %v5232 = vld [vmem:[%s4663 + $0x2b9] sm:$0xff]
    %v5233 = vld [vmem:[%s4663 + $0x2c1] sm:$0xff]
    %v5234 = vld [vmem:[%s4663 + $0x2d1] sm:$0xff]
    %v5235 = vld [vmem:[%s4663 + $0x2d9] sm:$0xff]
    %v5236 = vld [vmem:[%s4663 + $0x2e9] sm:$0xff]
    %v5237 = vld [vmem:[%s4663 + $0x2f1] sm:$0xff]
    %v5238 = vld [vmem:[%s4663 + $0x301] sm:$0xff]
    %v5239 = vld [vmem:[%s4663 + $0x309] sm:$0xff]
    %v5240 = vld [vmem:[%s4663 + $0x319] sm:$0xff]
    %v5241 = vld [vmem:[%s4663 + $0x321] sm:$0xff]
    %v5242 = vpack.c.bf16 %v5179, %v5178
    %v5243 = vpack.c.bf16 %v5181, %v5180
    %v5244 = vpack.c.bf16 %v5183, %v5182
    %v5245 = vpack.c.bf16 %v5185, %v5184
    %v5246 = vpack.c.bf16 %v5187, %v5186
    %v5247 = vpack.c.bf16 %v5189, %v5188
    %v5248 = vpack.c.bf16 %v5191, %v5190
    %v5249 = vpack.c.bf16 %v5193, %v5192
    %v5250 = vpack.c.bf16 %v5195, %v5194
    %v5251 = vpack.c.bf16 %v5197, %v5196
    %v5252 = vpack.c.bf16 %v5199, %v5198
    %v5253 = vpack.c.bf16 %v5201, %v5200
    %v5254 = vpack.c.bf16 %v5203, %v5202
    %v5255 = vpack.c.bf16 %v5205, %v5204
    %v5256 = vpack.c.bf16 %v5207, %v5206
    %v5257 = vpack.c.bf16 %v5209, %v5208
    %v5258 = vpack.c.bf16 %v5211, %v5210
    %v5259 = vpack.c.bf16 %v5213, %v5212
    %v5260 = vpack.c.bf16 %v5215, %v5214
    %v5261 = vpack.c.bf16 %v5217, %v5216
    %v5262 = vpack.c.bf16 %v5219, %v5218
    %v5263 = vpack.c.bf16 %v5221, %v5220
    %v5264 = vpack.c.bf16 %v5223, %v5222
    %v5265 = vpack.c.bf16 %v5225, %v5224
    %v5266 = vpack.c.bf16 %v5227, %v5226
    %v5267 = vpack.c.bf16 %v5229, %v5228
    %v5268 = vpack.c.bf16 %v5231, %v5230
    %v5269 = vpack.c.bf16 %v5233, %v5232
    %v5270 = vpack.c.bf16 %v5235, %v5234
    %v5271 = vpack.c.bf16 %v5237, %v5236
    %v5272 = vpack.c.bf16 %v5239, %v5238
    %v5273 = vpack.c.bf16 %v5241, %v5240
    %s5274 = scalar_lea.vmem [#allocation8], 448
    %v5275 = vld [vmem:[%s5274] sm:$0xf]
    %v5276 = vld [vmem:[%s5274 + $0x4] sm:$0xf]
    %v5277 = vld [vmem:[%s5274 + $0x8] sm:$0xf]
    %v5278 = vld [vmem:[%s5274 + $0xc] sm:$0xf]
    %v5279 = vld [vmem:[%s5274 + $0x10] sm:$0xf]
    %v5280 = vld [vmem:[%s5274 + $0x14] sm:$0xf]
    %v5281 = vld [vmem:[%s5274 + $0x18] sm:$0xf]
    %v5282 = vld [vmem:[%s5274 + $0x1c] sm:$0xf]
    %v5283 = vld [vmem:[%s5274 + $0x20] sm:$0xf]
    %v5284 = vld [vmem:[%s5274 + $0x24] sm:$0xf]
    %v5285 = vld [vmem:[%s5274 + $0x28] sm:$0xf]
    %v5286 = vld [vmem:[%s5274 + $0x2c] sm:$0xf]
    %v5287 = vld [vmem:[%s5274 + $0x30] sm:$0xf]
    %v5288 = vld [vmem:[%s5274 + $0x34] sm:$0xf]
    %v5289 = vld [vmem:[%s5274 + $0x38] sm:$0xf]
    %v5290 = vld [vmem:[%s5274 + $0x3c] sm:$0xf]
    %v5307 = vunpack.c.l.b16 %v5275
    %v5308 = vunpack.c.l.b16 %v5276
    %v5309 = vunpack.c.l.b16 %v5277
    %v5310 = vunpack.c.l.b16 %v5278
    %v5311 = vunpack.c.l.b16 %v5279
    %v5312 = vunpack.c.l.b16 %v5280
    %v5313 = vunpack.c.l.b16 %v5281
    %v5314 = vunpack.c.l.b16 %v5282
    %v5315 = vunpack.c.l.b16 %v5283
    %v5316 = vunpack.c.l.b16 %v5284
    %v5317 = vunpack.c.l.b16 %v5285
    %v5318 = vunpack.c.l.b16 %v5286
    %v5319 = vunpack.c.l.b16 %v5287
    %v5320 = vunpack.c.l.b16 %v5288
    %v5321 = vunpack.c.l.b16 %v5289
    %v5322 = vunpack.c.l.b16 %v5290
    %v5323 = vpack.c.b16 %v5308, %v5307
    %v5324 = vpack.c.b16 %v5310, %v5309
    %v5325 = vpack.c.b16 %v5312, %v5311
    %v5326 = vpack.c.b16 %v5314, %v5313
    %v5327 = vpack.c.b16 %v5316, %v5315
    %v5328 = vpack.c.b16 %v5318, %v5317
    %v5329 = vpack.c.b16 %v5320, %v5319
    %v5330 = vpack.c.b16 %v5322, %v5321
    %5339 = vmatprep.subr.bf16.mxu0 0
    %5340 = vmatpush1.bf16.msra.mxu0 %v5323
    %5341 = vmatprep.subr.bf16.mxu0 0
    %5342 = vmatpush1.bf16.msra.mxu0 %v5324
    %5343 = vmatprep.subr.bf16.mxu0 0
    %5344 = vmatpush1.bf16.msra.mxu0 %v5325
    %5345 = vmatprep.subr.bf16.mxu0 0
    %5346 = vmatpush1.bf16.msra.mxu0 %v5326
    %5347 = vmatprep.subr.bf16.mxu0 0
    %5348 = vmatpush1.bf16.msra.mxu0 %v5327
    %5349 = vmatprep.subr.bf16.mxu0 0
    %5350 = vmatpush1.bf16.msra.mxu0 %v5328
    %5351 = vmatprep.subr.bf16.mxu0 0
    %5352 = vmatpush1.bf16.msra.mxu0 %v5329
    %5353 = vmatprep.subr.bf16.mxu0 0
    %5354 = vmatpush1.bf16.msra.mxu0 %v5330
    %5355 = vmatprep.subr.bf16.mxu0 0
    %5356 = vmatpush1.bf16.msra.mxu0 0
    %5357 = vmatprep.subr.bf16.mxu0 0
    %5358 = vmatpush1.bf16.msra.mxu0 0
    %5359 = vmatprep.subr.bf16.mxu0 0
    %5360 = vmatpush1.bf16.msra.mxu0 0
    %5361 = vmatprep.subr.bf16.mxu0 0
    %5362 = vmatpush1.bf16.msra.mxu0 0
    %5363 = vmatprep.subr.bf16.mxu0 0
    %5364 = vmatpush1.bf16.msra.mxu0 0
    %5365 = vmatprep.subr.bf16.mxu0 0
    %5366 = vmatpush1.bf16.msra.mxu0 0
    %5367 = vmatprep.subr.bf16.mxu0 0
    %5368 = vmatpush1.bf16.msra.mxu0 0
    %5369 = vmatprep.subr.bf16.mxu0 0
    %5370 = vmatpush1.bf16.msra.mxu0 0
    %5371 = vmatprep.mubr.bf16.mxu0 0
    %5372 = vmatmul.mubr.bf16.gmra.mrb[0].mxu0 %v5242
    %v5373 = vpop.f32.mrb[0].mxu0
    %v5374 = vadd.f32 0.0, %v5373
    %v5375 = vpop.f32.mrb[0].mxu0
    %v5376 = vpop.f32.mrb[0].mxu0
    %v5377 = vadd.f32 0.0, %v5376
    %v5378 = vpop.f32.mrb[0].mxu0
    %5379 = vmatprep.mubr.bf16.mxu0 0
    %5380 = vmatmul.mubr.bf16.gmra.mrb[0].mxu0 %v5243
    %v5381 = vpop.f32.mrb[0].mxu0
    %v5382 = vadd.f32 0.0, %v5381
    %v5383 = vpop.f32.mrb[0].mxu0
    %v5384 = vpop.f32.mrb[0].mxu0
    %v5385 = vadd.f32 0.0, %v5384
    %v5386 = vpop.f32.mrb[0].mxu0
    %5387 = vmatprep.mubr.bf16.mxu0 0
    %5388 = vmatmul.mubr.bf16.gmra.mrb[0].mxu0 %v5244
    %v5389 = vpop.f32.mrb[0].mxu0
    %v5390 = vadd.f32 0.0, %v5389
    %v5391 = vpop.f32.mrb[0].mxu0
    %v5392 = vpop.f32.mrb[0].mxu0
    %v5393 = vadd.f32 0.0, %v5392
    %v5394 = vpop.f32.mrb[0].mxu0
    %5395 = vmatprep.mubr.bf16.mxu0 0
    %5396 = vmatmul.mubr.bf16.gmra.mrb[0].mxu0 %v5245
    %v5397 = vpop.f32.mrb[0].mxu0
    %v5398 = vadd.f32 0.0, %v5397
    %v5399 = vpop.f32.mrb[0].mxu0
    %v5400 = vpop.f32.mrb[0].mxu0
    %v5401 = vadd.f32 0.0, %v5400
    %v5402 = vpop.f32.mrb[0].mxu0
    %5403 = vmatprep.mubr.bf16.mxu0 0
    %5404 = vmatmul.mubr.bf16.gmra.mrb[0].mxu0 %v5246
    %v5405 = vpop.f32.mrb[0].mxu0
    %v5406 = vadd.f32 0.0, %v5405
    %v5407 = vpop.f32.mrb[0].mxu0
    %v5408 = vpop.f32.mrb[0].mxu0
    %v5409 = vadd.f32 0.0, %v5408
    %v5410 = vpop.f32.mrb[0].mxu0
    %5411 = vmatprep.mubr.bf16.mxu0 0
    %5412 = vmatmul.mubr.bf16.gmra.mrb[0].mxu0 %v5247
    %v5413 = vpop.f32.mrb[0].mxu0
    %v5414 = vadd.f32 0.0, %v5413
    %v5415 = vpop.f32.mrb[0].mxu0
    %v5416 = vpop.f32.mrb[0].mxu0
    %v5417 = vadd.f32 0.0, %v5416
    %v5418 = vpop.f32.mrb[0].mxu0
    %5419 = vmatprep.mubr.bf16.mxu0 0
    %5420 = vmatmul.mubr.bf16.gmra.mrb[0].mxu0 %v5248
    %v5421 = vpop.f32.mrb[0].mxu0
    %v5422 = vadd.f32 0.0, %v5421
    %v5423 = vpop.f32.mrb[0].mxu0
    %v5424 = vpop.f32.mrb[0].mxu0
    %v5425 = vadd.f32 0.0, %v5424
    %v5426 = vpop.f32.mrb[0].mxu0
    %5427 = vmatprep.mubr.bf16.mxu0 0
    %5428 = vmatmul.mubr.bf16.gmra.mrb[0].mxu0 %v5249
    %v5429 = vpop.f32.mrb[0].mxu0
    %v5430 = vadd.f32 0.0, %v5429
    %v5431 = vpop.f32.mrb[0].mxu0
    %v5432 = vpop.f32.mrb[0].mxu0
    %v5433 = vadd.f32 0.0, %v5432
    %v5434 = vpop.f32.mrb[0].mxu0
    %5435 = vmatprep.mubr.bf16.mxu0 0
    %5436 = vmatmul.mubr.bf16.gmra.mrb[0].mxu0 %v5250
    %v5437 = vpop.f32.mrb[0].mxu0
    %v5438 = vadd.f32 0.0, %v5437
    %v5439 = vpop.f32.mrb[0].mxu0
    %v5440 = vpop.f32.mrb[0].mxu0
    %v5441 = vadd.f32 0.0, %v5440
    %v5442 = vpop.f32.mrb[0].mxu0
    %5443 = vmatprep.mubr.bf16.mxu0 0
    %5444 = vmatmul.mubr.bf16.gmra.mrb[0].mxu0 %v5251
    %v5445 = vpop.f32.mrb[0].mxu0
    %v5446 = vadd.f32 0.0, %v5445
    %v5447 = vpop.f32.mrb[0].mxu0
    %v5448 = vpop.f32.mrb[0].mxu0
    %v5449 = vadd.f32 0.0, %v5448
    %v5450 = vpop.f32.mrb[0].mxu0
    %5451 = vmatprep.mubr.bf16.mxu0 0
    %5452 = vmatmul.mubr.bf16.gmra.mrb[0].mxu0 %v5252
    %v5453 = vpop.f32.mrb[0].mxu0
    %v5454 = vadd.f32 0.0, %v5453
    %v5455 = vpop.f32.mrb[0].mxu0
    %v5456 = vpop.f32.mrb[0].mxu0
    %v5457 = vadd.f32 0.0, %v5456
    %v5458 = vpop.f32.mrb[0].mxu0
    %5459 = vmatprep.mubr.bf16.mxu0 0
    %5460 = vmatmul.mubr.bf16.gmra.mrb[0].mxu0 %v5253
    %v5461 = vpop.f32.mrb[0].mxu0
    %v5462 = vadd.f32 0.0, %v5461
    %v5463 = vpop.f32.mrb[0].mxu0
    %v5464 = vpop.f32.mrb[0].mxu0
    %v5465 = vadd.f32 0.0, %v5464
    %v5466 = vpop.f32.mrb[0].mxu0
    %5467 = vmatprep.mubr.bf16.mxu0 0
    %5468 = vmatmul.mubr.bf16.gmra.mrb[0].mxu0 %v5254
    %v5469 = vpop.f32.mrb[0].mxu0
    %v5470 = vadd.f32 0.0, %v5469
    %v5471 = vpop.f32.mrb[0].mxu0
    %v5472 = vpop.f32.mrb[0].mxu0
    %v5473 = vadd.f32 0.0, %v5472
    %v5474 = vpop.f32.mrb[0].mxu0
    %5475 = vmatprep.mubr.bf16.mxu0 0
    %5476 = vmatmul.mubr.bf16.gmra.mrb[0].mxu0 %v5255
    %v5477 = vpop.f32.mrb[0].mxu0
    %v5478 = vadd.f32 0.0, %v5477
    %v5479 = vpop.f32.mrb[0].mxu0
    %v5480 = vpop.f32.mrb[0].mxu0
    %v5481 = vadd.f32 0.0, %v5480
    %v5482 = vpop.f32.mrb[0].mxu0
    %5483 = vmatprep.mubr.bf16.mxu0 0
    %5484 = vmatmul.mubr.bf16.gmra.mrb[0].mxu0 %v5256
    %v5485 = vpop.f32.mrb[0].mxu0
    %v5486 = vadd.f32 0.0, %v5485
    %v5487 = vpop.f32.mrb[0].mxu0
    %v5488 = vpop.f32.mrb[0].mxu0
    %v5489 = vadd.f32 0.0, %v5488
    %v5490 = vpop.f32.mrb[0].mxu0
    %5491 = vmatprep.mubr.bf16.mxu0 0
    %5492 = vmatmul.mubr.bf16.gmra.mrb[0].mxu0 %v5257
    %v5493 = vpop.f32.mrb[0].mxu0
    %v5494 = vadd.f32 0.0, %v5493
    %v5495 = vpop.f32.mrb[0].mxu0
    %v5496 = vpop.f32.mrb[0].mxu0
    %v5497 = vadd.f32 0.0, %v5496
    %v5498 = vpop.f32.mrb[0].mxu0
    %5499 = vmatprep.mubr.bf16.mxu0 0
    %5500 = vmatmul.mubr.bf16.gmra.mrb[0].mxu0 %v5258
    %v5501 = vpop.f32.mrb[0].mxu0
    %v5502 = vadd.f32 0.0, %v5501
    %v5503 = vpop.f32.mrb[0].mxu0
    %v5504 = vpop.f32.mrb[0].mxu0
    %v5505 = vadd.f32 0.0, %v5504
    %v5506 = vpop.f32.mrb[0].mxu0
    %5507 = vmatprep.mubr.bf16.mxu0 0
    %5508 = vmatmul.mubr.bf16.gmra.mrb[0].mxu0 %v5259
    %v5509 = vpop.f32.mrb[0].mxu0
    %v5510 = vadd.f32 0.0, %v5509
    %v5511 = vpop.f32.mrb[0].mxu0
    %v5512 = vpop.f32.mrb[0].mxu0
    %v5513 = vadd.f32 0.0, %v5512
    %v5514 = vpop.f32.mrb[0].mxu0
    %5515 = vmatprep.mubr.bf16.mxu0 0
    %5516 = vmatmul.mubr.bf16.gmra.mrb[0].mxu0 %v5260
    %v5517 = vpop.f32.mrb[0].mxu0
    %v5518 = vadd.f32 0.0, %v5517
    %v5519 = vpop.f32.mrb[0].mxu0
    %v5520 = vpop.f32.mrb[0].mxu0
    %v5521 = vadd.f32 0.0, %v5520
    %v5522 = vpop.f32.mrb[0].mxu0
    %5523 = vmatprep.mubr.bf16.mxu0 0
    %5524 = vmatmul.mubr.bf16.gmra.mrb[0].mxu0 %v5261
    %v5525 = vpop.f32.mrb[0].mxu0
    %v5526 = vadd.f32 0.0, %v5525
    %v5527 = vpop.f32.mrb[0].mxu0
    %v5528 = vpop.f32.mrb[0].mxu0
    %v5529 = vadd.f32 0.0, %v5528
    %v5530 = vpop.f32.mrb[0].mxu0
    %5531 = vmatprep.mubr.bf16.mxu0 0
    %5532 = vmatmul.mubr.bf16.gmra.mrb[0].mxu0 %v5262
    %v5533 = vpop.f32.mrb[0].mxu0
    %v5534 = vadd.f32 0.0, %v5533
    %v5535 = vpop.f32.mrb[0].mxu0
    %v5536 = vpop.f32.mrb[0].mxu0
    %v5537 = vadd.f32 0.0, %v5536
    %v5538 = vpop.f32.mrb[0].mxu0
    %5539 = vmatprep.mubr.bf16.mxu0 0
    %5540 = vmatmul.mubr.bf16.gmra.mrb[0].mxu0 %v5263
    %v5541 = vpop.f32.mrb[0].mxu0
    %v5542 = vadd.f32 0.0, %v5541
    %v5543 = vpop.f32.mrb[0].mxu0
    %v5544 = vpop.f32.mrb[0].mxu0
    %v5545 = vadd.f32 0.0, %v5544
    %v5546 = vpop.f32.mrb[0].mxu0
    %5547 = vmatprep.mubr.bf16.mxu0 0
    %5548 = vmatmul.mubr.bf16.gmra.mrb[0].mxu0 %v5264
    %v5549 = vpop.f32.mrb[0].mxu0
    %v5550 = vadd.f32 0.0, %v5549
    %v5551 = vpop.f32.mrb[0].mxu0
    %v5552 = vpop.f32.mrb[0].mxu0
    %v5553 = vadd.f32 0.0, %v5552
    %v5554 = vpop.f32.mrb[0].mxu0
    %5555 = vmatprep.mubr.bf16.mxu0 0
    %5556 = vmatmul.mubr.bf16.gmra.mrb[0].mxu0 %v5265
    %v5557 = vpop.f32.mrb[0].mxu0
    %v5558 = vadd.f32 0.0, %v5557
    %v5559 = vpop.f32.mrb[0].mxu0
    %v5560 = vpop.f32.mrb[0].mxu0
    %v5561 = vadd.f32 0.0, %v5560
    %v5562 = vpop.f32.mrb[0].mxu0
    %5563 = vmatprep.mubr.bf16.mxu0 0
    %5564 = vmatmul.mubr.bf16.gmra.mrb[0].mxu0 %v5266
    %v5565 = vpop.f32.mrb[0].mxu0
    %v5566 = vadd.f32 0.0, %v5565
    %v5567 = vpop.f32.mrb[0].mxu0
    %v5568 = vpop.f32.mrb[0].mxu0
    %v5569 = vadd.f32 0.0, %v5568
    %v5570 = vpop.f32.mrb[0].mxu0
    %5571 = vmatprep.mubr.bf16.mxu0 0
    %5572 = vmatmul.mubr.bf16.gmra.mrb[0].mxu0 %v5267
    %v5573 = vpop.f32.mrb[0].mxu0
    %v5574 = vadd.f32 0.0, %v5573
    %v5575 = vpop.f32.mrb[0].mxu0
    %v5576 = vpop.f32.mrb[0].mxu0
    %v5577 = vadd.f32 0.0, %v5576
    %v5578 = vpop.f32.mrb[0].mxu0
    %5579 = vmatprep.mubr.bf16.mxu0 0
    %5580 = vmatmul.mubr.bf16.gmra.mrb[0].mxu0 %v5268
    %v5581 = vpop.f32.mrb[0].mxu0
    %v5582 = vadd.f32 0.0, %v5581
    %v5583 = vpop.f32.mrb[0].mxu0
    %v5584 = vpop.f32.mrb[0].mxu0
    %v5585 = vadd.f32 0.0, %v5584
    %v5586 = vpop.f32.mrb[0].mxu0
    %5587 = vmatprep.mubr.bf16.mxu0 0
    %5588 = vmatmul.mubr.bf16.gmra.mrb[0].mxu0 %v5269
    %v5589 = vpop.f32.mrb[0].mxu0
    %v5590 = vadd.f32 0.0, %v5589
    %v5591 = vpop.f32.mrb[0].mxu0
    %v5592 = vpop.f32.mrb[0].mxu0
    %v5593 = vadd.f32 0.0, %v5592
    %v5594 = vpop.f32.mrb[0].mxu0
    %5595 = vmatprep.mubr.bf16.mxu0 0
    %5596 = vmatmul.mubr.bf16.gmra.mrb[0].mxu0 %v5270
    %v5597 = vpop.f32.mrb[0].mxu0
    %v5598 = vadd.f32 0.0, %v5597
    %v5599 = vpop.f32.mrb[0].mxu0
    %v5600 = vpop.f32.mrb[0].mxu0
    %v5601 = vadd.f32 0.0, %v5600
    %v5602 = vpop.f32.mrb[0].mxu0
    %5603 = vmatprep.mubr.bf16.mxu0 0
    %5604 = vmatmul.mubr.bf16.gmra.mrb[0].mxu0 %v5271
    %v5605 = vpop.f32.mrb[0].mxu0
    %v5606 = vadd.f32 0.0, %v5605
    %v5607 = vpop.f32.mrb[0].mxu0
    %v5608 = vpop.f32.mrb[0].mxu0
    %v5609 = vadd.f32 0.0, %v5608
    %v5610 = vpop.f32.mrb[0].mxu0
    %5611 = vmatprep.mubr.bf16.mxu0 0
    %5612 = vmatmul.mubr.bf16.gmra.mrb[0].mxu0 %v5272
    %v5613 = vpop.f32.mrb[0].mxu0
    %v5614 = vadd.f32 0.0, %v5613
    %v5615 = vpop.f32.mrb[0].mxu0
    %v5616 = vpop.f32.mrb[0].mxu0
    %v5617 = vadd.f32 0.0, %v5616
    %v5618 = vpop.f32.mrb[0].mxu0
    %5619 = vmatprep.mubr.bf16.mxu0 0
    %5620 = vmatmul.mubr.bf16.gmra.mrb[0].mxu0 %v5273
    %v5621 = vpop.f32.mrb[0].mxu0
    %v5622 = vadd.f32 0.0, %v5621
    %v5623 = vpop.f32.mrb[0].mxu0
    %v5624 = vpop.f32.mrb[0].mxu0
    %v5625 = vadd.f32 0.0, %v5624
    %v5626 = vpop.f32.mrb[0].mxu0
    %5627 = vdwg.mxu0
    %v5628 = vadd.f32 %v5114, %v5374
    %v5629 = vadd.f32 %v5115, %v5377
    %v5630 = vadd.f32 %v5116, %v5382
    %v5631 = vadd.f32 %v5117, %v5385
    %v5632 = vadd.f32 %v5118, %v5390
    %v5633 = vadd.f32 %v5119, %v5393
    %v5634 = vadd.f32 %v5120, %v5398
    %v5635 = vadd.f32 %v5121, %v5401
    %v5636 = vadd.f32 %v5122, %v5406
    %v5637 = vadd.f32 %v5123, %v5409
    %v5638 = vadd.f32 %v5124, %v5414
    %v5639 = vadd.f32 %v5125, %v5417
    %v5640 = vadd.f32 %v5126, %v5422
    %v5641 = vadd.f32 %v5127, %v5425
    %v5642 = vadd.f32 %v5128, %v5430
    %v5643 = vadd.f32 %v5129, %v5433
    %v5644 = vadd.f32 %v5130, %v5438
    %v5645 = vadd.f32 %v5131, %v5441
    %v5646 = vadd.f32 %v5132, %v5446
    %v5647 = vadd.f32 %v5133, %v5449
    %v5648 = vadd.f32 %v5134, %v5454
    %v5649 = vadd.f32 %v5135, %v5457
    %v5650 = vadd.f32 %v5136, %v5462
    %v5651 = vadd.f32 %v5137, %v5465
    %v5652 = vadd.f32 %v5138, %v5470
    %v5653 = vadd.f32 %v5139, %v5473
    %v5654 = vadd.f32 %v5140, %v5478
    %v5655 = vadd.f32 %v5141, %v5481
    %v5656 = vadd.f32 %v5142, %v5486
    %v5657 = vadd.f32 %v5143, %v5489
    %v5658 = vadd.f32 %v5144, %v5494
    %v5659 = vadd.f32 %v5145, %v5497
    %v5660 = vadd.f32 %v5146, %v5502
    %v5661 = vadd.f32 %v5147, %v5505
    %v5662 = vadd.f32 %v5148, %v5510
    %v5663 = vadd.f32 %v5149, %v5513
    %v5664 = vadd.f32 %v5150, %v5518
    %v5665 = vadd.f32 %v5151, %v5521
    %v5666 = vadd.f32 %v5152, %v5526
    %v5667 = vadd.f32 %v5153, %v5529
    %v5668 = vadd.f32 %v5154, %v5534
    %v5669 = vadd.f32 %v5155, %v5537
    %v5670 = vadd.f32 %v5156, %v5542
    %v5671 = vadd.f32 %v5157, %v5545
    %v5672 = vadd.f32 %v5158, %v5550
    %v5673 = vadd.f32 %v5159, %v5553
    %v5674 = vadd.f32 %v5160, %v5558
    %v5675 = vadd.f32 %v5161, %v5561
    %v5676 = vadd.f32 %v5162, %v5566
    %v5677 = vadd.f32 %v5163, %v5569
    %v5678 = vadd.f32 %v5164, %v5574
    %v5679 = vadd.f32 %v5165, %v5577
    %v5680 = vadd.f32 %v5166, %v5582
    %v5681 = vadd.f32 %v5167, %v5585
    %v5682 = vadd.f32 %v5168, %v5590
    %v5683 = vadd.f32 %v5169, %v5593
    %v5684 = vadd.f32 %v5170, %v5598
    %v5685 = vadd.f32 %v5171, %v5601
    %v5686 = vadd.f32 %v5172, %v5606
    %v5687 = vadd.f32 %v5173, %v5609
    %v5688 = vadd.f32 %v5174, %v5614
    %v5689 = vadd.f32 %v5175, %v5617
    %v5690 = vadd.f32 %v5176, %v5622
    %v5691 = vadd.f32 %v5177, %v5625
    %v5692 = vld [vmem:[%s4663 + $0x2] sm:$0xff]
    %v5693 = vld [vmem:[%s4663 + $0xa] sm:$0xff]
    %v5694 = vld [vmem:[%s4663 + $0x1a] sm:$0xff]
    %v5695 = vld [vmem:[%s4663 + $0x22] sm:$0xff]
    %v5696 = vld [vmem:[%s4663 + $0x32] sm:$0xff]
    %v5697 = vld [vmem:[%s4663 + $0x3a] sm:$0xff]
    %v5698 = vld [vmem:[%s4663 + $0x4a] sm:$0xff]
    %v5699 = vld [vmem:[%s4663 + $0x52] sm:$0xff]
    %v5700 = vld [vmem:[%s4663 + $0x62] sm:$0xff]
    %v5701 = vld [vmem:[%s4663 + $0x6a] sm:$0xff]
    %v5702 = vld [vmem:[%s4663 + $0x7a] sm:$0xff]
    %v5703 = vld [vmem:[%s4663 + $0x82] sm:$0xff]
    %v5704 = vld [vmem:[%s4663 + $0x92] sm:$0xff]
    %v5705 = vld [vmem:[%s4663 + $0x9a] sm:$0xff]
    %v5706 = vld [vmem:[%s4663 + $0xaa] sm:$0xff]
    %v5707 = vld [vmem:[%s4663 + $0xb2] sm:$0xff]
    %v5708 = vld [vmem:[%s4663 + $0xc2] sm:$0xff]
    %v5709 = vld [vmem:[%s4663 + $0xca] sm:$0xff]
    %v5710 = vld [vmem:[%s4663 + $0xda] sm:$0xff]
    %v5711 = vld [vmem:[%s4663 + $0xe2] sm:$0xff]
    %v5712 = vld [vmem:[%s4663 + $0xf2] sm:$0xff]
    %v5713 = vld [vmem:[%s4663 + $0xfa] sm:$0xff]
    %v5714 = vld [vmem:[%s4663 + $0x10a] sm:$0xff]
    %v5715 = vld [vmem:[%s4663 + $0x112] sm:$0xff]
    %v5716 = vld [vmem:[%s4663 + $0x122] sm:$0xff]
    %v5717 = vld [vmem:[%s4663 + $0x12a] sm:$0xff]
    %v5718 = vld [vmem:[%s4663 + $0x13a] sm:$0xff]
    %v5719 = vld [vmem:[%s4663 + $0x142] sm:$0xff]
    %v5720 = vld [vmem:[%s4663 + $0x152] sm:$0xff]
    %v5721 = vld [vmem:[%s4663 + $0x15a] sm:$0xff]
    %v5722 = vld [vmem:[%s4663 + $0x16a] sm:$0xff]
    %v5723 = vld [vmem:[%s4663 + $0x172] sm:$0xff]
    %v5724 = vld [vmem:[%s4663 + $0x1b2] sm:$0xff]
    %v5725 = vld [vmem:[%s4663 + $0x1ba] sm:$0xff]
    %v5726 = vld [vmem:[%s4663 + $0x1ca] sm:$0xff]
    %v5727 = vld [vmem:[%s4663 + $0x1d2] sm:$0xff]
    %v5728 = vld [vmem:[%s4663 + $0x1e2] sm:$0xff]
    %v5729 = vld [vmem:[%s4663 + $0x1ea] sm:$0xff]
    %v5730 = vld [vmem:[%s4663 + $0x1fa] sm:$0xff]
    %v5731 = vld [vmem:[%s4663 + $0x202] sm:$0xff]
    %v5732 = vld [vmem:[%s4663 + $0x212] sm:$0xff]
    %v5733 = vld [vmem:[%s4663 + $0x21a] sm:$0xff]
    %v5734 = vld [vmem:[%s4663 + $0x22a] sm:$0xff]
    %v5735 = vld [vmem:[%s4663 + $0x232] sm:$0xff]
    %v5736 = vld [vmem:[%s4663 + $0x242] sm:$0xff]
    %v5737 = vld [vmem:[%s4663 + $0x24a] sm:$0xff]
    %v5738 = vld [vmem:[%s4663 + $0x25a] sm:$0xff]
    %v5739 = vld [vmem:[%s4663 + $0x262] sm:$0xff]
    %v5740 = vld [vmem:[%s4663 + $0x272] sm:$0xff]
    %v5741 = vld [vmem:[%s4663 + $0x27a] sm:$0xff]
    %v5742 = vld [vmem:[%s4663 + $0x28a] sm:$0xff]
    %v5743 = vld [vmem:[%s4663 + $0x292] sm:$0xff]
    %v5744 = vld [vmem:[%s4663 + $0x2a2] sm:$0xff]
    %v5745 = vld [vmem:[%s4663 + $0x2aa] sm:$0xff]
    %v5746 = vld [vmem:[%s4663 + $0x2ba] sm:$0xff]
    %v5747 = vld [vmem:[%s4663 + $0x2c2] sm:$0xff]
    %v5748 = vld [vmem:[%s4663 + $0x2d2] sm:$0xff]
    %v5749 = vld [vmem:[%s4663 + $0x2da] sm:$0xff]
    %v5750 = vld [vmem:[%s4663 + $0x2ea] sm:$0xff]
    %v5751 = vld [vmem:[%s4663 + $0x2f2] sm:$0xff]
    %v5752 = vld [vmem:[%s4663 + $0x302] sm:$0xff]
    %v5753 = vld [vmem:[%s4663 + $0x30a] sm:$0xff]
    %v5754 = vld [vmem:[%s4663 + $0x31a] sm:$0xff]
    %v5755 = vld [vmem:[%s4663 + $0x322] sm:$0xff]
    %v5756 = vpack.c.bf16 %v5693, %v5692
    %v5757 = vpack.c.bf16 %v5695, %v5694
    %v5758 = vpack.c.bf16 %v5697, %v5696
    %v5759 = vpack.c.bf16 %v5699, %v5698
    %v5760 = vpack.c.bf16 %v5701, %v5700
    %v5761 = vpack.c.bf16 %v5703, %v5702
    %v5762 = vpack.c.bf16 %v5705, %v5704
    %v5763 = vpack.c.bf16 %v5707, %v5706
    %v5764 = vpack.c.bf16 %v5709, %v5708
    %v5765 = vpack.c.bf16 %v5711, %v5710
    %v5766 = vpack.c.bf16 %v5713, %v5712
    %v5767 = vpack.c.bf16 %v5715, %v5714
    %v5768 = vpack.c.bf16 %v5717, %v5716
    %v5769 = vpack.c.bf16 %v5719, %v5718
    %v5770 = vpack.c.bf16 %v5721, %v5720
    %v5771 = vpack.c.bf16 %v5723, %v5722
    %v5772 = vpack.c.bf16 %v5725, %v5724
    %v5773 = vpack.c.bf16 %v5727, %v5726
    %v5774 = vpack.c.bf16 %v5729, %v5728
    %v5775 = vpack.c.bf16 %v5731, %v5730
    %v5776 = vpack.c.bf16 %v5733, %v5732
    %v5777 = vpack.c.bf16 %v5735, %v5734
    %v5778 = vpack.c.bf16 %v5737, %v5736
    %v5779 = vpack.c.bf16 %v5739, %v5738
    %v5780 = vpack.c.bf16 %v5741, %v5740
    %v5781 = vpack.c.bf16 %v5743, %v5742
    %v5782 = vpack.c.bf16 %v5745, %v5744
    %v5783 = vpack.c.bf16 %v5747, %v5746
    %v5784 = vpack.c.bf16 %v5749, %v5748
    %v5785 = vpack.c.bf16 %v5751, %v5750
    %v5786 = vpack.c.bf16 %v5753, %v5752
    %v5787 = vpack.c.bf16 %v5755, %v5754
    %s5788 = scalar_lea.vmem [#allocation8], 512
    %v5789 = vld [vmem:[%s5788] sm:$0xf]
    %v5790 = vld [vmem:[%s5788 + $0x4] sm:$0xf]
    %v5791 = vld [vmem:[%s5788 + $0x8] sm:$0xf]
    %v5792 = vld [vmem:[%s5788 + $0xc] sm:$0xf]
    %v5793 = vld [vmem:[%s5788 + $0x10] sm:$0xf]
    %v5794 = vld [vmem:[%s5788 + $0x14] sm:$0xf]
    %v5795 = vld [vmem:[%s5788 + $0x18] sm:$0xf]
    %v5796 = vld [vmem:[%s5788 + $0x1c] sm:$0xf]
    %v5797 = vld [vmem:[%s5788 + $0x20] sm:$0xf]
    %v5798 = vld [vmem:[%s5788 + $0x24] sm:$0xf]
    %v5799 = vld [vmem:[%s5788 + $0x28] sm:$0xf]
    %v5800 = vld [vmem:[%s5788 + $0x2c] sm:$0xf]
    %v5801 = vld [vmem:[%s5788 + $0x30] sm:$0xf]
    %v5802 = vld [vmem:[%s5788 + $0x34] sm:$0xf]
    %v5803 = vld [vmem:[%s5788 + $0x38] sm:$0xf]
    %v5804 = vld [vmem:[%s5788 + $0x3c] sm:$0xf]
    %v5821 = vunpack.c.l.b16 %v5789
    %v5822 = vunpack.c.l.b16 %v5790
    %v5823 = vunpack.c.l.b16 %v5791
    %v5824 = vunpack.c.l.b16 %v5792
    %v5825 = vunpack.c.l.b16 %v5793
    %v5826 = vunpack.c.l.b16 %v5794
    %v5827 = vunpack.c.l.b16 %v5795
    %v5828 = vunpack.c.l.b16 %v5796
    %v5829 = vunpack.c.l.b16 %v5797
    %v5830 = vunpack.c.l.b16 %v5798
    %v5831 = vunpack.c.l.b16 %v5799
    %v5832 = vunpack.c.l.b16 %v5800
    %v5833 = vunpack.c.l.b16 %v5801
    %v5834 = vunpack.c.l.b16 %v5802
    %v5835 = vunpack.c.l.b16 %v5803
    %v5836 = vunpack.c.l.b16 %v5804
    %v5837 = vpack.c.b16 %v5822, %v5821
    %v5838 = vpack.c.b16 %v5824, %v5823
    %v5839 = vpack.c.b16 %v5826, %v5825
    %v5840 = vpack.c.b16 %v5828, %v5827
    %v5841 = vpack.c.b16 %v5830, %v5829
    %v5842 = vpack.c.b16 %v5832, %v5831
    %v5843 = vpack.c.b16 %v5834, %v5833
    %v5844 = vpack.c.b16 %v5836, %v5835
    %5853 = vmatprep.subr.bf16.mxu0 0
    %5854 = vmatpush1.bf16.msra.mxu0 %v5837
    %5855 = vmatprep.subr.bf16.mxu0 0
    %5856 = vmatpush1.bf16.msra.mxu0 %v5838
    %5857 = vmatprep.subr.bf16.mxu0 0
    %5858 = vmatpush1.bf16.msra.mxu0 %v5839
    %5859 = vmatprep.subr.bf16.mxu0 0
    %5860 = vmatpush1.bf16.msra.mxu0 %v5840
    %5861 = vmatprep.subr.bf16.mxu0 0
    %5862 = vmatpush1.bf16.msra.mxu0 %v5841
    %5863 = vmatprep.subr.bf16.mxu0 0
    %5864 = vmatpush1.bf16.msra.mxu0 %v5842
    %5865 = vmatprep.subr.bf16.mxu0 0
    %5866 = vmatpush1.bf16.msra.mxu0 %v5843
    %5867 = vmatprep.subr.bf16.mxu0 0
    %5868 = vmatpush1.bf16.msra.mxu0 %v5844
    %5869 = vmatprep.subr.bf16.mxu0 0
    %5870 = vmatpush1.bf16.msra.mxu0 0
    %5871 = vmatprep.subr.bf16.mxu0 0
    %5872 = vmatpush1.bf16.msra.mxu0 0
    %5873 = vmatprep.subr.bf16.mxu0 0
    %5874 = vmatpush1.bf16.msra.mxu0 0
    %5875 = vmatprep.subr.bf16.mxu0 0
    %5876 = vmatpush1.bf16.msra.mxu0 0
    %5877 = vmatprep.subr.bf16.mxu0 0
    %5878 = vmatpush1.bf16.msra.mxu0 0
    %5879 = vmatprep.subr.bf16.mxu0 0
    %5880 = vmatpush1.bf16.msra.mxu0 0
    %5881 = vmatprep.subr.bf16.mxu0 0
    %5882 = vmatpush1.bf16.msra.mxu0 0
    %5883 = vmatprep.subr.bf16.mxu0 0
    %5884 = vmatpush1.bf16.msra.mxu0 0
    %5885 = vmatprep.mubr.bf16.mxu0 0
    %5886 = vmatmul.mubr.bf16.gmra.mrb[0].mxu0 %v5756
    %v5887 = vpop.f32.mrb[0].mxu0
    %v5888 = vadd.f32 0.0, %v5887
    %v5889 = vpop.f32.mrb[0].mxu0
    %v5890 = vpop.f32.mrb[0].mxu0
    %v5891 = vadd.f32 0.0, %v5890
    %v5892 = vpop.f32.mrb[0].mxu0
    %5893 = vmatprep.mubr.bf16.mxu0 0
    %5894 = vmatmul.mubr.bf16.gmra.mrb[0].mxu0 %v5757
    %v5895 = vpop.f32.mrb[0].mxu0
    %v5896 = vadd.f32 0.0, %v5895
    %v5897 = vpop.f32.mrb[0].mxu0
    %v5898 = vpop.f32.mrb[0].mxu0
    %v5899 = vadd.f32 0.0, %v5898
    %v5900 = vpop.f32.mrb[0].mxu0
    %5901 = vmatprep.mubr.bf16.mxu0 0
    %5902 = vmatmul.mubr.bf16.gmra.mrb[0].mxu0 %v5758
    %v5903 = vpop.f32.mrb[0].mxu0
    %v5904 = vadd.f32 0.0, %v5903
    %v5905 = vpop.f32.mrb[0].mxu0
    %v5906 = vpop.f32.mrb[0].mxu0
    %v5907 = vadd.f32 0.0, %v5906
    %v5908 = vpop.f32.mrb[0].mxu0
    %5909 = vmatprep.mubr.bf16.mxu0 0
    %5910 = vmatmul.mubr.bf16.gmra.mrb[0].mxu0 %v5759
    %v5911 = vpop.f32.mrb[0].mxu0
    %v5912 = vadd.f32 0.0, %v5911
    %v5913 = vpop.f32.mrb[0].mxu0
    %v5914 = vpop.f32.mrb[0].mxu0
    %v5915 = vadd.f32 0.0, %v5914
    %v5916 = vpop.f32.mrb[0].mxu0
    %5917 = vmatprep.mubr.bf16.mxu0 0
    %5918 = vmatmul.mubr.bf16.gmra.mrb[0].mxu0 %v5760
    %v5919 = vpop.f32.mrb[0].mxu0
    %v5920 = vadd.f32 0.0, %v5919
    %v5921 = vpop.f32.mrb[0].mxu0
    %v5922 = vpop.f32.mrb[0].mxu0
    %v5923 = vadd.f32 0.0, %v5922
    %v5924 = vpop.f32.mrb[0].mxu0
    %5925 = vmatprep.mubr.bf16.mxu0 0
    %5926 = vmatmul.mubr.bf16.gmra.mrb[0].mxu0 %v5761
    %v5927 = vpop.f32.mrb[0].mxu0
    %v5928 = vadd.f32 0.0, %v5927
    %v5929 = vpop.f32.mrb[0].mxu0
    %v5930 = vpop.f32.mrb[0].mxu0
    %v5931 = vadd.f32 0.0, %v5930
    %v5932 = vpop.f32.mrb[0].mxu0
    %5933 = vmatprep.mubr.bf16.mxu0 0
    %5934 = vmatmul.mubr.bf16.gmra.mrb[0].mxu0 %v5762
    %v5935 = vpop.f32.mrb[0].mxu0
    %v5936 = vadd.f32 0.0, %v5935
    %v5937 = vpop.f32.mrb[0].mxu0
    %v5938 = vpop.f32.mrb[0].mxu0
    %v5939 = vadd.f32 0.0, %v5938
    %v5940 = vpop.f32.mrb[0].mxu0
    %5941 = vmatprep.mubr.bf16.mxu0 0
    %5942 = vmatmul.mubr.bf16.gmra.mrb[0].mxu0 %v5763
    %v5943 = vpop.f32.mrb[0].mxu0
    %v5944 = vadd.f32 0.0, %v5943
    %v5945 = vpop.f32.mrb[0].mxu0
    %v5946 = vpop.f32.mrb[0].mxu0
    %v5947 = vadd.f32 0.0, %v5946
    %v5948 = vpop.f32.mrb[0].mxu0
    %5949 = vmatprep.mubr.bf16.mxu0 0
    %5950 = vmatmul.mubr.bf16.gmra.mrb[0].mxu0 %v5764
    %v5951 = vpop.f32.mrb[0].mxu0
    %v5952 = vadd.f32 0.0, %v5951
    %v5953 = vpop.f32.mrb[0].mxu0
    %v5954 = vpop.f32.mrb[0].mxu0
    %v5955 = vadd.f32 0.0, %v5954
    %v5956 = vpop.f32.mrb[0].mxu0
    %5957 = vmatprep.mubr.bf16.mxu0 0
    %5958 = vmatmul.mubr.bf16.gmra.mrb[0].mxu0 %v5765
    %v5959 = vpop.f32.mrb[0].mxu0
    %v5960 = vadd.f32 0.0, %v5959
    %v5961 = vpop.f32.mrb[0].mxu0
    %v5962 = vpop.f32.mrb[0].mxu0
    %v5963 = vadd.f32 0.0, %v5962
    %v5964 = vpop.f32.mrb[0].mxu0
    %5965 = vmatprep.mubr.bf16.mxu0 0
    %5966 = vmatmul.mubr.bf16.gmra.mrb[0].mxu0 %v5766
    %v5967 = vpop.f32.mrb[0].mxu0
    %v5968 = vadd.f32 0.0, %v5967
    %v5969 = vpop.f32.mrb[0].mxu0
    %v5970 = vpop.f32.mrb[0].mxu0
    %v5971 = vadd.f32 0.0, %v5970
    %v5972 = vpop.f32.mrb[0].mxu0
    %5973 = vmatprep.mubr.bf16.mxu0 0
    %5974 = vmatmul.mubr.bf16.gmra.mrb[0].mxu0 %v5767
    %v5975 = vpop.f32.mrb[0].mxu0
    %v5976 = vadd.f32 0.0, %v5975
    %v5977 = vpop.f32.mrb[0].mxu0
    %v5978 = vpop.f32.mrb[0].mxu0
    %v5979 = vadd.f32 0.0, %v5978
    %v5980 = vpop.f32.mrb[0].mxu0
    %5981 = vmatprep.mubr.bf16.mxu0 0
    %5982 = vmatmul.mubr.bf16.gmra.mrb[0].mxu0 %v5768
    %v5983 = vpop.f32.mrb[0].mxu0
    %v5984 = vadd.f32 0.0, %v5983
    %v5985 = vpop.f32.mrb[0].mxu0
    %v5986 = vpop.f32.mrb[0].mxu0
    %v5987 = vadd.f32 0.0, %v5986
    %v5988 = vpop.f32.mrb[0].mxu0
    %5989 = vmatprep.mubr.bf16.mxu0 0
    %5990 = vmatmul.mubr.bf16.gmra.mrb[0].mxu0 %v5769
    %v5991 = vpop.f32.mrb[0].mxu0
    %v5992 = vadd.f32 0.0, %v5991
    %v5993 = vpop.f32.mrb[0].mxu0
    %v5994 = vpop.f32.mrb[0].mxu0
    %v5995 = vadd.f32 0.0, %v5994
    %v5996 = vpop.f32.mrb[0].mxu0
    %5997 = vmatprep.mubr.bf16.mxu0 0
    %5998 = vmatmul.mubr.bf16.gmra.mrb[0].mxu0 %v5770
    %v5999 = vpop.f32.mrb[0].mxu0
    %v6000 = vadd.f32 0.0, %v5999
    %v6001 = vpop.f32.mrb[0].mxu0
    %v6002 = vpop.f32.mrb[0].mxu0
    %v6003 = vadd.f32 0.0, %v6002
    %v6004 = vpop.f32.mrb[0].mxu0
    %6005 = vmatprep.mubr.bf16.mxu0 0
    %6006 = vmatmul.mubr.bf16.gmra.mrb[0].mxu0 %v5771
    %v6007 = vpop.f32.mrb[0].mxu0
    %v6008 = vadd.f32 0.0, %v6007
    %v6009 = vpop.f32.mrb[0].mxu0
    %v6010 = vpop.f32.mrb[0].mxu0
    %v6011 = vadd.f32 0.0, %v6010
    %v6012 = vpop.f32.mrb[0].mxu0
    %6013 = vmatprep.mubr.bf16.mxu0 0
    %6014 = vmatmul.mubr.bf16.gmra.mrb[0].mxu0 %v5772
    %v6015 = vpop.f32.mrb[0].mxu0
    %v6016 = vadd.f32 0.0, %v6015
    %v6017 = vpop.f32.mrb[0].mxu0
    %v6018 = vpop.f32.mrb[0].mxu0
    %v6019 = vadd.f32 0.0, %v6018
    %v6020 = vpop.f32.mrb[0].mxu0
    %6021 = vmatprep.mubr.bf16.mxu0 0
    %6022 = vmatmul.mubr.bf16.gmra.mrb[0].mxu0 %v5773
    %v6023 = vpop.f32.mrb[0].mxu0
    %v6024 = vadd.f32 0.0, %v6023
    %v6025 = vpop.f32.mrb[0].mxu0
    %v6026 = vpop.f32.mrb[0].mxu0
    %v6027 = vadd.f32 0.0, %v6026
    %v6028 = vpop.f32.mrb[0].mxu0
    %6029 = vmatprep.mubr.bf16.mxu0 0
    %6030 = vmatmul.mubr.bf16.gmra.mrb[0].mxu0 %v5774
    %v6031 = vpop.f32.mrb[0].mxu0
    %v6032 = vadd.f32 0.0, %v6031
    %v6033 = vpop.f32.mrb[0].mxu0
    %v6034 = vpop.f32.mrb[0].mxu0
    %v6035 = vadd.f32 0.0, %v6034
    %v6036 = vpop.f32.mrb[0].mxu0
    %6037 = vmatprep.mubr.bf16.mxu0 0
    %6038 = vmatmul.mubr.bf16.gmra.mrb[0].mxu0 %v5775
    %v6039 = vpop.f32.mrb[0].mxu0
    %v6040 = vadd.f32 0.0, %v6039
    %v6041 = vpop.f32.mrb[0].mxu0
    %v6042 = vpop.f32.mrb[0].mxu0
    %v6043 = vadd.f32 0.0, %v6042
    %v6044 = vpop.f32.mrb[0].mxu0
    %6045 = vmatprep.mubr.bf16.mxu0 0
    %6046 = vmatmul.mubr.bf16.gmra.mrb[0].mxu0 %v5776
    %v6047 = vpop.f32.mrb[0].mxu0
    %v6048 = vadd.f32 0.0, %v6047
    %v6049 = vpop.f32.mrb[0].mxu0
    %v6050 = vpop.f32.mrb[0].mxu0
    %v6051 = vadd.f32 0.0, %v6050
    %v6052 = vpop.f32.mrb[0].mxu0
    %6053 = vmatprep.mubr.bf16.mxu0 0
    %6054 = vmatmul.mubr.bf16.gmra.mrb[0].mxu0 %v5777
    %v6055 = vpop.f32.mrb[0].mxu0
    %v6056 = vadd.f32 0.0, %v6055
    %v6057 = vpop.f32.mrb[0].mxu0
    %v6058 = vpop.f32.mrb[0].mxu0
    %v6059 = vadd.f32 0.0, %v6058
    %v6060 = vpop.f32.mrb[0].mxu0
    %6061 = vmatprep.mubr.bf16.mxu0 0
    %6062 = vmatmul.mubr.bf16.gmra.mrb[0].mxu0 %v5778
    %v6063 = vpop.f32.mrb[0].mxu0
    %v6064 = vadd.f32 0.0, %v6063
    %v6065 = vpop.f32.mrb[0].mxu0
    %v6066 = vpop.f32.mrb[0].mxu0
    %v6067 = vadd.f32 0.0, %v6066
    %v6068 = vpop.f32.mrb[0].mxu0
    %6069 = vmatprep.mubr.bf16.mxu0 0
    %6070 = vmatmul.mubr.bf16.gmra.mrb[0].mxu0 %v5779
    %v6071 = vpop.f32.mrb[0].mxu0
    %v6072 = vadd.f32 0.0, %v6071
    %v6073 = vpop.f32.mrb[0].mxu0
    %v6074 = vpop.f32.mrb[0].mxu0
    %v6075 = vadd.f32 0.0, %v6074
    %v6076 = vpop.f32.mrb[0].mxu0
    %6077 = vmatprep.mubr.bf16.mxu0 0
    %6078 = vmatmul.mubr.bf16.gmra.mrb[0].mxu0 %v5780
    %v6079 = vpop.f32.mrb[0].mxu0
    %v6080 = vadd.f32 0.0, %v6079
    %v6081 = vpop.f32.mrb[0].mxu0
    %v6082 = vpop.f32.mrb[0].mxu0
    %v6083 = vadd.f32 0.0, %v6082
    %v6084 = vpop.f32.mrb[0].mxu0
    %6085 = vmatprep.mubr.bf16.mxu0 0
    %6086 = vmatmul.mubr.bf16.gmra.mrb[0].mxu0 %v5781
    %v6087 = vpop.f32.mrb[0].mxu0
    %v6088 = vadd.f32 0.0, %v6087
    %v6089 = vpop.f32.mrb[0].mxu0
    %v6090 = vpop.f32.mrb[0].mxu0
    %v6091 = vadd.f32 0.0, %v6090
    %v6092 = vpop.f32.mrb[0].mxu0
    %6093 = vmatprep.mubr.bf16.mxu0 0
    %6094 = vmatmul.mubr.bf16.gmra.mrb[0].mxu0 %v5782
    %v6095 = vpop.f32.mrb[0].mxu0
    %v6096 = vadd.f32 0.0, %v6095
    %v6097 = vpop.f32.mrb[0].mxu0
    %v6098 = vpop.f32.mrb[0].mxu0
    %v6099 = vadd.f32 0.0, %v6098
    %v6100 = vpop.f32.mrb[0].mxu0
    %6101 = vmatprep.mubr.bf16.mxu0 0
    %6102 = vmatmul.mubr.bf16.gmra.mrb[0].mxu0 %v5783
    %v6103 = vpop.f32.mrb[0].mxu0
    %v6104 = vadd.f32 0.0, %v6103
    %v6105 = vpop.f32.mrb[0].mxu0
    %v6106 = vpop.f32.mrb[0].mxu0
    %v6107 = vadd.f32 0.0, %v6106
    %v6108 = vpop.f32.mrb[0].mxu0
    %6109 = vmatprep.mubr.bf16.mxu0 0
    %6110 = vmatmul.mubr.bf16.gmra.mrb[0].mxu0 %v5784
    %v6111 = vpop.f32.mrb[0].mxu0
    %v6112 = vadd.f32 0.0, %v6111
    %v6113 = vpop.f32.mrb[0].mxu0
    %v6114 = vpop.f32.mrb[0].mxu0
    %v6115 = vadd.f32 0.0, %v6114
    %v6116 = vpop.f32.mrb[0].mxu0
    %6117 = vmatprep.mubr.bf16.mxu0 0
    %6118 = vmatmul.mubr.bf16.gmra.mrb[0].mxu0 %v5785
    %v6119 = vpop.f32.mrb[0].mxu0
    %v6120 = vadd.f32 0.0, %v6119
    %v6121 = vpop.f32.mrb[0].mxu0
    %v6122 = vpop.f32.mrb[0].mxu0
    %v6123 = vadd.f32 0.0, %v6122
    %v6124 = vpop.f32.mrb[0].mxu0
    %6125 = vmatprep.mubr.bf16.mxu0 0
    %6126 = vmatmul.mubr.bf16.gmra.mrb[0].mxu0 %v5786
    %v6127 = vpop.f32.mrb[0].mxu0
    %v6128 = vadd.f32 0.0, %v6127
    %v6129 = vpop.f32.mrb[0].mxu0
    %v6130 = vpop.f32.mrb[0].mxu0
    %v6131 = vadd.f32 0.0, %v6130
    %v6132 = vpop.f32.mrb[0].mxu0
    %6133 = vmatprep.mubr.bf16.mxu0 0
    %6134 = vmatmul.mubr.bf16.gmra.mrb[0].mxu0 %v5787
    %v6135 = vpop.f32.mrb[0].mxu0
    %v6136 = vadd.f32 0.0, %v6135
    %v6137 = vpop.f32.mrb[0].mxu0
    %v6138 = vpop.f32.mrb[0].mxu0
    %v6139 = vadd.f32 0.0, %v6138
    %v6140 = vpop.f32.mrb[0].mxu0
    %6141 = vdwg.mxu0
    %v6142 = vadd.f32 %v5628, %v5888
    %v6143 = vadd.f32 %v5629, %v5891
    %v6144 = vadd.f32 %v5630, %v5896
    %v6145 = vadd.f32 %v5631, %v5899
    %v6146 = vadd.f32 %v5632, %v5904
    %v6147 = vadd.f32 %v5633, %v5907
    %v6148 = vadd.f32 %v5634, %v5912
    %v6149 = vadd.f32 %v5635, %v5915
    %v6150 = vadd.f32 %v5636, %v5920
    %v6151 = vadd.f32 %v5637, %v5923
    %v6152 = vadd.f32 %v5638, %v5928
    %v6153 = vadd.f32 %v5639, %v5931
    %v6154 = vadd.f32 %v5640, %v5936
    %v6155 = vadd.f32 %v5641, %v5939
    %v6156 = vadd.f32 %v5642, %v5944
    %v6157 = vadd.f32 %v5643, %v5947
    %v6158 = vadd.f32 %v5644, %v5952
    %v6159 = vadd.f32 %v5645, %v5955
    %v6160 = vadd.f32 %v5646, %v5960
    %v6161 = vadd.f32 %v5647, %v5963
    %v6162 = vadd.f32 %v5648, %v5968
    %v6163 = vadd.f32 %v5649, %v5971
    %v6164 = vadd.f32 %v5650, %v5976
    %v6165 = vadd.f32 %v5651, %v5979
    %v6166 = vadd.f32 %v5652, %v5984
    %v6167 = vadd.f32 %v5653, %v5987
    %v6168 = vadd.f32 %v5654, %v5992
    %v6169 = vadd.f32 %v5655, %v5995
    %v6170 = vadd.f32 %v5656, %v6000
    %v6171 = vadd.f32 %v5657, %v6003
    %v6172 = vadd.f32 %v5658, %v6008
    %v6173 = vadd.f32 %v5659, %v6011
    %v6174 = vadd.f32 %v5660, %v6016
    %v6175 = vadd.f32 %v5661, %v6019
    %v6176 = vadd.f32 %v5662, %v6024
    %v6177 = vadd.f32 %v5663, %v6027
    %v6178 = vadd.f32 %v5664, %v6032
    %v6179 = vadd.f32 %v5665, %v6035
    %v6180 = vadd.f32 %v5666, %v6040
    %v6181 = vadd.f32 %v5667, %v6043
    %v6182 = vadd.f32 %v5668, %v6048
    %v6183 = vadd.f32 %v5669, %v6051
    %v6184 = vadd.f32 %v5670, %v6056
    %v6185 = vadd.f32 %v5671, %v6059
    %v6186 = vadd.f32 %v5672, %v6064
    %v6187 = vadd.f32 %v5673, %v6067
    %v6188 = vadd.f32 %v5674, %v6072
    %v6189 = vadd.f32 %v5675, %v6075
    %v6190 = vadd.f32 %v5676, %v6080
    %v6191 = vadd.f32 %v5677, %v6083
    %v6192 = vadd.f32 %v5678, %v6088
    %v6193 = vadd.f32 %v5679, %v6091
    %v6194 = vadd.f32 %v5680, %v6096
    %v6195 = vadd.f32 %v5681, %v6099
    %v6196 = vadd.f32 %v5682, %v6104
    %v6197 = vadd.f32 %v5683, %v6107
    %v6198 = vadd.f32 %v5684, %v6112
    %v6199 = vadd.f32 %v5685, %v6115
    %v6200 = vadd.f32 %v5686, %v6120
    %v6201 = vadd.f32 %v5687, %v6123
    %v6202 = vadd.f32 %v5688, %v6128
    %v6203 = vadd.f32 %v5689, %v6131
    %v6204 = vadd.f32 %v5690, %v6136
    %v6205 = vadd.f32 %v5691, %v6139
    %v6206 = vld [vmem:[%s8] sm:$0x1]
    %v6208 = vlaneseq
    %v6209 = vshrl.u32 %v6208, 7
    %v6210 = vsub.s32 0, %v6209
    %v6211 = vrot.slane %v6206, %v6210
    %v6213 = vadd.f32 %v6142, %v6211
    %v6214 = vadd.f32 %v6143, %v6211
    %v6215 = vadd.f32 %v6144, %v6211
    %v6216 = vadd.f32 %v6145, %v6211
    %v6217 = vadd.f32 %v6146, %v6211
    %v6218 = vadd.f32 %v6147, %v6211
    %v6219 = vadd.f32 %v6148, %v6211
    %v6220 = vadd.f32 %v6149, %v6211
    %v6221 = vadd.f32 %v6150, %v6211
    %v6222 = vadd.f32 %v6151, %v6211
    %v6223 = vadd.f32 %v6152, %v6211
    %v6224 = vadd.f32 %v6153, %v6211
    %v6225 = vadd.f32 %v6154, %v6211
    %v6226 = vadd.f32 %v6155, %v6211
    %v6227 = vadd.f32 %v6156, %v6211
    %v6228 = vadd.f32 %v6157, %v6211
    %v6229 = vadd.f32 %v6158, %v6211
    %v6230 = vadd.f32 %v6159, %v6211
    %v6231 = vadd.f32 %v6160, %v6211
    %v6232 = vadd.f32 %v6161, %v6211
    %v6233 = vadd.f32 %v6162, %v6211
    %v6234 = vadd.f32 %v6163, %v6211
    %v6235 = vadd.f32 %v6164, %v6211
    %v6236 = vadd.f32 %v6165, %v6211
    %v6237 = vadd.f32 %v6166, %v6211
    %v6238 = vadd.f32 %v6167, %v6211
    %v6239 = vadd.f32 %v6168, %v6211
    %v6240 = vadd.f32 %v6169, %v6211
    %v6241 = vadd.f32 %v6170, %v6211
    %v6242 = vadd.f32 %v6171, %v6211
    %v6243 = vadd.f32 %v6172, %v6211
    %v6244 = vadd.f32 %v6173, %v6211
    %v6245 = vadd.f32 %v6174, %v6211
    %v6246 = vadd.f32 %v6175, %v6211
    %v6247 = vadd.f32 %v6176, %v6211
    %v6248 = vadd.f32 %v6177, %v6211
    %v6249 = vadd.f32 %v6178, %v6211
    %v6250 = vadd.f32 %v6179, %v6211
    %v6251 = vadd.f32 %v6180, %v6211
    %v6252 = vadd.f32 %v6181, %v6211
    %v6253 = vadd.f32 %v6182, %v6211
    %v6254 = vadd.f32 %v6183, %v6211
    %v6255 = vadd.f32 %v6184, %v6211
    %v6256 = vadd.f32 %v6185, %v6211
    %v6257 = vadd.f32 %v6186, %v6211
    %v6258 = vadd.f32 %v6187, %v6211
    %v6259 = vadd.f32 %v6188, %v6211
    %v6260 = vadd.f32 %v6189, %v6211
    %v6261 = vadd.f32 %v6190, %v6211
    %v6262 = vadd.f32 %v6191, %v6211
    %v6263 = vadd.f32 %v6192, %v6211
    %v6264 = vadd.f32 %v6193, %v6211
    %v6265 = vadd.f32 %v6194, %v6211
    %v6266 = vadd.f32 %v6195, %v6211
    %v6267 = vadd.f32 %v6196, %v6211
    %v6268 = vadd.f32 %v6197, %v6211
    %v6269 = vadd.f32 %v6198, %v6211
    %v6270 = vadd.f32 %v6199, %v6211
    %v6271 = vadd.f32 %v6200, %v6211
    %v6272 = vadd.f32 %v6201, %v6211
    %v6273 = vadd.f32 %v6202, %v6211
    %v6274 = vadd.f32 %v6203, %v6211
    %v6275 = vadd.f32 %v6204, %v6211
    %v6276 = vadd.f32 %v6205, %v6211
    %v6277 = vld [vmem:[%s9] sm:$0x1]
    %v6278 = vld [vmem:[%s10] sm:$0x1]
    %v6279 = vadd.f32 %v6213, %v6214
    %v6280 = vadd.f32 %v6279, %v6215
    %v6281 = vadd.f32 %v6280, %v6216
    %v6282 = vadd.f32 %v6281, %v6217
    %v6283 = vadd.f32 %v6282, %v6218
    %v6284 = vadd.f32 %v6283, %v6219
    %v6285 = vadd.f32 %v6284, %v6220
    %v6286 = vadd.f32 %v6285, %v6221
    %v6287 = vadd.f32 %v6286, %v6222
    %v6288 = vadd.f32 %v6287, %v6223
    %v6289 = vadd.f32 %v6288, %v6224
    %v6290 = vadd.f32 %v6289, %v6225
    %v6291 = vadd.f32 %v6290, %v6226
    %v6292 = vadd.f32 %v6291, %v6227
    %v6293 = vadd.f32 %v6292, %v6228
    %v6294 = vadd.f32 %v6293, %v6229
    %v6295 = vadd.f32 %v6294, %v6230
    %v6296 = vadd.f32 %v6295, %v6231
    %v6297 = vadd.f32 %v6296, %v6232
    %v6298 = vadd.f32 %v6297, %v6233
    %v6299 = vadd.f32 %v6298, %v6234
    %v6300 = vadd.f32 %v6299, %v6235
    %v6301 = vadd.f32 %v6300, %v6236
    %v6302 = vadd.f32 %v6301, %v6237
    %v6303 = vadd.f32 %v6302, %v6238
    %v6304 = vadd.f32 %v6303, %v6239
    %v6305 = vadd.f32 %v6304, %v6240
    %v6306 = vadd.f32 %v6305, %v6241
    %v6307 = vadd.f32 %v6306, %v6242
    %v6308 = vadd.f32 %v6307, %v6243
    %v6309 = vadd.f32 %v6308, %v6244
    %v6310 = vadd.f32 %v6309, %v6245
    %v6311 = vadd.f32 %v6310, %v6246
    %v6312 = vadd.f32 %v6311, %v6247
    %v6313 = vadd.f32 %v6312, %v6248
    %v6314 = vadd.f32 %v6313, %v6249
    %v6315 = vadd.f32 %v6314, %v6250
    %v6316 = vadd.f32 %v6315, %v6251
    %v6317 = vadd.f32 %v6316, %v6252
    %v6318 = vadd.f32 %v6317, %v6253
    %v6319 = vadd.f32 %v6318, %v6254
    %v6320 = vadd.f32 %v6319, %v6255
    %v6321 = vadd.f32 %v6320, %v6256
    %v6322 = vadd.f32 %v6321, %v6257
    %v6323 = vadd.f32 %v6322, %v6258
    %v6324 = vadd.f32 %v6323, %v6259
    %v6325 = vadd.f32 %v6324, %v6260
    %v6326 = vadd.f32 %v6325, %v6261
    %v6327 = vadd.f32 %v6326, %v6262
    %v6328 = vadd.f32 %v6327, %v6263
    %v6329 = vadd.f32 %v6328, %v6264
    %v6330 = vadd.f32 %v6329, %v6265
    %v6331 = vadd.f32 %v6330, %v6266
    %v6332 = vadd.f32 %v6331, %v6267
    %v6333 = vadd.f32 %v6332, %v6268
    %v6334 = vadd.f32 %v6333, %v6269
    %v6335 = vadd.f32 %v6334, %v6270
    %v6336 = vadd.f32 %v6335, %v6271
    %v6337 = vadd.f32 %v6336, %v6272
    %v6338 = vadd.f32 %v6337, %v6273
    %v6339 = vadd.f32 %v6338, %v6274
    %v6340 = vadd.f32 %v6339, %v6275
    %v6341 = vadd.f32 %v6340, %v6276
    %v6342 = vrot.slane %v6341, 4
    %v6343 = vadd.f32 %v6341, %v6342
    %v6344 = vrot.slane %v6343, 2
    %v6345 = vadd.f32 %v6343, %v6344
    %v6346 = vrot.slane %v6345, 1
    %v6347 = vadd.f32 %v6345, %v6346
    %v6348 = vmul.f32 %v6347, %v255
    %v6349 = vsub.f32 %v6213, %v6348
    %v6350 = vsub.f32 %v6214, %v6348
    %v6351 = vsub.f32 %v6215, %v6348
    %v6352 = vsub.f32 %v6216, %v6348
    %v6353 = vsub.f32 %v6217, %v6348
    %v6354 = vsub.f32 %v6218, %v6348
    %v6355 = vsub.f32 %v6219, %v6348
    %v6356 = vsub.f32 %v6220, %v6348
    %v6357 = vsub.f32 %v6221, %v6348
    %v6358 = vsub.f32 %v6222, %v6348
    %v6359 = vsub.f32 %v6223, %v6348
    %v6360 = vsub.f32 %v6224, %v6348
    %v6361 = vsub.f32 %v6225, %v6348
    %v6362 = vsub.f32 %v6226, %v6348
    %v6363 = vsub.f32 %v6227, %v6348
    %v6364 = vsub.f32 %v6228, %v6348
    %v6365 = vsub.f32 %v6229, %v6348
    %v6366 = vsub.f32 %v6230, %v6348
    %v6367 = vsub.f32 %v6231, %v6348
    %v6368 = vsub.f32 %v6232, %v6348
    %v6369 = vsub.f32 %v6233, %v6348
    %v6370 = vsub.f32 %v6234, %v6348
    %v6371 = vsub.f32 %v6235, %v6348
    %v6372 = vsub.f32 %v6236, %v6348
    %v6373 = vsub.f32 %v6237, %v6348
    %v6374 = vsub.f32 %v6238, %v6348
    %v6375 = vsub.f32 %v6239, %v6348
    %v6376 = vsub.f32 %v6240, %v6348
    %v6377 = vsub.f32 %v6241, %v6348
    %v6378 = vsub.f32 %v6242, %v6348
    %v6379 = vsub.f32 %v6243, %v6348
    %v6380 = vsub.f32 %v6244, %v6348
    %v6381 = vsub.f32 %v6245, %v6348
    %v6382 = vsub.f32 %v6246, %v6348
    %v6383 = vsub.f32 %v6247, %v6348
    %v6384 = vsub.f32 %v6248, %v6348
    %v6385 = vsub.f32 %v6249, %v6348
    %v6386 = vsub.f32 %v6250, %v6348
    %v6387 = vsub.f32 %v6251, %v6348
    %v6388 = vsub.f32 %v6252, %v6348
    %v6389 = vsub.f32 %v6253, %v6348
    %v6390 = vsub.f32 %v6254, %v6348
    %v6391 = vsub.f32 %v6255, %v6348
    %v6392 = vsub.f32 %v6256, %v6348
    %v6393 = vsub.f32 %v6257, %v6348
    %v6394 = vsub.f32 %v6258, %v6348
    %v6395 = vsub.f32 %v6259, %v6348
    %v6396 = vsub.f32 %v6260, %v6348
    %v6397 = vsub.f32 %v6261, %v6348
    %v6398 = vsub.f32 %v6262, %v6348
    %v6399 = vsub.f32 %v6263, %v6348
    %v6400 = vsub.f32 %v6264, %v6348
    %v6401 = vsub.f32 %v6265, %v6348
    %v6402 = vsub.f32 %v6266, %v6348
    %v6403 = vsub.f32 %v6267, %v6348
    %v6404 = vsub.f32 %v6268, %v6348
    %v6405 = vsub.f32 %v6269, %v6348
    %v6406 = vsub.f32 %v6270, %v6348
    %v6407 = vsub.f32 %v6271, %v6348
    %v6408 = vsub.f32 %v6272, %v6348
    %v6409 = vsub.f32 %v6273, %v6348
    %v6410 = vsub.f32 %v6274, %v6348
    %v6411 = vsub.f32 %v6275, %v6348
    %v6412 = vsub.f32 %v6276, %v6348
    %v6413 = vmul.f32 %v6349, %v6349
    %v6414 = vmul.f32 %v6350, %v6350
    %v6415 = vmul.f32 %v6351, %v6351
    %v6416 = vmul.f32 %v6352, %v6352
    %v6417 = vmul.f32 %v6353, %v6353
    %v6418 = vmul.f32 %v6354, %v6354
    %v6419 = vmul.f32 %v6355, %v6355
    %v6420 = vmul.f32 %v6356, %v6356
    %v6421 = vmul.f32 %v6357, %v6357
    %v6422 = vmul.f32 %v6358, %v6358
    %v6423 = vmul.f32 %v6359, %v6359
    %v6424 = vmul.f32 %v6360, %v6360
    %v6425 = vmul.f32 %v6361, %v6361
    %v6426 = vmul.f32 %v6362, %v6362
    %v6427 = vmul.f32 %v6363, %v6363
    %v6428 = vmul.f32 %v6364, %v6364
    %v6429 = vmul.f32 %v6365, %v6365
    %v6430 = vmul.f32 %v6366, %v6366
    %v6431 = vmul.f32 %v6367, %v6367
    %v6432 = vmul.f32 %v6368, %v6368
    %v6433 = vmul.f32 %v6369, %v6369
    %v6434 = vmul.f32 %v6370, %v6370
    %v6435 = vmul.f32 %v6371, %v6371
    %v6436 = vmul.f32 %v6372, %v6372
    %v6437 = vmul.f32 %v6373, %v6373
    %v6438 = vmul.f32 %v6374, %v6374
    %v6439 = vmul.f32 %v6375, %v6375
    %v6440 = vmul.f32 %v6376, %v6376
    %v6441 = vmul.f32 %v6377, %v6377
    %v6442 = vmul.f32 %v6378, %v6378
    %v6443 = vmul.f32 %v6379, %v6379
    %v6444 = vmul.f32 %v6380, %v6380
    %v6445 = vmul.f32 %v6381, %v6381
    %v6446 = vmul.f32 %v6382, %v6382
    %v6447 = vmul.f32 %v6383, %v6383
    %v6448 = vmul.f32 %v6384, %v6384
    %v6449 = vmul.f32 %v6385, %v6385
    %v6450 = vmul.f32 %v6386, %v6386
    %v6451 = vmul.f32 %v6387, %v6387
    %v6452 = vmul.f32 %v6388, %v6388
    %v6453 = vmul.f32 %v6389, %v6389
    %v6454 = vmul.f32 %v6390, %v6390
    %v6455 = vmul.f32 %v6391, %v6391
    %v6456 = vmul.f32 %v6392, %v6392
    %v6457 = vmul.f32 %v6393, %v6393
    %v6458 = vmul.f32 %v6394, %v6394
    %v6459 = vmul.f32 %v6395, %v6395
    %v6460 = vmul.f32 %v6396, %v6396
    %v6461 = vmul.f32 %v6397, %v6397
    %v6462 = vmul.f32 %v6398, %v6398
    %v6463 = vmul.f32 %v6399, %v6399
    %v6464 = vmul.f32 %v6400, %v6400
    %v6465 = vmul.f32 %v6401, %v6401
    %v6466 = vmul.f32 %v6402, %v6402
    %v6467 = vmul.f32 %v6403, %v6403
    %v6468 = vmul.f32 %v6404, %v6404
    %v6469 = vmul.f32 %v6405, %v6405
    %v6470 = vmul.f32 %v6406, %v6406
    %v6471 = vmul.f32 %v6407, %v6407
    %v6472 = vmul.f32 %v6408, %v6408
    %v6473 = vmul.f32 %v6409, %v6409
    %v6474 = vmul.f32 %v6410, %v6410
    %v6475 = vmul.f32 %v6411, %v6411
    %v6476 = vmul.f32 %v6412, %v6412
    %v6477 = vadd.f32 %v6413, %v6414
    %v6478 = vadd.f32 %v6477, %v6415
    %v6479 = vadd.f32 %v6478, %v6416
    %v6480 = vadd.f32 %v6479, %v6417
    %v6481 = vadd.f32 %v6480, %v6418
    %v6482 = vadd.f32 %v6481, %v6419
    %v6483 = vadd.f32 %v6482, %v6420
    %v6484 = vadd.f32 %v6483, %v6421
    %v6485 = vadd.f32 %v6484, %v6422
    %v6486 = vadd.f32 %v6485, %v6423
    %v6487 = vadd.f32 %v6486, %v6424
    %v6488 = vadd.f32 %v6487, %v6425
    %v6489 = vadd.f32 %v6488, %v6426
    %v6490 = vadd.f32 %v6489, %v6427
    %v6491 = vadd.f32 %v6490, %v6428
    %v6492 = vadd.f32 %v6491, %v6429
    %v6493 = vadd.f32 %v6492, %v6430
    %v6494 = vadd.f32 %v6493, %v6431
    %v6495 = vadd.f32 %v6494, %v6432
    %v6496 = vadd.f32 %v6495, %v6433
    %v6497 = vadd.f32 %v6496, %v6434
    %v6498 = vadd.f32 %v6497, %v6435
    %v6499 = vadd.f32 %v6498, %v6436
    %v6500 = vadd.f32 %v6499, %v6437
    %v6501 = vadd.f32 %v6500, %v6438
    %v6502 = vadd.f32 %v6501, %v6439
    %v6503 = vadd.f32 %v6502, %v6440
    %v6504 = vadd.f32 %v6503, %v6441
    %v6505 = vadd.f32 %v6504, %v6442
    %v6506 = vadd.f32 %v6505, %v6443
    %v6507 = vadd.f32 %v6506, %v6444
    %v6508 = vadd.f32 %v6507, %v6445
    %v6509 = vadd.f32 %v6508, %v6446
    %v6510 = vadd.f32 %v6509, %v6447
    %v6511 = vadd.f32 %v6510, %v6448
    %v6512 = vadd.f32 %v6511, %v6449
    %v6513 = vadd.f32 %v6512, %v6450
    %v6514 = vadd.f32 %v6513, %v6451
    %v6515 = vadd.f32 %v6514, %v6452
    %v6516 = vadd.f32 %v6515, %v6453
    %v6517 = vadd.f32 %v6516, %v6454
    %v6518 = vadd.f32 %v6517, %v6455
    %v6519 = vadd.f32 %v6518, %v6456
    %v6520 = vadd.f32 %v6519, %v6457
    %v6521 = vadd.f32 %v6520, %v6458
    %v6522 = vadd.f32 %v6521, %v6459
    %v6523 = vadd.f32 %v6522, %v6460
    %v6524 = vadd.f32 %v6523, %v6461
    %v6525 = vadd.f32 %v6524, %v6462
    %v6526 = vadd.f32 %v6525, %v6463
    %v6527 = vadd.f32 %v6526, %v6464
    %v6528 = vadd.f32 %v6527, %v6465
    %v6529 = vadd.f32 %v6528, %v6466
    %v6530 = vadd.f32 %v6529, %v6467
    %v6531 = vadd.f32 %v6530, %v6468
    %v6532 = vadd.f32 %v6531, %v6469
    %v6533 = vadd.f32 %v6532, %v6470
    %v6534 = vadd.f32 %v6533, %v6471
    %v6535 = vadd.f32 %v6534, %v6472
    %v6536 = vadd.f32 %v6535, %v6473
    %v6537 = vadd.f32 %v6536, %v6474
    %v6538 = vadd.f32 %v6537, %v6475
    %v6539 = vadd.f32 %v6538, %v6476
    %v6540 = vrot.slane %v6539, 4
    %v6541 = vadd.f32 %v6539, %v6540
    %v6542 = vrot.slane %v6541, 2
    %v6543 = vadd.f32 %v6541, %v6542
    %v6544 = vrot.slane %v6543, 1
    %v6545 = vadd.f32 %v6543, %v6544
    %v6546 = vmul.f32 %v6545, %v255
    %v6547 = vadd.f32 %v6546, 1e-05
    %v6548 = vrsqrt.pop %v6547
    %v6549 = vmul.f32 %v6277, %v6548
    %v6550 = vmul.f32 %v6348, %v6549
    %v6551 = vsub.f32 %v6278, %v6550
    %v6553 = vlaneseq
    %v6554 = vshrl.u32 %v6553, 7
    %v6555 = vsub.s32 0, %v6554
    %v6556 = vrot.slane %v6549, %v6555
    %v6558 = vmul.f32 %v6213, %v6556
    %v6559 = vmul.f32 %v6214, %v6556
    %v6560 = vmul.f32 %v6215, %v6556
    %v6561 = vmul.f32 %v6216, %v6556
    %v6562 = vmul.f32 %v6217, %v6556
    %v6563 = vmul.f32 %v6218, %v6556
    %v6564 = vmul.f32 %v6219, %v6556
    %v6565 = vmul.f32 %v6220, %v6556
    %v6566 = vmul.f32 %v6221, %v6556
    %v6567 = vmul.f32 %v6222, %v6556
    %v6568 = vmul.f32 %v6223, %v6556
    %v6569 = vmul.f32 %v6224, %v6556
    %v6570 = vmul.f32 %v6225, %v6556
    %v6571 = vmul.f32 %v6226, %v6556
    %v6572 = vmul.f32 %v6227, %v6556
    %v6573 = vmul.f32 %v6228, %v6556
    %v6574 = vmul.f32 %v6229, %v6556
    %v6575 = vmul.f32 %v6230, %v6556
    %v6576 = vmul.f32 %v6231, %v6556
    %v6577 = vmul.f32 %v6232, %v6556
    %v6578 = vmul.f32 %v6233, %v6556
    %v6579 = vmul.f32 %v6234, %v6556
    %v6580 = vmul.f32 %v6235, %v6556
    %v6581 = vmul.f32 %v6236, %v6556
    %v6582 = vmul.f32 %v6237, %v6556
    %v6583 = vmul.f32 %v6238, %v6556
    %v6584 = vmul.f32 %v6239, %v6556
    %v6585 = vmul.f32 %v6240, %v6556
    %v6586 = vmul.f32 %v6241, %v6556
    %v6587 = vmul.f32 %v6242, %v6556
    %v6588 = vmul.f32 %v6243, %v6556
    %v6589 = vmul.f32 %v6244, %v6556
    %v6590 = vmul.f32 %v6245, %v6556
    %v6591 = vmul.f32 %v6246, %v6556
    %v6592 = vmul.f32 %v6247, %v6556
    %v6593 = vmul.f32 %v6248, %v6556
    %v6594 = vmul.f32 %v6249, %v6556
    %v6595 = vmul.f32 %v6250, %v6556
    %v6596 = vmul.f32 %v6251, %v6556
    %v6597 = vmul.f32 %v6252, %v6556
    %v6598 = vmul.f32 %v6253, %v6556
    %v6599 = vmul.f32 %v6254, %v6556
    %v6600 = vmul.f32 %v6255, %v6556
    %v6601 = vmul.f32 %v6256, %v6556
    %v6602 = vmul.f32 %v6257, %v6556
    %v6603 = vmul.f32 %v6258, %v6556
    %v6604 = vmul.f32 %v6259, %v6556
    %v6605 = vmul.f32 %v6260, %v6556
    %v6606 = vmul.f32 %v6261, %v6556
    %v6607 = vmul.f32 %v6262, %v6556
    %v6608 = vmul.f32 %v6263, %v6556
    %v6609 = vmul.f32 %v6264, %v6556
    %v6610 = vmul.f32 %v6265, %v6556
    %v6611 = vmul.f32 %v6266, %v6556
    %v6612 = vmul.f32 %v6267, %v6556
    %v6613 = vmul.f32 %v6268, %v6556
    %v6614 = vmul.f32 %v6269, %v6556
    %v6615 = vmul.f32 %v6270, %v6556
    %v6616 = vmul.f32 %v6271, %v6556
    %v6617 = vmul.f32 %v6272, %v6556
    %v6618 = vmul.f32 %v6273, %v6556
    %v6619 = vmul.f32 %v6274, %v6556
    %v6620 = vmul.f32 %v6275, %v6556
    %v6621 = vmul.f32 %v6276, %v6556
    %v6623 = vlaneseq
    %v6624 = vshrl.u32 %v6623, 7
    %v6625 = vsub.s32 0, %v6624
    %v6626 = vrot.slane %v6551, %v6625
    %v6628 = vadd.f32 %v6558, %v6626
    %v6629 = vadd.f32 %v6559, %v6626
    %v6630 = vadd.f32 %v6560, %v6626
    %v6631 = vadd.f32 %v6561, %v6626
    %v6632 = vadd.f32 %v6562, %v6626
    %v6633 = vadd.f32 %v6563, %v6626
    %v6634 = vadd.f32 %v6564, %v6626
    %v6635 = vadd.f32 %v6565, %v6626
    %v6636 = vadd.f32 %v6566, %v6626
    %v6637 = vadd.f32 %v6567, %v6626
    %v6638 = vadd.f32 %v6568, %v6626
    %v6639 = vadd.f32 %v6569, %v6626
    %v6640 = vadd.f32 %v6570, %v6626
    %v6641 = vadd.f32 %v6571, %v6626
    %v6642 = vadd.f32 %v6572, %v6626
    %v6643 = vadd.f32 %v6573, %v6626
    %v6644 = vadd.f32 %v6574, %v6626
    %v6645 = vadd.f32 %v6575, %v6626
    %v6646 = vadd.f32 %v6576, %v6626
    %v6647 = vadd.f32 %v6577, %v6626
    %v6648 = vadd.f32 %v6578, %v6626
    %v6649 = vadd.f32 %v6579, %v6626
    %v6650 = vadd.f32 %v6580, %v6626
    %v6651 = vadd.f32 %v6581, %v6626
    %v6652 = vadd.f32 %v6582, %v6626
    %v6653 = vadd.f32 %v6583, %v6626
    %v6654 = vadd.f32 %v6584, %v6626
    %v6655 = vadd.f32 %v6585, %v6626
    %v6656 = vadd.f32 %v6586, %v6626
    %v6657 = vadd.f32 %v6587, %v6626
    %v6658 = vadd.f32 %v6588, %v6626
    %v6659 = vadd.f32 %v6589, %v6626
    %v6660 = vadd.f32 %v6590, %v6626
    %v6661 = vadd.f32 %v6591, %v6626
    %v6662 = vadd.f32 %v6592, %v6626
    %v6663 = vadd.f32 %v6593, %v6626
    %v6664 = vadd.f32 %v6594, %v6626
    %v6665 = vadd.f32 %v6595, %v6626
    %v6666 = vadd.f32 %v6596, %v6626
    %v6667 = vadd.f32 %v6597, %v6626
    %v6668 = vadd.f32 %v6598, %v6626
    %v6669 = vadd.f32 %v6599, %v6626
    %v6670 = vadd.f32 %v6600, %v6626
    %v6671 = vadd.f32 %v6601, %v6626
    %v6672 = vadd.f32 %v6602, %v6626
    %v6673 = vadd.f32 %v6603, %v6626
    %v6674 = vadd.f32 %v6604, %v6626
    %v6675 = vadd.f32 %v6605, %v6626
    %v6676 = vadd.f32 %v6606, %v6626
    %v6677 = vadd.f32 %v6607, %v6626
    %v6678 = vadd.f32 %v6608, %v6626
    %v6679 = vadd.f32 %v6609, %v6626
    %v6680 = vadd.f32 %v6610, %v6626
    %v6681 = vadd.f32 %v6611, %v6626
    %v6682 = vadd.f32 %v6612, %v6626
    %v6683 = vadd.f32 %v6613, %v6626
    %v6684 = vadd.f32 %v6614, %v6626
    %v6685 = vadd.f32 %v6615, %v6626
    %v6686 = vadd.f32 %v6616, %v6626
    %v6687 = vadd.f32 %v6617, %v6626
    %v6688 = vadd.f32 %v6618, %v6626
    %v6689 = vadd.f32 %v6619, %v6626
    %v6690 = vadd.f32 %v6620, %v6626
    %v6691 = vadd.f32 %v6621, %v6626
    %v6692 = vmax.f32 %v6628, 0.0
    %v6693 = vmax.f32 %v6629, 0.0
    %v6694 = vmax.f32 %v6630, 0.0
    %v6695 = vmax.f32 %v6631, 0.0
    %v6696 = vmax.f32 %v6632, 0.0
    %v6697 = vmax.f32 %v6633, 0.0
    %v6698 = vmax.f32 %v6634, 0.0
    %v6699 = vmax.f32 %v6635, 0.0
    %v6700 = vmax.f32 %v6636, 0.0
    %v6701 = vmax.f32 %v6637, 0.0
    %v6702 = vmax.f32 %v6638, 0.0
    %v6703 = vmax.f32 %v6639, 0.0
    %v6704 = vmax.f32 %v6640, 0.0
    %v6705 = vmax.f32 %v6641, 0.0
    %v6706 = vmax.f32 %v6642, 0.0
    %v6707 = vmax.f32 %v6643, 0.0
    %v6708 = vmax.f32 %v6644, 0.0
    %v6709 = vmax.f32 %v6645, 0.0
    %v6710 = vmax.f32 %v6646, 0.0
    %v6711 = vmax.f32 %v6647, 0.0
    %v6712 = vmax.f32 %v6648, 0.0
    %v6713 = vmax.f32 %v6649, 0.0
    %v6714 = vmax.f32 %v6650, 0.0
    %v6715 = vmax.f32 %v6651, 0.0
    %v6716 = vmax.f32 %v6652, 0.0
    %v6717 = vmax.f32 %v6653, 0.0
    %v6718 = vmax.f32 %v6654, 0.0
    %v6719 = vmax.f32 %v6655, 0.0
    %v6720 = vmax.f32 %v6656, 0.0
    %v6721 = vmax.f32 %v6657, 0.0
    %v6722 = vmax.f32 %v6658, 0.0
    %v6723 = vmax.f32 %v6659, 0.0
    %v6724 = vmax.f32 %v6660, 0.0
    %v6725 = vmax.f32 %v6661, 0.0
    %v6726 = vmax.f32 %v6662, 0.0
    %v6727 = vmax.f32 %v6663, 0.0
    %v6728 = vmax.f32 %v6664, 0.0
    %v6729 = vmax.f32 %v6665, 0.0
    %v6730 = vmax.f32 %v6666, 0.0
    %v6731 = vmax.f32 %v6667, 0.0
    %v6732 = vmax.f32 %v6668, 0.0
    %v6733 = vmax.f32 %v6669, 0.0
    %v6734 = vmax.f32 %v6670, 0.0
    %v6735 = vmax.f32 %v6671, 0.0
    %v6736 = vmax.f32 %v6672, 0.0
    %v6737 = vmax.f32 %v6673, 0.0
    %v6738 = vmax.f32 %v6674, 0.0
    %v6739 = vmax.f32 %v6675, 0.0
    %v6740 = vmax.f32 %v6676, 0.0
    %v6741 = vmax.f32 %v6677, 0.0
    %v6742 = vmax.f32 %v6678, 0.0
    %v6743 = vmax.f32 %v6679, 0.0
    %v6744 = vmax.f32 %v6680, 0.0
    %v6745 = vmax.f32 %v6681, 0.0
    %v6746 = vmax.f32 %v6682, 0.0
    %v6747 = vmax.f32 %v6683, 0.0
    %v6748 = vmax.f32 %v6684, 0.0
    %v6749 = vmax.f32 %v6685, 0.0
    %v6750 = vmax.f32 %v6686, 0.0
    %v6751 = vmax.f32 %v6687, 0.0
    %v6752 = vmax.f32 %v6688, 0.0
    %v6753 = vmax.f32 %v6689, 0.0
    %v6754 = vmax.f32 %v6690, 0.0
    %v6755 = vmax.f32 %v6691, 0.0
    %v6756 = vpack.c.bf16 %v6693, %v6692
    %v6757 = vpack.c.bf16 %v6695, %v6694
    %v6758 = vpack.c.bf16 %v6697, %v6696
    %v6759 = vpack.c.bf16 %v6699, %v6698
    %v6760 = vpack.c.bf16 %v6701, %v6700
    %v6761 = vpack.c.bf16 %v6703, %v6702
    %v6762 = vpack.c.bf16 %v6705, %v6704
    %v6763 = vpack.c.bf16 %v6707, %v6706
    %v6764 = vpack.c.bf16 %v6709, %v6708
    %v6765 = vpack.c.bf16 %v6711, %v6710
    %v6766 = vpack.c.bf16 %v6713, %v6712
    %v6767 = vpack.c.bf16 %v6715, %v6714
    %v6768 = vpack.c.bf16 %v6717, %v6716
    %v6769 = vpack.c.bf16 %v6719, %v6718
    %v6770 = vpack.c.bf16 %v6721, %v6720
    %v6771 = vpack.c.bf16 %v6723, %v6722
    %v6772 = vpack.c.bf16 %v6725, %v6724
    %v6773 = vpack.c.bf16 %v6727, %v6726
    %v6774 = vpack.c.bf16 %v6729, %v6728
    %v6775 = vpack.c.bf16 %v6731, %v6730
    %v6776 = vpack.c.bf16 %v6733, %v6732
    %v6777 = vpack.c.bf16 %v6735, %v6734
    %v6778 = vpack.c.bf16 %v6737, %v6736
    %v6779 = vpack.c.bf16 %v6739, %v6738
    %v6780 = vpack.c.bf16 %v6741, %v6740
    %v6781 = vpack.c.bf16 %v6743, %v6742
    %v6782 = vpack.c.bf16 %v6745, %v6744
    %v6783 = vpack.c.bf16 %v6747, %v6746
    %v6784 = vpack.c.bf16 %v6749, %v6748
    %v6785 = vpack.c.bf16 %v6751, %v6750
    %v6786 = vpack.c.bf16 %v6753, %v6752
    %v6787 = vpack.c.bf16 %v6755, %v6754
    %v6788 = vld [vmem:[#allocation9] sm:$0xff]
    %v6789 = vld [vmem:[#allocation9 + $0x8] sm:$0xff]
    %v6790 = vld [vmem:[#allocation9 + $0x10] sm:$0xff]
    %v6791 = vld [vmem:[#allocation9 + $0x18] sm:$0xff]
    %v6792 = vld [vmem:[#allocation9 + $0x20] sm:$0xff]
    %v6793 = vld [vmem:[#allocation9 + $0x28] sm:$0xff]
    %v6794 = vld [vmem:[#allocation9 + $0x30] sm:$0xff]
    %v6795 = vld [vmem:[#allocation9 + $0x38] sm:$0xff]
    %v6796 = vld [vmem:[#allocation9 + $0x40] sm:$0xff]
    %v6797 = vld [vmem:[#allocation9 + $0x48] sm:$0xff]
    %v6798 = vld [vmem:[#allocation9 + $0x50] sm:$0xff]
    %v6799 = vld [vmem:[#allocation9 + $0x58] sm:$0xff]
    %v6800 = vld [vmem:[#allocation9 + $0x60] sm:$0xff]
    %v6801 = vld [vmem:[#allocation9 + $0x68] sm:$0xff]
    %v6802 = vld [vmem:[#allocation9 + $0x70] sm:$0xff]
    %v6803 = vld [vmem:[#allocation9 + $0x78] sm:$0xff]
    %v6804 = vld [vmem:[%s12] sm:$0x3]
    %v6806 = vlaneseq
    %v6807 = vshrl.u32 %v6806, 7
    %v6808 = vsub.s32 0, %v6807
    %v6809 = vrot.slane %v6804, %v6808
    %v6810 = vlaneseq
    %v6811 = vshrl.u32 %v6810, 7
    %v6812 = vsub.s32 1, %v6811
    %v6813 = vrot.slane %v6804, %v6812
    %v6832 = vunpack.c.l.b16 %v6788
    %v6833 = vunpack.c.h.b16 %v6788
    %v6834 = vunpack.c.l.b16 %v6789
    %v6835 = vunpack.c.h.b16 %v6789
    %v6836 = vunpack.c.l.b16 %v6790
    %v6837 = vunpack.c.h.b16 %v6790
    %v6838 = vunpack.c.l.b16 %v6791
    %v6839 = vunpack.c.h.b16 %v6791
    %v6840 = vunpack.c.l.b16 %v6792
    %v6841 = vunpack.c.h.b16 %v6792
    %v6842 = vunpack.c.l.b16 %v6793
    %v6843 = vunpack.c.h.b16 %v6793
    %v6844 = vunpack.c.l.b16 %v6794
    %v6845 = vunpack.c.h.b16 %v6794
    %v6846 = vunpack.c.l.b16 %v6795
    %v6847 = vunpack.c.h.b16 %v6795
    %v6848 = vunpack.c.l.b16 %v6796
    %v6849 = vunpack.c.h.b16 %v6796
    %v6850 = vunpack.c.l.b16 %v6797
    %v6851 = vunpack.c.h.b16 %v6797
    %v6852 = vunpack.c.l.b16 %v6798
    %v6853 = vunpack.c.h.b16 %v6798
    %v6854 = vunpack.c.l.b16 %v6799
    %v6855 = vunpack.c.h.b16 %v6799
    %v6856 = vunpack.c.l.b16 %v6800
    %v6857 = vunpack.c.h.b16 %v6800
    %v6858 = vunpack.c.l.b16 %v6801
    %v6859 = vunpack.c.h.b16 %v6801
    %v6860 = vunpack.c.l.b16 %v6802
    %v6861 = vunpack.c.h.b16 %v6802
    %v6862 = vunpack.c.l.b16 %v6803
    %v6863 = vunpack.c.h.b16 %v6803
    %v6864 = vpack.c.b16 %v6834, %v6832
    %v6865 = vpack.c.b16 %v6835, %v6833
    %v6866 = vpack.c.b16 %v6838, %v6836
    %v6867 = vpack.c.b16 %v6839, %v6837
    %v6868 = vpack.c.b16 %v6842, %v6840
    %v6869 = vpack.c.b16 %v6843, %v6841
    %v6870 = vpack.c.b16 %v6846, %v6844
    %v6871 = vpack.c.b16 %v6847, %v6845
    %v6872 = vpack.c.b16 %v6850, %v6848
    %v6873 = vpack.c.b16 %v6851, %v6849
    %v6874 = vpack.c.b16 %v6854, %v6852
    %v6875 = vpack.c.b16 %v6855, %v6853
    %v6876 = vpack.c.b16 %v6858, %v6856
    %v6877 = vpack.c.b16 %v6859, %v6857
    %v6878 = vpack.c.b16 %v6862, %v6860
    %v6879 = vpack.c.b16 %v6863, %v6861
    %6896 = vmatprep.subr.bf16.mxu0 %v6865
    %6897 = vmatpush1.bf16.msra.mxu0 %v6864
    %6898 = vmatprep.subr.bf16.mxu0 %v6867
    %6899 = vmatpush1.bf16.msra.mxu0 %v6866
    %6900 = vmatprep.subr.bf16.mxu0 %v6869
    %6901 = vmatpush1.bf16.msra.mxu0 %v6868
    %6902 = vmatprep.subr.bf16.mxu0 %v6871
    %6903 = vmatpush1.bf16.msra.mxu0 %v6870
    %6904 = vmatprep.subr.bf16.mxu0 %v6873
    %6905 = vmatpush1.bf16.msra.mxu0 %v6872
    %6906 = vmatprep.subr.bf16.mxu0 %v6875
    %6907 = vmatpush1.bf16.msra.mxu0 %v6874
    %6908 = vmatprep.subr.bf16.mxu0 %v6877
    %6909 = vmatpush1.bf16.msra.mxu0 %v6876
    %6910 = vmatprep.subr.bf16.mxu0 %v6879
    %6911 = vmatpush1.bf16.msra.mxu0 %v6878
    %6912 = vmatprep.subr.bf16.mxu0 0
    %6913 = vmatpush1.bf16.msra.mxu0 0
    %6914 = vmatprep.subr.bf16.mxu0 0
    %6915 = vmatpush1.bf16.msra.mxu0 0
    %6916 = vmatprep.subr.bf16.mxu0 0
    %6917 = vmatpush1.bf16.msra.mxu0 0
    %6918 = vmatprep.subr.bf16.mxu0 0
    %6919 = vmatpush1.bf16.msra.mxu0 0
    %6920 = vmatprep.subr.bf16.mxu0 0
    %6921 = vmatpush1.bf16.msra.mxu0 0
    %6922 = vmatprep.subr.bf16.mxu0 0
    %6923 = vmatpush1.bf16.msra.mxu0 0
    %6924 = vmatprep.subr.bf16.mxu0 0
    %6925 = vmatpush1.bf16.msra.mxu0 0
    %6926 = vmatprep.subr.bf16.mxu0 0
    %6927 = vmatpush1.bf16.msra.mxu0 0
    %6928 = vmatprep.mubr.bf16.mxu0 0
    %6929 = vmatmul.mubr.bf16.gmra.mrb[0].mxu0 %v6756
    %v6930 = vpop.f32.mrb[0].mxu0
    %v6931 = vadd.f32 %v6809, %v6930
    %v6932 = vpop.f32.mrb[0].mxu0
    %v6933 = vadd.f32 %v6813, %v6932
    %v6934 = vpop.f32.mrb[0].mxu0
    %v6935 = vadd.f32 %v6809, %v6934
    %v6936 = vpop.f32.mrb[0].mxu0
    %v6937 = vadd.f32 %v6813, %v6936
    %6938 = vmatprep.mubr.bf16.mxu0 0
    %6939 = vmatmul.mubr.bf16.gmra.mrb[0].mxu0 %v6757
    %v6940 = vpop.f32.mrb[0].mxu0
    %v6941 = vadd.f32 %v6809, %v6940
    %v6942 = vpop.f32.mrb[0].mxu0
    %v6943 = vadd.f32 %v6813, %v6942
    %v6944 = vpop.f32.mrb[0].mxu0
    %v6945 = vadd.f32 %v6809, %v6944
    %v6946 = vpop.f32.mrb[0].mxu0
    %v6947 = vadd.f32 %v6813, %v6946
    %6948 = vmatprep.mubr.bf16.mxu0 0
    %6949 = vmatmul.mubr.bf16.gmra.mrb[0].mxu0 %v6758
    %v6950 = vpop.f32.mrb[0].mxu0
    %v6951 = vadd.f32 %v6809, %v6950
    %v6952 = vpop.f32.mrb[0].mxu0
    %v6953 = vadd.f32 %v6813, %v6952
    %v6954 = vpop.f32.mrb[0].mxu0
    %v6955 = vadd.f32 %v6809, %v6954
    %v6956 = vpop.f32.mrb[0].mxu0
    %v6957 = vadd.f32 %v6813, %v6956
    %6958 = vmatprep.mubr.bf16.mxu0 0
    %6959 = vmatmul.mubr.bf16.gmra.mrb[0].mxu0 %v6759
    %v6960 = vpop.f32.mrb[0].mxu0
    %v6961 = vadd.f32 %v6809, %v6960
    %v6962 = vpop.f32.mrb[0].mxu0
    %v6963 = vadd.f32 %v6813, %v6962
    %v6964 = vpop.f32.mrb[0].mxu0
    %v6965 = vadd.f32 %v6809, %v6964
    %v6966 = vpop.f32.mrb[0].mxu0
    %v6967 = vadd.f32 %v6813, %v6966
    %6968 = vmatprep.mubr.bf16.mxu0 0
    %6969 = vmatmul.mubr.bf16.gmra.mrb[0].mxu0 %v6760
    %v6970 = vpop.f32.mrb[0].mxu0
    %v6971 = vadd.f32 %v6809, %v6970
    %v6972 = vpop.f32.mrb[0].mxu0
    %v6973 = vadd.f32 %v6813, %v6972
    %v6974 = vpop.f32.mrb[0].mxu0
    %v6975 = vadd.f32 %v6809, %v6974
    %v6976 = vpop.f32.mrb[0].mxu0
    %v6977 = vadd.f32 %v6813, %v6976
    %6978 = vmatprep.mubr.bf16.mxu0 0
    %6979 = vmatmul.mubr.bf16.gmra.mrb[0].mxu0 %v6761
    %v6980 = vpop.f32.mrb[0].mxu0
    %v6981 = vadd.f32 %v6809, %v6980
    %v6982 = vpop.f32.mrb[0].mxu0
    %v6983 = vadd.f32 %v6813, %v6982
    %v6984 = vpop.f32.mrb[0].mxu0
    %v6985 = vadd.f32 %v6809, %v6984
    %v6986 = vpop.f32.mrb[0].mxu0
    %v6987 = vadd.f32 %v6813, %v6986
    %6988 = vmatprep.mubr.bf16.mxu0 0
    %6989 = vmatmul.mubr.bf16.gmra.mrb[0].mxu0 %v6762
    %v6990 = vpop.f32.mrb[0].mxu0
    %v6991 = vadd.f32 %v6809, %v6990
    %v6992 = vpop.f32.mrb[0].mxu0
    %v6993 = vadd.f32 %v6813, %v6992
    %v6994 = vpop.f32.mrb[0].mxu0
    %v6995 = vadd.f32 %v6809, %v6994
    %v6996 = vpop.f32.mrb[0].mxu0
    %v6997 = vadd.f32 %v6813, %v6996
    %6998 = vmatprep.mubr.bf16.mxu0 0
    %6999 = vmatmul.mubr.bf16.gmra.mrb[0].mxu0 %v6763
    %v7000 = vpop.f32.mrb[0].mxu0
    %v7001 = vadd.f32 %v6809, %v7000
    %v7002 = vpop.f32.mrb[0].mxu0
    %v7003 = vadd.f32 %v6813, %v7002
    %v7004 = vpop.f32.mrb[0].mxu0
    %v7005 = vadd.f32 %v6809, %v7004
    %v7006 = vpop.f32.mrb[0].mxu0
    %v7007 = vadd.f32 %v6813, %v7006
    %7008 = vmatprep.mubr.bf16.mxu0 0
    %7009 = vmatmul.mubr.bf16.gmra.mrb[0].mxu0 %v6764
    %v7010 = vpop.f32.mrb[0].mxu0
    %v7011 = vadd.f32 %v6809, %v7010
    %v7012 = vpop.f32.mrb[0].mxu0
    %v7013 = vadd.f32 %v6813, %v7012
    %v7014 = vpop.f32.mrb[0].mxu0
    %v7015 = vadd.f32 %v6809, %v7014
    %v7016 = vpop.f32.mrb[0].mxu0
    %v7017 = vadd.f32 %v6813, %v7016
    %7018 = vmatprep.mubr.bf16.mxu0 0
    %7019 = vmatmul.mubr.bf16.gmra.mrb[0].mxu0 %v6765
    %v7020 = vpop.f32.mrb[0].mxu0
    %v7021 = vadd.f32 %v6809, %v7020
    %v7022 = vpop.f32.mrb[0].mxu0
    %v7023 = vadd.f32 %v6813, %v7022
    %v7024 = vpop.f32.mrb[0].mxu0
    %v7025 = vadd.f32 %v6809, %v7024
    %v7026 = vpop.f32.mrb[0].mxu0
    %v7027 = vadd.f32 %v6813, %v7026
    %7028 = vmatprep.mubr.bf16.mxu0 0
    %7029 = vmatmul.mubr.bf16.gmra.mrb[0].mxu0 %v6766
    %v7030 = vpop.f32.mrb[0].mxu0
    %v7031 = vadd.f32 %v6809, %v7030
    %v7032 = vpop.f32.mrb[0].mxu0
    %v7033 = vadd.f32 %v6813, %v7032
    %v7034 = vpop.f32.mrb[0].mxu0
    %v7035 = vadd.f32 %v6809, %v7034
    %v7036 = vpop.f32.mrb[0].mxu0
    %v7037 = vadd.f32 %v6813, %v7036
    %7038 = vmatprep.mubr.bf16.mxu0 0
    %7039 = vmatmul.mubr.bf16.gmra.mrb[0].mxu0 %v6767
    %v7040 = vpop.f32.mrb[0].mxu0
    %v7041 = vadd.f32 %v6809, %v7040
    %v7042 = vpop.f32.mrb[0].mxu0
    %v7043 = vadd.f32 %v6813, %v7042
    %v7044 = vpop.f32.mrb[0].mxu0
    %v7045 = vadd.f32 %v6809, %v7044
    %v7046 = vpop.f32.mrb[0].mxu0
    %v7047 = vadd.f32 %v6813, %v7046
    %7048 = vmatprep.mubr.bf16.mxu0 0
    %7049 = vmatmul.mubr.bf16.gmra.mrb[0].mxu0 %v6768
    %v7050 = vpop.f32.mrb[0].mxu0
    %v7051 = vadd.f32 %v6809, %v7050
    %v7052 = vpop.f32.mrb[0].mxu0
    %v7053 = vadd.f32 %v6813, %v7052
    %v7054 = vpop.f32.mrb[0].mxu0
    %v7055 = vadd.f32 %v6809, %v7054
    %v7056 = vpop.f32.mrb[0].mxu0
    %v7057 = vadd.f32 %v6813, %v7056
    %7058 = vmatprep.mubr.bf16.mxu0 0
    %7059 = vmatmul.mubr.bf16.gmra.mrb[0].mxu0 %v6769
    %v7060 = vpop.f32.mrb[0].mxu0
    %v7061 = vadd.f32 %v6809, %v7060
    %v7062 = vpop.f32.mrb[0].mxu0
    %v7063 = vadd.f32 %v6813, %v7062
    %v7064 = vpop.f32.mrb[0].mxu0
    %v7065 = vadd.f32 %v6809, %v7064
    %v7066 = vpop.f32.mrb[0].mxu0
    %v7067 = vadd.f32 %v6813, %v7066
    %7068 = vmatprep.mubr.bf16.mxu0 0
    %7069 = vmatmul.mubr.bf16.gmra.mrb[0].mxu0 %v6770
    %v7070 = vpop.f32.mrb[0].mxu0
    %v7071 = vadd.f32 %v6809, %v7070
    %v7072 = vpop.f32.mrb[0].mxu0
    %v7073 = vadd.f32 %v6813, %v7072
    %v7074 = vpop.f32.mrb[0].mxu0
    %v7075 = vadd.f32 %v6809, %v7074
    %v7076 = vpop.f32.mrb[0].mxu0
    %v7077 = vadd.f32 %v6813, %v7076
    %7078 = vmatprep.mubr.bf16.mxu0 0
    %7079 = vmatmul.mubr.bf16.gmra.mrb[0].mxu0 %v6771
    %v7080 = vpop.f32.mrb[0].mxu0
    %v7081 = vadd.f32 %v6809, %v7080
    %v7082 = vpop.f32.mrb[0].mxu0
    %v7083 = vadd.f32 %v6813, %v7082
    %v7084 = vpop.f32.mrb[0].mxu0
    %v7085 = vadd.f32 %v6809, %v7084
    %v7086 = vpop.f32.mrb[0].mxu0
    %v7087 = vadd.f32 %v6813, %v7086
    %7088 = vmatprep.mubr.bf16.mxu0 0
    %7089 = vmatmul.mubr.bf16.gmra.mrb[0].mxu0 %v6772
    %v7090 = vpop.f32.mrb[0].mxu0
    %v7091 = vadd.f32 %v6809, %v7090
    %v7092 = vpop.f32.mrb[0].mxu0
    %v7093 = vadd.f32 %v6813, %v7092
    %v7094 = vpop.f32.mrb[0].mxu0
    %v7095 = vadd.f32 %v6809, %v7094
    %v7096 = vpop.f32.mrb[0].mxu0
    %v7097 = vadd.f32 %v6813, %v7096
    %7098 = vmatprep.mubr.bf16.mxu0 0
    %7099 = vmatmul.mubr.bf16.gmra.mrb[0].mxu0 %v6773
    %v7100 = vpop.f32.mrb[0].mxu0
    %v7101 = vadd.f32 %v6809, %v7100
    %v7102 = vpop.f32.mrb[0].mxu0
    %v7103 = vadd.f32 %v6813, %v7102
    %v7104 = vpop.f32.mrb[0].mxu0
    %v7105 = vadd.f32 %v6809, %v7104
    %v7106 = vpop.f32.mrb[0].mxu0
    %v7107 = vadd.f32 %v6813, %v7106
    %7108 = vmatprep.mubr.bf16.mxu0 0
    %7109 = vmatmul.mubr.bf16.gmra.mrb[0].mxu0 %v6774
    %v7110 = vpop.f32.mrb[0].mxu0
    %v7111 = vadd.f32 %v6809, %v7110
    %v7112 = vpop.f32.mrb[0].mxu0
    %v7113 = vadd.f32 %v6813, %v7112
    %v7114 = vpop.f32.mrb[0].mxu0
    %v7115 = vadd.f32 %v6809, %v7114
    %v7116 = vpop.f32.mrb[0].mxu0
    %v7117 = vadd.f32 %v6813, %v7116
    %7118 = vmatprep.mubr.bf16.mxu0 0
    %7119 = vmatmul.mubr.bf16.gmra.mrb[0].mxu0 %v6775
    %v7120 = vpop.f32.mrb[0].mxu0
    %v7121 = vadd.f32 %v6809, %v7120
    %v7122 = vpop.f32.mrb[0].mxu0
    %v7123 = vadd.f32 %v6813, %v7122
    %v7124 = vpop.f32.mrb[0].mxu0
    %v7125 = vadd.f32 %v6809, %v7124
    %v7126 = vpop.f32.mrb[0].mxu0
    %v7127 = vadd.f32 %v6813, %v7126
    %7128 = vmatprep.mubr.bf16.mxu0 0
    %7129 = vmatmul.mubr.bf16.gmra.mrb[0].mxu0 %v6776
    %v7130 = vpop.f32.mrb[0].mxu0
    %v7131 = vadd.f32 %v6809, %v7130
    %v7132 = vpop.f32.mrb[0].mxu0
    %v7133 = vadd.f32 %v6813, %v7132
    %v7134 = vpop.f32.mrb[0].mxu0
    %v7135 = vadd.f32 %v6809, %v7134
    %v7136 = vpop.f32.mrb[0].mxu0
    %v7137 = vadd.f32 %v6813, %v7136
    %7138 = vmatprep.mubr.bf16.mxu0 0
    %7139 = vmatmul.mubr.bf16.gmra.mrb[0].mxu0 %v6777
    %v7140 = vpop.f32.mrb[0].mxu0
    %v7141 = vadd.f32 %v6809, %v7140
    %v7142 = vpop.f32.mrb[0].mxu0
    %v7143 = vadd.f32 %v6813, %v7142
    %v7144 = vpop.f32.mrb[0].mxu0
    %v7145 = vadd.f32 %v6809, %v7144
    %v7146 = vpop.f32.mrb[0].mxu0
    %v7147 = vadd.f32 %v6813, %v7146
    %7148 = vmatprep.mubr.bf16.mxu0 0
    %7149 = vmatmul.mubr.bf16.gmra.mrb[0].mxu0 %v6778
    %v7150 = vpop.f32.mrb[0].mxu0
    %v7151 = vadd.f32 %v6809, %v7150
    %v7152 = vpop.f32.mrb[0].mxu0
    %v7153 = vadd.f32 %v6813, %v7152
    %v7154 = vpop.f32.mrb[0].mxu0
    %v7155 = vadd.f32 %v6809, %v7154
    %v7156 = vpop.f32.mrb[0].mxu0
    %v7157 = vadd.f32 %v6813, %v7156
    %7158 = vmatprep.mubr.bf16.mxu0 0
    %7159 = vmatmul.mubr.bf16.gmra.mrb[0].mxu0 %v6779
    %v7160 = vpop.f32.mrb[0].mxu0
    %v7161 = vadd.f32 %v6809, %v7160
    %v7162 = vpop.f32.mrb[0].mxu0
    %v7163 = vadd.f32 %v6813, %v7162
    %v7164 = vpop.f32.mrb[0].mxu0
    %v7165 = vadd.f32 %v6809, %v7164
    %v7166 = vpop.f32.mrb[0].mxu0
    %v7167 = vadd.f32 %v6813, %v7166
    %7168 = vmatprep.mubr.bf16.mxu0 0
    %7169 = vmatmul.mubr.bf16.gmra.mrb[0].mxu0 %v6780
    %v7170 = vpop.f32.mrb[0].mxu0
    %v7171 = vadd.f32 %v6809, %v7170
    %v7172 = vpop.f32.mrb[0].mxu0
    %v7173 = vadd.f32 %v6813, %v7172
    %v7174 = vpop.f32.mrb[0].mxu0
    %v7175 = vadd.f32 %v6809, %v7174
    %v7176 = vpop.f32.mrb[0].mxu0
    %v7177 = vadd.f32 %v6813, %v7176
    %7178 = vmatprep.mubr.bf16.mxu0 0
    %7179 = vmatmul.mubr.bf16.gmra.mrb[0].mxu0 %v6781
    %v7180 = vpop.f32.mrb[0].mxu0
    %v7181 = vadd.f32 %v6809, %v7180
    %v7182 = vpop.f32.mrb[0].mxu0
    %v7183 = vadd.f32 %v6813, %v7182
    %v7184 = vpop.f32.mrb[0].mxu0
    %v7185 = vadd.f32 %v6809, %v7184
    %v7186 = vpop.f32.mrb[0].mxu0
    %v7187 = vadd.f32 %v6813, %v7186
    %7188 = vmatprep.mubr.bf16.mxu0 0
    %7189 = vmatmul.mubr.bf16.gmra.mrb[0].mxu0 %v6782
    %v7190 = vpop.f32.mrb[0].mxu0
    %v7191 = vadd.f32 %v6809, %v7190
    %v7192 = vpop.f32.mrb[0].mxu0
    %v7193 = vadd.f32 %v6813, %v7192
    %v7194 = vpop.f32.mrb[0].mxu0
    %v7195 = vadd.f32 %v6809, %v7194
    %v7196 = vpop.f32.mrb[0].mxu0
    %v7197 = vadd.f32 %v6813, %v7196
    %7198 = vmatprep.mubr.bf16.mxu0 0
    %7199 = vmatmul.mubr.bf16.gmra.mrb[0].mxu0 %v6783
    %v7200 = vpop.f32.mrb[0].mxu0
    %v7201 = vadd.f32 %v6809, %v7200
    %v7202 = vpop.f32.mrb[0].mxu0
    %v7203 = vadd.f32 %v6813, %v7202
    %v7204 = vpop.f32.mrb[0].mxu0
    %v7205 = vadd.f32 %v6809, %v7204
    %v7206 = vpop.f32.mrb[0].mxu0
    %v7207 = vadd.f32 %v6813, %v7206
    %7208 = vmatprep.mubr.bf16.mxu0 0
    %7209 = vmatmul.mubr.bf16.gmra.mrb[0].mxu0 %v6784
    %v7210 = vpop.f32.mrb[0].mxu0
    %v7211 = vadd.f32 %v6809, %v7210
    %v7212 = vpop.f32.mrb[0].mxu0
    %v7213 = vadd.f32 %v6813, %v7212
    %v7214 = vpop.f32.mrb[0].mxu0
    %v7215 = vadd.f32 %v6809, %v7214
    %v7216 = vpop.f32.mrb[0].mxu0
    %v7217 = vadd.f32 %v6813, %v7216
    %7218 = vmatprep.mubr.bf16.mxu0 0
    %7219 = vmatmul.mubr.bf16.gmra.mrb[0].mxu0 %v6785
    %v7220 = vpop.f32.mrb[0].mxu0
    %v7221 = vadd.f32 %v6809, %v7220
    %v7222 = vpop.f32.mrb[0].mxu0
    %v7223 = vadd.f32 %v6813, %v7222
    %v7224 = vpop.f32.mrb[0].mxu0
    %v7225 = vadd.f32 %v6809, %v7224
    %v7226 = vpop.f32.mrb[0].mxu0
    %v7227 = vadd.f32 %v6813, %v7226
    %7228 = vmatprep.mubr.bf16.mxu0 0
    %7229 = vmatmul.mubr.bf16.gmra.mrb[0].mxu0 %v6786
    %v7230 = vpop.f32.mrb[0].mxu0
    %v7231 = vadd.f32 %v6809, %v7230
    %v7232 = vpop.f32.mrb[0].mxu0
    %v7233 = vadd.f32 %v6813, %v7232
    %v7234 = vpop.f32.mrb[0].mxu0
    %v7235 = vadd.f32 %v6809, %v7234
    %v7236 = vpop.f32.mrb[0].mxu0
    %v7237 = vadd.f32 %v6813, %v7236
    %7238 = vmatprep.mubr.bf16.mxu0 0
    %7239 = vmatmul.mubr.bf16.gmra.mrb[0].mxu0 %v6787
    %v7240 = vpop.f32.mrb[0].mxu0
    %v7241 = vadd.f32 %v6809, %v7240
    %v7242 = vpop.f32.mrb[0].mxu0
    %v7243 = vadd.f32 %v6813, %v7242
    %v7244 = vpop.f32.mrb[0].mxu0
    %v7245 = vadd.f32 %v6809, %v7244
    %v7246 = vpop.f32.mrb[0].mxu0
    %v7247 = vadd.f32 %v6813, %v7246
    %7248 = vdwg.mxu0
    %v7249 = vpack.c.bf16 %v121, %v120
    %v7250 = vpack.c.bf16 %v123, %v122
    %v7251 = vpack.c.bf16 %v125, %v124
    %v7252 = vpack.c.bf16 %v127, %v126
    %v7253 = vpack.c.bf16 %v129, %v128
    %v7254 = vpack.c.bf16 %v131, %v130
    %v7255 = vpack.c.bf16 %v133, %v132
    %v7256 = vpack.c.bf16 %v135, %v134
    %v7257 = vpack.c.bf16 %v137, %v136
    %v7258 = vpack.c.bf16 %v139, %v138
    %v7259 = vpack.c.bf16 %v141, %v140
    %v7260 = vpack.c.bf16 %v143, %v142
    %v7261 = vpack.c.bf16 %v145, %v144
    %v7262 = vpack.c.bf16 %v147, %v146
    %v7263 = vpack.c.bf16 %v149, %v148
    %v7264 = vpack.c.bf16 %v151, %v150
    %v7265 = vpack.c.bf16 %v153, %v152
    %v7266 = vpack.c.bf16 %v155, %v154
    %v7267 = vpack.c.bf16 %v157, %v156
    %v7268 = vpack.c.bf16 %v159, %v158
    %v7269 = vpack.c.bf16 %v161, %v160
    %v7270 = vpack.c.bf16 %v163, %v162
    %v7271 = vpack.c.bf16 %v165, %v164
    %v7272 = vpack.c.bf16 %v167, %v166
    %v7273 = vpack.c.bf16 %v169, %v168
    %v7274 = vpack.c.bf16 %v171, %v170
    %v7275 = vpack.c.bf16 %v173, %v172
    %v7276 = vpack.c.bf16 %v175, %v174
    %v7277 = vpack.c.bf16 %v177, %v176
    %v7278 = vpack.c.bf16 %v179, %v178
    %v7279 = vpack.c.bf16 %v181, %v180
    %v7280 = vpack.c.bf16 %v183, %v182
    %v7281 = vld [vmem:[#allocation11] sm:$0xff]
    %v7282 = vld [vmem:[#allocation11 + $0x8] sm:$0xff]
    %v7283 = vld [vmem:[#allocation11 + $0x10] sm:$0xff]
    %v7284 = vld [vmem:[#allocation11 + $0x18] sm:$0xff]
    %v7285 = vld [vmem:[#allocation11 + $0x20] sm:$0xff]
    %v7286 = vld [vmem:[#allocation11 + $0x28] sm:$0xff]
    %v7287 = vld [vmem:[#allocation11 + $0x30] sm:$0xff]
    %v7288 = vld [vmem:[#allocation11 + $0x38] sm:$0xff]
    %v7289 = vld [vmem:[#allocation11 + $0x40] sm:$0xff]
    %v7290 = vld [vmem:[#allocation11 + $0x48] sm:$0xff]
    %v7291 = vld [vmem:[#allocation11 + $0x50] sm:$0xff]
    %v7292 = vld [vmem:[#allocation11 + $0x58] sm:$0xff]
    %v7293 = vld [vmem:[#allocation11 + $0x60] sm:$0xff]
    %v7294 = vld [vmem:[#allocation11 + $0x68] sm:$0xff]
    %v7295 = vld [vmem:[#allocation11 + $0x70] sm:$0xff]
    %v7296 = vld [vmem:[#allocation11 + $0x78] sm:$0xff]
    %v7297 = vld [vmem:[%s14] sm:$0x3]
    %v7299 = vlaneseq
    %v7300 = vshrl.u32 %v7299, 7
    %v7301 = vsub.s32 0, %v7300
    %v7302 = vrot.slane %v7297, %v7301
    %v7303 = vlaneseq
    %v7304 = vshrl.u32 %v7303, 7
    %v7305 = vsub.s32 1, %v7304
    %v7306 = vrot.slane %v7297, %v7305
    %v7325 = vunpack.c.l.b16 %v7281
    %v7326 = vunpack.c.h.b16 %v7281
    %v7327 = vunpack.c.l.b16 %v7282
    %v7328 = vunpack.c.h.b16 %v7282
    %v7329 = vunpack.c.l.b16 %v7283
    %v7330 = vunpack.c.h.b16 %v7283
    %v7331 = vunpack.c.l.b16 %v7284
    %v7332 = vunpack.c.h.b16 %v7284
    %v7333 = vunpack.c.l.b16 %v7285
    %v7334 = vunpack.c.h.b16 %v7285
    %v7335 = vunpack.c.l.b16 %v7286
    %v7336 = vunpack.c.h.b16 %v7286
    %v7337 = vunpack.c.l.b16 %v7287
    %v7338 = vunpack.c.h.b16 %v7287
    %v7339 = vunpack.c.l.b16 %v7288
    %v7340 = vunpack.c.h.b16 %v7288
    %v7341 = vunpack.c.l.b16 %v7289
    %v7342 = vunpack.c.h.b16 %v7289
    %v7343 = vunpack.c.l.b16 %v7290
    %v7344 = vunpack.c.h.b16 %v7290
    %v7345 = vunpack.c.l.b16 %v7291
    %v7346 = vunpack.c.h.b16 %v7291
    %v7347 = vunpack.c.l.b16 %v7292
    %v7348 = vunpack.c.h.b16 %v7292
    %v7349 = vunpack.c.l.b16 %v7293
    %v7350 = vunpack.c.h.b16 %v7293
    %v7351 = vunpack.c.l.b16 %v7294
    %v7352 = vunpack.c.h.b16 %v7294
    %v7353 = vunpack.c.l.b16 %v7295
    %v7354 = vunpack.c.h.b16 %v7295
    %v7355 = vunpack.c.l.b16 %v7296
    %v7356 = vunpack.c.h.b16 %v7296
    %v7357 = vpack.c.b16 %v7327, %v7325
    %v7358 = vpack.c.b16 %v7328, %v7326
    %v7359 = vpack.c.b16 %v7331, %v7329
    %v7360 = vpack.c.b16 %v7332, %v7330
    %v7361 = vpack.c.b16 %v7335, %v7333
    %v7362 = vpack.c.b16 %v7336, %v7334
    %v7363 = vpack.c.b16 %v7339, %v7337
    %v7364 = vpack.c.b16 %v7340, %v7338
    %v7365 = vpack.c.b16 %v7343, %v7341
    %v7366 = vpack.c.b16 %v7344, %v7342
    %v7367 = vpack.c.b16 %v7347, %v7345
    %v7368 = vpack.c.b16 %v7348, %v7346
    %v7369 = vpack.c.b16 %v7351, %v7349
    %v7370 = vpack.c.b16 %v7352, %v7350
    %v7371 = vpack.c.b16 %v7355, %v7353
    %v7372 = vpack.c.b16 %v7356, %v7354
    %7389 = vmatprep.subr.bf16.mxu0 %v7358
    %7390 = vmatpush1.bf16.msra.mxu0 %v7357
    %7391 = vmatprep.subr.bf16.mxu0 %v7360
    %7392 = vmatpush1.bf16.msra.mxu0 %v7359
    %7393 = vmatprep.subr.bf16.mxu0 %v7362
    %7394 = vmatpush1.bf16.msra.mxu0 %v7361
    %7395 = vmatprep.subr.bf16.mxu0 %v7364
    %7396 = vmatpush1.bf16.msra.mxu0 %v7363
    %7397 = vmatprep.subr.bf16.mxu0 %v7366
    %7398 = vmatpush1.bf16.msra.mxu0 %v7365
    %7399 = vmatprep.subr.bf16.mxu0 %v7368
    %7400 = vmatpush1.bf16.msra.mxu0 %v7367
    %7401 = vmatprep.subr.bf16.mxu0 %v7370
    %7402 = vmatpush1.bf16.msra.mxu0 %v7369
    %7403 = vmatprep.subr.bf16.mxu0 %v7372
    %7404 = vmatpush1.bf16.msra.mxu0 %v7371
    %7405 = vmatprep.subr.bf16.mxu0 0
    %7406 = vmatpush1.bf16.msra.mxu0 0
    %7407 = vmatprep.subr.bf16.mxu0 0
    %7408 = vmatpush1.bf16.msra.mxu0 0
    %7409 = vmatprep.subr.bf16.mxu0 0
    %7410 = vmatpush1.bf16.msra.mxu0 0
    %7411 = vmatprep.subr.bf16.mxu0 0
    %7412 = vmatpush1.bf16.msra.mxu0 0
    %7413 = vmatprep.subr.bf16.mxu0 0
    %7414 = vmatpush1.bf16.msra.mxu0 0
    %7415 = vmatprep.subr.bf16.mxu0 0
    %7416 = vmatpush1.bf16.msra.mxu0 0
    %7417 = vmatprep.subr.bf16.mxu0 0
    %7418 = vmatpush1.bf16.msra.mxu0 0
    %7419 = vmatprep.subr.bf16.mxu0 0
    %7420 = vmatpush1.bf16.msra.mxu0 0
    %7421 = vmatprep.mubr.bf16.mxu0 0
    %7422 = vmatmul.mubr.bf16.gmra.mrb[0].mxu0 %v7249
    %v7423 = vpop.f32.mrb[0].mxu0
    %v7424 = vadd.f32 %v7302, %v7423
    %v7425 = vpop.f32.mrb[0].mxu0
    %v7426 = vadd.f32 %v7306, %v7425
    %v7427 = vpop.f32.mrb[0].mxu0
    %v7428 = vadd.f32 %v7302, %v7427
    %v7429 = vpop.f32.mrb[0].mxu0
    %v7430 = vadd.f32 %v7306, %v7429
    %7431 = vmatprep.mubr.bf16.mxu0 0
    %7432 = vmatmul.mubr.bf16.gmra.mrb[0].mxu0 %v7250
    %v7433 = vpop.f32.mrb[0].mxu0
    %v7434 = vadd.f32 %v7302, %v7433
    %v7435 = vpop.f32.mrb[0].mxu0
    %v7436 = vadd.f32 %v7306, %v7435
    %v7437 = vpop.f32.mrb[0].mxu0
    %v7438 = vadd.f32 %v7302, %v7437
    %v7439 = vpop.f32.mrb[0].mxu0
    %v7440 = vadd.f32 %v7306, %v7439
    %7441 = vmatprep.mubr.bf16.mxu0 0
    %7442 = vmatmul.mubr.bf16.gmra.mrb[0].mxu0 %v7251
    %v7443 = vpop.f32.mrb[0].mxu0
    %v7444 = vadd.f32 %v7302, %v7443
    %v7445 = vpop.f32.mrb[0].mxu0
    %v7446 = vadd.f32 %v7306, %v7445
    %v7447 = vpop.f32.mrb[0].mxu0
    %v7448 = vadd.f32 %v7302, %v7447
    %v7449 = vpop.f32.mrb[0].mxu0
    %v7450 = vadd.f32 %v7306, %v7449
    %7451 = vmatprep.mubr.bf16.mxu0 0
    %7452 = vmatmul.mubr.bf16.gmra.mrb[0].mxu0 %v7252
    %v7453 = vpop.f32.mrb[0].mxu0
    %v7454 = vadd.f32 %v7302, %v7453
    %v7455 = vpop.f32.mrb[0].mxu0
    %v7456 = vadd.f32 %v7306, %v7455
    %v7457 = vpop.f32.mrb[0].mxu0
    %v7458 = vadd.f32 %v7302, %v7457
    %v7459 = vpop.f32.mrb[0].mxu0
    %v7460 = vadd.f32 %v7306, %v7459
    %7461 = vmatprep.mubr.bf16.mxu0 0
    %7462 = vmatmul.mubr.bf16.gmra.mrb[0].mxu0 %v7253
    %v7463 = vpop.f32.mrb[0].mxu0
    %v7464 = vadd.f32 %v7302, %v7463
    %v7465 = vpop.f32.mrb[0].mxu0
    %v7466 = vadd.f32 %v7306, %v7465
    %v7467 = vpop.f32.mrb[0].mxu0
    %v7468 = vadd.f32 %v7302, %v7467
    %v7469 = vpop.f32.mrb[0].mxu0
    %v7470 = vadd.f32 %v7306, %v7469
    %7471 = vmatprep.mubr.bf16.mxu0 0
    %7472 = vmatmul.mubr.bf16.gmra.mrb[0].mxu0 %v7254
    %v7473 = vpop.f32.mrb[0].mxu0
    %v7474 = vadd.f32 %v7302, %v7473
    %v7475 = vpop.f32.mrb[0].mxu0
    %v7476 = vadd.f32 %v7306, %v7475
    %v7477 = vpop.f32.mrb[0].mxu0
    %v7478 = vadd.f32 %v7302, %v7477
    %v7479 = vpop.f32.mrb[0].mxu0
    %v7480 = vadd.f32 %v7306, %v7479
    %7481 = vmatprep.mubr.bf16.mxu0 0
    %7482 = vmatmul.mubr.bf16.gmra.mrb[0].mxu0 %v7255
    %v7483 = vpop.f32.mrb[0].mxu0
    %v7484 = vadd.f32 %v7302, %v7483
    %v7485 = vpop.f32.mrb[0].mxu0
    %v7486 = vadd.f32 %v7306, %v7485
    %v7487 = vpop.f32.mrb[0].mxu0
    %v7488 = vadd.f32 %v7302, %v7487
    %v7489 = vpop.f32.mrb[0].mxu0
    %v7490 = vadd.f32 %v7306, %v7489
    %7491 = vmatprep.mubr.bf16.mxu0 0
    %7492 = vmatmul.mubr.bf16.gmra.mrb[0].mxu0 %v7256
    %v7493 = vpop.f32.mrb[0].mxu0
    %v7494 = vadd.f32 %v7302, %v7493
    %v7495 = vpop.f32.mrb[0].mxu0
    %v7496 = vadd.f32 %v7306, %v7495
    %v7497 = vpop.f32.mrb[0].mxu0
    %v7498 = vadd.f32 %v7302, %v7497
    %v7499 = vpop.f32.mrb[0].mxu0
    %v7500 = vadd.f32 %v7306, %v7499
    %7501 = vmatprep.mubr.bf16.mxu0 0
    %7502 = vmatmul.mubr.bf16.gmra.mrb[0].mxu0 %v7257
    %v7503 = vpop.f32.mrb[0].mxu0
    %v7504 = vadd.f32 %v7302, %v7503
    %v7505 = vpop.f32.mrb[0].mxu0
    %v7506 = vadd.f32 %v7306, %v7505
    %v7507 = vpop.f32.mrb[0].mxu0
    %v7508 = vadd.f32 %v7302, %v7507
    %v7509 = vpop.f32.mrb[0].mxu0
    %v7510 = vadd.f32 %v7306, %v7509
    %7511 = vmatprep.mubr.bf16.mxu0 0
    %7512 = vmatmul.mubr.bf16.gmra.mrb[0].mxu0 %v7258
    %v7513 = vpop.f32.mrb[0].mxu0
    %v7514 = vadd.f32 %v7302, %v7513
    %v7515 = vpop.f32.mrb[0].mxu0
    %v7516 = vadd.f32 %v7306, %v7515
    %v7517 = vpop.f32.mrb[0].mxu0
    %v7518 = vadd.f32 %v7302, %v7517
    %v7519 = vpop.f32.mrb[0].mxu0
    %v7520 = vadd.f32 %v7306, %v7519
    %7521 = vmatprep.mubr.bf16.mxu0 0
    %7522 = vmatmul.mubr.bf16.gmra.mrb[0].mxu0 %v7259
    %v7523 = vpop.f32.mrb[0].mxu0
    %v7524 = vadd.f32 %v7302, %v7523
    %v7525 = vpop.f32.mrb[0].mxu0
    %v7526 = vadd.f32 %v7306, %v7525
    %v7527 = vpop.f32.mrb[0].mxu0
    %v7528 = vadd.f32 %v7302, %v7527
    %v7529 = vpop.f32.mrb[0].mxu0
    %v7530 = vadd.f32 %v7306, %v7529
    %7531 = vmatprep.mubr.bf16.mxu0 0
    %7532 = vmatmul.mubr.bf16.gmra.mrb[0].mxu0 %v7260
    %v7533 = vpop.f32.mrb[0].mxu0
    %v7534 = vadd.f32 %v7302, %v7533
    %v7535 = vpop.f32.mrb[0].mxu0
    %v7536 = vadd.f32 %v7306, %v7535
    %v7537 = vpop.f32.mrb[0].mxu0
    %v7538 = vadd.f32 %v7302, %v7537
    %v7539 = vpop.f32.mrb[0].mxu0
    %v7540 = vadd.f32 %v7306, %v7539
    %7541 = vmatprep.mubr.bf16.mxu0 0
    %7542 = vmatmul.mubr.bf16.gmra.mrb[0].mxu0 %v7261
    %v7543 = vpop.f32.mrb[0].mxu0
    %v7544 = vadd.f32 %v7302, %v7543
    %v7545 = vpop.f32.mrb[0].mxu0
    %v7546 = vadd.f32 %v7306, %v7545
    %v7547 = vpop.f32.mrb[0].mxu0
    %v7548 = vadd.f32 %v7302, %v7547
    %v7549 = vpop.f32.mrb[0].mxu0
    %v7550 = vadd.f32 %v7306, %v7549
    %7551 = vmatprep.mubr.bf16.mxu0 0
    %7552 = vmatmul.mubr.bf16.gmra.mrb[0].mxu0 %v7262
    %v7553 = vpop.f32.mrb[0].mxu0
    %v7554 = vadd.f32 %v7302, %v7553
    %v7555 = vpop.f32.mrb[0].mxu0
    %v7556 = vadd.f32 %v7306, %v7555
    %v7557 = vpop.f32.mrb[0].mxu0
    %v7558 = vadd.f32 %v7302, %v7557
    %v7559 = vpop.f32.mrb[0].mxu0
    %v7560 = vadd.f32 %v7306, %v7559
    %7561 = vmatprep.mubr.bf16.mxu0 0
    %7562 = vmatmul.mubr.bf16.gmra.mrb[0].mxu0 %v7263
    %v7563 = vpop.f32.mrb[0].mxu0
    %v7564 = vadd.f32 %v7302, %v7563
    %v7565 = vpop.f32.mrb[0].mxu0
    %v7566 = vadd.f32 %v7306, %v7565
    %v7567 = vpop.f32.mrb[0].mxu0
    %v7568 = vadd.f32 %v7302, %v7567
    %v7569 = vpop.f32.mrb[0].mxu0
    %v7570 = vadd.f32 %v7306, %v7569
    %7571 = vmatprep.mubr.bf16.mxu0 0
    %7572 = vmatmul.mubr.bf16.gmra.mrb[0].mxu0 %v7264
    %v7573 = vpop.f32.mrb[0].mxu0
    %v7574 = vadd.f32 %v7302, %v7573
    %v7575 = vpop.f32.mrb[0].mxu0
    %v7576 = vadd.f32 %v7306, %v7575
    %v7577 = vpop.f32.mrb[0].mxu0
    %v7578 = vadd.f32 %v7302, %v7577
    %v7579 = vpop.f32.mrb[0].mxu0
    %v7580 = vadd.f32 %v7306, %v7579
    %7581 = vmatprep.mubr.bf16.mxu0 0
    %7582 = vmatmul.mubr.bf16.gmra.mrb[0].mxu0 %v7265
    %v7583 = vpop.f32.mrb[0].mxu0
    %v7584 = vadd.f32 %v7302, %v7583
    %v7585 = vpop.f32.mrb[0].mxu0
    %v7586 = vadd.f32 %v7306, %v7585
    %v7587 = vpop.f32.mrb[0].mxu0
    %v7588 = vadd.f32 %v7302, %v7587
    %v7589 = vpop.f32.mrb[0].mxu0
    %v7590 = vadd.f32 %v7306, %v7589
    %7591 = vmatprep.mubr.bf16.mxu0 0
    %7592 = vmatmul.mubr.bf16.gmra.mrb[0].mxu0 %v7266
    %v7593 = vpop.f32.mrb[0].mxu0
    %v7594 = vadd.f32 %v7302, %v7593
    %v7595 = vpop.f32.mrb[0].mxu0
    %v7596 = vadd.f32 %v7306, %v7595
    %v7597 = vpop.f32.mrb[0].mxu0
    %v7598 = vadd.f32 %v7302, %v7597
    %v7599 = vpop.f32.mrb[0].mxu0
    %v7600 = vadd.f32 %v7306, %v7599
    %7601 = vmatprep.mubr.bf16.mxu0 0
    %7602 = vmatmul.mubr.bf16.gmra.mrb[0].mxu0 %v7267
    %v7603 = vpop.f32.mrb[0].mxu0
    %v7604 = vadd.f32 %v7302, %v7603
    %v7605 = vpop.f32.mrb[0].mxu0
    %v7606 = vadd.f32 %v7306, %v7605
    %v7607 = vpop.f32.mrb[0].mxu0
    %v7608 = vadd.f32 %v7302, %v7607
    %v7609 = vpop.f32.mrb[0].mxu0
    %v7610 = vadd.f32 %v7306, %v7609
    %7611 = vmatprep.mubr.bf16.mxu0 0
    %7612 = vmatmul.mubr.bf16.gmra.mrb[0].mxu0 %v7268
    %v7613 = vpop.f32.mrb[0].mxu0
    %v7614 = vadd.f32 %v7302, %v7613
    %v7615 = vpop.f32.mrb[0].mxu0
    %v7616 = vadd.f32 %v7306, %v7615
    %v7617 = vpop.f32.mrb[0].mxu0
    %v7618 = vadd.f32 %v7302, %v7617
    %v7619 = vpop.f32.mrb[0].mxu0
    %v7620 = vadd.f32 %v7306, %v7619
    %7621 = vmatprep.mubr.bf16.mxu0 0
    %7622 = vmatmul.mubr.bf16.gmra.mrb[0].mxu0 %v7269
    %v7623 = vpop.f32.mrb[0].mxu0
    %v7624 = vadd.f32 %v7302, %v7623
    %v7625 = vpop.f32.mrb[0].mxu0
    %v7626 = vadd.f32 %v7306, %v7625
    %v7627 = vpop.f32.mrb[0].mxu0
    %v7628 = vadd.f32 %v7302, %v7627
    %v7629 = vpop.f32.mrb[0].mxu0
    %v7630 = vadd.f32 %v7306, %v7629
    %7631 = vmatprep.mubr.bf16.mxu0 0
    %7632 = vmatmul.mubr.bf16.gmra.mrb[0].mxu0 %v7270
    %v7633 = vpop.f32.mrb[0].mxu0
    %v7634 = vadd.f32 %v7302, %v7633
    %v7635 = vpop.f32.mrb[0].mxu0
    %v7636 = vadd.f32 %v7306, %v7635
    %v7637 = vpop.f32.mrb[0].mxu0
    %v7638 = vadd.f32 %v7302, %v7637
    %v7639 = vpop.f32.mrb[0].mxu0
    %v7640 = vadd.f32 %v7306, %v7639
    %7641 = vmatprep.mubr.bf16.mxu0 0
    %7642 = vmatmul.mubr.bf16.gmra.mrb[0].mxu0 %v7271
    %v7643 = vpop.f32.mrb[0].mxu0
    %v7644 = vadd.f32 %v7302, %v7643
    %v7645 = vpop.f32.mrb[0].mxu0
    %v7646 = vadd.f32 %v7306, %v7645
    %v7647 = vpop.f32.mrb[0].mxu0
    %v7648 = vadd.f32 %v7302, %v7647
    %v7649 = vpop.f32.mrb[0].mxu0
    %v7650 = vadd.f32 %v7306, %v7649
    %7651 = vmatprep.mubr.bf16.mxu0 0
    %7652 = vmatmul.mubr.bf16.gmra.mrb[0].mxu0 %v7272
    %v7653 = vpop.f32.mrb[0].mxu0
    %v7654 = vadd.f32 %v7302, %v7653
    %v7655 = vpop.f32.mrb[0].mxu0
    %v7656 = vadd.f32 %v7306, %v7655
    %v7657 = vpop.f32.mrb[0].mxu0
    %v7658 = vadd.f32 %v7302, %v7657
    %v7659 = vpop.f32.mrb[0].mxu0
    %v7660 = vadd.f32 %v7306, %v7659
    %7661 = vmatprep.mubr.bf16.mxu0 0
    %7662 = vmatmul.mubr.bf16.gmra.mrb[0].mxu0 %v7273
    %v7663 = vpop.f32.mrb[0].mxu0
    %v7664 = vadd.f32 %v7302, %v7663
    %v7665 = vpop.f32.mrb[0].mxu0
    %v7666 = vadd.f32 %v7306, %v7665
    %v7667 = vpop.f32.mrb[0].mxu0
    %v7668 = vadd.f32 %v7302, %v7667
    %v7669 = vpop.f32.mrb[0].mxu0
    %v7670 = vadd.f32 %v7306, %v7669
    %7671 = vmatprep.mubr.bf16.mxu0 0
    %7672 = vmatmul.mubr.bf16.gmra.mrb[0].mxu0 %v7274
    %v7673 = vpop.f32.mrb[0].mxu0
    %v7674 = vadd.f32 %v7302, %v7673
    %v7675 = vpop.f32.mrb[0].mxu0
    %v7676 = vadd.f32 %v7306, %v7675
    %v7677 = vpop.f32.mrb[0].mxu0
    %v7678 = vadd.f32 %v7302, %v7677
    %v7679 = vpop.f32.mrb[0].mxu0
    %v7680 = vadd.f32 %v7306, %v7679
    %7681 = vmatprep.mubr.bf16.mxu0 0
    %7682 = vmatmul.mubr.bf16.gmra.mrb[0].mxu0 %v7275
    %v7683 = vpop.f32.mrb[0].mxu0
    %v7684 = vadd.f32 %v7302, %v7683
    %v7685 = vpop.f32.mrb[0].mxu0
    %v7686 = vadd.f32 %v7306, %v7685
    %v7687 = vpop.f32.mrb[0].mxu0
    %v7688 = vadd.f32 %v7302, %v7687
    %v7689 = vpop.f32.mrb[0].mxu0
    %v7690 = vadd.f32 %v7306, %v7689
    %7691 = vmatprep.mubr.bf16.mxu0 0
    %7692 = vmatmul.mubr.bf16.gmra.mrb[0].mxu0 %v7276
    %v7693 = vpop.f32.mrb[0].mxu0
    %v7694 = vadd.f32 %v7302, %v7693
    %v7695 = vpop.f32.mrb[0].mxu0
    %v7696 = vadd.f32 %v7306, %v7695
    %v7697 = vpop.f32.mrb[0].mxu0
    %v7698 = vadd.f32 %v7302, %v7697
    %v7699 = vpop.f32.mrb[0].mxu0
    %v7700 = vadd.f32 %v7306, %v7699
    %7701 = vmatprep.mubr.bf16.mxu0 0
    %7702 = vmatmul.mubr.bf16.gmra.mrb[0].mxu0 %v7277
    %v7703 = vpop.f32.mrb[0].mxu0
    %v7704 = vadd.f32 %v7302, %v7703
    %v7705 = vpop.f32.mrb[0].mxu0
    %v7706 = vadd.f32 %v7306, %v7705
    %v7707 = vpop.f32.mrb[0].mxu0
    %v7708 = vadd.f32 %v7302, %v7707
    %v7709 = vpop.f32.mrb[0].mxu0
    %v7710 = vadd.f32 %v7306, %v7709
    %7711 = vmatprep.mubr.bf16.mxu0 0
    %7712 = vmatmul.mubr.bf16.gmra.mrb[0].mxu0 %v7278
    %v7713 = vpop.f32.mrb[0].mxu0
    %v7714 = vadd.f32 %v7302, %v7713
    %v7715 = vpop.f32.mrb[0].mxu0
    %v7716 = vadd.f32 %v7306, %v7715
    %v7717 = vpop.f32.mrb[0].mxu0
    %v7718 = vadd.f32 %v7302, %v7717
    %v7719 = vpop.f32.mrb[0].mxu0
    %v7720 = vadd.f32 %v7306, %v7719
    %7721 = vmatprep.mubr.bf16.mxu0 0
    %7722 = vmatmul.mubr.bf16.gmra.mrb[0].mxu0 %v7279
    %v7723 = vpop.f32.mrb[0].mxu0
    %v7724 = vadd.f32 %v7302, %v7723
    %v7725 = vpop.f32.mrb[0].mxu0
    %v7726 = vadd.f32 %v7306, %v7725
    %v7727 = vpop.f32.mrb[0].mxu0
    %v7728 = vadd.f32 %v7302, %v7727
    %v7729 = vpop.f32.mrb[0].mxu0
    %v7730 = vadd.f32 %v7306, %v7729
    %7731 = vmatprep.mubr.bf16.mxu0 0
    %7732 = vmatmul.mubr.bf16.gmra.mrb[0].mxu0 %v7280
    %v7733 = vpop.f32.mrb[0].mxu0
    %v7734 = vadd.f32 %v7302, %v7733
    %v7735 = vpop.f32.mrb[0].mxu0
    %v7736 = vadd.f32 %v7306, %v7735
    %v7737 = vpop.f32.mrb[0].mxu0
    %v7738 = vadd.f32 %v7302, %v7737
    %v7739 = vpop.f32.mrb[0].mxu0
    %v7740 = vadd.f32 %v7306, %v7739
    %7741 = vdwg.mxu0
    %v7742 = vadd.f32 %v6931, %v7424
    %v7743 = vadd.f32 %v6933, %v7426
    %v7744 = vadd.f32 %v6935, %v7428
    %v7745 = vadd.f32 %v6937, %v7430
    %v7746 = vadd.f32 %v6941, %v7434
    %v7747 = vadd.f32 %v6943, %v7436
    %v7748 = vadd.f32 %v6945, %v7438
    %v7749 = vadd.f32 %v6947, %v7440
    %v7750 = vadd.f32 %v6951, %v7444
    %v7751 = vadd.f32 %v6953, %v7446
    %v7752 = vadd.f32 %v6955, %v7448
    %v7753 = vadd.f32 %v6957, %v7450
    %v7754 = vadd.f32 %v6961, %v7454
    %v7755 = vadd.f32 %v6963, %v7456
    %v7756 = vadd.f32 %v6965, %v7458
    %v7757 = vadd.f32 %v6967, %v7460
    %v7758 = vadd.f32 %v6971, %v7464
    %v7759 = vadd.f32 %v6973, %v7466
    %v7760 = vadd.f32 %v6975, %v7468
    %v7761 = vadd.f32 %v6977, %v7470
    %v7762 = vadd.f32 %v6981, %v7474
    %v7763 = vadd.f32 %v6983, %v7476
    %v7764 = vadd.f32 %v6985, %v7478
    %v7765 = vadd.f32 %v6987, %v7480
    %v7766 = vadd.f32 %v6991, %v7484
    %v7767 = vadd.f32 %v6993, %v7486
    %v7768 = vadd.f32 %v6995, %v7488
    %v7769 = vadd.f32 %v6997, %v7490
    %v7770 = vadd.f32 %v7001, %v7494
    %v7771 = vadd.f32 %v7003, %v7496
    %v7772 = vadd.f32 %v7005, %v7498
    %v7773 = vadd.f32 %v7007, %v7500
    %v7774 = vadd.f32 %v7011, %v7504
    %v7775 = vadd.f32 %v7013, %v7506
    %v7776 = vadd.f32 %v7015, %v7508
    %v7777 = vadd.f32 %v7017, %v7510
    %v7778 = vadd.f32 %v7021, %v7514
    %v7779 = vadd.f32 %v7023, %v7516
    %v7780 = vadd.f32 %v7025, %v7518
    %v7781 = vadd.f32 %v7027, %v7520
    %v7782 = vadd.f32 %v7031, %v7524
    %v7783 = vadd.f32 %v7033, %v7526
    %v7784 = vadd.f32 %v7035, %v7528
    %v7785 = vadd.f32 %v7037, %v7530
    %v7786 = vadd.f32 %v7041, %v7534
    %v7787 = vadd.f32 %v7043, %v7536
    %v7788 = vadd.f32 %v7045, %v7538
    %v7789 = vadd.f32 %v7047, %v7540
    %v7790 = vadd.f32 %v7051, %v7544
    %v7791 = vadd.f32 %v7053, %v7546
    %v7792 = vadd.f32 %v7055, %v7548
    %v7793 = vadd.f32 %v7057, %v7550
    %v7794 = vadd.f32 %v7061, %v7554
    %v7795 = vadd.f32 %v7063, %v7556
    %v7796 = vadd.f32 %v7065, %v7558
    %v7797 = vadd.f32 %v7067, %v7560
    %v7798 = vadd.f32 %v7071, %v7564
    %v7799 = vadd.f32 %v7073, %v7566
    %v7800 = vadd.f32 %v7075, %v7568
    %v7801 = vadd.f32 %v7077, %v7570
    %v7802 = vadd.f32 %v7081, %v7574
    %v7803 = vadd.f32 %v7083, %v7576
    %v7804 = vadd.f32 %v7085, %v7578
    %v7805 = vadd.f32 %v7087, %v7580
    %v7806 = vadd.f32 %v7091, %v7584
    %v7807 = vadd.f32 %v7093, %v7586
    %v7808 = vadd.f32 %v7095, %v7588
    %v7809 = vadd.f32 %v7097, %v7590
    %v7810 = vadd.f32 %v7101, %v7594
    %v7811 = vadd.f32 %v7103, %v7596
    %v7812 = vadd.f32 %v7105, %v7598
    %v7813 = vadd.f32 %v7107, %v7600
    %v7814 = vadd.f32 %v7111, %v7604
    %v7815 = vadd.f32 %v7113, %v7606
    %v7816 = vadd.f32 %v7115, %v7608
    %v7817 = vadd.f32 %v7117, %v7610
    %v7818 = vadd.f32 %v7121, %v7614
    %v7819 = vadd.f32 %v7123, %v7616
    %v7820 = vadd.f32 %v7125, %v7618
    %v7821 = vadd.f32 %v7127, %v7620
    %v7822 = vadd.f32 %v7131, %v7624
    %v7823 = vadd.f32 %v7133, %v7626
    %v7824 = vadd.f32 %v7135, %v7628
    %v7825 = vadd.f32 %v7137, %v7630
    %v7826 = vadd.f32 %v7141, %v7634
    %v7827 = vadd.f32 %v7143, %v7636
    %v7828 = vadd.f32 %v7145, %v7638
    %v7829 = vadd.f32 %v7147, %v7640
    %v7830 = vadd.f32 %v7151, %v7644
    %v7831 = vadd.f32 %v7153, %v7646
    %v7832 = vadd.f32 %v7155, %v7648
    %v7833 = vadd.f32 %v7157, %v7650
    %v7834 = vadd.f32 %v7161, %v7654
    %v7835 = vadd.f32 %v7163, %v7656
    %v7836 = vadd.f32 %v7165, %v7658
    %v7837 = vadd.f32 %v7167, %v7660
    %v7838 = vadd.f32 %v7171, %v7664
    %v7839 = vadd.f32 %v7173, %v7666
    %v7840 = vadd.f32 %v7175, %v7668
    %v7841 = vadd.f32 %v7177, %v7670
    %v7842 = vadd.f32 %v7181, %v7674
    %v7843 = vadd.f32 %v7183, %v7676
    %v7844 = vadd.f32 %v7185, %v7678
    %v7845 = vadd.f32 %v7187, %v7680
    %v7846 = vadd.f32 %v7191, %v7684
    %v7847 = vadd.f32 %v7193, %v7686
    %v7848 = vadd.f32 %v7195, %v7688
    %v7849 = vadd.f32 %v7197, %v7690
    %v7850 = vadd.f32 %v7201, %v7694
    %v7851 = vadd.f32 %v7203, %v7696
    %v7852 = vadd.f32 %v7205, %v7698
    %v7853 = vadd.f32 %v7207, %v7700
    %v7854 = vadd.f32 %v7211, %v7704
    %v7855 = vadd.f32 %v7213, %v7706
    %v7856 = vadd.f32 %v7215, %v7708
    %v7857 = vadd.f32 %v7217, %v7710
    %v7858 = vadd.f32 %v7221, %v7714
    %v7859 = vadd.f32 %v7223, %v7716
    %v7860 = vadd.f32 %v7225, %v7718
    %v7861 = vadd.f32 %v7227, %v7720
    %v7862 = vadd.f32 %v7231, %v7724
    %v7863 = vadd.f32 %v7233, %v7726
    %v7864 = vadd.f32 %v7235, %v7728
    %v7865 = vadd.f32 %v7237, %v7730
    %v7866 = vadd.f32 %v7241, %v7734
    %v7867 = vadd.f32 %v7243, %v7736
    %v7868 = vadd.f32 %v7245, %v7738
    %v7869 = vadd.f32 %v7247, %v7740
    %7870 = vst [vmem:[#allocation12] sm:$0xff] %v7742
    %7871 = vst [vmem:[#allocation12 + $0x8] sm:$0xff] %v7743
    %7872 = vst [vmem:[#allocation12 + $0x10] sm:$0xff] %v7744
    %7873 = vst [vmem:[#allocation12 + $0x18] sm:$0xff] %v7745
    %7874 = vst [vmem:[#allocation12 + $0x20] sm:$0xff] %v7746
    %7875 = vst [vmem:[#allocation12 + $0x28] sm:$0xff] %v7747
    %7876 = vst [vmem:[#allocation12 + $0x30] sm:$0xff] %v7748
    %7877 = vst [vmem:[#allocation12 + $0x38] sm:$0xff] %v7749
    %7878 = vst [vmem:[#allocation12 + $0x40] sm:$0xff] %v7750
    %7879 = vst [vmem:[#allocation12 + $0x48] sm:$0xff] %v7751
    %7880 = vst [vmem:[#allocation12 + $0x50] sm:$0xff] %v7752
    %7881 = vst [vmem:[#allocation12 + $0x58] sm:$0xff] %v7753
    %7882 = vst [vmem:[#allocation12 + $0x60] sm:$0xff] %v7754
    %7883 = vst [vmem:[#allocation12 + $0x68] sm:$0xff] %v7755
    %7884 = vst [vmem:[#allocation12 + $0x70] sm:$0xff] %v7756
    %7885 = vst [vmem:[#allocation12 + $0x78] sm:$0xff] %v7757
    %7886 = vst [vmem:[#allocation12 + $0x80] sm:$0xff] %v7758
    %7887 = vst [vmem:[#allocation12 + $0x88] sm:$0xff] %v7759
    %7888 = vst [vmem:[#allocation12 + $0x90] sm:$0xff] %v7760
    %7889 = vst [vmem:[#allocation12 + $0x98] sm:$0xff] %v7761
    %7890 = vst [vmem:[#allocation12 + $0xa0] sm:$0xff] %v7762
    %7891 = vst [vmem:[#allocation12 + $0xa8] sm:$0xff] %v7763
    %7892 = vst [vmem:[#allocation12 + $0xb0] sm:$0xff] %v7764
    %7893 = vst [vmem:[#allocation12 + $0xb8] sm:$0xff] %v7765
    %7894 = vst [vmem:[#allocation12 + $0xc0] sm:$0xff] %v7766
    %7895 = vst [vmem:[#allocation12 + $0xc8] sm:$0xff] %v7767
    %7896 = vst [vmem:[#allocation12 + $0xd0] sm:$0xff] %v7768
    %7897 = vst [vmem:[#allocation12 + $0xd8] sm:$0xff] %v7769
    %7898 = vst [vmem:[#allocation12 + $0xe0] sm:$0xff] %v7770
    %7899 = vst [vmem:[#allocation12 + $0xe8] sm:$0xff] %v7771
    %7900 = vst [vmem:[#allocation12 + $0xf0] sm:$0xff] %v7772
    %7901 = vst [vmem:[#allocation12 + $0xf8] sm:$0xff] %v7773
    %7902 = vst [vmem:[#allocation12 + $0x100] sm:$0xff] %v7774
    %7903 = vst [vmem:[#allocation12 + $0x108] sm:$0xff] %v7775
    %7904 = vst [vmem:[#allocation12 + $0x110] sm:$0xff] %v7776
    %7905 = vst [vmem:[#allocation12 + $0x118] sm:$0xff] %v7777
    %7906 = vst [vmem:[#allocation12 + $0x120] sm:$0xff] %v7778
    %7907 = vst [vmem:[#allocation12 + $0x128] sm:$0xff] %v7779
    %7908 = vst [vmem:[#allocation12 + $0x130] sm:$0xff] %v7780
    %7909 = vst [vmem:[#allocation12 + $0x138] sm:$0xff] %v7781
    %7910 = vst [vmem:[#allocation12 + $0x140] sm:$0xff] %v7782
    %7911 = vst [vmem:[#allocation12 + $0x148] sm:$0xff] %v7783
    %7912 = vst [vmem:[#allocation12 + $0x150] sm:$0xff] %v7784
    %7913 = vst [vmem:[#allocation12 + $0x158] sm:$0xff] %v7785
    %7914 = vst [vmem:[#allocation12 + $0x160] sm:$0xff] %v7786
    %7915 = vst [vmem:[#allocation12 + $0x168] sm:$0xff] %v7787
    %7916 = vst [vmem:[#allocation12 + $0x170] sm:$0xff] %v7788
    %7917 = vst [vmem:[#allocation12 + $0x178] sm:$0xff] %v7789
    %7918 = vst [vmem:[#allocation12 + $0x180] sm:$0xff] %v7790
    %7919 = vst [vmem:[#allocation12 + $0x188] sm:$0xff] %v7791
    %7920 = vst [vmem:[#allocation12 + $0x190] sm:$0xff] %v7792
    %7921 = vst [vmem:[#allocation12 + $0x198] sm:$0xff] %v7793
    %7922 = vst [vmem:[#allocation12 + $0x1a0] sm:$0xff] %v7794
    %7923 = vst [vmem:[#allocation12 + $0x1a8] sm:$0xff] %v7795
    %7924 = vst [vmem:[#allocation12 + $0x1b0] sm:$0xff] %v7796
    %7925 = vst [vmem:[#allocation12 + $0x1b8] sm:$0xff] %v7797
    %7926 = vst [vmem:[#allocation12 + $0x1c0] sm:$0xff] %v7798
    %7927 = vst [vmem:[#allocation12 + $0x1c8] sm:$0xff] %v7799
    %7928 = vst [vmem:[#allocation12 + $0x1d0] sm:$0xff] %v7800
    %7929 = vst [vmem:[#allocation12 + $0x1d8] sm:$0xff] %v7801
    %7930 = vst [vmem:[#allocation12 + $0x1e0] sm:$0xff] %v7802
    %7931 = vst [vmem:[#allocation12 + $0x1e8] sm:$0xff] %v7803
    %7932 = vst [vmem:[#allocation12 + $0x1f0] sm:$0xff] %v7804
    %7933 = vst [vmem:[#allocation12 + $0x1f8] sm:$0xff] %v7805
    %7934 = vst [vmem:[#allocation12 + $0x200] sm:$0xff] %v7806
    %7935 = vst [vmem:[#allocation12 + $0x208] sm:$0xff] %v7807
    %7936 = vst [vmem:[#allocation12 + $0x210] sm:$0xff] %v7808
    %7937 = vst [vmem:[#allocation12 + $0x218] sm:$0xff] %v7809
    %7938 = vst [vmem:[#allocation12 + $0x220] sm:$0xff] %v7810
    %7939 = vst [vmem:[#allocation12 + $0x228] sm:$0xff] %v7811
    %7940 = vst [vmem:[#allocation12 + $0x230] sm:$0xff] %v7812
    %7941 = vst [vmem:[#allocation12 + $0x238] sm:$0xff] %v7813
    %7942 = vst [vmem:[#allocation12 + $0x240] sm:$0xff] %v7814
    %7943 = vst [vmem:[#allocation12 + $0x248] sm:$0xff] %v7815
    %7944 = vst [vmem:[#allocation12 + $0x250] sm:$0xff] %v7816
    %7945 = vst [vmem:[#allocation12 + $0x258] sm:$0xff] %v7817
    %7946 = vst [vmem:[#allocation12 + $0x260] sm:$0xff] %v7818
    %7947 = vst [vmem:[#allocation12 + $0x268] sm:$0xff] %v7819
    %7948 = vst [vmem:[#allocation12 + $0x270] sm:$0xff] %v7820
    %7949 = vst [vmem:[#allocation12 + $0x278] sm:$0xff] %v7821
    %7950 = vst [vmem:[#allocation12 + $0x280] sm:$0xff] %v7822
    %7951 = vst [vmem:[#allocation12 + $0x288] sm:$0xff] %v7823
    %7952 = vst [vmem:[#allocation12 + $0x290] sm:$0xff] %v7824
    %7953 = vst [vmem:[#allocation12 + $0x298] sm:$0xff] %v7825
    %7954 = vst [vmem:[#allocation12 + $0x2a0] sm:$0xff] %v7826
    %7955 = vst [vmem:[#allocation12 + $0x2a8] sm:$0xff] %v7827
    %7956 = vst [vmem:[#allocation12 + $0x2b0] sm:$0xff] %v7828
    %7957 = vst [vmem:[#allocation12 + $0x2b8] sm:$0xff] %v7829
    %7958 = vst [vmem:[#allocation12 + $0x2c0] sm:$0xff] %v7830
    %7959 = vst [vmem:[#allocation12 + $0x2c8] sm:$0xff] %v7831
    %7960 = vst [vmem:[#allocation12 + $0x2d0] sm:$0xff] %v7832
    %7961 = vst [vmem:[#allocation12 + $0x2d8] sm:$0xff] %v7833
    %7962 = vst [vmem:[#allocation12 + $0x2e0] sm:$0xff] %v7834
    %7963 = vst [vmem:[#allocation12 + $0x2e8] sm:$0xff] %v7835
    %7964 = vst [vmem:[#allocation12 + $0x2f0] sm:$0xff] %v7836
    %7965 = vst [vmem:[#allocation12 + $0x2f8] sm:$0xff] %v7837
    %7966 = vst [vmem:[#allocation12 + $0x300] sm:$0xff] %v7838
    %7967 = vst [vmem:[#allocation12 + $0x308] sm:$0xff] %v7839
    %7968 = vst [vmem:[#allocation12 + $0x310] sm:$0xff] %v7840
    %7969 = vst [vmem:[#allocation12 + $0x318] sm:$0xff] %v7841
    %7970 = vst [vmem:[#allocation12 + $0x320] sm:$0xff] %v7842
    %7971 = vst [vmem:[#allocation12 + $0x328] sm:$0xff] %v7843
    %7972 = vst [vmem:[#allocation12 + $0x330] sm:$0xff] %v7844
    %7973 = vst [vmem:[#allocation12 + $0x338] sm:$0xff] %v7845
    %7974 = vst [vmem:[#allocation12 + $0x340] sm:$0xff] %v7846
    %7975 = vst [vmem:[#allocation12 + $0x348] sm:$0xff] %v7847
    %7976 = vst [vmem:[#allocation12 + $0x350] sm:$0xff] %v7848
    %7977 = vst [vmem:[#allocation12 + $0x358] sm:$0xff] %v7849
    %7978 = vst [vmem:[#allocation12 + $0x360] sm:$0xff] %v7850
    %7979 = vst [vmem:[#allocation12 + $0x368] sm:$0xff] %v7851
    %7980 = vst [vmem:[#allocation12 + $0x370] sm:$0xff] %v7852
    %7981 = vst [vmem:[#allocation12 + $0x378] sm:$0xff] %v7853
    %7982 = vst [vmem:[#allocation12 + $0x380] sm:$0xff] %v7854
    %7983 = vst [vmem:[#allocation12 + $0x388] sm:$0xff] %v7855
    %7984 = vst [vmem:[#allocation12 + $0x390] sm:$0xff] %v7856
    %7985 = vst [vmem:[#allocation12 + $0x398] sm:$0xff] %v7857
    %7986 = vst [vmem:[#allocation12 + $0x3a0] sm:$0xff] %v7858
    %7987 = vst [vmem:[#allocation12 + $0x3a8] sm:$0xff] %v7859
    %7988 = vst [vmem:[#allocation12 + $0x3b0] sm:$0xff] %v7860
    %7989 = vst [vmem:[#allocation12 + $0x3b8] sm:$0xff] %v7861
    %7990 = vst [vmem:[#allocation12 + $0x3c0] sm:$0xff] %v7862
    %7991 = vst [vmem:[#allocation12 + $0x3c8] sm:$0xff] %v7863
    %7992 = vst [vmem:[#allocation12 + $0x3d0] sm:$0xff] %v7864
    %7993 = vst [vmem:[#allocation12 + $0x3d8] sm:$0xff] %v7865
    %7994 = vst [vmem:[#allocation12 + $0x3e0] sm:$0xff] %v7866
    %7995 = vst [vmem:[#allocation12 + $0x3e8] sm:$0xff] %v7867
    %7996 = vst [vmem:[#allocation12 + $0x3f0] sm:$0xff] %v7868
    %7997 = vst [vmem:[#allocation12 + $0x3f8] sm:$0xff] %v7869
    // Predicated region
    $region82: #{tpu_custom_call.1} parent=1 // pred_check
      _
    $region83: #{tpu_custom_call.1} parent=1 // pred_check_branch
      %7999 = sbr.rel (0) target = $region85
    $region84: #{tpu_custom_call.1} parent=1 // pred_region
      %s8001 = ssub.s32 16384, 16384
      %8002 = vsyncadd [#allocation5], %s8001
      %s8003 = sshll.u32 [#allocation12], 4
      %s8004 = int_to_ptr.vmem [resolvable:$true] %s8003
      %8009 = dma.vmem_to_hbm [thread:$0]  %s8004, 16384, %s15, [#allocation5], 256, 256, 16
    $region85: #{tpu_custom_call.1} parent=1 // pred_fallthru
      _
    // Predicated region
    $region86: #{tpu_custom_call.1} parent=1 // pred_check
      _
    $region87: #{tpu_custom_call.1} parent=1 // pred_check_branch
      %8011 = sbr.rel (0) target = $region89
    $region88: #{tpu_custom_call.1} parent=1 // pred_region
      %8012 = dma.done [#allocation5], 16384
    $region89: #{tpu_custom_call.1} parent=1 // pred_fallthru
      _
    %8013 = vsyncpa [#allocation4], 1
    %8014 = vsyncpa [#allocation7], 1
    %8015 = vsyncpa [#allocation10], 1
    %8016 = vsyncpa [#allocation5], 1

</llo_original>
